<compile_context>
chip_gen: v7x
topology: tpu7x:2x2x1
jax: 0.10.0
libtpu: 0.0.40
codegen_flags: <defaults>
</compile_context>

<pallas_src>
import jax
import jax.numpy as jnp
from jax.experimental import pallas as pl
from jax.experimental.pallas import tpu as pltpu

# ----------------------------- model hyper-parameters (small) -----------------------------
N_VOCAB_IN = 100
N_VOCAB_OUT = 100
VOCAB_PAD = 128          # lane-dense padded logits width (sliced back to 100 outside the kernel)
EMB_DIM = 32
PAD_IDX = 1
MAX_SEQ_LEN = 12
N_BLOCK = 2
ATTN_DIM = 8             # per-head dim
N_HEAD = 4
HD = N_HEAD * ATTN_DIM   # 32
FF_DIM = 64              # feedforward_dim (not passed in the reference ctor; chosen here)
BATCH = 2
L_SRC = 8
L_TRG = 8
LANE = 128
NEG_BIG = -1e9
WEIGHT_DTYPE = jnp.bfloat16   # MXU inputs; accumulation / elementwise math stays f32


# ----------------------------- packed-slab layouts (shared by packer & kernel) -----------------------------
def _build_layouts():
    mats, vecs = {}, {}
    m_off, v_off = 0, 0

    def add_m(name, rows, cols):
        nonlocal m_off
        mats[name] = (m_off, rows, cols)
        m_off += rows

    def add_v(name, cols):
        nonlocal v_off
        vecs[name] = (v_off, 1, cols)
        v_off += 1

    for i in range(N_BLOCK):
        p = f"enc{i}_"
        add_m(p + "qkv_w", EMB_DIM, 3 * HD); add_v(p + "qkv_b", 3 * HD)
        add_m(p + "o_w", HD, EMB_DIM);       add_v(p + "o_b", EMB_DIM)
        add_v(p + "ln1_g", EMB_DIM);         add_v(p + "ln1_b", EMB_DIM)
        add_m(p + "f1_w", EMB_DIM, FF_DIM);  add_v(p + "f1_b", FF_DIM)
        add_m(p + "f2_w", FF_DIM, EMB_DIM);  add_v(p + "f2_b", EMB_DIM)
        add_v(p + "ln2_g", EMB_DIM);         add_v(p + "ln2_b", EMB_DIM)
    for i in range(N_BLOCK):
        p = f"dec{i}_"
        add_m(p + "sqkv_w", EMB_DIM, 3 * HD); add_v(p + "sqkv_b", 3 * HD)
        add_m(p + "so_w", HD, EMB_DIM);       add_v(p + "so_b", EMB_DIM)
        add_v(p + "ln1_g", EMB_DIM);          add_v(p + "ln1_b", EMB_DIM)
        add_m(p + "cq_w", EMB_DIM, HD);       add_v(p + "cq_b", HD)
        add_m(p + "ckv_w", EMB_DIM, 2 * HD);  add_v(p + "ckv_b", 2 * HD)
        add_m(p + "co_w", HD, EMB_DIM);       add_v(p + "co_b", EMB_DIM)
        add_v(p + "ln2_g", EMB_DIM);          add_v(p + "ln2_b", EMB_DIM)
        add_m(p + "f1_w", EMB_DIM, FF_DIM);   add_v(p + "f1_b", FF_DIM)
        add_m(p + "f2_w", FF_DIM, EMB_DIM);   add_v(p + "f2_b", EMB_DIM)
        add_v(p + "ln3_g", EMB_DIM);          add_v(p + "ln3_b", EMB_DIM)
    add_m("proj_w", EMB_DIM, VOCAB_PAD); add_v("proj_b", VOCAB_PAD)

    def rup(x, m):
        return ((x + m - 1) // m) * m

    return mats, rup(m_off, 32), vecs, rup(v_off, 8)


M_LAYOUT, M_ROWS, V_LAYOUT, V_ROWS = _build_layouts()   # M_ROWS=864, V_ROWS=48


# ----------------------------- in-kernel helpers (traced inside the fused kernel) -----------------------------
def _mat(w_ref, name):
    off, rows, cols = M_LAYOUT[name]
    return w_ref[off:off + rows, 0:cols]                 # bf16 [rows, cols], static ref slice


def _vec(v_ref, name):
    off, _, cols = V_LAYOUT[name]
    return v_ref[off:off + 1, 0:cols]                    # f32 [1, cols]


def _dense(x, w_ref, v_ref, wname, bname):
    w = _mat(w_ref, wname)
    y = jnp.dot(x.astype(w.dtype), w, preferred_element_type=jnp.float32)
    return y + _vec(v_ref, bname)


def _layer_norm(x, g, b):
    # One-pass variance: E[x^2] - mean^2 (halves the cross-lane reductions); eps guards negatives.
    mean = jnp.mean(x, axis=-1, keepdims=True)
    var = jnp.mean(x * x, axis=-1, keepdims=True) - mean * mean
    return (x - mean) * jax.lax.rsqrt(var + 1e-5) * g + b


def _split_heads(x2, b, l):
    # [b*l, H*dk] -> [H*b, l, dk]   (group index g = h*b + batch)
    return jnp.concatenate(
        [x2[:, h * ATTN_DIM:(h + 1) * ATTN_DIM].reshape(b, l, ATTN_DIM)
         for h in range(N_HEAD)], axis=0)


def _merge_heads(c3, b, l):
    # [H*b, l, dk] -> [b*l, H*dk]
    return jnp.concatenate(
        [c3[h * b:(h + 1) * b].reshape(b * l, ATTN_DIM) for h in range(N_HEAD)],
        axis=-1)


def _mha(q2, k2, v2, bias, b, lq, lk):
    """Fused multi-head attention: all (batch, head) pairs in one leading axis, ONE softmax.
    q2: [b*lq, H*dk], k2/v2: [b*lk, H*dk], bias: additive [H*b, lq, lk] (0 keep / -1e9 mask)."""
    scale = 1.0 / float(ATTN_DIM) ** 0.5
    qh = _split_heads(q2, b, lq).astype(WEIGHT_DTYPE)
    kh = _split_heads(k2, b, lk).astype(WEIGHT_DTYPE)
    vh = _split_heads(v2, b, lk).astype(WEIGHT_DTYPE)
    s = jnp.einsum('gqd,gkd->gqk', qh, kh,
                   preferred_element_type=jnp.float32) * scale + bias
    m = jnp.max(s, axis=-1, keepdims=True)               # single XLU max push
    p = jnp.exp(s - m)
    denom = jnp.sum(p, axis=-1, keepdims=True)           # single XLU sum push
    a = p * pl.reciprocal(denom, approx=True)            # EUP reciprocal (free slot)
    ctx = jnp.einsum('gqk,gkd->gqd', a.astype(WEIGHT_DTYPE), vh,
                     preferred_element_type=jnp.float32)
    return _merge_heads(ctx, b, lq)                       # [b*lq, H*dk]


def _enc_block(x, bias_enc, w_ref, v_ref, i, b, l):
    p = f"enc{i}_"
    qkv = _dense(x, w_ref, v_ref, p + "qkv_w", p + "qkv_b")     # fused Q|K|V projection
    ctx = _mha(qkv[:, :HD], qkv[:, HD:2 * HD], qkv[:, 2 * HD:], bias_enc, b, l, l)
    x = _layer_norm(x + _dense(ctx, w_ref, v_ref, p + "o_w", p + "o_b"),
                    _vec(v_ref, p + "ln1_g"), _vec(v_ref, p + "ln1_b"))
    h = jnp.maximum(_dense(x, w_ref, v_ref, p + "f1_w", p + "f1_b"), 0.0)
    x = _layer_norm(x + _dense(h, w_ref, v_ref, p + "f2_w", p + "f2_b"),
                    _vec(v_ref, p + "ln2_g"), _vec(v_ref, p + "ln2_b"))
    return x


def _dec_block(enc, x, bias_self, bias_cross, w_ref, v_ref, i, b, lt, ls):
    p = f"dec{i}_"
    # masked self-attention
    qkv = _dense(x, w_ref, v_ref, p + "sqkv_w", p + "sqkv_b")
    ctx = _mha(qkv[:, :HD], qkv[:, HD:2 * HD], qkv[:, 2 * HD:], bias_self, b, lt, lt)
    x = _layer_norm(x + _dense(ctx, w_ref, v_ref, p + "so_w", p + "so_b"),
                    _vec(v_ref, p + "ln1_g"), _vec(v_ref, p + "ln1_b"))
    # cross-attention: Q from decoder, fused K|V from encoder output
    q = _dense(x, w_ref, v_ref, p + "cq_w", p + "cq_b")
    kv = _dense(enc, w_ref, v_ref, p + "ckv_w", p + "ckv_b")
    ctx = _mha(q, kv[:, :HD], kv[:, HD:], bias_cross, b, lt, ls)
    x = _layer_norm(x + _dense(ctx, w_ref, v_ref, p + "co_w", p + "co_b"),
                    _vec(v_ref, p + "ln2_g"), _vec(v_ref, p + "ln2_b"))
    # feed-forward
    h = jnp.maximum(_dense(x, w_ref, v_ref, p + "f1_w", p + "f1_b"), 0.0)
    x = _layer_norm(x + _dense(h, w_ref, v_ref, p + "f2_w", p + "f2_b"),
                    _vec(v_ref, p + "ln3_g"), _vec(v_ref, p + "ln3_b"))
    return x


# ----------------------------- fused forward pallas_call -----------------------------
def fused_transformer(enc_x, dec_x, bias_enc, bias_self, bias_cross, w_slab, v_slab):
    """One fused Pallas kernel invocation (no grid): encoder stack + decoder stack + projection.
    Whole batch folded into rows; everything (7 inputs, <0.5 MiB) is VMEM-resident, single-buffered."""
    B, Ls, D = enc_x.shape
    Lt = dec_x.shape[1]
    enc2 = enc_x.reshape(B * Ls, D)
    dec2 = dec_x.reshape(B * Lt, D)

    def kernel(enc_ref, dec_ref, be_ref, bs_ref, bc_ref, w_ref, v_ref, out_ref):
        enc = enc_ref[...]                      # [B*Ls, D] f32
        be = be_ref[...]
        for i in range(N_BLOCK):
            enc = _enc_block(enc, be, w_ref, v_ref, i, B, Ls)

        dec = dec_ref[...]                      # [B*Lt, D] f32
        bs = bs_ref[...]
        bc = bc_ref[...]
        for i in range(N_BLOCK):
            dec = _dec_block(enc, dec, bs, bc, w_ref, v_ref, i, B, Lt, Ls)

        # lane-dense (128-wide) logits store, one unmasked [B*Lt, 128] vst
        out_ref[...] = _dense(dec, w_ref, v_ref, "proj_w", "proj_b")

    vmem = pl.BlockSpec(memory_space=pltpu.MemorySpace.VMEM)
    out = pl.pallas_call(
        kernel,
        out_shape=jax.ShapeDtypeStruct((B * Lt, VOCAB_PAD), jnp.float32),
        in_specs=[vmem] * 7,
        out_specs=vmem,
        cost_estimate=pl.CostEstimate(flops=1_600_000, transcendentals=3_500,
                                      bytes_accessed=270_000),
    )(enc2, dec2, bias_enc, bias_self, bias_cross, w_slab, v_slab)
    return out.reshape(B, Lt, VOCAB_PAD)


# ----------------------------- parameter construction -----------------------------
def _position_table():
    # Reproduces the reference bug: .div() result discarded -> table[p, :] == p everywhere,
    # then sin on even feature dims, cos on odd feature dims.
    pos = jnp.arange(MAX_SEQ_LEN, dtype=jnp.float32)[:, None]
    tab = jnp.broadcast_to(pos, (MAX_SEQ_LEN, EMB_DIM))
    even = (jnp.arange(EMB_DIM) % 2) == 0
    return jnp.where(even[None, :], jnp.sin(tab), jnp.cos(tab))   # [max_seq_len, emb_dim]


def init_params(key):
    def nrm(k, shape):
        return jax.random.normal(k, shape, jnp.float32) * 0.02

    n_mats = len(M_LAYOUT)
    keys = jax.random.split(key, n_mats + 2)
    raw = {}
    ki = 0
    for name, (_, rows, cols) in M_LAYOUT.items():
        if name == "proj_w":
            w = jnp.zeros((rows, cols), jnp.float32).at[:, :N_VOCAB_OUT].set(
                nrm(keys[ki], (rows, N_VOCAB_OUT)))
        else:
            w = nrm(keys[ki], (rows, cols))
        raw[name] = w
        ki += 1
    for name, (_, _, cols) in V_LAYOUT.items():
        raw[name] = (jnp.ones if name.endswith("_g") else jnp.zeros)((1, cols), jnp.float32)

    enc_emb = nrm(keys[ki], (N_VOCAB_IN, EMB_DIM)).at[PAD_IDX].set(0.0)   # padding_idx
    dec_emb = nrm(keys[ki + 1], (N_VOCAB_OUT, EMB_DIM)).at[PAD_IDX].set(0.0)

    # Pack weights into two lane-dense slabs (bf16 matrices, f32 vectors).
    w_slab = jnp.zeros((M_ROWS, LANE), WEIGHT_DTYPE)
    for name, (off, rows, cols) in M_LAYOUT.items():
        w_slab = w_slab.at[off:off + rows, :cols].set(raw[name].astype(WEIGHT_DTYPE))
    v_slab = jnp.zeros((V_ROWS, LANE), jnp.float32)
    for name, (off, _, cols) in V_LAYOUT.items():
        v_slab = v_slab.at[off:off + 1, :cols].set(raw[name])

    params = {"enc_emb": enc_emb, "dec_emb": dec_emb, "pos_table": _position_table(),
              "w_slab": w_slab, "v_slab": v_slab}
    return params, raw


# ----------------------------- model glue (JAX) -----------------------------
def get_pad_mask(seq):
    return (seq != PAD_IDX).astype(jnp.float32)[:, None, :]            # [B,1,L] (1 keep / 0 mask)


def get_sequence_mask(length):
    return jnp.tril(jnp.ones((1, length, length), jnp.float32))        # [1,L,L]


def _attn_bias(mask, lq):
    """[B, 1 or Lq, Lk] keep-mask -> additive bias [H*B, lq, Lk] (group index g = h*B + b)."""
    b, lk = mask.shape[0], mask.shape[-1]
    m = jnp.broadcast_to(mask, (b, lq, lk))
    bias = (1.0 - m) * NEG_BIG
    return jnp.tile(bias[None], (N_HEAD, 1, 1, 1)).reshape(N_HEAD * b, lq, lk)


def transformer_forward(params, src_seq, trg_seq):
    # Teacher-forcing path (teacher == 1) of Transformer.forward
    ls, lt = src_seq.shape[1], trg_seq.shape[1]
    src_mask = get_pad_mask(src_seq)                                              # [B,1,Ls]
    seq_mask = get_pad_mask(trg_seq) * get_sequence_mask(lt)                      # [B,Lt,Lt]
    enc_x = jnp.take(params["enc_emb"], src_seq, axis=0) + params["pos_table"][None, :ls, :]
    dec_x = jnp.take(params["dec_emb"], trg_seq, axis=0) + params["pos_table"][None, :lt, :]
    bias_enc = _attn_bias(src_mask, ls)        # encoder self-attn
    bias_self = _attn_bias(seq_mask, lt)       # decoder masked self-attn
    bias_cross = _attn_bias(src_mask, lt)      # decoder cross-attn
    logits_padded = fused_transformer(enc_x, dec_x, bias_enc, bias_self, bias_cross,
                                      params["w_slab"], params["v_slab"])
    return logits_padded[:, :, :N_VOCAB_OUT]


# ----------------------------- pure-JAX reference (for validation) -----------------------------
def reference_forward(params, raw, src_seq, trg_seq):
    src_mask = get_pad_mask(src_seq)
    seq_mask = get_pad_mask(trg_seq) * get_sequence_mask(trg_seq.shape[1])
    x_enc = jnp.take(params["enc_emb"], src_seq, axis=0) + params["pos_table"][None, :src_seq.shape[1], :]
    x_dec = jnp.take(params["dec_emb"], trg_seq, axis=0) + params["pos_table"][None, :trg_seq.shape[1], :]

    def ln(x, g, b):
        m = jnp.mean(x, -1, keepdims=True)
        v = jnp.mean((x - m) ** 2, -1, keepdims=True)
        return (x - m) * jax.lax.rsqrt(v + 1e-5) * g + b

    def mha(q, k, v, mask):
        B_, Lq, _ = q.shape
        Lk = k.shape[1]
        qh = q.reshape(B_, Lq, N_HEAD, ATTN_DIM).transpose(0, 2, 1, 3)
        kh = k.reshape(B_, Lk, N_HEAD, ATTN_DIM).transpose(0, 2, 1, 3)
        vh = v.reshape(B_, Lk, N_HEAD, ATTN_DIM).transpose(0, 2, 1, 3)
        s = jnp.einsum("bhqd,bhkd->bhqk", qh, kh) / jnp.sqrt(jnp.float32(ATTN_DIM))
        s = jnp.where(mask[:, None, :, :] > 0, s, -1e9)
        a = jax.nn.softmax(s, axis=-1)
        o = jnp.einsum("bhqk,bhkd->bhqd", a, vh)
        return o.transpose(0, 2, 1, 3).reshape(B_, Lq, HD)

    for i in range(N_BLOCK):
        p = f"enc{i}_"
        qkv = x_enc @ raw[p + "qkv_w"] + raw[p + "qkv_b"]
        ctx = mha(qkv[..., :HD], qkv[..., HD:2 * HD], qkv[..., 2 * HD:], src_mask)
        x_enc = ln(x_enc + ctx @ raw[p + "o_w"] + raw[p + "o_b"], raw[p + "ln1_g"], raw[p + "ln1_b"])
        h = jnp.maximum(x_enc @ raw[p + "f1_w"] + raw[p + "f1_b"], 0.0)
        x_enc = ln(x_enc + h @ raw[p + "f2_w"] + raw[p + "f2_b"], raw[p + "ln2_g"], raw[p + "ln2_b"])

    for i in range(N_BLOCK):
        p = f"dec{i}_"
        qkv = x_dec @ raw[p + "sqkv_w"] + raw[p + "sqkv_b"]
        ctx = mha(qkv[..., :HD], qkv[..., HD:2 * HD], qkv[..., 2 * HD:], seq_mask)
        x_dec = ln(x_dec + ctx @ raw[p + "so_w"] + raw[p + "so_b"], raw[p + "ln1_g"], raw[p + "ln1_b"])
        q = x_dec @ raw[p + "cq_w"] + raw[p + "cq_b"]
        kv = x_enc @ raw[p + "ckv_w"] + raw[p + "ckv_b"]
        ctx = mha(q, kv[..., :HD], kv[..., HD:], src_mask)
        x_dec = ln(x_dec + ctx @ raw[p + "co_w"] + raw[p + "co_b"], raw[p + "ln2_g"], raw[p + "ln2_b"])
        h = jnp.maximum(x_dec @ raw[p + "f1_w"] + raw[p + "f1_b"], 0.0)
        x_dec = ln(x_dec + h @ raw[p + "f2_w"] + raw[p + "f2_b"], raw[p + "ln3_g"], raw[p + "ln3_b"])

    logits = x_dec @ raw["proj_w"] + raw["proj_b"]
    return logits[:, :, :N_VOCAB_OUT]


# ----------------------------- main -----------------------------
if __name__ == "__main__":
    key = jax.random.PRNGKey(0)
    k_par, k_src, k_trg = jax.random.split(key, 3)
    params, raw = init_params(k_par)

    src_seq = jax.random.randint(k_src, (BATCH, L_SRC), 0, N_VOCAB_IN, dtype=jnp.int32)
    trg_seq = jax.random.randint(k_trg, (BATCH, L_TRG), 0, N_VOCAB_OUT, dtype=jnp.int32)
    # plant a couple of pad tokens so the masks do something
    src_seq = src_seq.at[0, -2:].set(PAD_IDX)
    trg_seq = trg_seq.at[1, -1].set(PAD_IDX)

    out = jax.jit(transformer_forward)(params, src_seq, trg_seq)
    out = jax.block_until_ready(out)
    assert out.shape == (BATCH, L_TRG, N_VOCAB_OUT)
    assert bool(jnp.all(jnp.isfinite(out)))

    ref = jax.block_until_ready(jax.jit(reference_forward)(params, raw, src_seq, trg_seq))
    max_err = float(jnp.max(jnp.abs(out - ref)))
    assert max_err < 5e-2, f"mismatch vs pure-JAX reference: {max_err}"

    print("KERNEL_OK")
</pallas_src>

<mosaic_0001>
module attributes {stable_mosaic.version = 11 : i64} {
  func.func @kernel(%arg0: memref<16x32xf32, #tpu.memory_space<vmem>>, %arg1: memref<16x32xf32, #tpu.memory_space<vmem>>, %arg2: memref<8x8x8xf32, #tpu.memory_space<vmem>>, %arg3: memref<8x8x8xf32, #tpu.memory_space<vmem>>, %arg4: memref<8x8x8xf32, #tpu.memory_space<vmem>>, %arg5: memref<864x128xbf16, #tpu.memory_space<vmem>>, %arg6: memref<48x128xf32, #tpu.memory_space<vmem>>, %arg7: memref<16x128xf32, #tpu.memory_space<vmem>>) attributes {dimension_semantics = [], scalar_prefetch = 0 : i64, scratch_operands = 0 : i64, tpu.core_type = #tpu.core_type<tc>} {
    %c0 = arith.constant 0 : index
    %c0_0 = arith.constant 0 : index
    %0 = vector.load %arg0[%c0, %c0_0] : memref<16x32xf32, #tpu.memory_space<vmem>>, vector<16x32xf32>
    %c0_1 = arith.constant 0 : index
    %c0_2 = arith.constant 0 : index
    %c0_3 = arith.constant 0 : index
    %1 = vector.load %arg2[%c0_1, %c0_2, %c0_3] : memref<8x8x8xf32, #tpu.memory_space<vmem>>, vector<8x8x8xf32>
    %c0_4 = arith.constant 0 : index
    %c0_5 = arith.constant 0 : index
    %2 = vector.load %arg5[%c0_4, %c0_5] : memref<864x128xbf16, #tpu.memory_space<vmem>>, vector<32x96xbf16>
    %3 = arith.truncf %0 : vector<16x32xf32> to vector<16x32xbf16>
    %cst = arith.constant dense<0.000000e+00> : vector<16x96xf32>
    %4 = tpu.matmul %3, %2, %cst {dimension_numbers = #tpu.dot_dimension_numbers<[1], [0], [0], [1], [0, 0, 1, 1], [], []>} : vector<16x32xbf16>, vector<32x96xbf16>, vector<16x96xf32> -> vector<16x96xf32>
    %c0_6 = arith.constant 0 : index
    %c0_7 = arith.constant 0 : index
    %5 = vector.load %arg6[%c0_6, %c0_7] : memref<48x128xf32, #tpu.memory_space<vmem>>, vector<1x96xf32>
    %6 = vector.broadcast %5 : vector<1x96xf32> to vector<16x96xf32>
    %7 = arith.addf %4, %6 : vector<16x96xf32>
    %8 = vector.extract_strided_slice %7 {offsets = [0, 0], sizes = [16, 32], strides = [1, 1]} : vector<16x96xf32> to vector<16x32xf32>
    %9 = vector.extract_strided_slice %7 {offsets = [0, 32], sizes = [16, 32], strides = [1, 1]} : vector<16x96xf32> to vector<16x32xf32>
    %10 = vector.extract_strided_slice %7 {offsets = [0, 64], sizes = [16, 32], strides = [1, 1]} : vector<16x96xf32> to vector<16x32xf32>
    %11 = vector.extract_strided_slice %8 {offsets = [0, 0], sizes = [16, 8], strides = [1, 1]} : vector<16x32xf32> to vector<16x8xf32>
    %12 = vector.shape_cast %11 : vector<16x8xf32> to vector<2x8x8xf32>
    %13 = vector.extract_strided_slice %8 {offsets = [0, 8], sizes = [16, 8], strides = [1, 1]} : vector<16x32xf32> to vector<16x8xf32>
    %14 = vector.shape_cast %13 : vector<16x8xf32> to vector<2x8x8xf32>
    %15 = vector.extract_strided_slice %8 {offsets = [0, 16], sizes = [16, 8], strides = [1, 1]} : vector<16x32xf32> to vector<16x8xf32>
    %16 = vector.shape_cast %15 : vector<16x8xf32> to vector<2x8x8xf32>
    %17 = vector.extract_strided_slice %8 {offsets = [0, 24], sizes = [16, 8], strides = [1, 1]} : vector<16x32xf32> to vector<16x8xf32>
    %18 = vector.shape_cast %17 : vector<16x8xf32> to vector<2x8x8xf32>
    %19 = tpu.concatenate %12, %14, %16, %18 in 0 : vector<2x8x8xf32>, vector<2x8x8xf32>, vector<2x8x8xf32>, vector<2x8x8xf32> -> vector<8x8x8xf32>
    %20 = arith.truncf %19 : vector<8x8x8xf32> to vector<8x8x8xbf16>
    %21 = vector.extract_strided_slice %9 {offsets = [0, 0], sizes = [16, 8], strides = [1, 1]} : vector<16x32xf32> to vector<16x8xf32>
    %22 = vector.shape_cast %21 : vector<16x8xf32> to vector<2x8x8xf32>
    %23 = vector.extract_strided_slice %9 {offsets = [0, 8], sizes = [16, 8], strides = [1, 1]} : vector<16x32xf32> to vector<16x8xf32>
    %24 = vector.shape_cast %23 : vector<16x8xf32> to vector<2x8x8xf32>
    %25 = vector.extract_strided_slice %9 {offsets = [0, 16], sizes = [16, 8], strides = [1, 1]} : vector<16x32xf32> to vector<16x8xf32>
    %26 = vector.shape_cast %25 : vector<16x8xf32> to vector<2x8x8xf32>
    %27 = vector.extract_strided_slice %9 {offsets = [0, 24], sizes = [16, 8], strides = [1, 1]} : vector<16x32xf32> to vector<16x8xf32>
    %28 = vector.shape_cast %27 : vector<16x8xf32> to vector<2x8x8xf32>
    %29 = tpu.concatenate %22, %24, %26, %28 in 0 : vector<2x8x8xf32>, vector<2x8x8xf32>, vector<2x8x8xf32>, vector<2x8x8xf32> -> vector<8x8x8xf32>
    %30 = arith.truncf %29 : vector<8x8x8xf32> to vector<8x8x8xbf16>
    %31 = vector.extract_strided_slice %10 {offsets = [0, 0], sizes = [16, 8], strides = [1, 1]} : vector<16x32xf32> to vector<16x8xf32>
    %32 = vector.shape_cast %31 : vector<16x8xf32> to vector<2x8x8xf32>
    %33 = vector.extract_strided_slice %10 {offsets = [0, 8], sizes = [16, 8], strides = [1, 1]} : vector<16x32xf32> to vector<16x8xf32>
    %34 = vector.shape_cast %33 : vector<16x8xf32> to vector<2x8x8xf32>
    %35 = vector.extract_strided_slice %10 {offsets = [0, 16], sizes = [16, 8], strides = [1, 1]} : vector<16x32xf32> to vector<16x8xf32>
    %36 = vector.shape_cast %35 : vector<16x8xf32> to vector<2x8x8xf32>
    %37 = vector.extract_strided_slice %10 {offsets = [0, 24], sizes = [16, 8], strides = [1, 1]} : vector<16x32xf32> to vector<16x8xf32>
    %38 = vector.shape_cast %37 : vector<16x8xf32> to vector<2x8x8xf32>
    %39 = tpu.concatenate %32, %34, %36, %38 in 0 : vector<2x8x8xf32>, vector<2x8x8xf32>, vector<2x8x8xf32>, vector<2x8x8xf32> -> vector<8x8x8xf32>
    %40 = arith.truncf %39 : vector<8x8x8xf32> to vector<8x8x8xbf16>
    "tpu.trace_start"() <{level = 10 : i32, message = "gqd,gkd->gqk"}> : () -> ()
    %cst_8 = arith.constant dense<0.000000e+00> : vector<8x8x8xf32>
    %41 = tpu.matmul %20, %30, %cst_8 {dimension_numbers = #tpu.dot_dimension_numbers<[2], [2], [1], [1], [0, 0, 0, 1, 1, 1], [0], [0]>} : vector<8x8x8xbf16>, vector<8x8x8xbf16>, vector<8x8x8xf32> -> vector<8x8x8xf32>
    "tpu.trace_stop"() : () -> ()
    %cst_9 = arith.constant 0.353553385 : f32
    %42 = vector.broadcast %cst_9 : f32 to vector<8x8x8xf32>
    %43 = arith.mulf %41, %42 : vector<8x8x8xf32>
    %44 = arith.addf %43, %1 : vector<8x8x8xf32>
    %cst_10 = arith.constant dense<0xFF800000> : vector<8x8xf32>
    %45 = vector.multi_reduction <maximumf>, %44, %cst_10 [2] : vector<8x8x8xf32> to vector<8x8xf32>
    %46 = vector.shape_cast %45 : vector<8x8xf32> to vector<8x8x1xf32>
    %47 = vector.broadcast %46 : vector<8x8x1xf32> to vector<8x8x8xf32>
    %48 = arith.subf %44, %47 : vector<8x8x8xf32>
    %49 = math.exp %48 : vector<8x8x8xf32>
    %cst_11 = arith.constant dense<0.000000e+00> : vector<8x8xf32>
    %50 = vector.multi_reduction <add>, %49, %cst_11 [2] : vector<8x8x8xf32> to vector<8x8xf32>
    %51 = vector.shape_cast %50 : vector<8x8xf32> to vector<8x8x1xf32>
    %52 = tpu.reciprocal %51 {approx = true} : vector<8x8x1xf32> -> vector<8x8x1xf32>
    %53 = vector.broadcast %52 : vector<8x8x1xf32> to vector<8x8x8xf32>
    %54 = arith.mulf %49, %53 : vector<8x8x8xf32>
    %55 = arith.truncf %54 : vector<8x8x8xf32> to vector<8x8x8xbf16>
    "tpu.trace_start"() <{level = 10 : i32, message = "gqk,gkd->gqd"}> : () -> ()
    %cst_12 = arith.constant dense<0.000000e+00> : vector<8x8x8xf32>
    %56 = tpu.matmul %55, %40, %cst_12 {dimension_numbers = #tpu.dot_dimension_numbers<[2], [1], [1], [2], [0, 0, 0, 1, 1, 2], [0], [0]>} : vector<8x8x8xbf16>, vector<8x8x8xbf16>, vector<8x8x8xf32> -> vector<8x8x8xf32>
    "tpu.trace_stop"() : () -> ()
    %57 = vector.extract_strided_slice %56 {offsets = [0, 0, 0], sizes = [2, 8, 8], strides = [1, 1, 1]} : vector<8x8x8xf32> to vector<2x8x8xf32>
    %58 = vector.shape_cast %57 : vector<2x8x8xf32> to vector<16x8xf32>
    %59 = vector.extract_strided_slice %56 {offsets = [2, 0, 0], sizes = [2, 8, 8], strides = [1, 1, 1]} : vector<8x8x8xf32> to vector<2x8x8xf32>
    %60 = vector.shape_cast %59 : vector<2x8x8xf32> to vector<16x8xf32>
    %61 = vector.extract_strided_slice %56 {offsets = [4, 0, 0], sizes = [2, 8, 8], strides = [1, 1, 1]} : vector<8x8x8xf32> to vector<2x8x8xf32>
    %62 = vector.shape_cast %61 : vector<2x8x8xf32> to vector<16x8xf32>
    %63 = vector.extract_strided_slice %56 {offsets = [6, 0, 0], sizes = [2, 8, 8], strides = [1, 1, 1]} : vector<8x8x8xf32> to vector<2x8x8xf32>
    %64 = vector.shape_cast %63 : vector<2x8x8xf32> to vector<16x8xf32>
    %65 = tpu.concatenate %58, %60, %62, %64 in 1 : vector<16x8xf32>, vector<16x8xf32>, vector<16x8xf32>, vector<16x8xf32> -> vector<16x32xf32>
    %c32 = arith.constant 32 : index
    %c0_13 = arith.constant 0 : index
    %66 = vector.load %arg5[%c32, %c0_13] : memref<864x128xbf16, #tpu.memory_space<vmem>>, vector<32x32xbf16>
    %67 = arith.truncf %65 : vector<16x32xf32> to vector<16x32xbf16>
    %cst_14 = arith.constant dense<0.000000e+00> : vector<16x32xf32>
    %68 = tpu.matmul %67, %66, %cst_14 {dimension_numbers = #tpu.dot_dimension_numbers<[1], [0], [0], [1], [0, 0, 1, 1], [], []>} : vector<16x32xbf16>, vector<32x32xbf16>, vector<16x32xf32> -> vector<16x32xf32>
    %c1 = arith.constant 1 : index
    %c0_15 = arith.constant 0 : index
    %69 = vector.load %arg6[%c1, %c0_15] : memref<48x128xf32, #tpu.memory_space<vmem>>, vector<1x32xf32>
    %70 = vector.broadcast %69 : vector<1x32xf32> to vector<16x32xf32>
    %71 = arith.addf %68, %70 : vector<16x32xf32>
    %72 = arith.addf %0, %71 : vector<16x32xf32>
    %c2 = arith.constant 2 : index
    %c0_16 = arith.constant 0 : index
    %73 = vector.load %arg6[%c2, %c0_16] : memref<48x128xf32, #tpu.memory_space<vmem>>, vector<1x32xf32>
    %c3 = arith.constant 3 : index
    %c0_17 = arith.constant 0 : index
    %74 = vector.load %arg6[%c3, %c0_17] : memref<48x128xf32, #tpu.memory_space<vmem>>, vector<1x32xf32>
    %cst_18 = arith.constant dense<0.000000e+00> : vector<16xf32>
    %75 = vector.multi_reduction <add>, %72, %cst_18 [1] : vector<16x32xf32> to vector<16xf32>
    %76 = vector.shape_cast %75 : vector<16xf32> to vector<16x1xf32>
    %cst_19 = arith.constant 3.200000e+01 : f32
    %77 = vector.broadcast %cst_19 : f32 to vector<16x1xf32>
    %78 = arith.divf %76, %77 : vector<16x1xf32>
    %79 = arith.mulf %72, %72 : vector<16x32xf32>
    %cst_20 = arith.constant dense<0.000000e+00> : vector<16xf32>
    %80 = vector.multi_reduction <add>, %79, %cst_20 [1] : vector<16x32xf32> to vector<16xf32>
    %81 = vector.shape_cast %80 : vector<16xf32> to vector<16x1xf32>
    %cst_21 = arith.constant 3.200000e+01 : f32
    %82 = vector.broadcast %cst_21 : f32 to vector<16x1xf32>
    %83 = arith.divf %81, %82 : vector<16x1xf32>
    %84 = arith.mulf %78, %78 : vector<16x1xf32>
    %85 = arith.subf %83, %84 : vector<16x1xf32>
    %86 = vector.broadcast %78 : vector<16x1xf32> to vector<16x32xf32>
    %87 = arith.subf %72, %86 : vector<16x32xf32>
    %cst_22 = arith.constant 9.99999974E-6 : f32
    %88 = vector.broadcast %cst_22 : f32 to vector<16x1xf32>
    %89 = arith.addf %85, %88 : vector<16x1xf32>
    %90 = math.rsqrt %89 : vector<16x1xf32>
    %91 = vector.broadcast %90 : vector<16x1xf32> to vector<16x32xf32>
    %92 = arith.mulf %87, %91 : vector<16x32xf32>
    %93 = vector.broadcast %73 : vector<1x32xf32> to vector<16x32xf32>
    %94 = arith.mulf %92, %93 : vector<16x32xf32>
    %95 = vector.broadcast %74 : vector<1x32xf32> to vector<16x32xf32>
    %96 = arith.addf %94, %95 : vector<16x32xf32>
    %c64 = arith.constant 64 : index
    %c0_23 = arith.constant 0 : index
    %97 = vector.load %arg5[%c64, %c0_23] : memref<864x128xbf16, #tpu.memory_space<vmem>>, vector<32x64xbf16>
    %98 = arith.truncf %96 : vector<16x32xf32> to vector<16x32xbf16>
    %cst_24 = arith.constant dense<0.000000e+00> : vector<16x64xf32>
    %99 = tpu.matmul %98, %97, %cst_24 {dimension_numbers = #tpu.dot_dimension_numbers<[1], [0], [0], [1], [0, 0, 1, 1], [], []>} : vector<16x32xbf16>, vector<32x64xbf16>, vector<16x64xf32> -> vector<16x64xf32>
    %c4 = arith.constant 4 : index
    %c0_25 = arith.constant 0 : index
    %100 = vector.load %arg6[%c4, %c0_25] : memref<48x128xf32, #tpu.memory_space<vmem>>, vector<1x64xf32>
    %101 = vector.broadcast %100 : vector<1x64xf32> to vector<16x64xf32>
    %102 = arith.addf %99, %101 : vector<16x64xf32>
    %cst_26 = arith.constant 0.000000e+00 : f32
    %103 = vector.broadcast %cst_26 : f32 to vector<16x64xf32>
    %104 = arith.maximumf %102, %103 : vector<16x64xf32>
    %c96 = arith.constant 96 : index
    %c0_27 = arith.constant 0 : index
    %105 = vector.load %arg5[%c96, %c0_27] : memref<864x128xbf16, #tpu.memory_space<vmem>>, vector<64x32xbf16>
    %106 = arith.truncf %104 : vector<16x64xf32> to vector<16x64xbf16>
    %cst_28 = arith.constant dense<0.000000e+00> : vector<16x32xf32>
    %107 = tpu.matmul %106, %105, %cst_28 {dimension_numbers = #tpu.dot_dimension_numbers<[1], [0], [0], [1], [0, 0, 1, 1], [], []>} : vector<16x64xbf16>, vector<64x32xbf16>, vector<16x32xf32> -> vector<16x32xf32>
    %c5 = arith.constant 5 : index
    %c0_29 = arith.constant 0 : index
    %108 = vector.load %arg6[%c5, %c0_29] : memref<48x128xf32, #tpu.memory_space<vmem>>, vector<1x32xf32>
    %109 = vector.broadcast %108 : vector<1x32xf32> to vector<16x32xf32>
    %110 = arith.addf %107, %109 : vector<16x32xf32>
    %111 = arith.addf %96, %110 : vector<16x32xf32>
    %c6 = arith.constant 6 : index
    %c0_30 = arith.constant 0 : index
    %112 = vector.load %arg6[%c6, %c0_30] : memref<48x128xf32, #tpu.memory_space<vmem>>, vector<1x32xf32>
    %c7 = arith.constant 7 : index
    %c0_31 = arith.constant 0 : index
    %113 = vector.load %arg6[%c7, %c0_31] : memref<48x128xf32, #tpu.memory_space<vmem>>, vector<1x32xf32>
    %cst_32 = arith.constant dense<0.000000e+00> : vector<16xf32>
    %114 = vector.multi_reduction <add>, %111, %cst_32 [1] : vector<16x32xf32> to vector<16xf32>
    %115 = vector.shape_cast %114 : vector<16xf32> to vector<16x1xf32>
    %cst_33 = arith.constant 3.200000e+01 : f32
    %116 = vector.broadcast %cst_33 : f32 to vector<16x1xf32>
    %117 = arith.divf %115, %116 : vector<16x1xf32>
    %118 = arith.mulf %111, %111 : vector<16x32xf32>
    %cst_34 = arith.constant dense<0.000000e+00> : vector<16xf32>
    %119 = vector.multi_reduction <add>, %118, %cst_34 [1] : vector<16x32xf32> to vector<16xf32>
    %120 = vector.shape_cast %119 : vector<16xf32> to vector<16x1xf32>
    %cst_35 = arith.constant 3.200000e+01 : f32
    %121 = vector.broadcast %cst_35 : f32 to vector<16x1xf32>
    %122 = arith.divf %120, %121 : vector<16x1xf32>
    %123 = arith.mulf %117, %117 : vector<16x1xf32>
    %124 = arith.subf %122, %123 : vector<16x1xf32>
    %125 = vector.broadcast %117 : vector<16x1xf32> to vector<16x32xf32>
    %126 = arith.subf %111, %125 : vector<16x32xf32>
    %cst_36 = arith.constant 9.99999974E-6 : f32
    %127 = vector.broadcast %cst_36 : f32 to vector<16x1xf32>
    %128 = arith.addf %124, %127 : vector<16x1xf32>
    %129 = math.rsqrt %128 : vector<16x1xf32>
    %130 = vector.broadcast %129 : vector<16x1xf32> to vector<16x32xf32>
    %131 = arith.mulf %126, %130 : vector<16x32xf32>
    %132 = vector.broadcast %112 : vector<1x32xf32> to vector<16x32xf32>
    %133 = arith.mulf %131, %132 : vector<16x32xf32>
    %134 = vector.broadcast %113 : vector<1x32xf32> to vector<16x32xf32>
    %135 = arith.addf %133, %134 : vector<16x32xf32>
    %c160 = arith.constant 160 : index
    %c0_37 = arith.constant 0 : index
    %136 = vector.load %arg5[%c160, %c0_37] : memref<864x128xbf16, #tpu.memory_space<vmem>>, vector<32x96xbf16>
    %137 = arith.truncf %135 : vector<16x32xf32> to vector<16x32xbf16>
    %cst_38 = arith.constant dense<0.000000e+00> : vector<16x96xf32>
    %138 = tpu.matmul %137, %136, %cst_38 {dimension_numbers = #tpu.dot_dimension_numbers<[1], [0], [0], [1], [0, 0, 1, 1], [], []>} : vector<16x32xbf16>, vector<32x96xbf16>, vector<16x96xf32> -> vector<16x96xf32>
    %c8 = arith.constant 8 : index
    %c0_39 = arith.constant 0 : index
    %139 = vector.load %arg6[%c8, %c0_39] : memref<48x128xf32, #tpu.memory_space<vmem>>, vector<1x96xf32>
    %140 = vector.broadcast %139 : vector<1x96xf32> to vector<16x96xf32>
    %141 = arith.addf %138, %140 : vector<16x96xf32>
    %142 = vector.extract_strided_slice %141 {offsets = [0, 0], sizes = [16, 32], strides = [1, 1]} : vector<16x96xf32> to vector<16x32xf32>
    %143 = vector.extract_strided_slice %141 {offsets = [0, 32], sizes = [16, 32], strides = [1, 1]} : vector<16x96xf32> to vector<16x32xf32>
    %144 = vector.extract_strided_slice %141 {offsets = [0, 64], sizes = [16, 32], strides = [1, 1]} : vector<16x96xf32> to vector<16x32xf32>
    %145 = vector.extract_strided_slice %142 {offsets = [0, 0], sizes = [16, 8], strides = [1, 1]} : vector<16x32xf32> to vector<16x8xf32>
    %146 = vector.shape_cast %145 : vector<16x8xf32> to vector<2x8x8xf32>
    %147 = vector.extract_strided_slice %142 {offsets = [0, 8], sizes = [16, 8], strides = [1, 1]} : vector<16x32xf32> to vector<16x8xf32>
    %148 = vector.shape_cast %147 : vector<16x8xf32> to vector<2x8x8xf32>
    %149 = vector.extract_strided_slice %142 {offsets = [0, 16], sizes = [16, 8], strides = [1, 1]} : vector<16x32xf32> to vector<16x8xf32>
    %150 = vector.shape_cast %149 : vector<16x8xf32> to vector<2x8x8xf32>
    %151 = vector.extract_strided_slice %142 {offsets = [0, 24], sizes = [16, 8], strides = [1, 1]} : vector<16x32xf32> to vector<16x8xf32>
    %152 = vector.shape_cast %151 : vector<16x8xf32> to vector<2x8x8xf32>
    %153 = tpu.concatenate %146, %148, %150, %152 in 0 : vector<2x8x8xf32>, vector<2x8x8xf32>, vector<2x8x8xf32>, vector<2x8x8xf32> -> vector<8x8x8xf32>
    %154 = arith.truncf %153 : vector<8x8x8xf32> to vector<8x8x8xbf16>
    %155 = vector.extract_strided_slice %143 {offsets = [0, 0], sizes = [16, 8], strides = [1, 1]} : vector<16x32xf32> to vector<16x8xf32>
    %156 = vector.shape_cast %155 : vector<16x8xf32> to vector<2x8x8xf32>
    %157 = vector.extract_strided_slice %143 {offsets = [0, 8], sizes = [16, 8], strides = [1, 1]} : vector<16x32xf32> to vector<16x8xf32>
    %158 = vector.shape_cast %157 : vector<16x8xf32> to vector<2x8x8xf32>
    %159 = vector.extract_strided_slice %143 {offsets = [0, 16], sizes = [16, 8], strides = [1, 1]} : vector<16x32xf32> to vector<16x8xf32>
    %160 = vector.shape_cast %159 : vector<16x8xf32> to vector<2x8x8xf32>
    %161 = vector.extract_strided_slice %143 {offsets = [0, 24], sizes = [16, 8], strides = [1, 1]} : vector<16x32xf32> to vector<16x8xf32>
    %162 = vector.shape_cast %161 : vector<16x8xf32> to vector<2x8x8xf32>
    %163 = tpu.concatenate %156, %158, %160, %162 in 0 : vector<2x8x8xf32>, vector<2x8x8xf32>, vector<2x8x8xf32>, vector<2x8x8xf32> -> vector<8x8x8xf32>
    %164 = arith.truncf %163 : vector<8x8x8xf32> to vector<8x8x8xbf16>
    %165 = vector.extract_strided_slice %144 {offsets = [0, 0], sizes = [16, 8], strides = [1, 1]} : vector<16x32xf32> to vector<16x8xf32>
    %166 = vector.shape_cast %165 : vector<16x8xf32> to vector<2x8x8xf32>
    %167 = vector.extract_strided_slice %144 {offsets = [0, 8], sizes = [16, 8], strides = [1, 1]} : vector<16x32xf32> to vector<16x8xf32>
    %168 = vector.shape_cast %167 : vector<16x8xf32> to vector<2x8x8xf32>
    %169 = vector.extract_strided_slice %144 {offsets = [0, 16], sizes = [16, 8], strides = [1, 1]} : vector<16x32xf32> to vector<16x8xf32>
    %170 = vector.shape_cast %169 : vector<16x8xf32> to vector<2x8x8xf32>
    %171 = vector.extract_strided_slice %144 {offsets = [0, 24], sizes = [16, 8], strides = [1, 1]} : vector<16x32xf32> to vector<16x8xf32>
    %172 = vector.shape_cast %171 : vector<16x8xf32> to vector<2x8x8xf32>
    %173 = tpu.concatenate %166, %168, %170, %172 in 0 : vector<2x8x8xf32>, vector<2x8x8xf32>, vector<2x8x8xf32>, vector<2x8x8xf32> -> vector<8x8x8xf32>
    %174 = arith.truncf %173 : vector<8x8x8xf32> to vector<8x8x8xbf16>
    "tpu.trace_start"() <{level = 10 : i32, message = "gqd,gkd->gqk"}> : () -> ()
    %cst_40 = arith.constant dense<0.000000e+00> : vector<8x8x8xf32>
    %175 = tpu.matmul %154, %164, %cst_40 {dimension_numbers = #tpu.dot_dimension_numbers<[2], [2], [1], [1], [0, 0, 0, 1, 1, 1], [0], [0]>} : vector<8x8x8xbf16>, vector<8x8x8xbf16>, vector<8x8x8xf32> -> vector<8x8x8xf32>
    "tpu.trace_stop"() : () -> ()
    %cst_41 = arith.constant 0.353553385 : f32
    %176 = vector.broadcast %cst_41 : f32 to vector<8x8x8xf32>
    %177 = arith.mulf %175, %176 : vector<8x8x8xf32>
    %178 = arith.addf %177, %1 : vector<8x8x8xf32>
    %cst_42 = arith.constant dense<0xFF800000> : vector<8x8xf32>
    %179 = vector.multi_reduction <maximumf>, %178, %cst_42 [2] : vector<8x8x8xf32> to vector<8x8xf32>
    %180 = vector.shape_cast %179 : vector<8x8xf32> to vector<8x8x1xf32>
    %181 = vector.broadcast %180 : vector<8x8x1xf32> to vector<8x8x8xf32>
    %182 = arith.subf %178, %181 : vector<8x8x8xf32>
    %183 = math.exp %182 : vector<8x8x8xf32>
    %cst_43 = arith.constant dense<0.000000e+00> : vector<8x8xf32>
    %184 = vector.multi_reduction <add>, %183, %cst_43 [2] : vector<8x8x8xf32> to vector<8x8xf32>
    %185 = vector.shape_cast %184 : vector<8x8xf32> to vector<8x8x1xf32>
    %186 = tpu.reciprocal %185 {approx = true} : vector<8x8x1xf32> -> vector<8x8x1xf32>
    %187 = vector.broadcast %186 : vector<8x8x1xf32> to vector<8x8x8xf32>
    %188 = arith.mulf %183, %187 : vector<8x8x8xf32>
    %189 = arith.truncf %188 : vector<8x8x8xf32> to vector<8x8x8xbf16>
    "tpu.trace_start"() <{level = 10 : i32, message = "gqk,gkd->gqd"}> : () -> ()
    %cst_44 = arith.constant dense<0.000000e+00> : vector<8x8x8xf32>
    %190 = tpu.matmul %189, %174, %cst_44 {dimension_numbers = #tpu.dot_dimension_numbers<[2], [1], [1], [2], [0, 0, 0, 1, 1, 2], [0], [0]>} : vector<8x8x8xbf16>, vector<8x8x8xbf16>, vector<8x8x8xf32> -> vector<8x8x8xf32>
    "tpu.trace_stop"() : () -> ()
    %191 = vector.extract_strided_slice %190 {offsets = [0, 0, 0], sizes = [2, 8, 8], strides = [1, 1, 1]} : vector<8x8x8xf32> to vector<2x8x8xf32>
    %192 = vector.shape_cast %191 : vector<2x8x8xf32> to vector<16x8xf32>
    %193 = vector.extract_strided_slice %190 {offsets = [2, 0, 0], sizes = [2, 8, 8], strides = [1, 1, 1]} : vector<8x8x8xf32> to vector<2x8x8xf32>
    %194 = vector.shape_cast %193 : vector<2x8x8xf32> to vector<16x8xf32>
    %195 = vector.extract_strided_slice %190 {offsets = [4, 0, 0], sizes = [2, 8, 8], strides = [1, 1, 1]} : vector<8x8x8xf32> to vector<2x8x8xf32>
    %196 = vector.shape_cast %195 : vector<2x8x8xf32> to vector<16x8xf32>
    %197 = vector.extract_strided_slice %190 {offsets = [6, 0, 0], sizes = [2, 8, 8], strides = [1, 1, 1]} : vector<8x8x8xf32> to vector<2x8x8xf32>
    %198 = vector.shape_cast %197 : vector<2x8x8xf32> to vector<16x8xf32>
    %199 = tpu.concatenate %192, %194, %196, %198 in 1 : vector<16x8xf32>, vector<16x8xf32>, vector<16x8xf32>, vector<16x8xf32> -> vector<16x32xf32>
    %c192 = arith.constant 192 : index
    %c0_45 = arith.constant 0 : index
    %200 = vector.load %arg5[%c192, %c0_45] : memref<864x128xbf16, #tpu.memory_space<vmem>>, vector<32x32xbf16>
    %201 = arith.truncf %199 : vector<16x32xf32> to vector<16x32xbf16>
    %cst_46 = arith.constant dense<0.000000e+00> : vector<16x32xf32>
    %202 = tpu.matmul %201, %200, %cst_46 {dimension_numbers = #tpu.dot_dimension_numbers<[1], [0], [0], [1], [0, 0, 1, 1], [], []>} : vector<16x32xbf16>, vector<32x32xbf16>, vector<16x32xf32> -> vector<16x32xf32>
    %c9 = arith.constant 9 : index
    %c0_47 = arith.constant 0 : index
    %203 = vector.load %arg6[%c9, %c0_47] : memref<48x128xf32, #tpu.memory_space<vmem>>, vector<1x32xf32>
    %204 = vector.broadcast %203 : vector<1x32xf32> to vector<16x32xf32>
    %205 = arith.addf %202, %204 : vector<16x32xf32>
    %206 = arith.addf %135, %205 : vector<16x32xf32>
    %c10 = arith.constant 10 : index
    %c0_48 = arith.constant 0 : index
    %207 = vector.load %arg6[%c10, %c0_48] : memref<48x128xf32, #tpu.memory_space<vmem>>, vector<1x32xf32>
    %c11 = arith.constant 11 : index
    %c0_49 = arith.constant 0 : index
    %208 = vector.load %arg6[%c11, %c0_49] : memref<48x128xf32, #tpu.memory_space<vmem>>, vector<1x32xf32>
    %cst_50 = arith.constant dense<0.000000e+00> : vector<16xf32>
    %209 = vector.multi_reduction <add>, %206, %cst_50 [1] : vector<16x32xf32> to vector<16xf32>
    %210 = vector.shape_cast %209 : vector<16xf32> to vector<16x1xf32>
    %cst_51 = arith.constant 3.200000e+01 : f32
    %211 = vector.broadcast %cst_51 : f32 to vector<16x1xf32>
    %212 = arith.divf %210, %211 : vector<16x1xf32>
    %213 = arith.mulf %206, %206 : vector<16x32xf32>
    %cst_52 = arith.constant dense<0.000000e+00> : vector<16xf32>
    %214 = vector.multi_reduction <add>, %213, %cst_52 [1] : vector<16x32xf32> to vector<16xf32>
    %215 = vector.shape_cast %214 : vector<16xf32> to vector<16x1xf32>
    %cst_53 = arith.constant 3.200000e+01 : f32
    %216 = vector.broadcast %cst_53 : f32 to vector<16x1xf32>
    %217 = arith.divf %215, %216 : vector<16x1xf32>
    %218 = arith.mulf %212, %212 : vector<16x1xf32>
    %219 = arith.subf %217, %218 : vector<16x1xf32>
    %220 = vector.broadcast %212 : vector<16x1xf32> to vector<16x32xf32>
    %221 = arith.subf %206, %220 : vector<16x32xf32>
    %cst_54 = arith.constant 9.99999974E-6 : f32
    %222 = vector.broadcast %cst_54 : f32 to vector<16x1xf32>
    %223 = arith.addf %219, %222 : vector<16x1xf32>
    %224 = math.rsqrt %223 : vector<16x1xf32>
    %225 = vector.broadcast %224 : vector<16x1xf32> to vector<16x32xf32>
    %226 = arith.mulf %221, %225 : vector<16x32xf32>
    %227 = vector.broadcast %207 : vector<1x32xf32> to vector<16x32xf32>
    %228 = arith.mulf %226, %227 : vector<16x32xf32>
    %229 = vector.broadcast %208 : vector<1x32xf32> to vector<16x32xf32>
    %230 = arith.addf %228, %229 : vector<16x32xf32>
    %c224 = arith.constant 224 : index
    %c0_55 = arith.constant 0 : index
    %231 = vector.load %arg5[%c224, %c0_55] : memref<864x128xbf16, #tpu.memory_space<vmem>>, vector<32x64xbf16>
    %232 = arith.truncf %230 : vector<16x32xf32> to vector<16x32xbf16>
    %cst_56 = arith.constant dense<0.000000e+00> : vector<16x64xf32>
    %233 = tpu.matmul %232, %231, %cst_56 {dimension_numbers = #tpu.dot_dimension_numbers<[1], [0], [0], [1], [0, 0, 1, 1], [], []>} : vector<16x32xbf16>, vector<32x64xbf16>, vector<16x64xf32> -> vector<16x64xf32>
    %c12 = arith.constant 12 : index
    %c0_57 = arith.constant 0 : index
    %234 = vector.load %arg6[%c12, %c0_57] : memref<48x128xf32, #tpu.memory_space<vmem>>, vector<1x64xf32>
    %235 = vector.broadcast %234 : vector<1x64xf32> to vector<16x64xf32>
    %236 = arith.addf %233, %235 : vector<16x64xf32>
    %cst_58 = arith.constant 0.000000e+00 : f32
    %237 = vector.broadcast %cst_58 : f32 to vector<16x64xf32>
    %238 = arith.maximumf %236, %237 : vector<16x64xf32>
    %c256 = arith.constant 256 : index
    %c0_59 = arith.constant 0 : index
    %239 = vector.load %arg5[%c256, %c0_59] : memref<864x128xbf16, #tpu.memory_space<vmem>>, vector<64x32xbf16>
    %240 = arith.truncf %238 : vector<16x64xf32> to vector<16x64xbf16>
    %cst_60 = arith.constant dense<0.000000e+00> : vector<16x32xf32>
    %241 = tpu.matmul %240, %239, %cst_60 {dimension_numbers = #tpu.dot_dimension_numbers<[1], [0], [0], [1], [0, 0, 1, 1], [], []>} : vector<16x64xbf16>, vector<64x32xbf16>, vector<16x32xf32> -> vector<16x32xf32>
    %c13 = arith.constant 13 : index
    %c0_61 = arith.constant 0 : index
    %242 = vector.load %arg6[%c13, %c0_61] : memref<48x128xf32, #tpu.memory_space<vmem>>, vector<1x32xf32>
    %243 = vector.broadcast %242 : vector<1x32xf32> to vector<16x32xf32>
    %244 = arith.addf %241, %243 : vector<16x32xf32>
    %245 = arith.addf %230, %244 : vector<16x32xf32>
    %c14 = arith.constant 14 : index
    %c0_62 = arith.constant 0 : index
    %246 = vector.load %arg6[%c14, %c0_62] : memref<48x128xf32, #tpu.memory_space<vmem>>, vector<1x32xf32>
    %c15 = arith.constant 15 : index
    %c0_63 = arith.constant 0 : index
    %247 = vector.load %arg6[%c15, %c0_63] : memref<48x128xf32, #tpu.memory_space<vmem>>, vector<1x32xf32>
    %cst_64 = arith.constant dense<0.000000e+00> : vector<16xf32>
    %248 = vector.multi_reduction <add>, %245, %cst_64 [1] : vector<16x32xf32> to vector<16xf32>
    %249 = vector.shape_cast %248 : vector<16xf32> to vector<16x1xf32>
    %cst_65 = arith.constant 3.200000e+01 : f32
    %250 = vector.broadcast %cst_65 : f32 to vector<16x1xf32>
    %251 = arith.divf %249, %250 : vector<16x1xf32>
    %252 = arith.mulf %245, %245 : vector<16x32xf32>
    %cst_66 = arith.constant dense<0.000000e+00> : vector<16xf32>
    %253 = vector.multi_reduction <add>, %252, %cst_66 [1] : vector<16x32xf32> to vector<16xf32>
    %254 = vector.shape_cast %253 : vector<16xf32> to vector<16x1xf32>
    %cst_67 = arith.constant 3.200000e+01 : f32
    %255 = vector.broadcast %cst_67 : f32 to vector<16x1xf32>
    %256 = arith.divf %254, %255 : vector<16x1xf32>
    %257 = arith.mulf %251, %251 : vector<16x1xf32>
    %258 = arith.subf %256, %257 : vector<16x1xf32>
    %259 = vector.broadcast %251 : vector<16x1xf32> to vector<16x32xf32>
    %260 = arith.subf %245, %259 : vector<16x32xf32>
    %cst_68 = arith.constant 9.99999974E-6 : f32
    %261 = vector.broadcast %cst_68 : f32 to vector<16x1xf32>
    %262 = arith.addf %258, %261 : vector<16x1xf32>
    %263 = math.rsqrt %262 : vector<16x1xf32>
    %264 = vector.broadcast %263 : vector<16x1xf32> to vector<16x32xf32>
    %265 = arith.mulf %260, %264 : vector<16x32xf32>
    %266 = vector.broadcast %246 : vector<1x32xf32> to vector<16x32xf32>
    %267 = arith.mulf %265, %266 : vector<16x32xf32>
    %268 = vector.broadcast %247 : vector<1x32xf32> to vector<16x32xf32>
    %269 = arith.addf %267, %268 : vector<16x32xf32>
    %c0_69 = arith.constant 0 : index
    %c0_70 = arith.constant 0 : index
    %270 = vector.load %arg1[%c0_69, %c0_70] : memref<16x32xf32, #tpu.memory_space<vmem>>, vector<16x32xf32>
    %c0_71 = arith.constant 0 : index
    %c0_72 = arith.constant 0 : index
    %c0_73 = arith.constant 0 : index
    %271 = vector.load %arg3[%c0_71, %c0_72, %c0_73] : memref<8x8x8xf32, #tpu.memory_space<vmem>>, vector<8x8x8xf32>
    %c0_74 = arith.constant 0 : index
    %c0_75 = arith.constant 0 : index
    %c0_76 = arith.constant 0 : index
    %272 = vector.load %arg4[%c0_74, %c0_75, %c0_76] : memref<8x8x8xf32, #tpu.memory_space<vmem>>, vector<8x8x8xf32>
    %c320 = arith.constant 320 : index
    %c0_77 = arith.constant 0 : index
    %273 = vector.load %arg5[%c320, %c0_77] : memref<864x128xbf16, #tpu.memory_space<vmem>>, vector<32x96xbf16>
    %274 = arith.truncf %270 : vector<16x32xf32> to vector<16x32xbf16>
    %cst_78 = arith.constant dense<0.000000e+00> : vector<16x96xf32>
    %275 = tpu.matmul %274, %273, %cst_78 {dimension_numbers = #tpu.dot_dimension_numbers<[1], [0], [0], [1], [0, 0, 1, 1], [], []>} : vector<16x32xbf16>, vector<32x96xbf16>, vector<16x96xf32> -> vector<16x96xf32>
    %c16 = arith.constant 16 : index
    %c0_79 = arith.constant 0 : index
    %276 = vector.load %arg6[%c16, %c0_79] : memref<48x128xf32, #tpu.memory_space<vmem>>, vector<1x96xf32>
    %277 = vector.broadcast %276 : vector<1x96xf32> to vector<16x96xf32>
    %278 = arith.addf %275, %277 : vector<16x96xf32>
    %279 = vector.extract_strided_slice %278 {offsets = [0, 0], sizes = [16, 32], strides = [1, 1]} : vector<16x96xf32> to vector<16x32xf32>
    %280 = vector.extract_strided_slice %278 {offsets = [0, 32], sizes = [16, 32], strides = [1, 1]} : vector<16x96xf32> to vector<16x32xf32>
    %281 = vector.extract_strided_slice %278 {offsets = [0, 64], sizes = [16, 32], strides = [1, 1]} : vector<16x96xf32> to vector<16x32xf32>
    %282 = vector.extract_strided_slice %279 {offsets = [0, 0], sizes = [16, 8], strides = [1, 1]} : vector<16x32xf32> to vector<16x8xf32>
    %283 = vector.shape_cast %282 : vector<16x8xf32> to vector<2x8x8xf32>
    %284 = vector.extract_strided_slice %279 {offsets = [0, 8], sizes = [16, 8], strides = [1, 1]} : vector<16x32xf32> to vector<16x8xf32>
    %285 = vector.shape_cast %284 : vector<16x8xf32> to vector<2x8x8xf32>
    %286 = vector.extract_strided_slice %279 {offsets = [0, 16], sizes = [16, 8], strides = [1, 1]} : vector<16x32xf32> to vector<16x8xf32>
    %287 = vector.shape_cast %286 : vector<16x8xf32> to vector<2x8x8xf32>
    %288 = vector.extract_strided_slice %279 {offsets = [0, 24], sizes = [16, 8], strides = [1, 1]} : vector<16x32xf32> to vector<16x8xf32>
    %289 = vector.shape_cast %288 : vector<16x8xf32> to vector<2x8x8xf32>
    %290 = tpu.concatenate %283, %285, %287, %289 in 0 : vector<2x8x8xf32>, vector<2x8x8xf32>, vector<2x8x8xf32>, vector<2x8x8xf32> -> vector<8x8x8xf32>
    %291 = arith.truncf %290 : vector<8x8x8xf32> to vector<8x8x8xbf16>
    %292 = vector.extract_strided_slice %280 {offsets = [0, 0], sizes = [16, 8], strides = [1, 1]} : vector<16x32xf32> to vector<16x8xf32>
    %293 = vector.shape_cast %292 : vector<16x8xf32> to vector<2x8x8xf32>
    %294 = vector.extract_strided_slice %280 {offsets = [0, 8], sizes = [16, 8], strides = [1, 1]} : vector<16x32xf32> to vector<16x8xf32>
    %295 = vector.shape_cast %294 : vector<16x8xf32> to vector<2x8x8xf32>
    %296 = vector.extract_strided_slice %280 {offsets = [0, 16], sizes = [16, 8], strides = [1, 1]} : vector<16x32xf32> to vector<16x8xf32>
    %297 = vector.shape_cast %296 : vector<16x8xf32> to vector<2x8x8xf32>
    %298 = vector.extract_strided_slice %280 {offsets = [0, 24], sizes = [16, 8], strides = [1, 1]} : vector<16x32xf32> to vector<16x8xf32>
    %299 = vector.shape_cast %298 : vector<16x8xf32> to vector<2x8x8xf32>
    %300 = tpu.concatenate %293, %295, %297, %299 in 0 : vector<2x8x8xf32>, vector<2x8x8xf32>, vector<2x8x8xf32>, vector<2x8x8xf32> -> vector<8x8x8xf32>
    %301 = arith.truncf %300 : vector<8x8x8xf32> to vector<8x8x8xbf16>
    %302 = vector.extract_strided_slice %281 {offsets = [0, 0], sizes = [16, 8], strides = [1, 1]} : vector<16x32xf32> to vector<16x8xf32>
    %303 = vector.shape_cast %302 : vector<16x8xf32> to vector<2x8x8xf32>
    %304 = vector.extract_strided_slice %281 {offsets = [0, 8], sizes = [16, 8], strides = [1, 1]} : vector<16x32xf32> to vector<16x8xf32>
    %305 = vector.shape_cast %304 : vector<16x8xf32> to vector<2x8x8xf32>
    %306 = vector.extract_strided_slice %281 {offsets = [0, 16], sizes = [16, 8], strides = [1, 1]} : vector<16x32xf32> to vector<16x8xf32>
    %307 = vector.shape_cast %306 : vector<16x8xf32> to vector<2x8x8xf32>
    %308 = vector.extract_strided_slice %281 {offsets = [0, 24], sizes = [16, 8], strides = [1, 1]} : vector<16x32xf32> to vector<16x8xf32>
    %309 = vector.shape_cast %308 : vector<16x8xf32> to vector<2x8x8xf32>
    %310 = tpu.concatenate %303, %305, %307, %309 in 0 : vector<2x8x8xf32>, vector<2x8x8xf32>, vector<2x8x8xf32>, vector<2x8x8xf32> -> vector<8x8x8xf32>
    %311 = arith.truncf %310 : vector<8x8x8xf32> to vector<8x8x8xbf16>
    "tpu.trace_start"() <{level = 10 : i32, message = "gqd,gkd->gqk"}> : () -> ()
    %cst_80 = arith.constant dense<0.000000e+00> : vector<8x8x8xf32>
    %312 = tpu.matmul %291, %301, %cst_80 {dimension_numbers = #tpu.dot_dimension_numbers<[2], [2], [1], [1], [0, 0, 0, 1, 1, 1], [0], [0]>} : vector<8x8x8xbf16>, vector<8x8x8xbf16>, vector<8x8x8xf32> -> vector<8x8x8xf32>
    "tpu.trace_stop"() : () -> ()
    %cst_81 = arith.constant 0.353553385 : f32
    %313 = vector.broadcast %cst_81 : f32 to vector<8x8x8xf32>
    %314 = arith.mulf %312, %313 : vector<8x8x8xf32>
    %315 = arith.addf %314, %271 : vector<8x8x8xf32>
    %cst_82 = arith.constant dense<0xFF800000> : vector<8x8xf32>
    %316 = vector.multi_reduction <maximumf>, %315, %cst_82 [2] : vector<8x8x8xf32> to vector<8x8xf32>
    %317 = vector.shape_cast %316 : vector<8x8xf32> to vector<8x8x1xf32>
    %318 = vector.broadcast %317 : vector<8x8x1xf32> to vector<8x8x8xf32>
    %319 = arith.subf %315, %318 : vector<8x8x8xf32>
    %320 = math.exp %319 : vector<8x8x8xf32>
    %cst_83 = arith.constant dense<0.000000e+00> : vector<8x8xf32>
    %321 = vector.multi_reduction <add>, %320, %cst_83 [2] : vector<8x8x8xf32> to vector<8x8xf32>
    %322 = vector.shape_cast %321 : vector<8x8xf32> to vector<8x8x1xf32>
    %323 = tpu.reciprocal %322 {approx = true} : vector<8x8x1xf32> -> vector<8x8x1xf32>
    %324 = vector.broadcast %323 : vector<8x8x1xf32> to vector<8x8x8xf32>
    %325 = arith.mulf %320, %324 : vector<8x8x8xf32>
    %326 = arith.truncf %325 : vector<8x8x8xf32> to vector<8x8x8xbf16>
    "tpu.trace_start"() <{level = 10 : i32, message = "gqk,gkd->gqd"}> : () -> ()
    %cst_84 = arith.constant dense<0.000000e+00> : vector<8x8x8xf32>
    %327 = tpu.matmul %326, %311, %cst_84 {dimension_numbers = #tpu.dot_dimension_numbers<[2], [1], [1], [2], [0, 0, 0, 1, 1, 2], [0], [0]>} : vector<8x8x8xbf16>, vector<8x8x8xbf16>, vector<8x8x8xf32> -> vector<8x8x8xf32>
    "tpu.trace_stop"() : () -> ()
    %328 = vector.extract_strided_slice %327 {offsets = [0, 0, 0], sizes = [2, 8, 8], strides = [1, 1, 1]} : vector<8x8x8xf32> to vector<2x8x8xf32>
    %329 = vector.shape_cast %328 : vector<2x8x8xf32> to vector<16x8xf32>
    %330 = vector.extract_strided_slice %327 {offsets = [2, 0, 0], sizes = [2, 8, 8], strides = [1, 1, 1]} : vector<8x8x8xf32> to vector<2x8x8xf32>
    %331 = vector.shape_cast %330 : vector<2x8x8xf32> to vector<16x8xf32>
    %332 = vector.extract_strided_slice %327 {offsets = [4, 0, 0], sizes = [2, 8, 8], strides = [1, 1, 1]} : vector<8x8x8xf32> to vector<2x8x8xf32>
    %333 = vector.shape_cast %332 : vector<2x8x8xf32> to vector<16x8xf32>
    %334 = vector.extract_strided_slice %327 {offsets = [6, 0, 0], sizes = [2, 8, 8], strides = [1, 1, 1]} : vector<8x8x8xf32> to vector<2x8x8xf32>
    %335 = vector.shape_cast %334 : vector<2x8x8xf32> to vector<16x8xf32>
    %336 = tpu.concatenate %329, %331, %333, %335 in 1 : vector<16x8xf32>, vector<16x8xf32>, vector<16x8xf32>, vector<16x8xf32> -> vector<16x32xf32>
    %c352 = arith.constant 352 : index
    %c0_85 = arith.constant 0 : index
    %337 = vector.load %arg5[%c352, %c0_85] : memref<864x128xbf16, #tpu.memory_space<vmem>>, vector<32x32xbf16>
    %338 = arith.truncf %336 : vector<16x32xf32> to vector<16x32xbf16>
    %cst_86 = arith.constant dense<0.000000e+00> : vector<16x32xf32>
    %339 = tpu.matmul %338, %337, %cst_86 {dimension_numbers = #tpu.dot_dimension_numbers<[1], [0], [0], [1], [0, 0, 1, 1], [], []>} : vector<16x32xbf16>, vector<32x32xbf16>, vector<16x32xf32> -> vector<16x32xf32>
    %c17 = arith.constant 17 : index
    %c0_87 = arith.constant 0 : index
    %340 = vector.load %arg6[%c17, %c0_87] : memref<48x128xf32, #tpu.memory_space<vmem>>, vector<1x32xf32>
    %341 = vector.broadcast %340 : vector<1x32xf32> to vector<16x32xf32>
    %342 = arith.addf %339, %341 : vector<16x32xf32>
    %343 = arith.addf %270, %342 : vector<16x32xf32>
    %c18 = arith.constant 18 : index
    %c0_88 = arith.constant 0 : index
    %344 = vector.load %arg6[%c18, %c0_88] : memref<48x128xf32, #tpu.memory_space<vmem>>, vector<1x32xf32>
    %c19 = arith.constant 19 : index
    %c0_89 = arith.constant 0 : index
    %345 = vector.load %arg6[%c19, %c0_89] : memref<48x128xf32, #tpu.memory_space<vmem>>, vector<1x32xf32>
    %cst_90 = arith.constant dense<0.000000e+00> : vector<16xf32>
    %346 = vector.multi_reduction <add>, %343, %cst_90 [1] : vector<16x32xf32> to vector<16xf32>
    %347 = vector.shape_cast %346 : vector<16xf32> to vector<16x1xf32>
    %cst_91 = arith.constant 3.200000e+01 : f32
    %348 = vector.broadcast %cst_91 : f32 to vector<16x1xf32>
    %349 = arith.divf %347, %348 : vector<16x1xf32>
    %350 = arith.mulf %343, %343 : vector<16x32xf32>
    %cst_92 = arith.constant dense<0.000000e+00> : vector<16xf32>
    %351 = vector.multi_reduction <add>, %350, %cst_92 [1] : vector<16x32xf32> to vector<16xf32>
    %352 = vector.shape_cast %351 : vector<16xf32> to vector<16x1xf32>
    %cst_93 = arith.constant 3.200000e+01 : f32
    %353 = vector.broadcast %cst_93 : f32 to vector<16x1xf32>
    %354 = arith.divf %352, %353 : vector<16x1xf32>
    %355 = arith.mulf %349, %349 : vector<16x1xf32>
    %356 = arith.subf %354, %355 : vector<16x1xf32>
    %357 = vector.broadcast %349 : vector<16x1xf32> to vector<16x32xf32>
    %358 = arith.subf %343, %357 : vector<16x32xf32>
    %cst_94 = arith.constant 9.99999974E-6 : f32
    %359 = vector.broadcast %cst_94 : f32 to vector<16x1xf32>
    %360 = arith.addf %356, %359 : vector<16x1xf32>
    %361 = math.rsqrt %360 : vector<16x1xf32>
    %362 = vector.broadcast %361 : vector<16x1xf32> to vector<16x32xf32>
    %363 = arith.mulf %358, %362 : vector<16x32xf32>
    %364 = vector.broadcast %344 : vector<1x32xf32> to vector<16x32xf32>
    %365 = arith.mulf %363, %364 : vector<16x32xf32>
    %366 = vector.broadcast %345 : vector<1x32xf32> to vector<16x32xf32>
    %367 = arith.addf %365, %366 : vector<16x32xf32>
    %c384 = arith.constant 384 : index
    %c0_95 = arith.constant 0 : index
    %368 = vector.load %arg5[%c384, %c0_95] : memref<864x128xbf16, #tpu.memory_space<vmem>>, vector<32x32xbf16>
    %369 = arith.truncf %367 : vector<16x32xf32> to vector<16x32xbf16>
    %cst_96 = arith.constant dense<0.000000e+00> : vector<16x32xf32>
    %370 = tpu.matmul %369, %368, %cst_96 {dimension_numbers = #tpu.dot_dimension_numbers<[1], [0], [0], [1], [0, 0, 1, 1], [], []>} : vector<16x32xbf16>, vector<32x32xbf16>, vector<16x32xf32> -> vector<16x32xf32>
    %c20 = arith.constant 20 : index
    %c0_97 = arith.constant 0 : index
    %371 = vector.load %arg6[%c20, %c0_97] : memref<48x128xf32, #tpu.memory_space<vmem>>, vector<1x32xf32>
    %372 = vector.broadcast %371 : vector<1x32xf32> to vector<16x32xf32>
    %373 = arith.addf %370, %372 : vector<16x32xf32>
    %c416 = arith.constant 416 : index
    %c0_98 = arith.constant 0 : index
    %374 = vector.load %arg5[%c416, %c0_98] : memref<864x128xbf16, #tpu.memory_space<vmem>>, vector<32x64xbf16>
    %375 = arith.truncf %269 : vector<16x32xf32> to vector<16x32xbf16>
    %cst_99 = arith.constant dense<0.000000e+00> : vector<16x64xf32>
    %376 = tpu.matmul %375, %374, %cst_99 {dimension_numbers = #tpu.dot_dimension_numbers<[1], [0], [0], [1], [0, 0, 1, 1], [], []>} : vector<16x32xbf16>, vector<32x64xbf16>, vector<16x64xf32> -> vector<16x64xf32>
    %c21 = arith.constant 21 : index
    %c0_100 = arith.constant 0 : index
    %377 = vector.load %arg6[%c21, %c0_100] : memref<48x128xf32, #tpu.memory_space<vmem>>, vector<1x64xf32>
    %378 = vector.broadcast %377 : vector<1x64xf32> to vector<16x64xf32>
    %379 = arith.addf %376, %378 : vector<16x64xf32>
    %380 = vector.extract_strided_slice %379 {offsets = [0, 0], sizes = [16, 32], strides = [1, 1]} : vector<16x64xf32> to vector<16x32xf32>
    %381 = vector.extract_strided_slice %379 {offsets = [0, 32], sizes = [16, 32], strides = [1, 1]} : vector<16x64xf32> to vector<16x32xf32>
    %382 = vector.extract_strided_slice %373 {offsets = [0, 0], sizes = [16, 8], strides = [1, 1]} : vector<16x32xf32> to vector<16x8xf32>
    %383 = vector.shape_cast %382 : vector<16x8xf32> to vector<2x8x8xf32>
    %384 = vector.extract_strided_slice %373 {offsets = [0, 8], sizes = [16, 8], strides = [1, 1]} : vector<16x32xf32> to vector<16x8xf32>
    %385 = vector.shape_cast %384 : vector<16x8xf32> to vector<2x8x8xf32>
    %386 = vector.extract_strided_slice %373 {offsets = [0, 16], sizes = [16, 8], strides = [1, 1]} : vector<16x32xf32> to vector<16x8xf32>
    %387 = vector.shape_cast %386 : vector<16x8xf32> to vector<2x8x8xf32>
    %388 = vector.extract_strided_slice %373 {offsets = [0, 24], sizes = [16, 8], strides = [1, 1]} : vector<16x32xf32> to vector<16x8xf32>
    %389 = vector.shape_cast %388 : vector<16x8xf32> to vector<2x8x8xf32>
    %390 = tpu.concatenate %383, %385, %387, %389 in 0 : vector<2x8x8xf32>, vector<2x8x8xf32>, vector<2x8x8xf32>, vector<2x8x8xf32> -> vector<8x8x8xf32>
    %391 = arith.truncf %390 : vector<8x8x8xf32> to vector<8x8x8xbf16>
    %392 = vector.extract_strided_slice %380 {offsets = [0, 0], sizes = [16, 8], strides = [1, 1]} : vector<16x32xf32> to vector<16x8xf32>
    %393 = vector.shape_cast %392 : vector<16x8xf32> to vector<2x8x8xf32>
    %394 = vector.extract_strided_slice %380 {offsets = [0, 8], sizes = [16, 8], strides = [1, 1]} : vector<16x32xf32> to vector<16x8xf32>
    %395 = vector.shape_cast %394 : vector<16x8xf32> to vector<2x8x8xf32>
    %396 = vector.extract_strided_slice %380 {offsets = [0, 16], sizes = [16, 8], strides = [1, 1]} : vector<16x32xf32> to vector<16x8xf32>
    %397 = vector.shape_cast %396 : vector<16x8xf32> to vector<2x8x8xf32>
    %398 = vector.extract_strided_slice %380 {offsets = [0, 24], sizes = [16, 8], strides = [1, 1]} : vector<16x32xf32> to vector<16x8xf32>
    %399 = vector.shape_cast %398 : vector<16x8xf32> to vector<2x8x8xf32>
    %400 = tpu.concatenate %393, %395, %397, %399 in 0 : vector<2x8x8xf32>, vector<2x8x8xf32>, vector<2x8x8xf32>, vector<2x8x8xf32> -> vector<8x8x8xf32>
    %401 = arith.truncf %400 : vector<8x8x8xf32> to vector<8x8x8xbf16>
    %402 = vector.extract_strided_slice %381 {offsets = [0, 0], sizes = [16, 8], strides = [1, 1]} : vector<16x32xf32> to vector<16x8xf32>
    %403 = vector.shape_cast %402 : vector<16x8xf32> to vector<2x8x8xf32>
    %404 = vector.extract_strided_slice %381 {offsets = [0, 8], sizes = [16, 8], strides = [1, 1]} : vector<16x32xf32> to vector<16x8xf32>
    %405 = vector.shape_cast %404 : vector<16x8xf32> to vector<2x8x8xf32>
    %406 = vector.extract_strided_slice %381 {offsets = [0, 16], sizes = [16, 8], strides = [1, 1]} : vector<16x32xf32> to vector<16x8xf32>
    %407 = vector.shape_cast %406 : vector<16x8xf32> to vector<2x8x8xf32>
    %408 = vector.extract_strided_slice %381 {offsets = [0, 24], sizes = [16, 8], strides = [1, 1]} : vector<16x32xf32> to vector<16x8xf32>
    %409 = vector.shape_cast %408 : vector<16x8xf32> to vector<2x8x8xf32>
    %410 = tpu.concatenate %403, %405, %407, %409 in 0 : vector<2x8x8xf32>, vector<2x8x8xf32>, vector<2x8x8xf32>, vector<2x8x8xf32> -> vector<8x8x8xf32>
    %411 = arith.truncf %410 : vector<8x8x8xf32> to vector<8x8x8xbf16>
    "tpu.trace_start"() <{level = 10 : i32, message = "gqd,gkd->gqk"}> : () -> ()
    %cst_101 = arith.constant dense<0.000000e+00> : vector<8x8x8xf32>
    %412 = tpu.matmul %391, %401, %cst_101 {dimension_numbers = #tpu.dot_dimension_numbers<[2], [2], [1], [1], [0, 0, 0, 1, 1, 1], [0], [0]>} : vector<8x8x8xbf16>, vector<8x8x8xbf16>, vector<8x8x8xf32> -> vector<8x8x8xf32>
    "tpu.trace_stop"() : () -> ()
    %cst_102 = arith.constant 0.353553385 : f32
    %413 = vector.broadcast %cst_102 : f32 to vector<8x8x8xf32>
    %414 = arith.mulf %412, %413 : vector<8x8x8xf32>
    %415 = arith.addf %414, %272 : vector<8x8x8xf32>
    %cst_103 = arith.constant dense<0xFF800000> : vector<8x8xf32>
    %416 = vector.multi_reduction <maximumf>, %415, %cst_103 [2] : vector<8x8x8xf32> to vector<8x8xf32>
    %417 = vector.shape_cast %416 : vector<8x8xf32> to vector<8x8x1xf32>
    %418 = vector.broadcast %417 : vector<8x8x1xf32> to vector<8x8x8xf32>
    %419 = arith.subf %415, %418 : vector<8x8x8xf32>
    %420 = math.exp %419 : vector<8x8x8xf32>
    %cst_104 = arith.constant dense<0.000000e+00> : vector<8x8xf32>
    %421 = vector.multi_reduction <add>, %420, %cst_104 [2] : vector<8x8x8xf32> to vector<8x8xf32>
    %422 = vector.shape_cast %421 : vector<8x8xf32> to vector<8x8x1xf32>
    %423 = tpu.reciprocal %422 {approx = true} : vector<8x8x1xf32> -> vector<8x8x1xf32>
    %424 = vector.broadcast %423 : vector<8x8x1xf32> to vector<8x8x8xf32>
    %425 = arith.mulf %420, %424 : vector<8x8x8xf32>
    %426 = arith.truncf %425 : vector<8x8x8xf32> to vector<8x8x8xbf16>
    "tpu.trace_start"() <{level = 10 : i32, message = "gqk,gkd->gqd"}> : () -> ()
    %cst_105 = arith.constant dense<0.000000e+00> : vector<8x8x8xf32>
    %427 = tpu.matmul %426, %411, %cst_105 {dimension_numbers = #tpu.dot_dimension_numbers<[2], [1], [1], [2], [0, 0, 0, 1, 1, 2], [0], [0]>} : vector<8x8x8xbf16>, vector<8x8x8xbf16>, vector<8x8x8xf32> -> vector<8x8x8xf32>
    "tpu.trace_stop"() : () -> ()
    %428 = vector.extract_strided_slice %427 {offsets = [0, 0, 0], sizes = [2, 8, 8], strides = [1, 1, 1]} : vector<8x8x8xf32> to vector<2x8x8xf32>
    %429 = vector.shape_cast %428 : vector<2x8x8xf32> to vector<16x8xf32>
    %430 = vector.extract_strided_slice %427 {offsets = [2, 0, 0], sizes = [2, 8, 8], strides = [1, 1, 1]} : vector<8x8x8xf32> to vector<2x8x8xf32>
    %431 = vector.shape_cast %430 : vector<2x8x8xf32> to vector<16x8xf32>
    %432 = vector.extract_strided_slice %427 {offsets = [4, 0, 0], sizes = [2, 8, 8], strides = [1, 1, 1]} : vector<8x8x8xf32> to vector<2x8x8xf32>
    %433 = vector.shape_cast %432 : vector<2x8x8xf32> to vector<16x8xf32>
    %434 = vector.extract_strided_slice %427 {offsets = [6, 0, 0], sizes = [2, 8, 8], strides = [1, 1, 1]} : vector<8x8x8xf32> to vector<2x8x8xf32>
    %435 = vector.shape_cast %434 : vector<2x8x8xf32> to vector<16x8xf32>
    %436 = tpu.concatenate %429, %431, %433, %435 in 1 : vector<16x8xf32>, vector<16x8xf32>, vector<16x8xf32>, vector<16x8xf32> -> vector<16x32xf32>
    %c448 = arith.constant 448 : index
    %c0_106 = arith.constant 0 : index
    %437 = vector.load %arg5[%c448, %c0_106] : memref<864x128xbf16, #tpu.memory_space<vmem>>, vector<32x32xbf16>
    %438 = arith.truncf %436 : vector<16x32xf32> to vector<16x32xbf16>
    %cst_107 = arith.constant dense<0.000000e+00> : vector<16x32xf32>
    %439 = tpu.matmul %438, %437, %cst_107 {dimension_numbers = #tpu.dot_dimension_numbers<[1], [0], [0], [1], [0, 0, 1, 1], [], []>} : vector<16x32xbf16>, vector<32x32xbf16>, vector<16x32xf32> -> vector<16x32xf32>
    %c22 = arith.constant 22 : index
    %c0_108 = arith.constant 0 : index
    %440 = vector.load %arg6[%c22, %c0_108] : memref<48x128xf32, #tpu.memory_space<vmem>>, vector<1x32xf32>
    %441 = vector.broadcast %440 : vector<1x32xf32> to vector<16x32xf32>
    %442 = arith.addf %439, %441 : vector<16x32xf32>
    %443 = arith.addf %367, %442 : vector<16x32xf32>
    %c23 = arith.constant 23 : index
    %c0_109 = arith.constant 0 : index
    %444 = vector.load %arg6[%c23, %c0_109] : memref<48x128xf32, #tpu.memory_space<vmem>>, vector<1x32xf32>
    %c24 = arith.constant 24 : index
    %c0_110 = arith.constant 0 : index
    %445 = vector.load %arg6[%c24, %c0_110] : memref<48x128xf32, #tpu.memory_space<vmem>>, vector<1x32xf32>
    %cst_111 = arith.constant dense<0.000000e+00> : vector<16xf32>
    %446 = vector.multi_reduction <add>, %443, %cst_111 [1] : vector<16x32xf32> to vector<16xf32>
    %447 = vector.shape_cast %446 : vector<16xf32> to vector<16x1xf32>
    %cst_112 = arith.constant 3.200000e+01 : f32
    %448 = vector.broadcast %cst_112 : f32 to vector<16x1xf32>
    %449 = arith.divf %447, %448 : vector<16x1xf32>
    %450 = arith.mulf %443, %443 : vector<16x32xf32>
    %cst_113 = arith.constant dense<0.000000e+00> : vector<16xf32>
    %451 = vector.multi_reduction <add>, %450, %cst_113 [1] : vector<16x32xf32> to vector<16xf32>
    %452 = vector.shape_cast %451 : vector<16xf32> to vector<16x1xf32>
    %cst_114 = arith.constant 3.200000e+01 : f32
    %453 = vector.broadcast %cst_114 : f32 to vector<16x1xf32>
    %454 = arith.divf %452, %453 : vector<16x1xf32>
    %455 = arith.mulf %449, %449 : vector<16x1xf32>
    %456 = arith.subf %454, %455 : vector<16x1xf32>
    %457 = vector.broadcast %449 : vector<16x1xf32> to vector<16x32xf32>
    %458 = arith.subf %443, %457 : vector<16x32xf32>
    %cst_115 = arith.constant 9.99999974E-6 : f32
    %459 = vector.broadcast %cst_115 : f32 to vector<16x1xf32>
    %460 = arith.addf %456, %459 : vector<16x1xf32>
    %461 = math.rsqrt %460 : vector<16x1xf32>
    %462 = vector.broadcast %461 : vector<16x1xf32> to vector<16x32xf32>
    %463 = arith.mulf %458, %462 : vector<16x32xf32>
    %464 = vector.broadcast %444 : vector<1x32xf32> to vector<16x32xf32>
    %465 = arith.mulf %463, %464 : vector<16x32xf32>
    %466 = vector.broadcast %445 : vector<1x32xf32> to vector<16x32xf32>
    %467 = arith.addf %465, %466 : vector<16x32xf32>
    %c480 = arith.constant 480 : index
    %c0_116 = arith.constant 0 : index
    %468 = vector.load %arg5[%c480, %c0_116] : memref<864x128xbf16, #tpu.memory_space<vmem>>, vector<32x64xbf16>
    %469 = arith.truncf %467 : vector<16x32xf32> to vector<16x32xbf16>
    %cst_117 = arith.constant dense<0.000000e+00> : vector<16x64xf32>
    %470 = tpu.matmul %469, %468, %cst_117 {dimension_numbers = #tpu.dot_dimension_numbers<[1], [0], [0], [1], [0, 0, 1, 1], [], []>} : vector<16x32xbf16>, vector<32x64xbf16>, vector<16x64xf32> -> vector<16x64xf32>
    %c25 = arith.constant 25 : index
    %c0_118 = arith.constant 0 : index
    %471 = vector.load %arg6[%c25, %c0_118] : memref<48x128xf32, #tpu.memory_space<vmem>>, vector<1x64xf32>
    %472 = vector.broadcast %471 : vector<1x64xf32> to vector<16x64xf32>
    %473 = arith.addf %470, %472 : vector<16x64xf32>
    %cst_119 = arith.constant 0.000000e+00 : f32
    %474 = vector.broadcast %cst_119 : f32 to vector<16x64xf32>
    %475 = arith.maximumf %473, %474 : vector<16x64xf32>
    %c512 = arith.constant 512 : index
    %c0_120 = arith.constant 0 : index
    %476 = vector.load %arg5[%c512, %c0_120] : memref<864x128xbf16, #tpu.memory_space<vmem>>, vector<64x32xbf16>
    %477 = arith.truncf %475 : vector<16x64xf32> to vector<16x64xbf16>
    %cst_121 = arith.constant dense<0.000000e+00> : vector<16x32xf32>
    %478 = tpu.matmul %477, %476, %cst_121 {dimension_numbers = #tpu.dot_dimension_numbers<[1], [0], [0], [1], [0, 0, 1, 1], [], []>} : vector<16x64xbf16>, vector<64x32xbf16>, vector<16x32xf32> -> vector<16x32xf32>
    %c26 = arith.constant 26 : index
    %c0_122 = arith.constant 0 : index
    %479 = vector.load %arg6[%c26, %c0_122] : memref<48x128xf32, #tpu.memory_space<vmem>>, vector<1x32xf32>
    %480 = vector.broadcast %479 : vector<1x32xf32> to vector<16x32xf32>
    %481 = arith.addf %478, %480 : vector<16x32xf32>
    %482 = arith.addf %467, %481 : vector<16x32xf32>
    %c27 = arith.constant 27 : index
    %c0_123 = arith.constant 0 : index
    %483 = vector.load %arg6[%c27, %c0_123] : memref<48x128xf32, #tpu.memory_space<vmem>>, vector<1x32xf32>
    %c28 = arith.constant 28 : index
    %c0_124 = arith.constant 0 : index
    %484 = vector.load %arg6[%c28, %c0_124] : memref<48x128xf32, #tpu.memory_space<vmem>>, vector<1x32xf32>
    %cst_125 = arith.constant dense<0.000000e+00> : vector<16xf32>
    %485 = vector.multi_reduction <add>, %482, %cst_125 [1] : vector<16x32xf32> to vector<16xf32>
    %486 = vector.shape_cast %485 : vector<16xf32> to vector<16x1xf32>
    %cst_126 = arith.constant 3.200000e+01 : f32
    %487 = vector.broadcast %cst_126 : f32 to vector<16x1xf32>
    %488 = arith.divf %486, %487 : vector<16x1xf32>
    %489 = arith.mulf %482, %482 : vector<16x32xf32>
    %cst_127 = arith.constant dense<0.000000e+00> : vector<16xf32>
    %490 = vector.multi_reduction <add>, %489, %cst_127 [1] : vector<16x32xf32> to vector<16xf32>
    %491 = vector.shape_cast %490 : vector<16xf32> to vector<16x1xf32>
    %cst_128 = arith.constant 3.200000e+01 : f32
    %492 = vector.broadcast %cst_128 : f32 to vector<16x1xf32>
    %493 = arith.divf %491, %492 : vector<16x1xf32>
    %494 = arith.mulf %488, %488 : vector<16x1xf32>
    %495 = arith.subf %493, %494 : vector<16x1xf32>
    %496 = vector.broadcast %488 : vector<16x1xf32> to vector<16x32xf32>
    %497 = arith.subf %482, %496 : vector<16x32xf32>
    %cst_129 = arith.constant 9.99999974E-6 : f32
    %498 = vector.broadcast %cst_129 : f32 to vector<16x1xf32>
    %499 = arith.addf %495, %498 : vector<16x1xf32>
    %500 = math.rsqrt %499 : vector<16x1xf32>
    %501 = vector.broadcast %500 : vector<16x1xf32> to vector<16x32xf32>
    %502 = arith.mulf %497, %501 : vector<16x32xf32>
    %503 = vector.broadcast %483 : vector<1x32xf32> to vector<16x32xf32>
    %504 = arith.mulf %502, %503 : vector<16x32xf32>
    %505 = vector.broadcast %484 : vector<1x32xf32> to vector<16x32xf32>
    %506 = arith.addf %504, %505 : vector<16x32xf32>
    %c576 = arith.constant 576 : index
    %c0_130 = arith.constant 0 : index
    %507 = vector.load %arg5[%c576, %c0_130] : memref<864x128xbf16, #tpu.memory_space<vmem>>, vector<32x96xbf16>
    %508 = arith.truncf %506 : vector<16x32xf32> to vector<16x32xbf16>
    %cst_131 = arith.constant dense<0.000000e+00> : vector<16x96xf32>
    %509 = tpu.matmul %508, %507, %cst_131 {dimension_numbers = #tpu.dot_dimension_numbers<[1], [0], [0], [1], [0, 0, 1, 1], [], []>} : vector<16x32xbf16>, vector<32x96xbf16>, vector<16x96xf32> -> vector<16x96xf32>
    %c29 = arith.constant 29 : index
    %c0_132 = arith.constant 0 : index
    %510 = vector.load %arg6[%c29, %c0_132] : memref<48x128xf32, #tpu.memory_space<vmem>>, vector<1x96xf32>
    %511 = vector.broadcast %510 : vector<1x96xf32> to vector<16x96xf32>
    %512 = arith.addf %509, %511 : vector<16x96xf32>
    %513 = vector.extract_strided_slice %512 {offsets = [0, 0], sizes = [16, 32], strides = [1, 1]} : vector<16x96xf32> to vector<16x32xf32>
    %514 = vector.extract_strided_slice %512 {offsets = [0, 32], sizes = [16, 32], strides = [1, 1]} : vector<16x96xf32> to vector<16x32xf32>
    %515 = vector.extract_strided_slice %512 {offsets = [0, 64], sizes = [16, 32], strides = [1, 1]} : vector<16x96xf32> to vector<16x32xf32>
    %516 = vector.extract_strided_slice %513 {offsets = [0, 0], sizes = [16, 8], strides = [1, 1]} : vector<16x32xf32> to vector<16x8xf32>
    %517 = vector.shape_cast %516 : vector<16x8xf32> to vector<2x8x8xf32>
    %518 = vector.extract_strided_slice %513 {offsets = [0, 8], sizes = [16, 8], strides = [1, 1]} : vector<16x32xf32> to vector<16x8xf32>
    %519 = vector.shape_cast %518 : vector<16x8xf32> to vector<2x8x8xf32>
    %520 = vector.extract_strided_slice %513 {offsets = [0, 16], sizes = [16, 8], strides = [1, 1]} : vector<16x32xf32> to vector<16x8xf32>
    %521 = vector.shape_cast %520 : vector<16x8xf32> to vector<2x8x8xf32>
    %522 = vector.extract_strided_slice %513 {offsets = [0, 24], sizes = [16, 8], strides = [1, 1]} : vector<16x32xf32> to vector<16x8xf32>
    %523 = vector.shape_cast %522 : vector<16x8xf32> to vector<2x8x8xf32>
    %524 = tpu.concatenate %517, %519, %521, %523 in 0 : vector<2x8x8xf32>, vector<2x8x8xf32>, vector<2x8x8xf32>, vector<2x8x8xf32> -> vector<8x8x8xf32>
    %525 = arith.truncf %524 : vector<8x8x8xf32> to vector<8x8x8xbf16>
    %526 = vector.extract_strided_slice %514 {offsets = [0, 0], sizes = [16, 8], strides = [1, 1]} : vector<16x32xf32> to vector<16x8xf32>
    %527 = vector.shape_cast %526 : vector<16x8xf32> to vector<2x8x8xf32>
    %528 = vector.extract_strided_slice %514 {offsets = [0, 8], sizes = [16, 8], strides = [1, 1]} : vector<16x32xf32> to vector<16x8xf32>
    %529 = vector.shape_cast %528 : vector<16x8xf32> to vector<2x8x8xf32>
    %530 = vector.extract_strided_slice %514 {offsets = [0, 16], sizes = [16, 8], strides = [1, 1]} : vector<16x32xf32> to vector<16x8xf32>
    %531 = vector.shape_cast %530 : vector<16x8xf32> to vector<2x8x8xf32>
    %532 = vector.extract_strided_slice %514 {offsets = [0, 24], sizes = [16, 8], strides = [1, 1]} : vector<16x32xf32> to vector<16x8xf32>
    %533 = vector.shape_cast %532 : vector<16x8xf32> to vector<2x8x8xf32>
    %534 = tpu.concatenate %527, %529, %531, %533 in 0 : vector<2x8x8xf32>, vector<2x8x8xf32>, vector<2x8x8xf32>, vector<2x8x8xf32> -> vector<8x8x8xf32>
    %535 = arith.truncf %534 : vector<8x8x8xf32> to vector<8x8x8xbf16>
    %536 = vector.extract_strided_slice %515 {offsets = [0, 0], sizes = [16, 8], strides = [1, 1]} : vector<16x32xf32> to vector<16x8xf32>
    %537 = vector.shape_cast %536 : vector<16x8xf32> to vector<2x8x8xf32>
    %538 = vector.extract_strided_slice %515 {offsets = [0, 8], sizes = [16, 8], strides = [1, 1]} : vector<16x32xf32> to vector<16x8xf32>
    %539 = vector.shape_cast %538 : vector<16x8xf32> to vector<2x8x8xf32>
    %540 = vector.extract_strided_slice %515 {offsets = [0, 16], sizes = [16, 8], strides = [1, 1]} : vector<16x32xf32> to vector<16x8xf32>
    %541 = vector.shape_cast %540 : vector<16x8xf32> to vector<2x8x8xf32>
    %542 = vector.extract_strided_slice %515 {offsets = [0, 24], sizes = [16, 8], strides = [1, 1]} : vector<16x32xf32> to vector<16x8xf32>
    %543 = vector.shape_cast %542 : vector<16x8xf32> to vector<2x8x8xf32>
    %544 = tpu.concatenate %537, %539, %541, %543 in 0 : vector<2x8x8xf32>, vector<2x8x8xf32>, vector<2x8x8xf32>, vector<2x8x8xf32> -> vector<8x8x8xf32>
    %545 = arith.truncf %544 : vector<8x8x8xf32> to vector<8x8x8xbf16>
    "tpu.trace_start"() <{level = 10 : i32, message = "gqd,gkd->gqk"}> : () -> ()
    %cst_133 = arith.constant dense<0.000000e+00> : vector<8x8x8xf32>
    %546 = tpu.matmul %525, %535, %cst_133 {dimension_numbers = #tpu.dot_dimension_numbers<[2], [2], [1], [1], [0, 0, 0, 1, 1, 1], [0], [0]>} : vector<8x8x8xbf16>, vector<8x8x8xbf16>, vector<8x8x8xf32> -> vector<8x8x8xf32>
    "tpu.trace_stop"() : () -> ()
    %cst_134 = arith.constant 0.353553385 : f32
    %547 = vector.broadcast %cst_134 : f32 to vector<8x8x8xf32>
    %548 = arith.mulf %546, %547 : vector<8x8x8xf32>
    %549 = arith.addf %548, %271 : vector<8x8x8xf32>
    %cst_135 = arith.constant dense<0xFF800000> : vector<8x8xf32>
    %550 = vector.multi_reduction <maximumf>, %549, %cst_135 [2] : vector<8x8x8xf32> to vector<8x8xf32>
    %551 = vector.shape_cast %550 : vector<8x8xf32> to vector<8x8x1xf32>
    %552 = vector.broadcast %551 : vector<8x8x1xf32> to vector<8x8x8xf32>
    %553 = arith.subf %549, %552 : vector<8x8x8xf32>
    %554 = math.exp %553 : vector<8x8x8xf32>
    %cst_136 = arith.constant dense<0.000000e+00> : vector<8x8xf32>
    %555 = vector.multi_reduction <add>, %554, %cst_136 [2] : vector<8x8x8xf32> to vector<8x8xf32>
    %556 = vector.shape_cast %555 : vector<8x8xf32> to vector<8x8x1xf32>
    %557 = tpu.reciprocal %556 {approx = true} : vector<8x8x1xf32> -> vector<8x8x1xf32>
    %558 = vector.broadcast %557 : vector<8x8x1xf32> to vector<8x8x8xf32>
    %559 = arith.mulf %554, %558 : vector<8x8x8xf32>
    %560 = arith.truncf %559 : vector<8x8x8xf32> to vector<8x8x8xbf16>
    "tpu.trace_start"() <{level = 10 : i32, message = "gqk,gkd->gqd"}> : () -> ()
    %cst_137 = arith.constant dense<0.000000e+00> : vector<8x8x8xf32>
    %561 = tpu.matmul %560, %545, %cst_137 {dimension_numbers = #tpu.dot_dimension_numbers<[2], [1], [1], [2], [0, 0, 0, 1, 1, 2], [0], [0]>} : vector<8x8x8xbf16>, vector<8x8x8xbf16>, vector<8x8x8xf32> -> vector<8x8x8xf32>
    "tpu.trace_stop"() : () -> ()
    %562 = vector.extract_strided_slice %561 {offsets = [0, 0, 0], sizes = [2, 8, 8], strides = [1, 1, 1]} : vector<8x8x8xf32> to vector<2x8x8xf32>
    %563 = vector.shape_cast %562 : vector<2x8x8xf32> to vector<16x8xf32>
    %564 = vector.extract_strided_slice %561 {offsets = [2, 0, 0], sizes = [2, 8, 8], strides = [1, 1, 1]} : vector<8x8x8xf32> to vector<2x8x8xf32>
    %565 = vector.shape_cast %564 : vector<2x8x8xf32> to vector<16x8xf32>
    %566 = vector.extract_strided_slice %561 {offsets = [4, 0, 0], sizes = [2, 8, 8], strides = [1, 1, 1]} : vector<8x8x8xf32> to vector<2x8x8xf32>
    %567 = vector.shape_cast %566 : vector<2x8x8xf32> to vector<16x8xf32>
    %568 = vector.extract_strided_slice %561 {offsets = [6, 0, 0], sizes = [2, 8, 8], strides = [1, 1, 1]} : vector<8x8x8xf32> to vector<2x8x8xf32>
    %569 = vector.shape_cast %568 : vector<2x8x8xf32> to vector<16x8xf32>
    %570 = tpu.concatenate %563, %565, %567, %569 in 1 : vector<16x8xf32>, vector<16x8xf32>, vector<16x8xf32>, vector<16x8xf32> -> vector<16x32xf32>
    %c608 = arith.constant 608 : index
    %c0_138 = arith.constant 0 : index
    %571 = vector.load %arg5[%c608, %c0_138] : memref<864x128xbf16, #tpu.memory_space<vmem>>, vector<32x32xbf16>
    %572 = arith.truncf %570 : vector<16x32xf32> to vector<16x32xbf16>
    %cst_139 = arith.constant dense<0.000000e+00> : vector<16x32xf32>
    %573 = tpu.matmul %572, %571, %cst_139 {dimension_numbers = #tpu.dot_dimension_numbers<[1], [0], [0], [1], [0, 0, 1, 1], [], []>} : vector<16x32xbf16>, vector<32x32xbf16>, vector<16x32xf32> -> vector<16x32xf32>
    %c30 = arith.constant 30 : index
    %c0_140 = arith.constant 0 : index
    %574 = vector.load %arg6[%c30, %c0_140] : memref<48x128xf32, #tpu.memory_space<vmem>>, vector<1x32xf32>
    %575 = vector.broadcast %574 : vector<1x32xf32> to vector<16x32xf32>
    %576 = arith.addf %573, %575 : vector<16x32xf32>
    %577 = arith.addf %506, %576 : vector<16x32xf32>
    %c31 = arith.constant 31 : index
    %c0_141 = arith.constant 0 : index
    %578 = vector.load %arg6[%c31, %c0_141] : memref<48x128xf32, #tpu.memory_space<vmem>>, vector<1x32xf32>
    %c32_142 = arith.constant 32 : index
    %c0_143 = arith.constant 0 : index
    %579 = vector.load %arg6[%c32_142, %c0_143] : memref<48x128xf32, #tpu.memory_space<vmem>>, vector<1x32xf32>
    %cst_144 = arith.constant dense<0.000000e+00> : vector<16xf32>
    %580 = vector.multi_reduction <add>, %577, %cst_144 [1] : vector<16x32xf32> to vector<16xf32>
    %581 = vector.shape_cast %580 : vector<16xf32> to vector<16x1xf32>
    %cst_145 = arith.constant 3.200000e+01 : f32
    %582 = vector.broadcast %cst_145 : f32 to vector<16x1xf32>
    %583 = arith.divf %581, %582 : vector<16x1xf32>
    %584 = arith.mulf %577, %577 : vector<16x32xf32>
    %cst_146 = arith.constant dense<0.000000e+00> : vector<16xf32>
    %585 = vector.multi_reduction <add>, %584, %cst_146 [1] : vector<16x32xf32> to vector<16xf32>
    %586 = vector.shape_cast %585 : vector<16xf32> to vector<16x1xf32>
    %cst_147 = arith.constant 3.200000e+01 : f32
    %587 = vector.broadcast %cst_147 : f32 to vector<16x1xf32>
    %588 = arith.divf %586, %587 : vector<16x1xf32>
    %589 = arith.mulf %583, %583 : vector<16x1xf32>
    %590 = arith.subf %588, %589 : vector<16x1xf32>
    %591 = vector.broadcast %583 : vector<16x1xf32> to vector<16x32xf32>
    %592 = arith.subf %577, %591 : vector<16x32xf32>
    %cst_148 = arith.constant 9.99999974E-6 : f32
    %593 = vector.broadcast %cst_148 : f32 to vector<16x1xf32>
    %594 = arith.addf %590, %593 : vector<16x1xf32>
    %595 = math.rsqrt %594 : vector<16x1xf32>
    %596 = vector.broadcast %595 : vector<16x1xf32> to vector<16x32xf32>
    %597 = arith.mulf %592, %596 : vector<16x32xf32>
    %598 = vector.broadcast %578 : vector<1x32xf32> to vector<16x32xf32>
    %599 = arith.mulf %597, %598 : vector<16x32xf32>
    %600 = vector.broadcast %579 : vector<1x32xf32> to vector<16x32xf32>
    %601 = arith.addf %599, %600 : vector<16x32xf32>
    %c640 = arith.constant 640 : index
    %c0_149 = arith.constant 0 : index
    %602 = vector.load %arg5[%c640, %c0_149] : memref<864x128xbf16, #tpu.memory_space<vmem>>, vector<32x32xbf16>
    %603 = arith.truncf %601 : vector<16x32xf32> to vector<16x32xbf16>
    %cst_150 = arith.constant dense<0.000000e+00> : vector<16x32xf32>
    %604 = tpu.matmul %603, %602, %cst_150 {dimension_numbers = #tpu.dot_dimension_numbers<[1], [0], [0], [1], [0, 0, 1, 1], [], []>} : vector<16x32xbf16>, vector<32x32xbf16>, vector<16x32xf32> -> vector<16x32xf32>
    %c33 = arith.constant 33 : index
    %c0_151 = arith.constant 0 : index
    %605 = vector.load %arg6[%c33, %c0_151] : memref<48x128xf32, #tpu.memory_space<vmem>>, vector<1x32xf32>
    %606 = vector.broadcast %605 : vector<1x32xf32> to vector<16x32xf32>
    %607 = arith.addf %604, %606 : vector<16x32xf32>
    %c672 = arith.constant 672 : index
    %c0_152 = arith.constant 0 : index
    %608 = vector.load %arg5[%c672, %c0_152] : memref<864x128xbf16, #tpu.memory_space<vmem>>, vector<32x64xbf16>
    %609 = arith.truncf %269 : vector<16x32xf32> to vector<16x32xbf16>
    %cst_153 = arith.constant dense<0.000000e+00> : vector<16x64xf32>
    %610 = tpu.matmul %609, %608, %cst_153 {dimension_numbers = #tpu.dot_dimension_numbers<[1], [0], [0], [1], [0, 0, 1, 1], [], []>} : vector<16x32xbf16>, vector<32x64xbf16>, vector<16x64xf32> -> vector<16x64xf32>
    %c34 = arith.constant 34 : index
    %c0_154 = arith.constant 0 : index
    %611 = vector.load %arg6[%c34, %c0_154] : memref<48x128xf32, #tpu.memory_space<vmem>>, vector<1x64xf32>
    %612 = vector.broadcast %611 : vector<1x64xf32> to vector<16x64xf32>
    %613 = arith.addf %610, %612 : vector<16x64xf32>
    %614 = vector.extract_strided_slice %613 {offsets = [0, 0], sizes = [16, 32], strides = [1, 1]} : vector<16x64xf32> to vector<16x32xf32>
    %615 = vector.extract_strided_slice %613 {offsets = [0, 32], sizes = [16, 32], strides = [1, 1]} : vector<16x64xf32> to vector<16x32xf32>
    %616 = vector.extract_strided_slice %607 {offsets = [0, 0], sizes = [16, 8], strides = [1, 1]} : vector<16x32xf32> to vector<16x8xf32>
    %617 = vector.shape_cast %616 : vector<16x8xf32> to vector<2x8x8xf32>
    %618 = vector.extract_strided_slice %607 {offsets = [0, 8], sizes = [16, 8], strides = [1, 1]} : vector<16x32xf32> to vector<16x8xf32>
    %619 = vector.shape_cast %618 : vector<16x8xf32> to vector<2x8x8xf32>
    %620 = vector.extract_strided_slice %607 {offsets = [0, 16], sizes = [16, 8], strides = [1, 1]} : vector<16x32xf32> to vector<16x8xf32>
    %621 = vector.shape_cast %620 : vector<16x8xf32> to vector<2x8x8xf32>
    %622 = vector.extract_strided_slice %607 {offsets = [0, 24], sizes = [16, 8], strides = [1, 1]} : vector<16x32xf32> to vector<16x8xf32>
    %623 = vector.shape_cast %622 : vector<16x8xf32> to vector<2x8x8xf32>
    %624 = tpu.concatenate %617, %619, %621, %623 in 0 : vector<2x8x8xf32>, vector<2x8x8xf32>, vector<2x8x8xf32>, vector<2x8x8xf32> -> vector<8x8x8xf32>
    %625 = arith.truncf %624 : vector<8x8x8xf32> to vector<8x8x8xbf16>
    %626 = vector.extract_strided_slice %614 {offsets = [0, 0], sizes = [16, 8], strides = [1, 1]} : vector<16x32xf32> to vector<16x8xf32>
    %627 = vector.shape_cast %626 : vector<16x8xf32> to vector<2x8x8xf32>
    %628 = vector.extract_strided_slice %614 {offsets = [0, 8], sizes = [16, 8], strides = [1, 1]} : vector<16x32xf32> to vector<16x8xf32>
    %629 = vector.shape_cast %628 : vector<16x8xf32> to vector<2x8x8xf32>
    %630 = vector.extract_strided_slice %614 {offsets = [0, 16], sizes = [16, 8], strides = [1, 1]} : vector<16x32xf32> to vector<16x8xf32>
    %631 = vector.shape_cast %630 : vector<16x8xf32> to vector<2x8x8xf32>
    %632 = vector.extract_strided_slice %614 {offsets = [0, 24], sizes = [16, 8], strides = [1, 1]} : vector<16x32xf32> to vector<16x8xf32>
    %633 = vector.shape_cast %632 : vector<16x8xf32> to vector<2x8x8xf32>
    %634 = tpu.concatenate %627, %629, %631, %633 in 0 : vector<2x8x8xf32>, vector<2x8x8xf32>, vector<2x8x8xf32>, vector<2x8x8xf32> -> vector<8x8x8xf32>
    %635 = arith.truncf %634 : vector<8x8x8xf32> to vector<8x8x8xbf16>
    %636 = vector.extract_strided_slice %615 {offsets = [0, 0], sizes = [16, 8], strides = [1, 1]} : vector<16x32xf32> to vector<16x8xf32>
    %637 = vector.shape_cast %636 : vector<16x8xf32> to vector<2x8x8xf32>
    %638 = vector.extract_strided_slice %615 {offsets = [0, 8], sizes = [16, 8], strides = [1, 1]} : vector<16x32xf32> to vector<16x8xf32>
    %639 = vector.shape_cast %638 : vector<16x8xf32> to vector<2x8x8xf32>
    %640 = vector.extract_strided_slice %615 {offsets = [0, 16], sizes = [16, 8], strides = [1, 1]} : vector<16x32xf32> to vector<16x8xf32>
    %641 = vector.shape_cast %640 : vector<16x8xf32> to vector<2x8x8xf32>
    %642 = vector.extract_strided_slice %615 {offsets = [0, 24], sizes = [16, 8], strides = [1, 1]} : vector<16x32xf32> to vector<16x8xf32>
    %643 = vector.shape_cast %642 : vector<16x8xf32> to vector<2x8x8xf32>
    %644 = tpu.concatenate %637, %639, %641, %643 in 0 : vector<2x8x8xf32>, vector<2x8x8xf32>, vector<2x8x8xf32>, vector<2x8x8xf32> -> vector<8x8x8xf32>
    %645 = arith.truncf %644 : vector<8x8x8xf32> to vector<8x8x8xbf16>
    "tpu.trace_start"() <{level = 10 : i32, message = "gqd,gkd->gqk"}> : () -> ()
    %cst_155 = arith.constant dense<0.000000e+00> : vector<8x8x8xf32>
    %646 = tpu.matmul %625, %635, %cst_155 {dimension_numbers = #tpu.dot_dimension_numbers<[2], [2], [1], [1], [0, 0, 0, 1, 1, 1], [0], [0]>} : vector<8x8x8xbf16>, vector<8x8x8xbf16>, vector<8x8x8xf32> -> vector<8x8x8xf32>
    "tpu.trace_stop"() : () -> ()
    %cst_156 = arith.constant 0.353553385 : f32
    %647 = vector.broadcast %cst_156 : f32 to vector<8x8x8xf32>
    %648 = arith.mulf %646, %647 : vector<8x8x8xf32>
    %649 = arith.addf %648, %272 : vector<8x8x8xf32>
    %cst_157 = arith.constant dense<0xFF800000> : vector<8x8xf32>
    %650 = vector.multi_reduction <maximumf>, %649, %cst_157 [2] : vector<8x8x8xf32> to vector<8x8xf32>
    %651 = vector.shape_cast %650 : vector<8x8xf32> to vector<8x8x1xf32>
    %652 = vector.broadcast %651 : vector<8x8x1xf32> to vector<8x8x8xf32>
    %653 = arith.subf %649, %652 : vector<8x8x8xf32>
    %654 = math.exp %653 : vector<8x8x8xf32>
    %cst_158 = arith.constant dense<0.000000e+00> : vector<8x8xf32>
    %655 = vector.multi_reduction <add>, %654, %cst_158 [2] : vector<8x8x8xf32> to vector<8x8xf32>
    %656 = vector.shape_cast %655 : vector<8x8xf32> to vector<8x8x1xf32>
    %657 = tpu.reciprocal %656 {approx = true} : vector<8x8x1xf32> -> vector<8x8x1xf32>
    %658 = vector.broadcast %657 : vector<8x8x1xf32> to vector<8x8x8xf32>
    %659 = arith.mulf %654, %658 : vector<8x8x8xf32>
    %660 = arith.truncf %659 : vector<8x8x8xf32> to vector<8x8x8xbf16>
    "tpu.trace_start"() <{level = 10 : i32, message = "gqk,gkd->gqd"}> : () -> ()
    %cst_159 = arith.constant dense<0.000000e+00> : vector<8x8x8xf32>
    %661 = tpu.matmul %660, %645, %cst_159 {dimension_numbers = #tpu.dot_dimension_numbers<[2], [1], [1], [2], [0, 0, 0, 1, 1, 2], [0], [0]>} : vector<8x8x8xbf16>, vector<8x8x8xbf16>, vector<8x8x8xf32> -> vector<8x8x8xf32>
    "tpu.trace_stop"() : () -> ()
    %662 = vector.extract_strided_slice %661 {offsets = [0, 0, 0], sizes = [2, 8, 8], strides = [1, 1, 1]} : vector<8x8x8xf32> to vector<2x8x8xf32>
    %663 = vector.shape_cast %662 : vector<2x8x8xf32> to vector<16x8xf32>
    %664 = vector.extract_strided_slice %661 {offsets = [2, 0, 0], sizes = [2, 8, 8], strides = [1, 1, 1]} : vector<8x8x8xf32> to vector<2x8x8xf32>
    %665 = vector.shape_cast %664 : vector<2x8x8xf32> to vector<16x8xf32>
    %666 = vector.extract_strided_slice %661 {offsets = [4, 0, 0], sizes = [2, 8, 8], strides = [1, 1, 1]} : vector<8x8x8xf32> to vector<2x8x8xf32>
    %667 = vector.shape_cast %666 : vector<2x8x8xf32> to vector<16x8xf32>
    %668 = vector.extract_strided_slice %661 {offsets = [6, 0, 0], sizes = [2, 8, 8], strides = [1, 1, 1]} : vector<8x8x8xf32> to vector<2x8x8xf32>
    %669 = vector.shape_cast %668 : vector<2x8x8xf32> to vector<16x8xf32>
    %670 = tpu.concatenate %663, %665, %667, %669 in 1 : vector<16x8xf32>, vector<16x8xf32>, vector<16x8xf32>, vector<16x8xf32> -> vector<16x32xf32>
    %c704 = arith.constant 704 : index
    %c0_160 = arith.constant 0 : index
    %671 = vector.load %arg5[%c704, %c0_160] : memref<864x128xbf16, #tpu.memory_space<vmem>>, vector<32x32xbf16>
    %672 = arith.truncf %670 : vector<16x32xf32> to vector<16x32xbf16>
    %cst_161 = arith.constant dense<0.000000e+00> : vector<16x32xf32>
    %673 = tpu.matmul %672, %671, %cst_161 {dimension_numbers = #tpu.dot_dimension_numbers<[1], [0], [0], [1], [0, 0, 1, 1], [], []>} : vector<16x32xbf16>, vector<32x32xbf16>, vector<16x32xf32> -> vector<16x32xf32>
    %c35 = arith.constant 35 : index
    %c0_162 = arith.constant 0 : index
    %674 = vector.load %arg6[%c35, %c0_162] : memref<48x128xf32, #tpu.memory_space<vmem>>, vector<1x32xf32>
    %675 = vector.broadcast %674 : vector<1x32xf32> to vector<16x32xf32>
    %676 = arith.addf %673, %675 : vector<16x32xf32>
    %677 = arith.addf %601, %676 : vector<16x32xf32>
    %c36 = arith.constant 36 : index
    %c0_163 = arith.constant 0 : index
    %678 = vector.load %arg6[%c36, %c0_163] : memref<48x128xf32, #tpu.memory_space<vmem>>, vector<1x32xf32>
    %c37 = arith.constant 37 : index
    %c0_164 = arith.constant 0 : index
    %679 = vector.load %arg6[%c37, %c0_164] : memref<48x128xf32, #tpu.memory_space<vmem>>, vector<1x32xf32>
    %cst_165 = arith.constant dense<0.000000e+00> : vector<16xf32>
    %680 = vector.multi_reduction <add>, %677, %cst_165 [1] : vector<16x32xf32> to vector<16xf32>
    %681 = vector.shape_cast %680 : vector<16xf32> to vector<16x1xf32>
    %cst_166 = arith.constant 3.200000e+01 : f32
    %682 = vector.broadcast %cst_166 : f32 to vector<16x1xf32>
    %683 = arith.divf %681, %682 : vector<16x1xf32>
    %684 = arith.mulf %677, %677 : vector<16x32xf32>
    %cst_167 = arith.constant dense<0.000000e+00> : vector<16xf32>
    %685 = vector.multi_reduction <add>, %684, %cst_167 [1] : vector<16x32xf32> to vector<16xf32>
    %686 = vector.shape_cast %685 : vector<16xf32> to vector<16x1xf32>
    %cst_168 = arith.constant 3.200000e+01 : f32
    %687 = vector.broadcast %cst_168 : f32 to vector<16x1xf32>
    %688 = arith.divf %686, %687 : vector<16x1xf32>
    %689 = arith.mulf %683, %683 : vector<16x1xf32>
    %690 = arith.subf %688, %689 : vector<16x1xf32>
    %691 = vector.broadcast %683 : vector<16x1xf32> to vector<16x32xf32>
    %692 = arith.subf %677, %691 : vector<16x32xf32>
    %cst_169 = arith.constant 9.99999974E-6 : f32
    %693 = vector.broadcast %cst_169 : f32 to vector<16x1xf32>
    %694 = arith.addf %690, %693 : vector<16x1xf32>
    %695 = math.rsqrt %694 : vector<16x1xf32>
    %696 = vector.broadcast %695 : vector<16x1xf32> to vector<16x32xf32>
    %697 = arith.mulf %692, %696 : vector<16x32xf32>
    %698 = vector.broadcast %678 : vector<1x32xf32> to vector<16x32xf32>
    %699 = arith.mulf %697, %698 : vector<16x32xf32>
    %700 = vector.broadcast %679 : vector<1x32xf32> to vector<16x32xf32>
    %701 = arith.addf %699, %700 : vector<16x32xf32>
    %c736 = arith.constant 736 : index
    %c0_170 = arith.constant 0 : index
    %702 = vector.load %arg5[%c736, %c0_170] : memref<864x128xbf16, #tpu.memory_space<vmem>>, vector<32x64xbf16>
    %703 = arith.truncf %701 : vector<16x32xf32> to vector<16x32xbf16>
    %cst_171 = arith.constant dense<0.000000e+00> : vector<16x64xf32>
    %704 = tpu.matmul %703, %702, %cst_171 {dimension_numbers = #tpu.dot_dimension_numbers<[1], [0], [0], [1], [0, 0, 1, 1], [], []>} : vector<16x32xbf16>, vector<32x64xbf16>, vector<16x64xf32> -> vector<16x64xf32>
    %c38 = arith.constant 38 : index
    %c0_172 = arith.constant 0 : index
    %705 = vector.load %arg6[%c38, %c0_172] : memref<48x128xf32, #tpu.memory_space<vmem>>, vector<1x64xf32>
    %706 = vector.broadcast %705 : vector<1x64xf32> to vector<16x64xf32>
    %707 = arith.addf %704, %706 : vector<16x64xf32>
    %cst_173 = arith.constant 0.000000e+00 : f32
    %708 = vector.broadcast %cst_173 : f32 to vector<16x64xf32>
    %709 = arith.maximumf %707, %708 : vector<16x64xf32>
    %c768 = arith.constant 768 : index
    %c0_174 = arith.constant 0 : index
    %710 = vector.load %arg5[%c768, %c0_174] : memref<864x128xbf16, #tpu.memory_space<vmem>>, vector<64x32xbf16>
    %711 = arith.truncf %709 : vector<16x64xf32> to vector<16x64xbf16>
    %cst_175 = arith.constant dense<0.000000e+00> : vector<16x32xf32>
    %712 = tpu.matmul %711, %710, %cst_175 {dimension_numbers = #tpu.dot_dimension_numbers<[1], [0], [0], [1], [0, 0, 1, 1], [], []>} : vector<16x64xbf16>, vector<64x32xbf16>, vector<16x32xf32> -> vector<16x32xf32>
    %c39 = arith.constant 39 : index
    %c0_176 = arith.constant 0 : index
    %713 = vector.load %arg6[%c39, %c0_176] : memref<48x128xf32, #tpu.memory_space<vmem>>, vector<1x32xf32>
    %714 = vector.broadcast %713 : vector<1x32xf32> to vector<16x32xf32>
    %715 = arith.addf %712, %714 : vector<16x32xf32>
    %716 = arith.addf %701, %715 : vector<16x32xf32>
    %c40 = arith.constant 40 : index
    %c0_177 = arith.constant 0 : index
    %717 = vector.load %arg6[%c40, %c0_177] : memref<48x128xf32, #tpu.memory_space<vmem>>, vector<1x32xf32>
    %c41 = arith.constant 41 : index
    %c0_178 = arith.constant 0 : index
    %718 = vector.load %arg6[%c41, %c0_178] : memref<48x128xf32, #tpu.memory_space<vmem>>, vector<1x32xf32>
    %cst_179 = arith.constant dense<0.000000e+00> : vector<16xf32>
    %719 = vector.multi_reduction <add>, %716, %cst_179 [1] : vector<16x32xf32> to vector<16xf32>
    %720 = vector.shape_cast %719 : vector<16xf32> to vector<16x1xf32>
    %cst_180 = arith.constant 3.200000e+01 : f32
    %721 = vector.broadcast %cst_180 : f32 to vector<16x1xf32>
    %722 = arith.divf %720, %721 : vector<16x1xf32>
    %723 = arith.mulf %716, %716 : vector<16x32xf32>
    %cst_181 = arith.constant dense<0.000000e+00> : vector<16xf32>
    %724 = vector.multi_reduction <add>, %723, %cst_181 [1] : vector<16x32xf32> to vector<16xf32>
    %725 = vector.shape_cast %724 : vector<16xf32> to vector<16x1xf32>
    %cst_182 = arith.constant 3.200000e+01 : f32
    %726 = vector.broadcast %cst_182 : f32 to vector<16x1xf32>
    %727 = arith.divf %725, %726 : vector<16x1xf32>
    %728 = arith.mulf %722, %722 : vector<16x1xf32>
    %729 = arith.subf %727, %728 : vector<16x1xf32>
    %730 = vector.broadcast %722 : vector<16x1xf32> to vector<16x32xf32>
    %731 = arith.subf %716, %730 : vector<16x32xf32>
    %cst_183 = arith.constant 9.99999974E-6 : f32
    %732 = vector.broadcast %cst_183 : f32 to vector<16x1xf32>
    %733 = arith.addf %729, %732 : vector<16x1xf32>
    %734 = math.rsqrt %733 : vector<16x1xf32>
    %735 = vector.broadcast %734 : vector<16x1xf32> to vector<16x32xf32>
    %736 = arith.mulf %731, %735 : vector<16x32xf32>
    %737 = vector.broadcast %717 : vector<1x32xf32> to vector<16x32xf32>
    %738 = arith.mulf %736, %737 : vector<16x32xf32>
    %739 = vector.broadcast %718 : vector<1x32xf32> to vector<16x32xf32>
    %740 = arith.addf %738, %739 : vector<16x32xf32>
    %c832 = arith.constant 832 : index
    %c0_184 = arith.constant 0 : index
    %741 = vector.load %arg5[%c832, %c0_184] : memref<864x128xbf16, #tpu.memory_space<vmem>>, vector<32x128xbf16>
    %742 = arith.truncf %740 : vector<16x32xf32> to vector<16x32xbf16>
    %cst_185 = arith.constant dense<0.000000e+00> : vector<16x128xf32>
    %743 = tpu.matmul %742, %741, %cst_185 {dimension_numbers = #tpu.dot_dimension_numbers<[1], [0], [0], [1], [0, 0, 1, 1], [], []>} : vector<16x32xbf16>, vector<32x128xbf16>, vector<16x128xf32> -> vector<16x128xf32>
    %c42 = arith.constant 42 : index
    %c0_186 = arith.constant 0 : index
    %744 = vector.load %arg6[%c42, %c0_186] : memref<48x128xf32, #tpu.memory_space<vmem>>, vector<1x128xf32>
    %745 = vector.broadcast %744 : vector<1x128xf32> to vector<16x128xf32>
    %746 = arith.addf %743, %745 : vector<16x128xf32>
    %c0_187 = arith.constant 0 : index
    %c0_188 = arith.constant 0 : index
    %747 = vector.load %arg7[%c0_187, %c0_188] : memref<16x128xf32, #tpu.memory_space<vmem>>, vector<16x128xf32>
    tpu.vector_store %arg7[%c0_187, %c0_188], %746 {strides = array<i32>} : memref<16x128xf32, #tpu.memory_space<vmem>>, vector<16x128xf32>,
    return
  }
}

</mosaic_0001>

<llo_original>
// kernel: transformer_forward.1
$region0: #{transformer_forward.1}
  #allocation0 [shape = 'u32[]', space=smem, size = 0x4, offset = 0x4, fixed_abs, tag = 'smem constant byte address 0x4 - core index']
  #allocation1 [shape = 'u32[144,128]{1,0:T(1,128)}', space=vmem, size = 0x12000, scoped, tag = 'internal scratch']
  %s0 = inlined_call_operand.vmem [shape: f32[16,32], index: 0, kind: input, shape index: {}]
  %s1 = inlined_call_operand.vmem [shape: f32[16,32], index: 1, kind: input, shape index: {}]
  %s2 = inlined_call_operand.vmem [shape: f32[8,8,8], index: 2, kind: input, shape index: {}, may-alias: {2,4}]
  %s3 = inlined_call_operand.vmem [shape: f32[8,8,8], index: 3, kind: input, shape index: {}]
  %s4 = inlined_call_operand.vmem [shape: f32[8,8,8], index: 4, kind: input, shape index: {}, may-alias: {2,4}]
  %s5 = inlined_call_operand.vmem [shape: bf16[864,128], index: 5, kind: input, shape index: {}]
  %s6 = inlined_call_operand.vmem [shape: f32[48,128], index: 6, kind: input, shape index: {}]
  %s7 = inlined_call_operand.hbm [shape: f32[16,128], index: 7, kind: output, shape index: {}]
  %s8 = sld [smem:[#allocation0]]
  $region38: #{transformer_forward.1} parent=0
    _
  %s10 = ssub.s32 1, %s8
  %s11 = scalar_select 0, %s10, %s8
  $region1: #{transformer_forward.1} parent=0
    #allocation2 [shape = 'u8[8192]{0}', space=vmem, size = 0x2000, scoped, tag = 'output window, operand 0, single buffered']
    #allocation3 [shape = 's32[1]{0}', space=sflag, size = 0x4, scoped, tag = 'scoped memory for transformer_forward.1']
    %12 = vsyncpa [#allocation3], 0
    // Predicated region
    $region2: #{transformer_forward.1} parent=1 // pred_check
      _
    $region3: #{transformer_forward.1} parent=1 // pred_check_branch
      %14 = sbr.rel (0) target = $region5
    $region4: #{transformer_forward.1} parent=1 // pred_region
      _
    $region5: #{transformer_forward.1} parent=1 // pred_fallthru
      _
    // Predicated region
    $region6: #{transformer_forward.1} parent=1 // pred_check
      _
    $region7: #{transformer_forward.1} parent=1 // pred_check_branch
      %16 = sbr.rel (0) target = $region9
    $region8: #{transformer_forward.1} parent=1 // pred_region
      _
    $region9: #{transformer_forward.1} parent=1 // pred_fallthru
      _
    // Predicated region
    $region10: #{transformer_forward.1} parent=1 // pred_check
      _
    $region11: #{transformer_forward.1} parent=1 // pred_check_branch
      %18 = sbr.rel (0) target = $region13
    $region12: #{transformer_forward.1} parent=1 // pred_region
      _
    $region13: #{transformer_forward.1} parent=1 // pred_fallthru
      _
    // Predicated region
    $region14: #{transformer_forward.1} parent=1 // pred_check
      _
    $region15: #{transformer_forward.1} parent=1 // pred_check_branch
      %20 = sbr.rel (0) target = $region17
    $region16: #{transformer_forward.1} parent=1 // pred_region
      _
    $region17: #{transformer_forward.1} parent=1 // pred_fallthru
      _
    // Predicated region
    $region18: #{transformer_forward.1} parent=1 // pred_check
      _
    $region19: #{transformer_forward.1} parent=1 // pred_check_branch
      %22 = sbr.rel (0) target = $region21
    $region20: #{transformer_forward.1} parent=1 // pred_region
      _
    $region21: #{transformer_forward.1} parent=1 // pred_fallthru
      _
    // Predicated region
    $region22: #{transformer_forward.1} parent=1 // pred_check
      _
    $region23: #{transformer_forward.1} parent=1 // pred_check_branch
      %24 = sbr.rel (0) target = $region25
    $region24: #{transformer_forward.1} parent=1 // pred_region
      _
    $region25: #{transformer_forward.1} parent=1 // pred_fallthru
      _
    // Predicated region
    $region26: #{transformer_forward.1} parent=1 // pred_check
      _
    $region27: #{transformer_forward.1} parent=1 // pred_check_branch
      %26 = sbr.rel (0) target = $region29
    $region28: #{transformer_forward.1} parent=1 // pred_region
      _
    $region29: #{transformer_forward.1} parent=1 // pred_fallthru
      _
    %v28 = vld [vmem:[%s0] sm:$0xff]
    %v29 = vld [vmem:[%s0 + $0x8] sm:$0xff]
    %v30 = vld [vmem:[%s2] sm:$0xff]
    %v31 = vld [vmem:[%s2 + $0x8] sm:$0xff]
    %v32 = vld [vmem:[%s2 + $0x10] sm:$0xff]
    %v33 = vld [vmem:[%s2 + $0x18] sm:$0xff]
    %v34 = vld [vmem:[%s2 + $0x20] sm:$0xff]
    %v35 = vld [vmem:[%s2 + $0x28] sm:$0xff]
    %v36 = vld [vmem:[%s2 + $0x30] sm:$0xff]
    %v37 = vld [vmem:[%s2 + $0x38] sm:$0xff]
    %v38 = vld [vmem:[%s5] sm:$0xf]
    %v39 = vld [vmem:[%s5 + $0x4] sm:$0xf]
    %v40 = vld [vmem:[%s5 + $0x8] sm:$0xf]
    %v41 = vld [vmem:[%s5 + $0xc] sm:$0xf]
    %v42 = vpack.c.bf16 %v29, %v28
    %v43 = vld [vmem:[%s6] sm:$0x1]
    %v44 = vlaneseq
    %v45 = vshrl.u32 %v44, 7
    %v46 = vsub.s32 0, %v45
    %v47 = vrot.slane %v43, %v46
    %v52 = vunpack.c.l.b16 %v38
    %v53 = vunpack.c.l.b16 %v39
    %v54 = vunpack.c.l.b16 %v40
    %v55 = vunpack.c.l.b16 %v41
    %v56 = vpack.c.b16 %v53, %v52
    %v57 = vpack.c.b16 %v55, %v54
    %vm60 = vcmask 261120
    %v62 = vsel %vm60, %v42, 0
    %64 = vmatprep.subr.bf16.mxu0 0
    %65 = vmatpush1.bf16.msra.mxu0 %v56
    %66 = vmatprep.subr.bf16.mxu0 0
    %67 = vmatpush1.bf16.msra.mxu0 %v57
    %68 = vmatprep.subr.bf16.mxu0 0
    %69 = vmatpush1.bf16.msra.mxu0 0
    %70 = vmatprep.subr.bf16.mxu0 0
    %71 = vmatpush1.bf16.msra.mxu0 0
    %72 = vmatprep.subr.bf16.mxu0 0
    %73 = vmatpush1.bf16.msra.mxu0 0
    %74 = vmatprep.subr.bf16.mxu0 0
    %75 = vmatpush1.bf16.msra.mxu0 0
    %76 = vmatprep.subr.bf16.mxu0 0
    %77 = vmatpush1.bf16.msra.mxu0 0
    %78 = vmatprep.subr.bf16.mxu0 0
    %79 = vmatpush1.bf16.msra.mxu0 0
    %80 = vmatprep.subr.bf16.mxu0 0
    %81 = vmatpush1.bf16.msra.mxu0 0
    %82 = vmatprep.subr.bf16.mxu0 0
    %83 = vmatpush1.bf16.msra.mxu0 0
    %84 = vmatprep.subr.bf16.mxu0 0
    %85 = vmatpush1.bf16.msra.mxu0 0
    %86 = vmatprep.subr.bf16.mxu0 0
    %87 = vmatpush1.bf16.msra.mxu0 0
    %88 = vmatprep.subr.bf16.mxu0 0
    %89 = vmatpush1.bf16.msra.mxu0 0
    %90 = vmatprep.subr.bf16.mxu0 0
    %91 = vmatpush1.bf16.msra.mxu0 0
    %92 = vmatprep.subr.bf16.mxu0 0
    %93 = vmatpush1.bf16.msra.mxu0 0
    %94 = vmatprep.subr.bf16.mxu0 0
    %95 = vmatpush1.bf16.msra.mxu0 0
    %96 = vmatprep.mubr.bf16.mxu0 0
    %97 = vmatmul.mubr.bf16.gmra.mrb[0].mxu0 %v62
    %v98 = vpop.f32.mrb[0].mxu0
    %v99 = vadd.f32 %v47, %v98
    %v100 = vpop.f32.mrb[0].mxu0
    %v101 = vpop.f32.mrb[0].mxu0
    %v102 = vadd.f32 %v47, %v101
    %v103 = vpop.f32.mrb[0].mxu0
    %104 = vdwg.mxu0
    %107 = vrot.lane.b32.xlu0 %v99, 120
    %v108 = vpop.permute.xlu0 %107
    %109 = vrot.lane.b32.xlu0 %v102, 120
    %v110 = vpop.permute.xlu0 %109
    %113 = vrot.lane.b32.xlu0 %v99, 112
    %v114 = vpop.permute.xlu0 %113
    %115 = vrot.lane.b32.xlu0 %v102, 112
    %v116 = vpop.permute.xlu0 %115
    %119 = vrot.lane.b32.xlu0 %v99, 104
    %v120 = vpop.permute.xlu0 %119
    %121 = vrot.lane.b32.xlu0 %v102, 104
    %v122 = vpop.permute.xlu0 %121
    %v125 = vpack.c.bf16 %v99, %v99
    %v126 = vpack.c.bf16 %v102, %v102
    %v127 = vpack.c.bf16 %v108, %v108
    %v128 = vpack.c.bf16 %v110, %v110
    %v129 = vpack.c.bf16 %v114, %v114
    %v130 = vpack.c.bf16 %v116, %v116
    %v131 = vpack.c.bf16 %v120, %v120
    %v132 = vpack.c.bf16 %v122, %v122
    %134 = vrot.lane.b32.xlu0 %v125, 96
    %v135 = vpop.permute.xlu0 %134
    %vm136 = vcmask 64512
    %v138 = vsel %vm136, %v125, 0
    %v141 = vsel %vm136, %v135, 0
    %143 = vmatprep.subr.bf16.mxu0 0
    %144 = vmatpush1.bf16.xpose.msra.mxu0 %v141
    %145 = vmatprep.subr.bf16.mxu0 0
    %146 = vmatpush1.bf16.xpose.msra.mxu0 0
    %147 = vmatprep.subr.bf16.mxu0 0
    %148 = vmatpush1.bf16.xpose.msra.mxu0 0
    %149 = vmatprep.subr.bf16.mxu0 0
    %150 = vmatpush1.bf16.xpose.msra.mxu0 0
    %151 = vmatprep.subr.bf16.mxu0 0
    %152 = vmatpush1.bf16.xpose.msra.mxu0 0
    %153 = vmatprep.subr.bf16.mxu0 0
    %154 = vmatpush1.bf16.xpose.msra.mxu0 0
    %155 = vmatprep.subr.bf16.mxu0 0
    %156 = vmatpush1.bf16.xpose.msra.mxu0 0
    %157 = vmatprep.subr.bf16.mxu0 0
    %158 = vmatpush1.bf16.xpose.msra.mxu0 0
    %159 = vmatprep.subr.bf16.mxu0 0
    %160 = vmatpush1.bf16.xpose.msra.mxu0 0
    %161 = vmatprep.subr.bf16.mxu0 0
    %162 = vmatpush1.bf16.xpose.msra.mxu0 0
    %163 = vmatprep.subr.bf16.mxu0 0
    %164 = vmatpush1.bf16.xpose.msra.mxu0 0
    %165 = vmatprep.subr.bf16.mxu0 0
    %166 = vmatpush1.bf16.xpose.msra.mxu0 0
    %167 = vmatprep.subr.bf16.mxu0 0
    %168 = vmatpush1.bf16.xpose.msra.mxu0 0
    %169 = vmatprep.subr.bf16.mxu0 0
    %170 = vmatpush1.bf16.xpose.msra.mxu0 0
    %171 = vmatprep.subr.bf16.mxu0 0
    %172 = vmatpush1.bf16.xpose.msra.mxu0 0
    %173 = vmatprep.subr.bf16.mxu0 0
    %174 = vmatpush1.bf16.xpose.msra.mxu0 0
    %175 = vmatprep.mubr.bf16.mxu0 0
    %176 = vmatmul.mubr.bf16.gmra.mrb[0].mxu0 %v138
    %v177 = vpop.f32.mrb[0].mxu0
    %v178 = vadd.f32 0.0, %v177
    %v179 = vpop.f32.mrb[0].mxu0
    %v180 = vpop.f32.mrb[0].mxu0
    %v181 = vpop.f32.mrb[0].mxu0
    %182 = vdwg.mxu0
    %184 = vrot.lane.b32.xlu0 %v126, 96
    %v185 = vpop.permute.xlu0 %184
    %v187 = vsel %vm136, %v126, 0
    %v190 = vsel %vm136, %v185, 0
    %192 = vmatprep.subr.bf16.mxu0 0
    %193 = vmatpush1.bf16.xpose.msra.mxu0 %v190
    %194 = vmatprep.subr.bf16.mxu0 0
    %195 = vmatpush1.bf16.xpose.msra.mxu0 0
    %196 = vmatprep.subr.bf16.mxu0 0
    %197 = vmatpush1.bf16.xpose.msra.mxu0 0
    %198 = vmatprep.subr.bf16.mxu0 0
    %199 = vmatpush1.bf16.xpose.msra.mxu0 0
    %200 = vmatprep.subr.bf16.mxu0 0
    %201 = vmatpush1.bf16.xpose.msra.mxu0 0
    %202 = vmatprep.subr.bf16.mxu0 0
    %203 = vmatpush1.bf16.xpose.msra.mxu0 0
    %204 = vmatprep.subr.bf16.mxu0 0
    %205 = vmatpush1.bf16.xpose.msra.mxu0 0
    %206 = vmatprep.subr.bf16.mxu0 0
    %207 = vmatpush1.bf16.xpose.msra.mxu0 0
    %208 = vmatprep.subr.bf16.mxu0 0
    %209 = vmatpush1.bf16.xpose.msra.mxu0 0
    %210 = vmatprep.subr.bf16.mxu0 0
    %211 = vmatpush1.bf16.xpose.msra.mxu0 0
    %212 = vmatprep.subr.bf16.mxu0 0
    %213 = vmatpush1.bf16.xpose.msra.mxu0 0
    %214 = vmatprep.subr.bf16.mxu0 0
    %215 = vmatpush1.bf16.xpose.msra.mxu0 0
    %216 = vmatprep.subr.bf16.mxu0 0
    %217 = vmatpush1.bf16.xpose.msra.mxu0 0
    %218 = vmatprep.subr.bf16.mxu0 0
    %219 = vmatpush1.bf16.xpose.msra.mxu0 0
    %220 = vmatprep.subr.bf16.mxu0 0
    %221 = vmatpush1.bf16.xpose.msra.mxu0 0
    %222 = vmatprep.subr.bf16.mxu0 0
    %223 = vmatpush1.bf16.xpose.msra.mxu0 0
    %224 = vmatprep.mubr.bf16.mxu0 0
    %225 = vmatmul.mubr.bf16.gmra.mrb[0].mxu0 %v187
    %v226 = vpop.f32.mrb[0].mxu0
    %v227 = vadd.f32 0.0, %v226
    %v228 = vpop.f32.mrb[0].mxu0
    %v229 = vpop.f32.mrb[0].mxu0
    %v230 = vpop.f32.mrb[0].mxu0
    %231 = vdwg.mxu0
    %233 = vrot.lane.b32.xlu0 %v127, 96
    %v234 = vpop.permute.xlu0 %233
    %v236 = vsel %vm136, %v127, 0
    %v239 = vsel %vm136, %v234, 0
    %241 = vmatprep.subr.bf16.mxu0 0
    %242 = vmatpush1.bf16.xpose.msra.mxu0 %v239
    %243 = vmatprep.subr.bf16.mxu0 0
    %244 = vmatpush1.bf16.xpose.msra.mxu0 0
    %245 = vmatprep.subr.bf16.mxu0 0
    %246 = vmatpush1.bf16.xpose.msra.mxu0 0
    %247 = vmatprep.subr.bf16.mxu0 0
    %248 = vmatpush1.bf16.xpose.msra.mxu0 0
    %249 = vmatprep.subr.bf16.mxu0 0
    %250 = vmatpush1.bf16.xpose.msra.mxu0 0
    %251 = vmatprep.subr.bf16.mxu0 0
    %252 = vmatpush1.bf16.xpose.msra.mxu0 0
    %253 = vmatprep.subr.bf16.mxu0 0
    %254 = vmatpush1.bf16.xpose.msra.mxu0 0
    %255 = vmatprep.subr.bf16.mxu0 0
    %256 = vmatpush1.bf16.xpose.msra.mxu0 0
    %257 = vmatprep.subr.bf16.mxu0 0
    %258 = vmatpush1.bf16.xpose.msra.mxu0 0
    %259 = vmatprep.subr.bf16.mxu0 0
    %260 = vmatpush1.bf16.xpose.msra.mxu0 0
    %261 = vmatprep.subr.bf16.mxu0 0
    %262 = vmatpush1.bf16.xpose.msra.mxu0 0
    %263 = vmatprep.subr.bf16.mxu0 0
    %264 = vmatpush1.bf16.xpose.msra.mxu0 0
    %265 = vmatprep.subr.bf16.mxu0 0
    %266 = vmatpush1.bf16.xpose.msra.mxu0 0
    %267 = vmatprep.subr.bf16.mxu0 0
    %268 = vmatpush1.bf16.xpose.msra.mxu0 0
    %269 = vmatprep.subr.bf16.mxu0 0
    %270 = vmatpush1.bf16.xpose.msra.mxu0 0
    %271 = vmatprep.subr.bf16.mxu0 0
    %272 = vmatpush1.bf16.xpose.msra.mxu0 0
    %273 = vmatprep.mubr.bf16.mxu0 0
    %274 = vmatmul.mubr.bf16.gmra.mrb[0].mxu0 %v236
    %v275 = vpop.f32.mrb[0].mxu0
    %v276 = vadd.f32 0.0, %v275
    %v277 = vpop.f32.mrb[0].mxu0
    %v278 = vpop.f32.mrb[0].mxu0
    %v279 = vpop.f32.mrb[0].mxu0
    %280 = vdwg.mxu0
    %282 = vrot.lane.b32.xlu0 %v128, 96
    %v283 = vpop.permute.xlu0 %282
    %v285 = vsel %vm136, %v128, 0
    %v288 = vsel %vm136, %v283, 0
    %290 = vmatprep.subr.bf16.mxu0 0
    %291 = vmatpush1.bf16.xpose.msra.mxu0 %v288
    %292 = vmatprep.subr.bf16.mxu0 0
    %293 = vmatpush1.bf16.xpose.msra.mxu0 0
    %294 = vmatprep.subr.bf16.mxu0 0
    %295 = vmatpush1.bf16.xpose.msra.mxu0 0
    %296 = vmatprep.subr.bf16.mxu0 0
    %297 = vmatpush1.bf16.xpose.msra.mxu0 0
    %298 = vmatprep.subr.bf16.mxu0 0
    %299 = vmatpush1.bf16.xpose.msra.mxu0 0
    %300 = vmatprep.subr.bf16.mxu0 0
    %301 = vmatpush1.bf16.xpose.msra.mxu0 0
    %302 = vmatprep.subr.bf16.mxu0 0
    %303 = vmatpush1.bf16.xpose.msra.mxu0 0
    %304 = vmatprep.subr.bf16.mxu0 0
    %305 = vmatpush1.bf16.xpose.msra.mxu0 0
    %306 = vmatprep.subr.bf16.mxu0 0
    %307 = vmatpush1.bf16.xpose.msra.mxu0 0
    %308 = vmatprep.subr.bf16.mxu0 0
    %309 = vmatpush1.bf16.xpose.msra.mxu0 0
    %310 = vmatprep.subr.bf16.mxu0 0
    %311 = vmatpush1.bf16.xpose.msra.mxu0 0
    %312 = vmatprep.subr.bf16.mxu0 0
    %313 = vmatpush1.bf16.xpose.msra.mxu0 0
    %314 = vmatprep.subr.bf16.mxu0 0
    %315 = vmatpush1.bf16.xpose.msra.mxu0 0
    %316 = vmatprep.subr.bf16.mxu0 0
    %317 = vmatpush1.bf16.xpose.msra.mxu0 0
    %318 = vmatprep.subr.bf16.mxu0 0
    %319 = vmatpush1.bf16.xpose.msra.mxu0 0
    %320 = vmatprep.subr.bf16.mxu0 0
    %321 = vmatpush1.bf16.xpose.msra.mxu0 0
    %322 = vmatprep.mubr.bf16.mxu0 0
    %323 = vmatmul.mubr.bf16.gmra.mrb[0].mxu0 %v285
    %v324 = vpop.f32.mrb[0].mxu0
    %v325 = vadd.f32 0.0, %v324
    %v326 = vpop.f32.mrb[0].mxu0
    %v327 = vpop.f32.mrb[0].mxu0
    %v328 = vpop.f32.mrb[0].mxu0
    %329 = vdwg.mxu0
    %331 = vrot.lane.b32.xlu0 %v129, 96
    %v332 = vpop.permute.xlu0 %331
    %v334 = vsel %vm136, %v129, 0
    %v337 = vsel %vm136, %v332, 0
    %339 = vmatprep.subr.bf16.mxu0 0
    %340 = vmatpush1.bf16.xpose.msra.mxu0 %v337
    %341 = vmatprep.subr.bf16.mxu0 0
    %342 = vmatpush1.bf16.xpose.msra.mxu0 0
    %343 = vmatprep.subr.bf16.mxu0 0
    %344 = vmatpush1.bf16.xpose.msra.mxu0 0
    %345 = vmatprep.subr.bf16.mxu0 0
    %346 = vmatpush1.bf16.xpose.msra.mxu0 0
    %347 = vmatprep.subr.bf16.mxu0 0
    %348 = vmatpush1.bf16.xpose.msra.mxu0 0
    %349 = vmatprep.subr.bf16.mxu0 0
    %350 = vmatpush1.bf16.xpose.msra.mxu0 0
    %351 = vmatprep.subr.bf16.mxu0 0
    %352 = vmatpush1.bf16.xpose.msra.mxu0 0
    %353 = vmatprep.subr.bf16.mxu0 0
    %354 = vmatpush1.bf16.xpose.msra.mxu0 0
    %355 = vmatprep.subr.bf16.mxu0 0
    %356 = vmatpush1.bf16.xpose.msra.mxu0 0
    %357 = vmatprep.subr.bf16.mxu0 0
    %358 = vmatpush1.bf16.xpose.msra.mxu0 0
    %359 = vmatprep.subr.bf16.mxu0 0
    %360 = vmatpush1.bf16.xpose.msra.mxu0 0
    %361 = vmatprep.subr.bf16.mxu0 0
    %362 = vmatpush1.bf16.xpose.msra.mxu0 0
    %363 = vmatprep.subr.bf16.mxu0 0
    %364 = vmatpush1.bf16.xpose.msra.mxu0 0
    %365 = vmatprep.subr.bf16.mxu0 0
    %366 = vmatpush1.bf16.xpose.msra.mxu0 0
    %367 = vmatprep.subr.bf16.mxu0 0
    %368 = vmatpush1.bf16.xpose.msra.mxu0 0
    %369 = vmatprep.subr.bf16.mxu0 0
    %370 = vmatpush1.bf16.xpose.msra.mxu0 0
    %371 = vmatprep.mubr.bf16.mxu0 0
    %372 = vmatmul.mubr.bf16.gmra.mrb[0].mxu0 %v334
    %v373 = vpop.f32.mrb[0].mxu0
    %v374 = vadd.f32 0.0, %v373
    %v375 = vpop.f32.mrb[0].mxu0
    %v376 = vpop.f32.mrb[0].mxu0
    %v377 = vpop.f32.mrb[0].mxu0
    %378 = vdwg.mxu0
    %380 = vrot.lane.b32.xlu0 %v130, 96
    %v381 = vpop.permute.xlu0 %380
    %v383 = vsel %vm136, %v130, 0
    %v386 = vsel %vm136, %v381, 0
    %388 = vmatprep.subr.bf16.mxu0 0
    %389 = vmatpush1.bf16.xpose.msra.mxu0 %v386
    %390 = vmatprep.subr.bf16.mxu0 0
    %391 = vmatpush1.bf16.xpose.msra.mxu0 0
    %392 = vmatprep.subr.bf16.mxu0 0
    %393 = vmatpush1.bf16.xpose.msra.mxu0 0
    %394 = vmatprep.subr.bf16.mxu0 0
    %395 = vmatpush1.bf16.xpose.msra.mxu0 0
    %396 = vmatprep.subr.bf16.mxu0 0
    %397 = vmatpush1.bf16.xpose.msra.mxu0 0
    %398 = vmatprep.subr.bf16.mxu0 0
    %399 = vmatpush1.bf16.xpose.msra.mxu0 0
    %400 = vmatprep.subr.bf16.mxu0 0
    %401 = vmatpush1.bf16.xpose.msra.mxu0 0
    %402 = vmatprep.subr.bf16.mxu0 0
    %403 = vmatpush1.bf16.xpose.msra.mxu0 0
    %404 = vmatprep.subr.bf16.mxu0 0
    %405 = vmatpush1.bf16.xpose.msra.mxu0 0
    %406 = vmatprep.subr.bf16.mxu0 0
    %407 = vmatpush1.bf16.xpose.msra.mxu0 0
    %408 = vmatprep.subr.bf16.mxu0 0
    %409 = vmatpush1.bf16.xpose.msra.mxu0 0
    %410 = vmatprep.subr.bf16.mxu0 0
    %411 = vmatpush1.bf16.xpose.msra.mxu0 0
    %412 = vmatprep.subr.bf16.mxu0 0
    %413 = vmatpush1.bf16.xpose.msra.mxu0 0
    %414 = vmatprep.subr.bf16.mxu0 0
    %415 = vmatpush1.bf16.xpose.msra.mxu0 0
    %416 = vmatprep.subr.bf16.mxu0 0
    %417 = vmatpush1.bf16.xpose.msra.mxu0 0
    %418 = vmatprep.subr.bf16.mxu0 0
    %419 = vmatpush1.bf16.xpose.msra.mxu0 0
    %420 = vmatprep.mubr.bf16.mxu0 0
    %421 = vmatmul.mubr.bf16.gmra.mrb[0].mxu0 %v383
    %v422 = vpop.f32.mrb[0].mxu0
    %v423 = vadd.f32 0.0, %v422
    %v424 = vpop.f32.mrb[0].mxu0
    %v425 = vpop.f32.mrb[0].mxu0
    %v426 = vpop.f32.mrb[0].mxu0
    %427 = vdwg.mxu0
    %429 = vrot.lane.b32.xlu0 %v131, 96
    %v430 = vpop.permute.xlu0 %429
    %v432 = vsel %vm136, %v131, 0
    %v435 = vsel %vm136, %v430, 0
    %437 = vmatprep.subr.bf16.mxu0 0
    %438 = vmatpush1.bf16.xpose.msra.mxu0 %v435
    %439 = vmatprep.subr.bf16.mxu0 0
    %440 = vmatpush1.bf16.xpose.msra.mxu0 0
    %441 = vmatprep.subr.bf16.mxu0 0
    %442 = vmatpush1.bf16.xpose.msra.mxu0 0
    %443 = vmatprep.subr.bf16.mxu0 0
    %444 = vmatpush1.bf16.xpose.msra.mxu0 0
    %445 = vmatprep.subr.bf16.mxu0 0
    %446 = vmatpush1.bf16.xpose.msra.mxu0 0
    %447 = vmatprep.subr.bf16.mxu0 0
    %448 = vmatpush1.bf16.xpose.msra.mxu0 0
    %449 = vmatprep.subr.bf16.mxu0 0
    %450 = vmatpush1.bf16.xpose.msra.mxu0 0
    %451 = vmatprep.subr.bf16.mxu0 0
    %452 = vmatpush1.bf16.xpose.msra.mxu0 0
    %453 = vmatprep.subr.bf16.mxu0 0
    %454 = vmatpush1.bf16.xpose.msra.mxu0 0
    %455 = vmatprep.subr.bf16.mxu0 0
    %456 = vmatpush1.bf16.xpose.msra.mxu0 0
    %457 = vmatprep.subr.bf16.mxu0 0
    %458 = vmatpush1.bf16.xpose.msra.mxu0 0
    %459 = vmatprep.subr.bf16.mxu0 0
    %460 = vmatpush1.bf16.xpose.msra.mxu0 0
    %461 = vmatprep.subr.bf16.mxu0 0
    %462 = vmatpush1.bf16.xpose.msra.mxu0 0
    %463 = vmatprep.subr.bf16.mxu0 0
    %464 = vmatpush1.bf16.xpose.msra.mxu0 0
    %465 = vmatprep.subr.bf16.mxu0 0
    %466 = vmatpush1.bf16.xpose.msra.mxu0 0
    %467 = vmatprep.subr.bf16.mxu0 0
    %468 = vmatpush1.bf16.xpose.msra.mxu0 0
    %469 = vmatprep.mubr.bf16.mxu0 0
    %470 = vmatmul.mubr.bf16.gmra.mrb[0].mxu0 %v432
    %v471 = vpop.f32.mrb[0].mxu0
    %v472 = vadd.f32 0.0, %v471
    %v473 = vpop.f32.mrb[0].mxu0
    %v474 = vpop.f32.mrb[0].mxu0
    %v475 = vpop.f32.mrb[0].mxu0
    %476 = vdwg.mxu0
    %478 = vrot.lane.b32.xlu0 %v132, 96
    %v479 = vpop.permute.xlu0 %478
    %v481 = vsel %vm136, %v132, 0
    %v484 = vsel %vm136, %v479, 0
    %486 = vmatprep.subr.bf16.mxu0 0
    %487 = vmatpush1.bf16.xpose.msra.mxu0 %v484
    %488 = vmatprep.subr.bf16.mxu0 0
    %489 = vmatpush1.bf16.xpose.msra.mxu0 0
    %490 = vmatprep.subr.bf16.mxu0 0
    %491 = vmatpush1.bf16.xpose.msra.mxu0 0
    %492 = vmatprep.subr.bf16.mxu0 0
    %493 = vmatpush1.bf16.xpose.msra.mxu0 0
    %494 = vmatprep.subr.bf16.mxu0 0
    %495 = vmatpush1.bf16.xpose.msra.mxu0 0
    %496 = vmatprep.subr.bf16.mxu0 0
    %497 = vmatpush1.bf16.xpose.msra.mxu0 0
    %498 = vmatprep.subr.bf16.mxu0 0
    %499 = vmatpush1.bf16.xpose.msra.mxu0 0
    %500 = vmatprep.subr.bf16.mxu0 0
    %501 = vmatpush1.bf16.xpose.msra.mxu0 0
    %502 = vmatprep.subr.bf16.mxu0 0
    %503 = vmatpush1.bf16.xpose.msra.mxu0 0
    %504 = vmatprep.subr.bf16.mxu0 0
    %505 = vmatpush1.bf16.xpose.msra.mxu0 0
    %506 = vmatprep.subr.bf16.mxu0 0
    %507 = vmatpush1.bf16.xpose.msra.mxu0 0
    %508 = vmatprep.subr.bf16.mxu0 0
    %509 = vmatpush1.bf16.xpose.msra.mxu0 0
    %510 = vmatprep.subr.bf16.mxu0 0
    %511 = vmatpush1.bf16.xpose.msra.mxu0 0
    %512 = vmatprep.subr.bf16.mxu0 0
    %513 = vmatpush1.bf16.xpose.msra.mxu0 0
    %514 = vmatprep.subr.bf16.mxu0 0
    %515 = vmatpush1.bf16.xpose.msra.mxu0 0
    %516 = vmatprep.subr.bf16.mxu0 0
    %517 = vmatpush1.bf16.xpose.msra.mxu0 0
    %518 = vmatprep.mubr.bf16.mxu0 0
    %519 = vmatmul.mubr.bf16.gmra.mrb[0].mxu0 %v481
    %v520 = vpop.f32.mrb[0].mxu0
    %v521 = vadd.f32 0.0, %v520
    %v522 = vpop.f32.mrb[0].mxu0
    %v523 = vpop.f32.mrb[0].mxu0
    %v524 = vpop.f32.mrb[0].mxu0
    %525 = vdwg.mxu0
    %v526 = vmul.f32 %v178, 0.35355338
    %v527 = vmul.f32 %v227, 0.35355338
    %v528 = vmul.f32 %v276, 0.35355338
    %v529 = vmul.f32 %v325, 0.35355338
    %v530 = vmul.f32 %v374, 0.35355338
    %v531 = vmul.f32 %v423, 0.35355338
    %v532 = vmul.f32 %v472, 0.35355338
    %v533 = vmul.f32 %v521, 0.35355338
    %v534 = vadd.f32 %v526, %v30
    %v535 = vadd.f32 %v527, %v31
    %v536 = vadd.f32 %v528, %v32
    %v537 = vadd.f32 %v529, %v33
    %v538 = vadd.f32 %v530, %v34
    %v539 = vadd.f32 %v531, %v35
    %v540 = vadd.f32 %v532, %v36
    %v541 = vadd.f32 %v533, %v37
    %v542 = vsel %vm136, %v534, -inf
    %543 = vmax.xlane.f32.xlu0 %v542
    %v544 = vpop.xlane.xlu0 %543
    %v545 = vsel %vm136, %v535, -inf
    %546 = vmax.xlane.f32.xlu0 %v545
    %v547 = vpop.xlane.xlu0 %546
    %v548 = vsel %vm136, %v536, -inf
    %549 = vmax.xlane.f32.xlu0 %v548
    %v550 = vpop.xlane.xlu0 %549
    %v551 = vsel %vm136, %v537, -inf
    %552 = vmax.xlane.f32.xlu0 %v551
    %v553 = vpop.xlane.xlu0 %552
    %v554 = vsel %vm136, %v538, -inf
    %555 = vmax.xlane.f32.xlu0 %v554
    %v556 = vpop.xlane.xlu0 %555
    %v557 = vsel %vm136, %v539, -inf
    %558 = vmax.xlane.f32.xlu0 %v557
    %v559 = vpop.xlane.xlu0 %558
    %v560 = vsel %vm136, %v540, -inf
    %561 = vmax.xlane.f32.xlu0 %v560
    %v562 = vpop.xlane.xlu0 %561
    %v563 = vsel %vm136, %v541, -inf
    %564 = vmax.xlane.f32.xlu0 %v563
    %v565 = vpop.xlane.xlu0 %564
    %v566 = vsub.f32 %v534, %v544
    %v567 = vsub.f32 %v535, %v547
    %v568 = vsub.f32 %v536, %v550
    %v569 = vsub.f32 %v537, %v553
    %v570 = vsub.f32 %v538, %v556
    %v571 = vsub.f32 %v539, %v559
    %v572 = vsub.f32 %v540, %v562
    %v573 = vsub.f32 %v541, %v565
    %v574 = vmul.f32 %v566, 1.442695
    %v575 = vpow.pop %v574
    %v576 = vmul.f32 %v567, 1.442695
    %v577 = vpow.pop %v576
    %v578 = vmul.f32 %v568, 1.442695
    %v579 = vpow.pop %v578
    %v580 = vmul.f32 %v569, 1.442695
    %v581 = vpow.pop %v580
    %v582 = vmul.f32 %v570, 1.442695
    %v583 = vpow.pop %v582
    %v584 = vmul.f32 %v571, 1.442695
    %v585 = vpow.pop %v584
    %v586 = vmul.f32 %v572, 1.442695
    %v587 = vpow.pop %v586
    %v588 = vmul.f32 %v573, 1.442695
    %v589 = vpow.pop %v588
    %v590 = vsel %vm136, %v575, 0.0
    %591 = vadd.xlane.f32.xlu0 %v590
    %v592 = vpop.xlane.xlu0 %591
    %v593 = vsel %vm136, %v577, 0.0
    %594 = vadd.xlane.f32.xlu0 %v593
    %v595 = vpop.xlane.xlu0 %594
    %v596 = vsel %vm136, %v579, 0.0
    %597 = vadd.xlane.f32.xlu0 %v596
    %v598 = vpop.xlane.xlu0 %597
    %v599 = vsel %vm136, %v581, 0.0
    %600 = vadd.xlane.f32.xlu0 %v599
    %v601 = vpop.xlane.xlu0 %600
    %v602 = vsel %vm136, %v583, 0.0
    %603 = vadd.xlane.f32.xlu0 %v602
    %v604 = vpop.xlane.xlu0 %603
    %v605 = vsel %vm136, %v585, 0.0
    %606 = vadd.xlane.f32.xlu0 %v605
    %v607 = vpop.xlane.xlu0 %606
    %v608 = vsel %vm136, %v587, 0.0
    %609 = vadd.xlane.f32.xlu0 %v608
    %v610 = vpop.xlane.xlu0 %609
    %v611 = vsel %vm136, %v589, 0.0
    %612 = vadd.xlane.f32.xlu0 %v611
    %v613 = vpop.xlane.xlu0 %612
    %v614 = vrcp.pop %v592
    %v615 = vrcp.pop %v595
    %v616 = vrcp.pop %v598
    %v617 = vrcp.pop %v601
    %v618 = vrcp.pop %v604
    %v619 = vrcp.pop %v607
    %v620 = vrcp.pop %v610
    %v621 = vrcp.pop %v613
    %v622 = vmul.f32 %v575, %v614
    %v623 = vmul.f32 %v577, %v615
    %v624 = vmul.f32 %v579, %v616
    %v625 = vmul.f32 %v581, %v617
    %v626 = vmul.f32 %v583, %v618
    %v627 = vmul.f32 %v585, %v619
    %v628 = vmul.f32 %v587, %v620
    %v629 = vmul.f32 %v589, %v621
    %v630 = vpack.c.bf16 %v622, %v622
    %v631 = vpack.c.bf16 %v623, %v623
    %v632 = vpack.c.bf16 %v624, %v624
    %v633 = vpack.c.bf16 %v625, %v625
    %v634 = vpack.c.bf16 %v626, %v626
    %v635 = vpack.c.bf16 %v627, %v627
    %v636 = vpack.c.bf16 %v628, %v628
    %v637 = vpack.c.bf16 %v629, %v629
    %638 = vrot.lane.b32.xlu0 %v125, 64
    %v639 = vpop.permute.xlu0 %638
    %v641 = vsel %vm136, %v630, 0
    %vm643 = vcmask 1043456
    %v645 = vsel %vm643, %v639, 0
    %647 = vmatprep.subr.bf16.mxu0 0
    %648 = vmatpush1.bf16.msra.mxu0 %v645
    %649 = vmatprep.subr.bf16.mxu0 0
    %650 = vmatpush1.bf16.msra.mxu0 0
    %651 = vmatprep.subr.bf16.mxu0 0
    %652 = vmatpush1.bf16.msra.mxu0 0
    %653 = vmatprep.subr.bf16.mxu0 0
    %654 = vmatpush1.bf16.msra.mxu0 0
    %655 = vmatprep.subr.bf16.mxu0 0
    %656 = vmatpush1.bf16.msra.mxu0 0
    %657 = vmatprep.subr.bf16.mxu0 0
    %658 = vmatpush1.bf16.msra.mxu0 0
    %659 = vmatprep.subr.bf16.mxu0 0
    %660 = vmatpush1.bf16.msra.mxu0 0
    %661 = vmatprep.subr.bf16.mxu0 0
    %662 = vmatpush1.bf16.msra.mxu0 0
    %663 = vmatprep.subr.bf16.mxu0 0
    %664 = vmatpush1.bf16.msra.mxu0 0
    %665 = vmatprep.subr.bf16.mxu0 0
    %666 = vmatpush1.bf16.msra.mxu0 0
    %667 = vmatprep.subr.bf16.mxu0 0
    %668 = vmatpush1.bf16.msra.mxu0 0
    %669 = vmatprep.subr.bf16.mxu0 0
    %670 = vmatpush1.bf16.msra.mxu0 0
    %671 = vmatprep.subr.bf16.mxu0 0
    %672 = vmatpush1.bf16.msra.mxu0 0
    %673 = vmatprep.subr.bf16.mxu0 0
    %674 = vmatpush1.bf16.msra.mxu0 0
    %675 = vmatprep.subr.bf16.mxu0 0
    %676 = vmatpush1.bf16.msra.mxu0 0
    %677 = vmatprep.subr.bf16.mxu0 0
    %678 = vmatpush1.bf16.msra.mxu0 0
    %679 = vmatprep.mubr.bf16.mxu0 0
    %680 = vmatmul.mubr.bf16.gmra.mrb[0].mxu0 %v641
    %v681 = vpop.f32.mrb[0].mxu0
    %v682 = vadd.f32 0.0, %v681
    %v683 = vpop.f32.mrb[0].mxu0
    %v684 = vpop.f32.mrb[0].mxu0
    %v685 = vpop.f32.mrb[0].mxu0
    %686 = vdwg.mxu0
    %687 = vrot.lane.b32.xlu0 %v126, 64
    %v688 = vpop.permute.xlu0 %687
    %v690 = vsel %vm136, %v631, 0
    %v693 = vsel %vm643, %v688, 0
    %695 = vmatprep.subr.bf16.mxu0 0
    %696 = vmatpush1.bf16.msra.mxu0 %v693
    %697 = vmatprep.subr.bf16.mxu0 0
    %698 = vmatpush1.bf16.msra.mxu0 0
    %699 = vmatprep.subr.bf16.mxu0 0
    %700 = vmatpush1.bf16.msra.mxu0 0
    %701 = vmatprep.subr.bf16.mxu0 0
    %702 = vmatpush1.bf16.msra.mxu0 0
    %703 = vmatprep.subr.bf16.mxu0 0
    %704 = vmatpush1.bf16.msra.mxu0 0
    %705 = vmatprep.subr.bf16.mxu0 0
    %706 = vmatpush1.bf16.msra.mxu0 0
    %707 = vmatprep.subr.bf16.mxu0 0
    %708 = vmatpush1.bf16.msra.mxu0 0
    %709 = vmatprep.subr.bf16.mxu0 0
    %710 = vmatpush1.bf16.msra.mxu0 0
    %711 = vmatprep.subr.bf16.mxu0 0
    %712 = vmatpush1.bf16.msra.mxu0 0
    %713 = vmatprep.subr.bf16.mxu0 0
    %714 = vmatpush1.bf16.msra.mxu0 0
    %715 = vmatprep.subr.bf16.mxu0 0
    %716 = vmatpush1.bf16.msra.mxu0 0
    %717 = vmatprep.subr.bf16.mxu0 0
    %718 = vmatpush1.bf16.msra.mxu0 0
    %719 = vmatprep.subr.bf16.mxu0 0
    %720 = vmatpush1.bf16.msra.mxu0 0
    %721 = vmatprep.subr.bf16.mxu0 0
    %722 = vmatpush1.bf16.msra.mxu0 0
    %723 = vmatprep.subr.bf16.mxu0 0
    %724 = vmatpush1.bf16.msra.mxu0 0
    %725 = vmatprep.subr.bf16.mxu0 0
    %726 = vmatpush1.bf16.msra.mxu0 0
    %727 = vmatprep.mubr.bf16.mxu0 0
    %728 = vmatmul.mubr.bf16.gmra.mrb[0].mxu0 %v690
    %v729 = vpop.f32.mrb[0].mxu0
    %v730 = vadd.f32 0.0, %v729
    %v731 = vpop.f32.mrb[0].mxu0
    %v732 = vpop.f32.mrb[0].mxu0
    %v733 = vpop.f32.mrb[0].mxu0
    %734 = vdwg.mxu0
    %735 = vrot.lane.b32.xlu0 %v127, 64
    %v736 = vpop.permute.xlu0 %735
    %v738 = vsel %vm136, %v632, 0
    %v741 = vsel %vm643, %v736, 0
    %743 = vmatprep.subr.bf16.mxu0 0
    %744 = vmatpush1.bf16.msra.mxu0 %v741
    %745 = vmatprep.subr.bf16.mxu0 0
    %746 = vmatpush1.bf16.msra.mxu0 0
    %747 = vmatprep.subr.bf16.mxu0 0
    %748 = vmatpush1.bf16.msra.mxu0 0
    %749 = vmatprep.subr.bf16.mxu0 0
    %750 = vmatpush1.bf16.msra.mxu0 0
    %751 = vmatprep.subr.bf16.mxu0 0
    %752 = vmatpush1.bf16.msra.mxu0 0
    %753 = vmatprep.subr.bf16.mxu0 0
    %754 = vmatpush1.bf16.msra.mxu0 0
    %755 = vmatprep.subr.bf16.mxu0 0
    %756 = vmatpush1.bf16.msra.mxu0 0
    %757 = vmatprep.subr.bf16.mxu0 0
    %758 = vmatpush1.bf16.msra.mxu0 0
    %759 = vmatprep.subr.bf16.mxu0 0
    %760 = vmatpush1.bf16.msra.mxu0 0
    %761 = vmatprep.subr.bf16.mxu0 0
    %762 = vmatpush1.bf16.msra.mxu0 0
    %763 = vmatprep.subr.bf16.mxu0 0
    %764 = vmatpush1.bf16.msra.mxu0 0
    %765 = vmatprep.subr.bf16.mxu0 0
    %766 = vmatpush1.bf16.msra.mxu0 0
    %767 = vmatprep.subr.bf16.mxu0 0
    %768 = vmatpush1.bf16.msra.mxu0 0
    %769 = vmatprep.subr.bf16.mxu0 0
    %770 = vmatpush1.bf16.msra.mxu0 0
    %771 = vmatprep.subr.bf16.mxu0 0
    %772 = vmatpush1.bf16.msra.mxu0 0
    %773 = vmatprep.subr.bf16.mxu0 0
    %774 = vmatpush1.bf16.msra.mxu0 0
    %775 = vmatprep.mubr.bf16.mxu0 0
    %776 = vmatmul.mubr.bf16.gmra.mrb[0].mxu0 %v738
    %v777 = vpop.f32.mrb[0].mxu0
    %v778 = vadd.f32 0.0, %v777
    %v779 = vpop.f32.mrb[0].mxu0
    %v780 = vpop.f32.mrb[0].mxu0
    %v781 = vpop.f32.mrb[0].mxu0
    %782 = vdwg.mxu0
    %783 = vrot.lane.b32.xlu0 %v128, 64
    %v784 = vpop.permute.xlu0 %783
    %v786 = vsel %vm136, %v633, 0
    %v789 = vsel %vm643, %v784, 0
    %791 = vmatprep.subr.bf16.mxu0 0
    %792 = vmatpush1.bf16.msra.mxu0 %v789
    %793 = vmatprep.subr.bf16.mxu0 0
    %794 = vmatpush1.bf16.msra.mxu0 0
    %795 = vmatprep.subr.bf16.mxu0 0
    %796 = vmatpush1.bf16.msra.mxu0 0
    %797 = vmatprep.subr.bf16.mxu0 0
    %798 = vmatpush1.bf16.msra.mxu0 0
    %799 = vmatprep.subr.bf16.mxu0 0
    %800 = vmatpush1.bf16.msra.mxu0 0
    %801 = vmatprep.subr.bf16.mxu0 0
    %802 = vmatpush1.bf16.msra.mxu0 0
    %803 = vmatprep.subr.bf16.mxu0 0
    %804 = vmatpush1.bf16.msra.mxu0 0
    %805 = vmatprep.subr.bf16.mxu0 0
    %806 = vmatpush1.bf16.msra.mxu0 0
    %807 = vmatprep.subr.bf16.mxu0 0
    %808 = vmatpush1.bf16.msra.mxu0 0
    %809 = vmatprep.subr.bf16.mxu0 0
    %810 = vmatpush1.bf16.msra.mxu0 0
    %811 = vmatprep.subr.bf16.mxu0 0
    %812 = vmatpush1.bf16.msra.mxu0 0
    %813 = vmatprep.subr.bf16.mxu0 0
    %814 = vmatpush1.bf16.msra.mxu0 0
    %815 = vmatprep.subr.bf16.mxu0 0
    %816 = vmatpush1.bf16.msra.mxu0 0
    %817 = vmatprep.subr.bf16.mxu0 0
    %818 = vmatpush1.bf16.msra.mxu0 0
    %819 = vmatprep.subr.bf16.mxu0 0
    %820 = vmatpush1.bf16.msra.mxu0 0
    %821 = vmatprep.subr.bf16.mxu0 0
    %822 = vmatpush1.bf16.msra.mxu0 0
    %823 = vmatprep.mubr.bf16.mxu0 0
    %824 = vmatmul.mubr.bf16.gmra.mrb[0].mxu0 %v786
    %v825 = vpop.f32.mrb[0].mxu0
    %v826 = vadd.f32 0.0, %v825
    %v827 = vpop.f32.mrb[0].mxu0
    %v828 = vpop.f32.mrb[0].mxu0
    %v829 = vpop.f32.mrb[0].mxu0
    %830 = vdwg.mxu0
    %831 = vrot.lane.b32.xlu0 %v129, 64
    %v832 = vpop.permute.xlu0 %831
    %v834 = vsel %vm136, %v634, 0
    %v837 = vsel %vm643, %v832, 0
    %839 = vmatprep.subr.bf16.mxu0 0
    %840 = vmatpush1.bf16.msra.mxu0 %v837
    %841 = vmatprep.subr.bf16.mxu0 0
    %842 = vmatpush1.bf16.msra.mxu0 0
    %843 = vmatprep.subr.bf16.mxu0 0
    %844 = vmatpush1.bf16.msra.mxu0 0
    %845 = vmatprep.subr.bf16.mxu0 0
    %846 = vmatpush1.bf16.msra.mxu0 0
    %847 = vmatprep.subr.bf16.mxu0 0
    %848 = vmatpush1.bf16.msra.mxu0 0
    %849 = vmatprep.subr.bf16.mxu0 0
    %850 = vmatpush1.bf16.msra.mxu0 0
    %851 = vmatprep.subr.bf16.mxu0 0
    %852 = vmatpush1.bf16.msra.mxu0 0
    %853 = vmatprep.subr.bf16.mxu0 0
    %854 = vmatpush1.bf16.msra.mxu0 0
    %855 = vmatprep.subr.bf16.mxu0 0
    %856 = vmatpush1.bf16.msra.mxu0 0
    %857 = vmatprep.subr.bf16.mxu0 0
    %858 = vmatpush1.bf16.msra.mxu0 0
    %859 = vmatprep.subr.bf16.mxu0 0
    %860 = vmatpush1.bf16.msra.mxu0 0
    %861 = vmatprep.subr.bf16.mxu0 0
    %862 = vmatpush1.bf16.msra.mxu0 0
    %863 = vmatprep.subr.bf16.mxu0 0
    %864 = vmatpush1.bf16.msra.mxu0 0
    %865 = vmatprep.subr.bf16.mxu0 0
    %866 = vmatpush1.bf16.msra.mxu0 0
    %867 = vmatprep.subr.bf16.mxu0 0
    %868 = vmatpush1.bf16.msra.mxu0 0
    %869 = vmatprep.subr.bf16.mxu0 0
    %870 = vmatpush1.bf16.msra.mxu0 0
    %871 = vmatprep.mubr.bf16.mxu0 0
    %872 = vmatmul.mubr.bf16.gmra.mrb[0].mxu0 %v834
    %v873 = vpop.f32.mrb[0].mxu0
    %v874 = vadd.f32 0.0, %v873
    %v875 = vpop.f32.mrb[0].mxu0
    %v876 = vpop.f32.mrb[0].mxu0
    %v877 = vpop.f32.mrb[0].mxu0
    %878 = vdwg.mxu0
    %879 = vrot.lane.b32.xlu0 %v130, 64
    %v880 = vpop.permute.xlu0 %879
    %v882 = vsel %vm136, %v635, 0
    %v885 = vsel %vm643, %v880, 0
    %887 = vmatprep.subr.bf16.mxu0 0
    %888 = vmatpush1.bf16.msra.mxu0 %v885
    %889 = vmatprep.subr.bf16.mxu0 0
    %890 = vmatpush1.bf16.msra.mxu0 0
    %891 = vmatprep.subr.bf16.mxu0 0
    %892 = vmatpush1.bf16.msra.mxu0 0
    %893 = vmatprep.subr.bf16.mxu0 0
    %894 = vmatpush1.bf16.msra.mxu0 0
    %895 = vmatprep.subr.bf16.mxu0 0
    %896 = vmatpush1.bf16.msra.mxu0 0
    %897 = vmatprep.subr.bf16.mxu0 0
    %898 = vmatpush1.bf16.msra.mxu0 0
    %899 = vmatprep.subr.bf16.mxu0 0
    %900 = vmatpush1.bf16.msra.mxu0 0
    %901 = vmatprep.subr.bf16.mxu0 0
    %902 = vmatpush1.bf16.msra.mxu0 0
    %903 = vmatprep.subr.bf16.mxu0 0
    %904 = vmatpush1.bf16.msra.mxu0 0
    %905 = vmatprep.subr.bf16.mxu0 0
    %906 = vmatpush1.bf16.msra.mxu0 0
    %907 = vmatprep.subr.bf16.mxu0 0
    %908 = vmatpush1.bf16.msra.mxu0 0
    %909 = vmatprep.subr.bf16.mxu0 0
    %910 = vmatpush1.bf16.msra.mxu0 0
    %911 = vmatprep.subr.bf16.mxu0 0
    %912 = vmatpush1.bf16.msra.mxu0 0
    %913 = vmatprep.subr.bf16.mxu0 0
    %914 = vmatpush1.bf16.msra.mxu0 0
    %915 = vmatprep.subr.bf16.mxu0 0
    %916 = vmatpush1.bf16.msra.mxu0 0
    %917 = vmatprep.subr.bf16.mxu0 0
    %918 = vmatpush1.bf16.msra.mxu0 0
    %919 = vmatprep.mubr.bf16.mxu0 0
    %920 = vmatmul.mubr.bf16.gmra.mrb[0].mxu0 %v882
    %v921 = vpop.f32.mrb[0].mxu0
    %v922 = vadd.f32 0.0, %v921
    %v923 = vpop.f32.mrb[0].mxu0
    %v924 = vpop.f32.mrb[0].mxu0
    %v925 = vpop.f32.mrb[0].mxu0
    %926 = vdwg.mxu0
    %927 = vrot.lane.b32.xlu0 %v131, 64
    %v928 = vpop.permute.xlu0 %927
    %v930 = vsel %vm136, %v636, 0
    %v933 = vsel %vm643, %v928, 0
    %935 = vmatprep.subr.bf16.mxu0 0
    %936 = vmatpush1.bf16.msra.mxu0 %v933
    %937 = vmatprep.subr.bf16.mxu0 0
    %938 = vmatpush1.bf16.msra.mxu0 0
    %939 = vmatprep.subr.bf16.mxu0 0
    %940 = vmatpush1.bf16.msra.mxu0 0
    %941 = vmatprep.subr.bf16.mxu0 0
    %942 = vmatpush1.bf16.msra.mxu0 0
    %943 = vmatprep.subr.bf16.mxu0 0
    %944 = vmatpush1.bf16.msra.mxu0 0
    %945 = vmatprep.subr.bf16.mxu0 0
    %946 = vmatpush1.bf16.msra.mxu0 0
    %947 = vmatprep.subr.bf16.mxu0 0
    %948 = vmatpush1.bf16.msra.mxu0 0
    %949 = vmatprep.subr.bf16.mxu0 0
    %950 = vmatpush1.bf16.msra.mxu0 0
    %951 = vmatprep.subr.bf16.mxu0 0
    %952 = vmatpush1.bf16.msra.mxu0 0
    %953 = vmatprep.subr.bf16.mxu0 0
    %954 = vmatpush1.bf16.msra.mxu0 0
    %955 = vmatprep.subr.bf16.mxu0 0
    %956 = vmatpush1.bf16.msra.mxu0 0
    %957 = vmatprep.subr.bf16.mxu0 0
    %958 = vmatpush1.bf16.msra.mxu0 0
    %959 = vmatprep.subr.bf16.mxu0 0
    %960 = vmatpush1.bf16.msra.mxu0 0
    %961 = vmatprep.subr.bf16.mxu0 0
    %962 = vmatpush1.bf16.msra.mxu0 0
    %963 = vmatprep.subr.bf16.mxu0 0
    %964 = vmatpush1.bf16.msra.mxu0 0
    %965 = vmatprep.subr.bf16.mxu0 0
    %966 = vmatpush1.bf16.msra.mxu0 0
    %967 = vmatprep.mubr.bf16.mxu0 0
    %968 = vmatmul.mubr.bf16.gmra.mrb[0].mxu0 %v930
    %v969 = vpop.f32.mrb[0].mxu0
    %v970 = vadd.f32 0.0, %v969
    %v971 = vpop.f32.mrb[0].mxu0
    %v972 = vpop.f32.mrb[0].mxu0
    %v973 = vpop.f32.mrb[0].mxu0
    %974 = vdwg.mxu0
    %975 = vrot.lane.b32.xlu0 %v132, 64
    %v976 = vpop.permute.xlu0 %975
    %v978 = vsel %vm136, %v637, 0
    %v981 = vsel %vm643, %v976, 0
    %983 = vmatprep.subr.bf16.mxu0 0
    %984 = vmatpush1.bf16.msra.mxu0 %v981
    %985 = vmatprep.subr.bf16.mxu0 0
    %986 = vmatpush1.bf16.msra.mxu0 0
    %987 = vmatprep.subr.bf16.mxu0 0
    %988 = vmatpush1.bf16.msra.mxu0 0
    %989 = vmatprep.subr.bf16.mxu0 0
    %990 = vmatpush1.bf16.msra.mxu0 0
    %991 = vmatprep.subr.bf16.mxu0 0
    %992 = vmatpush1.bf16.msra.mxu0 0
    %993 = vmatprep.subr.bf16.mxu0 0
    %994 = vmatpush1.bf16.msra.mxu0 0
    %995 = vmatprep.subr.bf16.mxu0 0
    %996 = vmatpush1.bf16.msra.mxu0 0
    %997 = vmatprep.subr.bf16.mxu0 0
    %998 = vmatpush1.bf16.msra.mxu0 0
    %999 = vmatprep.subr.bf16.mxu0 0
    %1000 = vmatpush1.bf16.msra.mxu0 0
    %1001 = vmatprep.subr.bf16.mxu0 0
    %1002 = vmatpush1.bf16.msra.mxu0 0
    %1003 = vmatprep.subr.bf16.mxu0 0
    %1004 = vmatpush1.bf16.msra.mxu0 0
    %1005 = vmatprep.subr.bf16.mxu0 0
    %1006 = vmatpush1.bf16.msra.mxu0 0
    %1007 = vmatprep.subr.bf16.mxu0 0
    %1008 = vmatpush1.bf16.msra.mxu0 0
    %1009 = vmatprep.subr.bf16.mxu0 0
    %1010 = vmatpush1.bf16.msra.mxu0 0
    %1011 = vmatprep.subr.bf16.mxu0 0
    %1012 = vmatpush1.bf16.msra.mxu0 0
    %1013 = vmatprep.subr.bf16.mxu0 0
    %1014 = vmatpush1.bf16.msra.mxu0 0
    %1015 = vmatprep.mubr.bf16.mxu0 0
    %1016 = vmatmul.mubr.bf16.gmra.mrb[0].mxu0 %v978
    %v1017 = vpop.f32.mrb[0].mxu0
    %v1018 = vadd.f32 0.0, %v1017
    %v1019 = vpop.f32.mrb[0].mxu0
    %v1020 = vpop.f32.mrb[0].mxu0
    %v1021 = vpop.f32.mrb[0].mxu0
    %1022 = vdwg.mxu0
    %1025 = vrot.lane.b32.xlu0 %v778, 8
    %v1026 = vpop.permute.xlu0 %1025
    %1027 = vrot.lane.b32.xlu0 %v826, 8
    %v1028 = vpop.permute.xlu0 %1027
    %1033 = vrot.lane.b32.xlu0 %v874, 16
    %v1034 = vpop.permute.xlu0 %1033
    %1035 = vrot.lane.b32.xlu0 %v922, 16
    %v1036 = vpop.permute.xlu0 %1035
    %1041 = vrot.lane.b32.xlu0 %v970, 24
    %v1042 = vpop.permute.xlu0 %1041
    %1043 = vrot.lane.b32.xlu0 %v1018, 24
    %v1044 = vpop.permute.xlu0 %1043
    %v1047 = vsel %vm136, %v682, %v1026
    %v1048 = vsel %vm136, %v730, %v1028
    %vm1049 = vcmask 130048
    %v1050 = vsel %vm1049, %v1047, %v1034
    %v1051 = vsel %vm1049, %v1048, %v1036
    %vm1052 = vcmask 195584
    %v1053 = vsel %vm1052, %v1050, %v1042
    %v1054 = vsel %vm1052, %v1051, %v1044
    %v1055 = vld [vmem:[%s5 + $0x10] sm:$0xf]
    %v1056 = vld [vmem:[%s5 + $0x14] sm:$0xf]
    %v1057 = vld [vmem:[%s5 + $0x18] sm:$0xf]
    %v1058 = vld [vmem:[%s5 + $0x1c] sm:$0xf]
    %v1059 = vpack.c.bf16 %v1054, %v1053
    %v1060 = vld [vmem:[%s6 + $0x1] sm:$0x1]
    %v1061 = vlaneseq
    %v1062 = vshrl.u32 %v1061, 7
    %v1063 = vsub.s32 0, %v1062
    %v1064 = vrot.slane %v1060, %v1063
    %v1069 = vunpack.c.l.b16 %v1055
    %v1070 = vunpack.c.l.b16 %v1056
    %v1071 = vunpack.c.l.b16 %v1057
    %v1072 = vunpack.c.l.b16 %v1058
    %v1073 = vpack.c.b16 %v1070, %v1069
    %v1074 = vpack.c.b16 %v1072, %v1071
    %v1078 = vsel %vm60, %v1059, 0
    %1080 = vmatprep.subr.bf16.mxu0 0
    %1081 = vmatpush1.bf16.msra.mxu0 %v1073
    %1082 = vmatprep.subr.bf16.mxu0 0
    %1083 = vmatpush1.bf16.msra.mxu0 %v1074
    %1084 = vmatprep.subr.bf16.mxu0 0
    %1085 = vmatpush1.bf16.msra.mxu0 0
    %1086 = vmatprep.subr.bf16.mxu0 0
    %1087 = vmatpush1.bf16.msra.mxu0 0
    %1088 = vmatprep.subr.bf16.mxu0 0
    %1089 = vmatpush1.bf16.msra.mxu0 0
    %1090 = vmatprep.subr.bf16.mxu0 0
    %1091 = vmatpush1.bf16.msra.mxu0 0
    %1092 = vmatprep.subr.bf16.mxu0 0
    %1093 = vmatpush1.bf16.msra.mxu0 0
    %1094 = vmatprep.subr.bf16.mxu0 0
    %1095 = vmatpush1.bf16.msra.mxu0 0
    %1096 = vmatprep.subr.bf16.mxu0 0
    %1097 = vmatpush1.bf16.msra.mxu0 0
    %1098 = vmatprep.subr.bf16.mxu0 0
    %1099 = vmatpush1.bf16.msra.mxu0 0
    %1100 = vmatprep.subr.bf16.mxu0 0
    %1101 = vmatpush1.bf16.msra.mxu0 0
    %1102 = vmatprep.subr.bf16.mxu0 0
    %1103 = vmatpush1.bf16.msra.mxu0 0
    %1104 = vmatprep.subr.bf16.mxu0 0
    %1105 = vmatpush1.bf16.msra.mxu0 0
    %1106 = vmatprep.subr.bf16.mxu0 0
    %1107 = vmatpush1.bf16.msra.mxu0 0
    %1108 = vmatprep.subr.bf16.mxu0 0
    %1109 = vmatpush1.bf16.msra.mxu0 0
    %1110 = vmatprep.subr.bf16.mxu0 0
    %1111 = vmatpush1.bf16.msra.mxu0 0
    %1112 = vmatprep.mubr.bf16.mxu0 0
    %1113 = vmatmul.mubr.bf16.gmra.mrb[0].mxu0 %v1078
    %v1114 = vpop.f32.mrb[0].mxu0
    %v1115 = vadd.f32 %v1064, %v1114
    %v1116 = vpop.f32.mrb[0].mxu0
    %v1117 = vpop.f32.mrb[0].mxu0
    %v1118 = vadd.f32 %v1064, %v1117
    %v1119 = vpop.f32.mrb[0].mxu0
    %1120 = vdwg.mxu0
    %v1121 = vadd.f32 %v28, %v1115
    %v1122 = vadd.f32 %v29, %v1118
    %v1123 = vld [vmem:[%s6 + $0x2] sm:$0x1]
    %v1124 = vld [vmem:[%s6 + $0x3] sm:$0x1]
    %v1125 = vsel %vm60, %v1121, 0.0
    %1126 = vadd.xlane.f32.xlu0 %v1125
    %v1127 = vpop.xlane.xlu0 %1126
    %v1128 = vsel %vm60, %v1122, 0.0
    %1129 = vadd.xlane.f32.xlu0 %v1128
    %v1130 = vpop.xlane.xlu0 %1129
    %v1131 = vrcp.pop 32.0
    %v1132 = vmul.f32 %v1127, %v1131
    %v1133 = vmul.f32 %v1130, %v1131
    %v1134 = vmul.f32 %v1121, %v1121
    %v1135 = vmul.f32 %v1122, %v1122
    %v1136 = vsel %vm60, %v1134, 0.0
    %1137 = vadd.xlane.f32.xlu0 %v1136
    %v1138 = vpop.xlane.xlu0 %1137
    %v1139 = vsel %vm60, %v1135, 0.0
    %1140 = vadd.xlane.f32.xlu0 %v1139
    %v1141 = vpop.xlane.xlu0 %1140
    %v1142 = vmul.f32 %v1138, %v1131
    %v1143 = vmul.f32 %v1141, %v1131
    %v1144 = vmul.f32 %v1132, %v1132
    %v1145 = vmul.f32 %v1133, %v1133
    %v1146 = vsub.f32 %v1142, %v1144
    %v1147 = vsub.f32 %v1143, %v1145
    %v1148 = vsub.f32 %v1121, %v1132
    %v1149 = vsub.f32 %v1122, %v1133
    %v1150 = vadd.f32 %v1146, 1e-05
    %v1151 = vadd.f32 %v1147, 1e-05
    %v1152 = vrsqrt.pop %v1150
    %v1153 = vrsqrt.pop %v1151
    %v1154 = vmul.f32 %v1148, %v1152
    %v1155 = vmul.f32 %v1149, %v1153
    %v1156 = vlaneseq
    %v1157 = vshrl.u32 %v1156, 7
    %v1158 = vsub.s32 0, %v1157
    %v1159 = vrot.slane %v1123, %v1158
    %v1160 = vmul.f32 %v1154, %v1159
    %v1161 = vmul.f32 %v1155, %v1159
    %v1162 = vlaneseq
    %v1163 = vshrl.u32 %v1162, 7
    %v1164 = vsub.s32 0, %v1163
    %v1165 = vrot.slane %v1124, %v1164
    %v1166 = vadd.f32 %v1160, %v1165
    %v1167 = vadd.f32 %v1161, %v1165
    %v1168 = vld [vmem:[%s5 + $0x20] sm:$0xf]
    %v1169 = vld [vmem:[%s5 + $0x24] sm:$0xf]
    %v1170 = vld [vmem:[%s5 + $0x28] sm:$0xf]
    %v1171 = vld [vmem:[%s5 + $0x2c] sm:$0xf]
    %v1172 = vpack.c.bf16 %v1167, %v1166
    %v1173 = vld [vmem:[%s6 + $0x4] sm:$0x1]
    %v1174 = vlaneseq
    %v1175 = vshrl.u32 %v1174, 7
    %v1176 = vsub.s32 0, %v1175
    %v1177 = vrot.slane %v1173, %v1176
    %v1182 = vunpack.c.l.b16 %v1168
    %v1183 = vunpack.c.l.b16 %v1169
    %v1184 = vunpack.c.l.b16 %v1170
    %v1185 = vunpack.c.l.b16 %v1171
    %v1186 = vpack.c.b16 %v1183, %v1182
    %v1187 = vpack.c.b16 %v1185, %v1184
    %v1191 = vsel %vm60, %v1172, 0
    %1193 = vmatprep.subr.bf16.mxu0 0
    %1194 = vmatpush1.bf16.msra.mxu0 %v1186
    %1195 = vmatprep.subr.bf16.mxu0 0
    %1196 = vmatpush1.bf16.msra.mxu0 %v1187
    %1197 = vmatprep.subr.bf16.mxu0 0
    %1198 = vmatpush1.bf16.msra.mxu0 0
    %1199 = vmatprep.subr.bf16.mxu0 0
    %1200 = vmatpush1.bf16.msra.mxu0 0
    %1201 = vmatprep.subr.bf16.mxu0 0
    %1202 = vmatpush1.bf16.msra.mxu0 0
    %1203 = vmatprep.subr.bf16.mxu0 0
    %1204 = vmatpush1.bf16.msra.mxu0 0
    %1205 = vmatprep.subr.bf16.mxu0 0
    %1206 = vmatpush1.bf16.msra.mxu0 0
    %1207 = vmatprep.subr.bf16.mxu0 0
    %1208 = vmatpush1.bf16.msra.mxu0 0
    %1209 = vmatprep.subr.bf16.mxu0 0
    %1210 = vmatpush1.bf16.msra.mxu0 0
    %1211 = vmatprep.subr.bf16.mxu0 0
    %1212 = vmatpush1.bf16.msra.mxu0 0
    %1213 = vmatprep.subr.bf16.mxu0 0
    %1214 = vmatpush1.bf16.msra.mxu0 0
    %1215 = vmatprep.subr.bf16.mxu0 0
    %1216 = vmatpush1.bf16.msra.mxu0 0
    %1217 = vmatprep.subr.bf16.mxu0 0
    %1218 = vmatpush1.bf16.msra.mxu0 0
    %1219 = vmatprep.subr.bf16.mxu0 0
    %1220 = vmatpush1.bf16.msra.mxu0 0
    %1221 = vmatprep.subr.bf16.mxu0 0
    %1222 = vmatpush1.bf16.msra.mxu0 0
    %1223 = vmatprep.subr.bf16.mxu0 0
    %1224 = vmatpush1.bf16.msra.mxu0 0
    %1225 = vmatprep.mubr.bf16.mxu0 0
    %1226 = vmatmul.mubr.bf16.gmra.mrb[0].mxu0 %v1191
    %v1227 = vpop.f32.mrb[0].mxu0
    %v1228 = vadd.f32 %v1177, %v1227
    %v1229 = vpop.f32.mrb[0].mxu0
    %v1230 = vpop.f32.mrb[0].mxu0
    %v1231 = vadd.f32 %v1177, %v1230
    %v1232 = vpop.f32.mrb[0].mxu0
    %1233 = vdwg.mxu0
    %v1234 = vmax.f32 %v1228, 0.0
    %v1235 = vmax.f32 %v1231, 0.0
    %v1236 = vld [vmem:[%s5 + $0x30] sm:$0xf]
    %v1237 = vld [vmem:[%s5 + $0x34] sm:$0xf]
    %v1238 = vld [vmem:[%s5 + $0x38] sm:$0xf]
    %v1239 = vld [vmem:[%s5 + $0x3c] sm:$0xf]
    %v1240 = vld [vmem:[%s5 + $0x40] sm:$0xf]
    %v1241 = vld [vmem:[%s5 + $0x44] sm:$0xf]
    %v1242 = vld [vmem:[%s5 + $0x48] sm:$0xf]
    %v1243 = vld [vmem:[%s5 + $0x4c] sm:$0xf]
    %v1244 = vpack.c.bf16 %v1235, %v1234
    %v1245 = vld [vmem:[%s6 + $0x5] sm:$0x1]
    %v1246 = vlaneseq
    %v1247 = vshrl.u32 %v1246, 7
    %v1248 = vsub.s32 0, %v1247
    %v1249 = vrot.slane %v1245, %v1248
    %v1258 = vunpack.c.l.b16 %v1236
    %v1259 = vunpack.c.l.b16 %v1237
    %v1260 = vunpack.c.l.b16 %v1238
    %v1261 = vunpack.c.l.b16 %v1239
    %v1262 = vunpack.c.l.b16 %v1240
    %v1263 = vunpack.c.l.b16 %v1241
    %v1264 = vunpack.c.l.b16 %v1242
    %v1265 = vunpack.c.l.b16 %v1243
    %v1266 = vpack.c.b16 %v1259, %v1258
    %v1267 = vpack.c.b16 %v1261, %v1260
    %v1268 = vpack.c.b16 %v1263, %v1262
    %v1269 = vpack.c.b16 %v1265, %v1264
    %vm1274 = vcmask 523264
    %v1276 = vsel %vm1274, %v1244, 0
    %1278 = vmatprep.subr.bf16.mxu0 0
    %1279 = vmatpush1.bf16.msra.mxu0 %v1266
    %1280 = vmatprep.subr.bf16.mxu0 0
    %1281 = vmatpush1.bf16.msra.mxu0 %v1267
    %1282 = vmatprep.subr.bf16.mxu0 0
    %1283 = vmatpush1.bf16.msra.mxu0 %v1268
    %1284 = vmatprep.subr.bf16.mxu0 0
    %1285 = vmatpush1.bf16.msra.mxu0 %v1269
    %1286 = vmatprep.subr.bf16.mxu0 0
    %1287 = vmatpush1.bf16.msra.mxu0 0
    %1288 = vmatprep.subr.bf16.mxu0 0
    %1289 = vmatpush1.bf16.msra.mxu0 0
    %1290 = vmatprep.subr.bf16.mxu0 0
    %1291 = vmatpush1.bf16.msra.mxu0 0
    %1292 = vmatprep.subr.bf16.mxu0 0
    %1293 = vmatpush1.bf16.msra.mxu0 0
    %1294 = vmatprep.subr.bf16.mxu0 0
    %1295 = vmatpush1.bf16.msra.mxu0 0
    %1296 = vmatprep.subr.bf16.mxu0 0
    %1297 = vmatpush1.bf16.msra.mxu0 0
    %1298 = vmatprep.subr.bf16.mxu0 0
    %1299 = vmatpush1.bf16.msra.mxu0 0
    %1300 = vmatprep.subr.bf16.mxu0 0
    %1301 = vmatpush1.bf16.msra.mxu0 0
    %1302 = vmatprep.subr.bf16.mxu0 0
    %1303 = vmatpush1.bf16.msra.mxu0 0
    %1304 = vmatprep.subr.bf16.mxu0 0
    %1305 = vmatpush1.bf16.msra.mxu0 0
    %1306 = vmatprep.subr.bf16.mxu0 0
    %1307 = vmatpush1.bf16.msra.mxu0 0
    %1308 = vmatprep.subr.bf16.mxu0 0
    %1309 = vmatpush1.bf16.msra.mxu0 0
    %1310 = vmatprep.mubr.bf16.mxu0 0
    %1311 = vmatmul.mubr.bf16.gmra.mrb[0].mxu0 %v1276
    %v1312 = vpop.f32.mrb[0].mxu0
    %v1313 = vadd.f32 %v1249, %v1312
    %v1314 = vpop.f32.mrb[0].mxu0
    %v1315 = vpop.f32.mrb[0].mxu0
    %v1316 = vadd.f32 %v1249, %v1315
    %v1317 = vpop.f32.mrb[0].mxu0
    %1318 = vdwg.mxu0
    %v1319 = vadd.f32 %v1166, %v1313
    %v1320 = vadd.f32 %v1167, %v1316
    %v1321 = vld [vmem:[%s6 + $0x6] sm:$0x1]
    %v1322 = vld [vmem:[%s6 + $0x7] sm:$0x1]
    %v1323 = vsel %vm60, %v1319, 0.0
    %1324 = vadd.xlane.f32.xlu0 %v1323
    %v1325 = vpop.xlane.xlu0 %1324
    %v1326 = vsel %vm60, %v1320, 0.0
    %1327 = vadd.xlane.f32.xlu0 %v1326
    %v1328 = vpop.xlane.xlu0 %1327
    %v1329 = vmul.f32 %v1325, %v1131
    %v1330 = vmul.f32 %v1328, %v1131
    %v1331 = vmul.f32 %v1319, %v1319
    %v1332 = vmul.f32 %v1320, %v1320
    %v1333 = vsel %vm60, %v1331, 0.0
    %1334 = vadd.xlane.f32.xlu0 %v1333
    %v1335 = vpop.xlane.xlu0 %1334
    %v1336 = vsel %vm60, %v1332, 0.0
    %1337 = vadd.xlane.f32.xlu0 %v1336
    %v1338 = vpop.xlane.xlu0 %1337
    %v1339 = vmul.f32 %v1335, %v1131
    %v1340 = vmul.f32 %v1338, %v1131
    %v1341 = vmul.f32 %v1329, %v1329
    %v1342 = vmul.f32 %v1330, %v1330
    %v1343 = vsub.f32 %v1339, %v1341
    %v1344 = vsub.f32 %v1340, %v1342
    %v1345 = vsub.f32 %v1319, %v1329
    %v1346 = vsub.f32 %v1320, %v1330
    %v1347 = vadd.f32 %v1343, 1e-05
    %v1348 = vadd.f32 %v1344, 1e-05
    %v1349 = vrsqrt.pop %v1347
    %v1350 = vrsqrt.pop %v1348
    %v1351 = vmul.f32 %v1345, %v1349
    %v1352 = vmul.f32 %v1346, %v1350
    %v1353 = vlaneseq
    %v1354 = vshrl.u32 %v1353, 7
    %v1355 = vsub.s32 0, %v1354
    %v1356 = vrot.slane %v1321, %v1355
    %v1357 = vmul.f32 %v1351, %v1356
    %v1358 = vmul.f32 %v1352, %v1356
    %v1359 = vlaneseq
    %v1360 = vshrl.u32 %v1359, 7
    %v1361 = vsub.s32 0, %v1360
    %v1362 = vrot.slane %v1322, %v1361
    %v1363 = vadd.f32 %v1357, %v1362
    %v1364 = vadd.f32 %v1358, %v1362
    %v1365 = vld [vmem:[%s5 + $0x50] sm:$0xf]
    %v1366 = vld [vmem:[%s5 + $0x54] sm:$0xf]
    %v1367 = vld [vmem:[%s5 + $0x58] sm:$0xf]
    %v1368 = vld [vmem:[%s5 + $0x5c] sm:$0xf]
    %v1369 = vpack.c.bf16 %v1364, %v1363
    %v1370 = vld [vmem:[%s6 + $0x8] sm:$0x1]
    %v1371 = vlaneseq
    %v1372 = vshrl.u32 %v1371, 7
    %v1373 = vsub.s32 0, %v1372
    %v1374 = vrot.slane %v1370, %v1373
    %v1379 = vunpack.c.l.b16 %v1365
    %v1380 = vunpack.c.l.b16 %v1366
    %v1381 = vunpack.c.l.b16 %v1367
    %v1382 = vunpack.c.l.b16 %v1368
    %v1383 = vpack.c.b16 %v1380, %v1379
    %v1384 = vpack.c.b16 %v1382, %v1381
    %v1388 = vsel %vm60, %v1369, 0
    %1390 = vmatprep.subr.bf16.mxu0 0
    %1391 = vmatpush1.bf16.msra.mxu0 %v1383
    %1392 = vmatprep.subr.bf16.mxu0 0
    %1393 = vmatpush1.bf16.msra.mxu0 %v1384
    %1394 = vmatprep.subr.bf16.mxu0 0
    %1395 = vmatpush1.bf16.msra.mxu0 0
    %1396 = vmatprep.subr.bf16.mxu0 0
    %1397 = vmatpush1.bf16.msra.mxu0 0
    %1398 = vmatprep.subr.bf16.mxu0 0
    %1399 = vmatpush1.bf16.msra.mxu0 0
    %1400 = vmatprep.subr.bf16.mxu0 0
    %1401 = vmatpush1.bf16.msra.mxu0 0
    %1402 = vmatprep.subr.bf16.mxu0 0
    %1403 = vmatpush1.bf16.msra.mxu0 0
    %1404 = vmatprep.subr.bf16.mxu0 0
    %1405 = vmatpush1.bf16.msra.mxu0 0
    %1406 = vmatprep.subr.bf16.mxu0 0
    %1407 = vmatpush1.bf16.msra.mxu0 0
    %1408 = vmatprep.subr.bf16.mxu0 0
    %1409 = vmatpush1.bf16.msra.mxu0 0
    %1410 = vmatprep.subr.bf16.mxu0 0
    %1411 = vmatpush1.bf16.msra.mxu0 0
    %1412 = vmatprep.subr.bf16.mxu0 0
    %1413 = vmatpush1.bf16.msra.mxu0 0
    %1414 = vmatprep.subr.bf16.mxu0 0
    %1415 = vmatpush1.bf16.msra.mxu0 0
    %1416 = vmatprep.subr.bf16.mxu0 0
    %1417 = vmatpush1.bf16.msra.mxu0 0
    %1418 = vmatprep.subr.bf16.mxu0 0
    %1419 = vmatpush1.bf16.msra.mxu0 0
    %1420 = vmatprep.subr.bf16.mxu0 0
    %1421 = vmatpush1.bf16.msra.mxu0 0
    %1422 = vmatprep.mubr.bf16.mxu0 0
    %1423 = vmatmul.mubr.bf16.gmra.mrb[0].mxu0 %v1388
    %v1424 = vpop.f32.mrb[0].mxu0
    %v1425 = vadd.f32 %v1374, %v1424
    %v1426 = vpop.f32.mrb[0].mxu0
    %v1427 = vpop.f32.mrb[0].mxu0
    %v1428 = vadd.f32 %v1374, %v1427
    %v1429 = vpop.f32.mrb[0].mxu0
    %1430 = vdwg.mxu0
    %1433 = vrot.lane.b32.xlu0 %v1425, 120
    %v1434 = vpop.permute.xlu0 %1433
    %1435 = vrot.lane.b32.xlu0 %v1428, 120
    %v1436 = vpop.permute.xlu0 %1435
    %1439 = vrot.lane.b32.xlu0 %v1425, 112
    %v1440 = vpop.permute.xlu0 %1439
    %1441 = vrot.lane.b32.xlu0 %v1428, 112
    %v1442 = vpop.permute.xlu0 %1441
    %1445 = vrot.lane.b32.xlu0 %v1425, 104
    %v1446 = vpop.permute.xlu0 %1445
    %1447 = vrot.lane.b32.xlu0 %v1428, 104
    %v1448 = vpop.permute.xlu0 %1447
    %v1451 = vpack.c.bf16 %v1425, %v1425
    %v1452 = vpack.c.bf16 %v1428, %v1428
    %v1453 = vpack.c.bf16 %v1434, %v1434
    %v1454 = vpack.c.bf16 %v1436, %v1436
    %v1455 = vpack.c.bf16 %v1440, %v1440
    %v1456 = vpack.c.bf16 %v1442, %v1442
    %v1457 = vpack.c.bf16 %v1446, %v1446
    %v1458 = vpack.c.bf16 %v1448, %v1448
    %1460 = vrot.lane.b32.xlu0 %v1451, 96
    %v1461 = vpop.permute.xlu0 %1460
    %v1463 = vsel %vm136, %v1451, 0
    %v1466 = vsel %vm136, %v1461, 0
    %1468 = vmatprep.subr.bf16.mxu0 0
    %1469 = vmatpush1.bf16.xpose.msra.mxu0 %v1466
    %1470 = vmatprep.subr.bf16.mxu0 0
    %1471 = vmatpush1.bf16.xpose.msra.mxu0 0
    %1472 = vmatprep.subr.bf16.mxu0 0
    %1473 = vmatpush1.bf16.xpose.msra.mxu0 0
    %1474 = vmatprep.subr.bf16.mxu0 0
    %1475 = vmatpush1.bf16.xpose.msra.mxu0 0
    %1476 = vmatprep.subr.bf16.mxu0 0
    %1477 = vmatpush1.bf16.xpose.msra.mxu0 0
    %1478 = vmatprep.subr.bf16.mxu0 0
    %1479 = vmatpush1.bf16.xpose.msra.mxu0 0
    %1480 = vmatprep.subr.bf16.mxu0 0
    %1481 = vmatpush1.bf16.xpose.msra.mxu0 0
    %1482 = vmatprep.subr.bf16.mxu0 0
    %1483 = vmatpush1.bf16.xpose.msra.mxu0 0
    %1484 = vmatprep.subr.bf16.mxu0 0
    %1485 = vmatpush1.bf16.xpose.msra.mxu0 0
    %1486 = vmatprep.subr.bf16.mxu0 0
    %1487 = vmatpush1.bf16.xpose.msra.mxu0 0
    %1488 = vmatprep.subr.bf16.mxu0 0
    %1489 = vmatpush1.bf16.xpose.msra.mxu0 0
    %1490 = vmatprep.subr.bf16.mxu0 0
    %1491 = vmatpush1.bf16.xpose.msra.mxu0 0
    %1492 = vmatprep.subr.bf16.mxu0 0
    %1493 = vmatpush1.bf16.xpose.msra.mxu0 0
    %1494 = vmatprep.subr.bf16.mxu0 0
    %1495 = vmatpush1.bf16.xpose.msra.mxu0 0
    %1496 = vmatprep.subr.bf16.mxu0 0
    %1497 = vmatpush1.bf16.xpose.msra.mxu0 0
    %1498 = vmatprep.subr.bf16.mxu0 0
    %1499 = vmatpush1.bf16.xpose.msra.mxu0 0
    %1500 = vmatprep.mubr.bf16.mxu0 0
    %1501 = vmatmul.mubr.bf16.gmra.mrb[0].mxu0 %v1463
    %v1502 = vpop.f32.mrb[0].mxu0
    %v1503 = vadd.f32 0.0, %v1502
    %v1504 = vpop.f32.mrb[0].mxu0
    %v1505 = vpop.f32.mrb[0].mxu0
    %v1506 = vpop.f32.mrb[0].mxu0
    %1507 = vdwg.mxu0
    %1509 = vrot.lane.b32.xlu0 %v1452, 96
    %v1510 = vpop.permute.xlu0 %1509
    %v1512 = vsel %vm136, %v1452, 0
    %v1515 = vsel %vm136, %v1510, 0
    %1517 = vmatprep.subr.bf16.mxu0 0
    %1518 = vmatpush1.bf16.xpose.msra.mxu0 %v1515
    %1519 = vmatprep.subr.bf16.mxu0 0
    %1520 = vmatpush1.bf16.xpose.msra.mxu0 0
    %1521 = vmatprep.subr.bf16.mxu0 0
    %1522 = vmatpush1.bf16.xpose.msra.mxu0 0
    %1523 = vmatprep.subr.bf16.mxu0 0
    %1524 = vmatpush1.bf16.xpose.msra.mxu0 0
    %1525 = vmatprep.subr.bf16.mxu0 0
    %1526 = vmatpush1.bf16.xpose.msra.mxu0 0
    %1527 = vmatprep.subr.bf16.mxu0 0
    %1528 = vmatpush1.bf16.xpose.msra.mxu0 0
    %1529 = vmatprep.subr.bf16.mxu0 0
    %1530 = vmatpush1.bf16.xpose.msra.mxu0 0
    %1531 = vmatprep.subr.bf16.mxu0 0
    %1532 = vmatpush1.bf16.xpose.msra.mxu0 0
    %1533 = vmatprep.subr.bf16.mxu0 0
    %1534 = vmatpush1.bf16.xpose.msra.mxu0 0
    %1535 = vmatprep.subr.bf16.mxu0 0
    %1536 = vmatpush1.bf16.xpose.msra.mxu0 0
    %1537 = vmatprep.subr.bf16.mxu0 0
    %1538 = vmatpush1.bf16.xpose.msra.mxu0 0
    %1539 = vmatprep.subr.bf16.mxu0 0
    %1540 = vmatpush1.bf16.xpose.msra.mxu0 0
    %1541 = vmatprep.subr.bf16.mxu0 0
    %1542 = vmatpush1.bf16.xpose.msra.mxu0 0
    %1543 = vmatprep.subr.bf16.mxu0 0
    %1544 = vmatpush1.bf16.xpose.msra.mxu0 0
    %1545 = vmatprep.subr.bf16.mxu0 0
    %1546 = vmatpush1.bf16.xpose.msra.mxu0 0
    %1547 = vmatprep.subr.bf16.mxu0 0
    %1548 = vmatpush1.bf16.xpose.msra.mxu0 0
    %1549 = vmatprep.mubr.bf16.mxu0 0
    %1550 = vmatmul.mubr.bf16.gmra.mrb[0].mxu0 %v1512
    %v1551 = vpop.f32.mrb[0].mxu0
    %v1552 = vadd.f32 0.0, %v1551
    %v1553 = vpop.f32.mrb[0].mxu0
    %v1554 = vpop.f32.mrb[0].mxu0
    %v1555 = vpop.f32.mrb[0].mxu0
    %1556 = vdwg.mxu0
    %1558 = vrot.lane.b32.xlu0 %v1453, 96
    %v1559 = vpop.permute.xlu0 %1558
    %v1561 = vsel %vm136, %v1453, 0
    %v1564 = vsel %vm136, %v1559, 0
    %1566 = vmatprep.subr.bf16.mxu0 0
    %1567 = vmatpush1.bf16.xpose.msra.mxu0 %v1564
    %1568 = vmatprep.subr.bf16.mxu0 0
    %1569 = vmatpush1.bf16.xpose.msra.mxu0 0
    %1570 = vmatprep.subr.bf16.mxu0 0
    %1571 = vmatpush1.bf16.xpose.msra.mxu0 0
    %1572 = vmatprep.subr.bf16.mxu0 0
    %1573 = vmatpush1.bf16.xpose.msra.mxu0 0
    %1574 = vmatprep.subr.bf16.mxu0 0
    %1575 = vmatpush1.bf16.xpose.msra.mxu0 0
    %1576 = vmatprep.subr.bf16.mxu0 0
    %1577 = vmatpush1.bf16.xpose.msra.mxu0 0
    %1578 = vmatprep.subr.bf16.mxu0 0
    %1579 = vmatpush1.bf16.xpose.msra.mxu0 0
    %1580 = vmatprep.subr.bf16.mxu0 0
    %1581 = vmatpush1.bf16.xpose.msra.mxu0 0
    %1582 = vmatprep.subr.bf16.mxu0 0
    %1583 = vmatpush1.bf16.xpose.msra.mxu0 0
    %1584 = vmatprep.subr.bf16.mxu0 0
    %1585 = vmatpush1.bf16.xpose.msra.mxu0 0
    %1586 = vmatprep.subr.bf16.mxu0 0
    %1587 = vmatpush1.bf16.xpose.msra.mxu0 0
    %1588 = vmatprep.subr.bf16.mxu0 0
    %1589 = vmatpush1.bf16.xpose.msra.mxu0 0
    %1590 = vmatprep.subr.bf16.mxu0 0
    %1591 = vmatpush1.bf16.xpose.msra.mxu0 0
    %1592 = vmatprep.subr.bf16.mxu0 0
    %1593 = vmatpush1.bf16.xpose.msra.mxu0 0
    %1594 = vmatprep.subr.bf16.mxu0 0
    %1595 = vmatpush1.bf16.xpose.msra.mxu0 0
    %1596 = vmatprep.subr.bf16.mxu0 0
    %1597 = vmatpush1.bf16.xpose.msra.mxu0 0
    %1598 = vmatprep.mubr.bf16.mxu0 0
    %1599 = vmatmul.mubr.bf16.gmra.mrb[0].mxu0 %v1561
    %v1600 = vpop.f32.mrb[0].mxu0
    %v1601 = vadd.f32 0.0, %v1600
    %v1602 = vpop.f32.mrb[0].mxu0
    %v1603 = vpop.f32.mrb[0].mxu0
    %v1604 = vpop.f32.mrb[0].mxu0
    %1605 = vdwg.mxu0
    %1607 = vrot.lane.b32.xlu0 %v1454, 96
    %v1608 = vpop.permute.xlu0 %1607
    %v1610 = vsel %vm136, %v1454, 0
    %v1613 = vsel %vm136, %v1608, 0
    %1615 = vmatprep.subr.bf16.mxu0 0
    %1616 = vmatpush1.bf16.xpose.msra.mxu0 %v1613
    %1617 = vmatprep.subr.bf16.mxu0 0
    %1618 = vmatpush1.bf16.xpose.msra.mxu0 0
    %1619 = vmatprep.subr.bf16.mxu0 0
    %1620 = vmatpush1.bf16.xpose.msra.mxu0 0
    %1621 = vmatprep.subr.bf16.mxu0 0
    %1622 = vmatpush1.bf16.xpose.msra.mxu0 0
    %1623 = vmatprep.subr.bf16.mxu0 0
    %1624 = vmatpush1.bf16.xpose.msra.mxu0 0
    %1625 = vmatprep.subr.bf16.mxu0 0
    %1626 = vmatpush1.bf16.xpose.msra.mxu0 0
    %1627 = vmatprep.subr.bf16.mxu0 0
    %1628 = vmatpush1.bf16.xpose.msra.mxu0 0
    %1629 = vmatprep.subr.bf16.mxu0 0
    %1630 = vmatpush1.bf16.xpose.msra.mxu0 0
    %1631 = vmatprep.subr.bf16.mxu0 0
    %1632 = vmatpush1.bf16.xpose.msra.mxu0 0
    %1633 = vmatprep.subr.bf16.mxu0 0
    %1634 = vmatpush1.bf16.xpose.msra.mxu0 0
    %1635 = vmatprep.subr.bf16.mxu0 0
    %1636 = vmatpush1.bf16.xpose.msra.mxu0 0
    %1637 = vmatprep.subr.bf16.mxu0 0
    %1638 = vmatpush1.bf16.xpose.msra.mxu0 0
    %1639 = vmatprep.subr.bf16.mxu0 0
    %1640 = vmatpush1.bf16.xpose.msra.mxu0 0
    %1641 = vmatprep.subr.bf16.mxu0 0
    %1642 = vmatpush1.bf16.xpose.msra.mxu0 0
    %1643 = vmatprep.subr.bf16.mxu0 0
    %1644 = vmatpush1.bf16.xpose.msra.mxu0 0
    %1645 = vmatprep.subr.bf16.mxu0 0
    %1646 = vmatpush1.bf16.xpose.msra.mxu0 0
    %1647 = vmatprep.mubr.bf16.mxu0 0
    %1648 = vmatmul.mubr.bf16.gmra.mrb[0].mxu0 %v1610
    %v1649 = vpop.f32.mrb[0].mxu0
    %v1650 = vadd.f32 0.0, %v1649
    %v1651 = vpop.f32.mrb[0].mxu0
    %v1652 = vpop.f32.mrb[0].mxu0
    %v1653 = vpop.f32.mrb[0].mxu0
    %1654 = vdwg.mxu0
    %1656 = vrot.lane.b32.xlu0 %v1455, 96
    %v1657 = vpop.permute.xlu0 %1656
    %v1659 = vsel %vm136, %v1455, 0
    %v1662 = vsel %vm136, %v1657, 0
    %1664 = vmatprep.subr.bf16.mxu0 0
    %1665 = vmatpush1.bf16.xpose.msra.mxu0 %v1662
    %1666 = vmatprep.subr.bf16.mxu0 0
    %1667 = vmatpush1.bf16.xpose.msra.mxu0 0
    %1668 = vmatprep.subr.bf16.mxu0 0
    %1669 = vmatpush1.bf16.xpose.msra.mxu0 0
    %1670 = vmatprep.subr.bf16.mxu0 0
    %1671 = vmatpush1.bf16.xpose.msra.mxu0 0
    %1672 = vmatprep.subr.bf16.mxu0 0
    %1673 = vmatpush1.bf16.xpose.msra.mxu0 0
    %1674 = vmatprep.subr.bf16.mxu0 0
    %1675 = vmatpush1.bf16.xpose.msra.mxu0 0
    %1676 = vmatprep.subr.bf16.mxu0 0
    %1677 = vmatpush1.bf16.xpose.msra.mxu0 0
    %1678 = vmatprep.subr.bf16.mxu0 0
    %1679 = vmatpush1.bf16.xpose.msra.mxu0 0
    %1680 = vmatprep.subr.bf16.mxu0 0
    %1681 = vmatpush1.bf16.xpose.msra.mxu0 0
    %1682 = vmatprep.subr.bf16.mxu0 0
    %1683 = vmatpush1.bf16.xpose.msra.mxu0 0
    %1684 = vmatprep.subr.bf16.mxu0 0
    %1685 = vmatpush1.bf16.xpose.msra.mxu0 0
    %1686 = vmatprep.subr.bf16.mxu0 0
    %1687 = vmatpush1.bf16.xpose.msra.mxu0 0
    %1688 = vmatprep.subr.bf16.mxu0 0
    %1689 = vmatpush1.bf16.xpose.msra.mxu0 0
    %1690 = vmatprep.subr.bf16.mxu0 0
    %1691 = vmatpush1.bf16.xpose.msra.mxu0 0
    %1692 = vmatprep.subr.bf16.mxu0 0
    %1693 = vmatpush1.bf16.xpose.msra.mxu0 0
    %1694 = vmatprep.subr.bf16.mxu0 0
    %1695 = vmatpush1.bf16.xpose.msra.mxu0 0
    %1696 = vmatprep.mubr.bf16.mxu0 0
    %1697 = vmatmul.mubr.bf16.gmra.mrb[0].mxu0 %v1659
    %v1698 = vpop.f32.mrb[0].mxu0
    %v1699 = vadd.f32 0.0, %v1698
    %v1700 = vpop.f32.mrb[0].mxu0
    %v1701 = vpop.f32.mrb[0].mxu0
    %v1702 = vpop.f32.mrb[0].mxu0
    %1703 = vdwg.mxu0
    %1705 = vrot.lane.b32.xlu0 %v1456, 96
    %v1706 = vpop.permute.xlu0 %1705
    %v1708 = vsel %vm136, %v1456, 0
    %v1711 = vsel %vm136, %v1706, 0
    %1713 = vmatprep.subr.bf16.mxu0 0
    %1714 = vmatpush1.bf16.xpose.msra.mxu0 %v1711
    %1715 = vmatprep.subr.bf16.mxu0 0
    %1716 = vmatpush1.bf16.xpose.msra.mxu0 0
    %1717 = vmatprep.subr.bf16.mxu0 0
    %1718 = vmatpush1.bf16.xpose.msra.mxu0 0
    %1719 = vmatprep.subr.bf16.mxu0 0
    %1720 = vmatpush1.bf16.xpose.msra.mxu0 0
    %1721 = vmatprep.subr.bf16.mxu0 0
    %1722 = vmatpush1.bf16.xpose.msra.mxu0 0
    %1723 = vmatprep.subr.bf16.mxu0 0
    %1724 = vmatpush1.bf16.xpose.msra.mxu0 0
    %1725 = vmatprep.subr.bf16.mxu0 0
    %1726 = vmatpush1.bf16.xpose.msra.mxu0 0
    %1727 = vmatprep.subr.bf16.mxu0 0
    %1728 = vmatpush1.bf16.xpose.msra.mxu0 0
    %1729 = vmatprep.subr.bf16.mxu0 0
    %1730 = vmatpush1.bf16.xpose.msra.mxu0 0
    %1731 = vmatprep.subr.bf16.mxu0 0
    %1732 = vmatpush1.bf16.xpose.msra.mxu0 0
    %1733 = vmatprep.subr.bf16.mxu0 0
    %1734 = vmatpush1.bf16.xpose.msra.mxu0 0
    %1735 = vmatprep.subr.bf16.mxu0 0
    %1736 = vmatpush1.bf16.xpose.msra.mxu0 0
    %1737 = vmatprep.subr.bf16.mxu0 0
    %1738 = vmatpush1.bf16.xpose.msra.mxu0 0
    %1739 = vmatprep.subr.bf16.mxu0 0
    %1740 = vmatpush1.bf16.xpose.msra.mxu0 0
    %1741 = vmatprep.subr.bf16.mxu0 0
    %1742 = vmatpush1.bf16.xpose.msra.mxu0 0
    %1743 = vmatprep.subr.bf16.mxu0 0
    %1744 = vmatpush1.bf16.xpose.msra.mxu0 0
    %1745 = vmatprep.mubr.bf16.mxu0 0
    %1746 = vmatmul.mubr.bf16.gmra.mrb[0].mxu0 %v1708
    %v1747 = vpop.f32.mrb[0].mxu0
    %v1748 = vadd.f32 0.0, %v1747
    %v1749 = vpop.f32.mrb[0].mxu0
    %v1750 = vpop.f32.mrb[0].mxu0
    %v1751 = vpop.f32.mrb[0].mxu0
    %1752 = vdwg.mxu0
    %1754 = vrot.lane.b32.xlu0 %v1457, 96
    %v1755 = vpop.permute.xlu0 %1754
    %v1757 = vsel %vm136, %v1457, 0
    %v1760 = vsel %vm136, %v1755, 0
    %1762 = vmatprep.subr.bf16.mxu0 0
    %1763 = vmatpush1.bf16.xpose.msra.mxu0 %v1760
    %1764 = vmatprep.subr.bf16.mxu0 0
    %1765 = vmatpush1.bf16.xpose.msra.mxu0 0
    %1766 = vmatprep.subr.bf16.mxu0 0
    %1767 = vmatpush1.bf16.xpose.msra.mxu0 0
    %1768 = vmatprep.subr.bf16.mxu0 0
    %1769 = vmatpush1.bf16.xpose.msra.mxu0 0
    %1770 = vmatprep.subr.bf16.mxu0 0
    %1771 = vmatpush1.bf16.xpose.msra.mxu0 0
    %1772 = vmatprep.subr.bf16.mxu0 0
    %1773 = vmatpush1.bf16.xpose.msra.mxu0 0
    %1774 = vmatprep.subr.bf16.mxu0 0
    %1775 = vmatpush1.bf16.xpose.msra.mxu0 0
    %1776 = vmatprep.subr.bf16.mxu0 0
    %1777 = vmatpush1.bf16.xpose.msra.mxu0 0
    %1778 = vmatprep.subr.bf16.mxu0 0
    %1779 = vmatpush1.bf16.xpose.msra.mxu0 0
    %1780 = vmatprep.subr.bf16.mxu0 0
    %1781 = vmatpush1.bf16.xpose.msra.mxu0 0
    %1782 = vmatprep.subr.bf16.mxu0 0
    %1783 = vmatpush1.bf16.xpose.msra.mxu0 0
    %1784 = vmatprep.subr.bf16.mxu0 0
    %1785 = vmatpush1.bf16.xpose.msra.mxu0 0
    %1786 = vmatprep.subr.bf16.mxu0 0
    %1787 = vmatpush1.bf16.xpose.msra.mxu0 0
    %1788 = vmatprep.subr.bf16.mxu0 0
    %1789 = vmatpush1.bf16.xpose.msra.mxu0 0
    %1790 = vmatprep.subr.bf16.mxu0 0
    %1791 = vmatpush1.bf16.xpose.msra.mxu0 0
    %1792 = vmatprep.subr.bf16.mxu0 0
    %1793 = vmatpush1.bf16.xpose.msra.mxu0 0
    %1794 = vmatprep.mubr.bf16.mxu0 0
    %1795 = vmatmul.mubr.bf16.gmra.mrb[0].mxu0 %v1757
    %v1796 = vpop.f32.mrb[0].mxu0
    %v1797 = vadd.f32 0.0, %v1796
    %v1798 = vpop.f32.mrb[0].mxu0
    %v1799 = vpop.f32.mrb[0].mxu0
    %v1800 = vpop.f32.mrb[0].mxu0
    %1801 = vdwg.mxu0
    %1803 = vrot.lane.b32.xlu0 %v1458, 96
    %v1804 = vpop.permute.xlu0 %1803
    %v1806 = vsel %vm136, %v1458, 0
    %v1809 = vsel %vm136, %v1804, 0
    %1811 = vmatprep.subr.bf16.mxu0 0
    %1812 = vmatpush1.bf16.xpose.msra.mxu0 %v1809
    %1813 = vmatprep.subr.bf16.mxu0 0
    %1814 = vmatpush1.bf16.xpose.msra.mxu0 0
    %1815 = vmatprep.subr.bf16.mxu0 0
    %1816 = vmatpush1.bf16.xpose.msra.mxu0 0
    %1817 = vmatprep.subr.bf16.mxu0 0
    %1818 = vmatpush1.bf16.xpose.msra.mxu0 0
    %1819 = vmatprep.subr.bf16.mxu0 0
    %1820 = vmatpush1.bf16.xpose.msra.mxu0 0
    %1821 = vmatprep.subr.bf16.mxu0 0
    %1822 = vmatpush1.bf16.xpose.msra.mxu0 0
    %1823 = vmatprep.subr.bf16.mxu0 0
    %1824 = vmatpush1.bf16.xpose.msra.mxu0 0
    %1825 = vmatprep.subr.bf16.mxu0 0
    %1826 = vmatpush1.bf16.xpose.msra.mxu0 0
    %1827 = vmatprep.subr.bf16.mxu0 0
    %1828 = vmatpush1.bf16.xpose.msra.mxu0 0
    %1829 = vmatprep.subr.bf16.mxu0 0
    %1830 = vmatpush1.bf16.xpose.msra.mxu0 0
    %1831 = vmatprep.subr.bf16.mxu0 0
    %1832 = vmatpush1.bf16.xpose.msra.mxu0 0
    %1833 = vmatprep.subr.bf16.mxu0 0
    %1834 = vmatpush1.bf16.xpose.msra.mxu0 0
    %1835 = vmatprep.subr.bf16.mxu0 0
    %1836 = vmatpush1.bf16.xpose.msra.mxu0 0
    %1837 = vmatprep.subr.bf16.mxu0 0
    %1838 = vmatpush1.bf16.xpose.msra.mxu0 0
    %1839 = vmatprep.subr.bf16.mxu0 0
    %1840 = vmatpush1.bf16.xpose.msra.mxu0 0
    %1841 = vmatprep.subr.bf16.mxu0 0
    %1842 = vmatpush1.bf16.xpose.msra.mxu0 0
    %1843 = vmatprep.mubr.bf16.mxu0 0
    %1844 = vmatmul.mubr.bf16.gmra.mrb[0].mxu0 %v1806
    %v1845 = vpop.f32.mrb[0].mxu0
    %v1846 = vadd.f32 0.0, %v1845
    %v1847 = vpop.f32.mrb[0].mxu0
    %v1848 = vpop.f32.mrb[0].mxu0
    %v1849 = vpop.f32.mrb[0].mxu0
    %1850 = vdwg.mxu0
    %v1851 = vmul.f32 %v1503, 0.35355338
    %v1852 = vmul.f32 %v1552, 0.35355338
    %v1853 = vmul.f32 %v1601, 0.35355338
    %v1854 = vmul.f32 %v1650, 0.35355338
    %v1855 = vmul.f32 %v1699, 0.35355338
    %v1856 = vmul.f32 %v1748, 0.35355338
    %v1857 = vmul.f32 %v1797, 0.35355338
    %v1858 = vmul.f32 %v1846, 0.35355338
    %v1859 = vadd.f32 %v1851, %v30
    %v1860 = vadd.f32 %v1852, %v31
    %v1861 = vadd.f32 %v1853, %v32
    %v1862 = vadd.f32 %v1854, %v33
    %v1863 = vadd.f32 %v1855, %v34
    %v1864 = vadd.f32 %v1856, %v35
    %v1865 = vadd.f32 %v1857, %v36
    %v1866 = vadd.f32 %v1858, %v37
    %v1867 = vsel %vm136, %v1859, -inf
    %1868 = vmax.xlane.f32.xlu0 %v1867
    %v1869 = vpop.xlane.xlu0 %1868
    %v1870 = vsel %vm136, %v1860, -inf
    %1871 = vmax.xlane.f32.xlu0 %v1870
    %v1872 = vpop.xlane.xlu0 %1871
    %v1873 = vsel %vm136, %v1861, -inf
    %1874 = vmax.xlane.f32.xlu0 %v1873
    %v1875 = vpop.xlane.xlu0 %1874
    %v1876 = vsel %vm136, %v1862, -inf
    %1877 = vmax.xlane.f32.xlu0 %v1876
    %v1878 = vpop.xlane.xlu0 %1877
    %v1879 = vsel %vm136, %v1863, -inf
    %1880 = vmax.xlane.f32.xlu0 %v1879
    %v1881 = vpop.xlane.xlu0 %1880
    %v1882 = vsel %vm136, %v1864, -inf
    %1883 = vmax.xlane.f32.xlu0 %v1882
    %v1884 = vpop.xlane.xlu0 %1883
    %v1885 = vsel %vm136, %v1865, -inf
    %1886 = vmax.xlane.f32.xlu0 %v1885
    %v1887 = vpop.xlane.xlu0 %1886
    %v1888 = vsel %vm136, %v1866, -inf
    %1889 = vmax.xlane.f32.xlu0 %v1888
    %v1890 = vpop.xlane.xlu0 %1889
    %v1891 = vsub.f32 %v1859, %v1869
    %v1892 = vsub.f32 %v1860, %v1872
    %v1893 = vsub.f32 %v1861, %v1875
    %v1894 = vsub.f32 %v1862, %v1878
    %v1895 = vsub.f32 %v1863, %v1881
    %v1896 = vsub.f32 %v1864, %v1884
    %v1897 = vsub.f32 %v1865, %v1887
    %v1898 = vsub.f32 %v1866, %v1890
    %v1899 = vmul.f32 %v1891, 1.442695
    %v1900 = vpow.pop %v1899
    %v1901 = vmul.f32 %v1892, 1.442695
    %v1902 = vpow.pop %v1901
    %v1903 = vmul.f32 %v1893, 1.442695
    %v1904 = vpow.pop %v1903
    %v1905 = vmul.f32 %v1894, 1.442695
    %v1906 = vpow.pop %v1905
    %v1907 = vmul.f32 %v1895, 1.442695
    %v1908 = vpow.pop %v1907
    %v1909 = vmul.f32 %v1896, 1.442695
    %v1910 = vpow.pop %v1909
    %v1911 = vmul.f32 %v1897, 1.442695
    %v1912 = vpow.pop %v1911
    %v1913 = vmul.f32 %v1898, 1.442695
    %v1914 = vpow.pop %v1913
    %v1915 = vsel %vm136, %v1900, 0.0
    %1916 = vadd.xlane.f32.xlu0 %v1915
    %v1917 = vpop.xlane.xlu0 %1916
    %v1918 = vsel %vm136, %v1902, 0.0
    %1919 = vadd.xlane.f32.xlu0 %v1918
    %v1920 = vpop.xlane.xlu0 %1919
    %v1921 = vsel %vm136, %v1904, 0.0
    %1922 = vadd.xlane.f32.xlu0 %v1921
    %v1923 = vpop.xlane.xlu0 %1922
    %v1924 = vsel %vm136, %v1906, 0.0
    %1925 = vadd.xlane.f32.xlu0 %v1924
    %v1926 = vpop.xlane.xlu0 %1925
    %v1927 = vsel %vm136, %v1908, 0.0
    %1928 = vadd.xlane.f32.xlu0 %v1927
    %v1929 = vpop.xlane.xlu0 %1928
    %v1930 = vsel %vm136, %v1910, 0.0
    %1931 = vadd.xlane.f32.xlu0 %v1930
    %v1932 = vpop.xlane.xlu0 %1931
    %v1933 = vsel %vm136, %v1912, 0.0
    %1934 = vadd.xlane.f32.xlu0 %v1933
    %v1935 = vpop.xlane.xlu0 %1934
    %v1936 = vsel %vm136, %v1914, 0.0
    %1937 = vadd.xlane.f32.xlu0 %v1936
    %v1938 = vpop.xlane.xlu0 %1937
    %v1939 = vrcp.pop %v1917
    %v1940 = vrcp.pop %v1920
    %v1941 = vrcp.pop %v1923
    %v1942 = vrcp.pop %v1926
    %v1943 = vrcp.pop %v1929
    %v1944 = vrcp.pop %v1932
    %v1945 = vrcp.pop %v1935
    %v1946 = vrcp.pop %v1938
    %v1947 = vmul.f32 %v1900, %v1939
    %v1948 = vmul.f32 %v1902, %v1940
    %v1949 = vmul.f32 %v1904, %v1941
    %v1950 = vmul.f32 %v1906, %v1942
    %v1951 = vmul.f32 %v1908, %v1943
    %v1952 = vmul.f32 %v1910, %v1944
    %v1953 = vmul.f32 %v1912, %v1945
    %v1954 = vmul.f32 %v1914, %v1946
    %v1955 = vpack.c.bf16 %v1947, %v1947
    %v1956 = vpack.c.bf16 %v1948, %v1948
    %v1957 = vpack.c.bf16 %v1949, %v1949
    %v1958 = vpack.c.bf16 %v1950, %v1950
    %v1959 = vpack.c.bf16 %v1951, %v1951
    %v1960 = vpack.c.bf16 %v1952, %v1952
    %v1961 = vpack.c.bf16 %v1953, %v1953
    %v1962 = vpack.c.bf16 %v1954, %v1954
    %1963 = vrot.lane.b32.xlu0 %v1451, 64
    %v1964 = vpop.permute.xlu0 %1963
    %v1966 = vsel %vm136, %v1955, 0
    %v1969 = vsel %vm643, %v1964, 0
    %1971 = vmatprep.subr.bf16.mxu0 0
    %1972 = vmatpush1.bf16.msra.mxu0 %v1969
    %1973 = vmatprep.subr.bf16.mxu0 0
    %1974 = vmatpush1.bf16.msra.mxu0 0
    %1975 = vmatprep.subr.bf16.mxu0 0
    %1976 = vmatpush1.bf16.msra.mxu0 0
    %1977 = vmatprep.subr.bf16.mxu0 0
    %1978 = vmatpush1.bf16.msra.mxu0 0
    %1979 = vmatprep.subr.bf16.mxu0 0
    %1980 = vmatpush1.bf16.msra.mxu0 0
    %1981 = vmatprep.subr.bf16.mxu0 0
    %1982 = vmatpush1.bf16.msra.mxu0 0
    %1983 = vmatprep.subr.bf16.mxu0 0
    %1984 = vmatpush1.bf16.msra.mxu0 0
    %1985 = vmatprep.subr.bf16.mxu0 0
    %1986 = vmatpush1.bf16.msra.mxu0 0
    %1987 = vmatprep.subr.bf16.mxu0 0
    %1988 = vmatpush1.bf16.msra.mxu0 0
    %1989 = vmatprep.subr.bf16.mxu0 0
    %1990 = vmatpush1.bf16.msra.mxu0 0
    %1991 = vmatprep.subr.bf16.mxu0 0
    %1992 = vmatpush1.bf16.msra.mxu0 0
    %1993 = vmatprep.subr.bf16.mxu0 0
    %1994 = vmatpush1.bf16.msra.mxu0 0
    %1995 = vmatprep.subr.bf16.mxu0 0
    %1996 = vmatpush1.bf16.msra.mxu0 0
    %1997 = vmatprep.subr.bf16.mxu0 0
    %1998 = vmatpush1.bf16.msra.mxu0 0
    %1999 = vmatprep.subr.bf16.mxu0 0
    %2000 = vmatpush1.bf16.msra.mxu0 0
    %2001 = vmatprep.subr.bf16.mxu0 0
    %2002 = vmatpush1.bf16.msra.mxu0 0
    %2003 = vmatprep.mubr.bf16.mxu0 0
    %2004 = vmatmul.mubr.bf16.gmra.mrb[0].mxu0 %v1966
    %v2005 = vpop.f32.mrb[0].mxu0
    %v2006 = vadd.f32 0.0, %v2005
    %v2007 = vpop.f32.mrb[0].mxu0
    %v2008 = vpop.f32.mrb[0].mxu0
    %v2009 = vpop.f32.mrb[0].mxu0
    %2010 = vdwg.mxu0
    %2011 = vrot.lane.b32.xlu0 %v1452, 64
    %v2012 = vpop.permute.xlu0 %2011
    %v2014 = vsel %vm136, %v1956, 0
    %v2017 = vsel %vm643, %v2012, 0
    %2019 = vmatprep.subr.bf16.mxu0 0
    %2020 = vmatpush1.bf16.msra.mxu0 %v2017
    %2021 = vmatprep.subr.bf16.mxu0 0
    %2022 = vmatpush1.bf16.msra.mxu0 0
    %2023 = vmatprep.subr.bf16.mxu0 0
    %2024 = vmatpush1.bf16.msra.mxu0 0
    %2025 = vmatprep.subr.bf16.mxu0 0
    %2026 = vmatpush1.bf16.msra.mxu0 0
    %2027 = vmatprep.subr.bf16.mxu0 0
    %2028 = vmatpush1.bf16.msra.mxu0 0
    %2029 = vmatprep.subr.bf16.mxu0 0
    %2030 = vmatpush1.bf16.msra.mxu0 0
    %2031 = vmatprep.subr.bf16.mxu0 0
    %2032 = vmatpush1.bf16.msra.mxu0 0
    %2033 = vmatprep.subr.bf16.mxu0 0
    %2034 = vmatpush1.bf16.msra.mxu0 0
    %2035 = vmatprep.subr.bf16.mxu0 0
    %2036 = vmatpush1.bf16.msra.mxu0 0
    %2037 = vmatprep.subr.bf16.mxu0 0
    %2038 = vmatpush1.bf16.msra.mxu0 0
    %2039 = vmatprep.subr.bf16.mxu0 0
    %2040 = vmatpush1.bf16.msra.mxu0 0
    %2041 = vmatprep.subr.bf16.mxu0 0
    %2042 = vmatpush1.bf16.msra.mxu0 0
    %2043 = vmatprep.subr.bf16.mxu0 0
    %2044 = vmatpush1.bf16.msra.mxu0 0
    %2045 = vmatprep.subr.bf16.mxu0 0
    %2046 = vmatpush1.bf16.msra.mxu0 0
    %2047 = vmatprep.subr.bf16.mxu0 0
    %2048 = vmatpush1.bf16.msra.mxu0 0
    %2049 = vmatprep.subr.bf16.mxu0 0
    %2050 = vmatpush1.bf16.msra.mxu0 0
    %2051 = vmatprep.mubr.bf16.mxu0 0
    %2052 = vmatmul.mubr.bf16.gmra.mrb[0].mxu0 %v2014
    %v2053 = vpop.f32.mrb[0].mxu0
    %v2054 = vadd.f32 0.0, %v2053
    %v2055 = vpop.f32.mrb[0].mxu0
    %v2056 = vpop.f32.mrb[0].mxu0
    %v2057 = vpop.f32.mrb[0].mxu0
    %2058 = vdwg.mxu0
    %2059 = vrot.lane.b32.xlu0 %v1453, 64
    %v2060 = vpop.permute.xlu0 %2059
    %v2062 = vsel %vm136, %v1957, 0
    %v2065 = vsel %vm643, %v2060, 0
    %2067 = vmatprep.subr.bf16.mxu0 0
    %2068 = vmatpush1.bf16.msra.mxu0 %v2065
    %2069 = vmatprep.subr.bf16.mxu0 0
    %2070 = vmatpush1.bf16.msra.mxu0 0
    %2071 = vmatprep.subr.bf16.mxu0 0
    %2072 = vmatpush1.bf16.msra.mxu0 0
    %2073 = vmatprep.subr.bf16.mxu0 0
    %2074 = vmatpush1.bf16.msra.mxu0 0
    %2075 = vmatprep.subr.bf16.mxu0 0
    %2076 = vmatpush1.bf16.msra.mxu0 0
    %2077 = vmatprep.subr.bf16.mxu0 0
    %2078 = vmatpush1.bf16.msra.mxu0 0
    %2079 = vmatprep.subr.bf16.mxu0 0
    %2080 = vmatpush1.bf16.msra.mxu0 0
    %2081 = vmatprep.subr.bf16.mxu0 0
    %2082 = vmatpush1.bf16.msra.mxu0 0
    %2083 = vmatprep.subr.bf16.mxu0 0
    %2084 = vmatpush1.bf16.msra.mxu0 0
    %2085 = vmatprep.subr.bf16.mxu0 0
    %2086 = vmatpush1.bf16.msra.mxu0 0
    %2087 = vmatprep.subr.bf16.mxu0 0
    %2088 = vmatpush1.bf16.msra.mxu0 0
    %2089 = vmatprep.subr.bf16.mxu0 0
    %2090 = vmatpush1.bf16.msra.mxu0 0
    %2091 = vmatprep.subr.bf16.mxu0 0
    %2092 = vmatpush1.bf16.msra.mxu0 0
    %2093 = vmatprep.subr.bf16.mxu0 0
    %2094 = vmatpush1.bf16.msra.mxu0 0
    %2095 = vmatprep.subr.bf16.mxu0 0
    %2096 = vmatpush1.bf16.msra.mxu0 0
    %2097 = vmatprep.subr.bf16.mxu0 0
    %2098 = vmatpush1.bf16.msra.mxu0 0
    %2099 = vmatprep.mubr.bf16.mxu0 0
    %2100 = vmatmul.mubr.bf16.gmra.mrb[0].mxu0 %v2062
    %v2101 = vpop.f32.mrb[0].mxu0
    %v2102 = vadd.f32 0.0, %v2101
    %v2103 = vpop.f32.mrb[0].mxu0
    %v2104 = vpop.f32.mrb[0].mxu0
    %v2105 = vpop.f32.mrb[0].mxu0
    %2106 = vdwg.mxu0
    %2107 = vrot.lane.b32.xlu0 %v1454, 64
    %v2108 = vpop.permute.xlu0 %2107
    %v2110 = vsel %vm136, %v1958, 0
    %v2113 = vsel %vm643, %v2108, 0
    %2115 = vmatprep.subr.bf16.mxu0 0
    %2116 = vmatpush1.bf16.msra.mxu0 %v2113
    %2117 = vmatprep.subr.bf16.mxu0 0
    %2118 = vmatpush1.bf16.msra.mxu0 0
    %2119 = vmatprep.subr.bf16.mxu0 0
    %2120 = vmatpush1.bf16.msra.mxu0 0
    %2121 = vmatprep.subr.bf16.mxu0 0
    %2122 = vmatpush1.bf16.msra.mxu0 0
    %2123 = vmatprep.subr.bf16.mxu0 0
    %2124 = vmatpush1.bf16.msra.mxu0 0
    %2125 = vmatprep.subr.bf16.mxu0 0
    %2126 = vmatpush1.bf16.msra.mxu0 0
    %2127 = vmatprep.subr.bf16.mxu0 0
    %2128 = vmatpush1.bf16.msra.mxu0 0
    %2129 = vmatprep.subr.bf16.mxu0 0
    %2130 = vmatpush1.bf16.msra.mxu0 0
    %2131 = vmatprep.subr.bf16.mxu0 0
    %2132 = vmatpush1.bf16.msra.mxu0 0
    %2133 = vmatprep.subr.bf16.mxu0 0
    %2134 = vmatpush1.bf16.msra.mxu0 0
    %2135 = vmatprep.subr.bf16.mxu0 0
    %2136 = vmatpush1.bf16.msra.mxu0 0
    %2137 = vmatprep.subr.bf16.mxu0 0
    %2138 = vmatpush1.bf16.msra.mxu0 0
    %2139 = vmatprep.subr.bf16.mxu0 0
    %2140 = vmatpush1.bf16.msra.mxu0 0
    %2141 = vmatprep.subr.bf16.mxu0 0
    %2142 = vmatpush1.bf16.msra.mxu0 0
    %2143 = vmatprep.subr.bf16.mxu0 0
    %2144 = vmatpush1.bf16.msra.mxu0 0
    %2145 = vmatprep.subr.bf16.mxu0 0
    %2146 = vmatpush1.bf16.msra.mxu0 0
    %2147 = vmatprep.mubr.bf16.mxu0 0
    %2148 = vmatmul.mubr.bf16.gmra.mrb[0].mxu0 %v2110
    %v2149 = vpop.f32.mrb[0].mxu0
    %v2150 = vadd.f32 0.0, %v2149
    %v2151 = vpop.f32.mrb[0].mxu0
    %v2152 = vpop.f32.mrb[0].mxu0
    %v2153 = vpop.f32.mrb[0].mxu0
    %2154 = vdwg.mxu0
    %2155 = vrot.lane.b32.xlu0 %v1455, 64
    %v2156 = vpop.permute.xlu0 %2155
    %v2158 = vsel %vm136, %v1959, 0
    %v2161 = vsel %vm643, %v2156, 0
    %2163 = vmatprep.subr.bf16.mxu0 0
    %2164 = vmatpush1.bf16.msra.mxu0 %v2161
    %2165 = vmatprep.subr.bf16.mxu0 0
    %2166 = vmatpush1.bf16.msra.mxu0 0
    %2167 = vmatprep.subr.bf16.mxu0 0
    %2168 = vmatpush1.bf16.msra.mxu0 0
    %2169 = vmatprep.subr.bf16.mxu0 0
    %2170 = vmatpush1.bf16.msra.mxu0 0
    %2171 = vmatprep.subr.bf16.mxu0 0
    %2172 = vmatpush1.bf16.msra.mxu0 0
    %2173 = vmatprep.subr.bf16.mxu0 0
    %2174 = vmatpush1.bf16.msra.mxu0 0
    %2175 = vmatprep.subr.bf16.mxu0 0
    %2176 = vmatpush1.bf16.msra.mxu0 0
    %2177 = vmatprep.subr.bf16.mxu0 0
    %2178 = vmatpush1.bf16.msra.mxu0 0
    %2179 = vmatprep.subr.bf16.mxu0 0
    %2180 = vmatpush1.bf16.msra.mxu0 0
    %2181 = vmatprep.subr.bf16.mxu0 0
    %2182 = vmatpush1.bf16.msra.mxu0 0
    %2183 = vmatprep.subr.bf16.mxu0 0
    %2184 = vmatpush1.bf16.msra.mxu0 0
    %2185 = vmatprep.subr.bf16.mxu0 0
    %2186 = vmatpush1.bf16.msra.mxu0 0
    %2187 = vmatprep.subr.bf16.mxu0 0
    %2188 = vmatpush1.bf16.msra.mxu0 0
    %2189 = vmatprep.subr.bf16.mxu0 0
    %2190 = vmatpush1.bf16.msra.mxu0 0
    %2191 = vmatprep.subr.bf16.mxu0 0
    %2192 = vmatpush1.bf16.msra.mxu0 0
    %2193 = vmatprep.subr.bf16.mxu0 0
    %2194 = vmatpush1.bf16.msra.mxu0 0
    %2195 = vmatprep.mubr.bf16.mxu0 0
    %2196 = vmatmul.mubr.bf16.gmra.mrb[0].mxu0 %v2158
    %v2197 = vpop.f32.mrb[0].mxu0
    %v2198 = vadd.f32 0.0, %v2197
    %v2199 = vpop.f32.mrb[0].mxu0
    %v2200 = vpop.f32.mrb[0].mxu0
    %v2201 = vpop.f32.mrb[0].mxu0
    %2202 = vdwg.mxu0
    %2203 = vrot.lane.b32.xlu0 %v1456, 64
    %v2204 = vpop.permute.xlu0 %2203
    %v2206 = vsel %vm136, %v1960, 0
    %v2209 = vsel %vm643, %v2204, 0
    %2211 = vmatprep.subr.bf16.mxu0 0
    %2212 = vmatpush1.bf16.msra.mxu0 %v2209
    %2213 = vmatprep.subr.bf16.mxu0 0
    %2214 = vmatpush1.bf16.msra.mxu0 0
    %2215 = vmatprep.subr.bf16.mxu0 0
    %2216 = vmatpush1.bf16.msra.mxu0 0
    %2217 = vmatprep.subr.bf16.mxu0 0
    %2218 = vmatpush1.bf16.msra.mxu0 0
    %2219 = vmatprep.subr.bf16.mxu0 0
    %2220 = vmatpush1.bf16.msra.mxu0 0
    %2221 = vmatprep.subr.bf16.mxu0 0
    %2222 = vmatpush1.bf16.msra.mxu0 0
    %2223 = vmatprep.subr.bf16.mxu0 0
    %2224 = vmatpush1.bf16.msra.mxu0 0
    %2225 = vmatprep.subr.bf16.mxu0 0
    %2226 = vmatpush1.bf16.msra.mxu0 0
    %2227 = vmatprep.subr.bf16.mxu0 0
    %2228 = vmatpush1.bf16.msra.mxu0 0
    %2229 = vmatprep.subr.bf16.mxu0 0
    %2230 = vmatpush1.bf16.msra.mxu0 0
    %2231 = vmatprep.subr.bf16.mxu0 0
    %2232 = vmatpush1.bf16.msra.mxu0 0
    %2233 = vmatprep.subr.bf16.mxu0 0
    %2234 = vmatpush1.bf16.msra.mxu0 0
    %2235 = vmatprep.subr.bf16.mxu0 0
    %2236 = vmatpush1.bf16.msra.mxu0 0
    %2237 = vmatprep.subr.bf16.mxu0 0
    %2238 = vmatpush1.bf16.msra.mxu0 0
    %2239 = vmatprep.subr.bf16.mxu0 0
    %2240 = vmatpush1.bf16.msra.mxu0 0
    %2241 = vmatprep.subr.bf16.mxu0 0
    %2242 = vmatpush1.bf16.msra.mxu0 0
    %2243 = vmatprep.mubr.bf16.mxu0 0
    %2244 = vmatmul.mubr.bf16.gmra.mrb[0].mxu0 %v2206
    %v2245 = vpop.f32.mrb[0].mxu0
    %v2246 = vadd.f32 0.0, %v2245
    %v2247 = vpop.f32.mrb[0].mxu0
    %v2248 = vpop.f32.mrb[0].mxu0
    %v2249 = vpop.f32.mrb[0].mxu0
    %2250 = vdwg.mxu0
    %2251 = vrot.lane.b32.xlu0 %v1457, 64
    %v2252 = vpop.permute.xlu0 %2251
    %v2254 = vsel %vm136, %v1961, 0
    %v2257 = vsel %vm643, %v2252, 0
    %2259 = vmatprep.subr.bf16.mxu0 0
    %2260 = vmatpush1.bf16.msra.mxu0 %v2257
    %2261 = vmatprep.subr.bf16.mxu0 0
    %2262 = vmatpush1.bf16.msra.mxu0 0
    %2263 = vmatprep.subr.bf16.mxu0 0
    %2264 = vmatpush1.bf16.msra.mxu0 0
    %2265 = vmatprep.subr.bf16.mxu0 0
    %2266 = vmatpush1.bf16.msra.mxu0 0
    %2267 = vmatprep.subr.bf16.mxu0 0
    %2268 = vmatpush1.bf16.msra.mxu0 0
    %2269 = vmatprep.subr.bf16.mxu0 0
    %2270 = vmatpush1.bf16.msra.mxu0 0
    %2271 = vmatprep.subr.bf16.mxu0 0
    %2272 = vmatpush1.bf16.msra.mxu0 0
    %2273 = vmatprep.subr.bf16.mxu0 0
    %2274 = vmatpush1.bf16.msra.mxu0 0
    %2275 = vmatprep.subr.bf16.mxu0 0
    %2276 = vmatpush1.bf16.msra.mxu0 0
    %2277 = vmatprep.subr.bf16.mxu0 0
    %2278 = vmatpush1.bf16.msra.mxu0 0
    %2279 = vmatprep.subr.bf16.mxu0 0
    %2280 = vmatpush1.bf16.msra.mxu0 0
    %2281 = vmatprep.subr.bf16.mxu0 0
    %2282 = vmatpush1.bf16.msra.mxu0 0
    %2283 = vmatprep.subr.bf16.mxu0 0
    %2284 = vmatpush1.bf16.msra.mxu0 0
    %2285 = vmatprep.subr.bf16.mxu0 0
    %2286 = vmatpush1.bf16.msra.mxu0 0
    %2287 = vmatprep.subr.bf16.mxu0 0
    %2288 = vmatpush1.bf16.msra.mxu0 0
    %2289 = vmatprep.subr.bf16.mxu0 0
    %2290 = vmatpush1.bf16.msra.mxu0 0
    %2291 = vmatprep.mubr.bf16.mxu0 0
    %2292 = vmatmul.mubr.bf16.gmra.mrb[0].mxu0 %v2254
    %v2293 = vpop.f32.mrb[0].mxu0
    %v2294 = vadd.f32 0.0, %v2293
    %v2295 = vpop.f32.mrb[0].mxu0
    %v2296 = vpop.f32.mrb[0].mxu0
    %v2297 = vpop.f32.mrb[0].mxu0
    %2298 = vdwg.mxu0
    %2299 = vrot.lane.b32.xlu0 %v1458, 64
    %v2300 = vpop.permute.xlu0 %2299
    %v2302 = vsel %vm136, %v1962, 0
    %v2305 = vsel %vm643, %v2300, 0
    %2307 = vmatprep.subr.bf16.mxu0 0
    %2308 = vmatpush1.bf16.msra.mxu0 %v2305
    %2309 = vmatprep.subr.bf16.mxu0 0
    %2310 = vmatpush1.bf16.msra.mxu0 0
    %2311 = vmatprep.subr.bf16.mxu0 0
    %2312 = vmatpush1.bf16.msra.mxu0 0
    %2313 = vmatprep.subr.bf16.mxu0 0
    %2314 = vmatpush1.bf16.msra.mxu0 0
    %2315 = vmatprep.subr.bf16.mxu0 0
    %2316 = vmatpush1.bf16.msra.mxu0 0
    %2317 = vmatprep.subr.bf16.mxu0 0
    %2318 = vmatpush1.bf16.msra.mxu0 0
    %2319 = vmatprep.subr.bf16.mxu0 0
    %2320 = vmatpush1.bf16.msra.mxu0 0
    %2321 = vmatprep.subr.bf16.mxu0 0
    %2322 = vmatpush1.bf16.msra.mxu0 0
    %2323 = vmatprep.subr.bf16.mxu0 0
    %2324 = vmatpush1.bf16.msra.mxu0 0
    %2325 = vmatprep.subr.bf16.mxu0 0
    %2326 = vmatpush1.bf16.msra.mxu0 0
    %2327 = vmatprep.subr.bf16.mxu0 0
    %2328 = vmatpush1.bf16.msra.mxu0 0
    %2329 = vmatprep.subr.bf16.mxu0 0
    %2330 = vmatpush1.bf16.msra.mxu0 0
    %2331 = vmatprep.subr.bf16.mxu0 0
    %2332 = vmatpush1.bf16.msra.mxu0 0
    %2333 = vmatprep.subr.bf16.mxu0 0
    %2334 = vmatpush1.bf16.msra.mxu0 0
    %2335 = vmatprep.subr.bf16.mxu0 0
    %2336 = vmatpush1.bf16.msra.mxu0 0
    %2337 = vmatprep.subr.bf16.mxu0 0
    %2338 = vmatpush1.bf16.msra.mxu0 0
    %2339 = vmatprep.mubr.bf16.mxu0 0
    %2340 = vmatmul.mubr.bf16.gmra.mrb[0].mxu0 %v2302
    %v2341 = vpop.f32.mrb[0].mxu0
    %v2342 = vadd.f32 0.0, %v2341
    %v2343 = vpop.f32.mrb[0].mxu0
    %v2344 = vpop.f32.mrb[0].mxu0
    %v2345 = vpop.f32.mrb[0].mxu0
    %2346 = vdwg.mxu0
    %2349 = vrot.lane.b32.xlu0 %v2102, 8
    %v2350 = vpop.permute.xlu0 %2349
    %2351 = vrot.lane.b32.xlu0 %v2150, 8
    %v2352 = vpop.permute.xlu0 %2351
    %2357 = vrot.lane.b32.xlu0 %v2198, 16
    %v2358 = vpop.permute.xlu0 %2357
    %2359 = vrot.lane.b32.xlu0 %v2246, 16
    %v2360 = vpop.permute.xlu0 %2359
    %2365 = vrot.lane.b32.xlu0 %v2294, 24
    %v2366 = vpop.permute.xlu0 %2365
    %2367 = vrot.lane.b32.xlu0 %v2342, 24
    %v2368 = vpop.permute.xlu0 %2367
    %v2371 = vsel %vm136, %v2006, %v2350
    %v2372 = vsel %vm136, %v2054, %v2352
    %v2373 = vsel %vm1049, %v2371, %v2358
    %v2374 = vsel %vm1049, %v2372, %v2360
    %v2375 = vsel %vm1052, %v2373, %v2366
    %v2376 = vsel %vm1052, %v2374, %v2368
    %v2377 = vld [vmem:[%s5 + $0x60] sm:$0xf]
    %v2378 = vld [vmem:[%s5 + $0x64] sm:$0xf]
    %v2379 = vld [vmem:[%s5 + $0x68] sm:$0xf]
    %v2380 = vld [vmem:[%s5 + $0x6c] sm:$0xf]
    %v2381 = vpack.c.bf16 %v2376, %v2375
    %v2382 = vld [vmem:[%s6 + $0x9] sm:$0x1]
    %v2383 = vlaneseq
    %v2384 = vshrl.u32 %v2383, 7
    %v2385 = vsub.s32 0, %v2384
    %v2386 = vrot.slane %v2382, %v2385
    %v2391 = vunpack.c.l.b16 %v2377
    %v2392 = vunpack.c.l.b16 %v2378
    %v2393 = vunpack.c.l.b16 %v2379
    %v2394 = vunpack.c.l.b16 %v2380
    %v2395 = vpack.c.b16 %v2392, %v2391
    %v2396 = vpack.c.b16 %v2394, %v2393
    %v2400 = vsel %vm60, %v2381, 0
    %2402 = vmatprep.subr.bf16.mxu0 0
    %2403 = vmatpush1.bf16.msra.mxu0 %v2395
    %2404 = vmatprep.subr.bf16.mxu0 0
    %2405 = vmatpush1.bf16.msra.mxu0 %v2396
    %2406 = vmatprep.subr.bf16.mxu0 0
    %2407 = vmatpush1.bf16.msra.mxu0 0
    %2408 = vmatprep.subr.bf16.mxu0 0
    %2409 = vmatpush1.bf16.msra.mxu0 0
    %2410 = vmatprep.subr.bf16.mxu0 0
    %2411 = vmatpush1.bf16.msra.mxu0 0
    %2412 = vmatprep.subr.bf16.mxu0 0
    %2413 = vmatpush1.bf16.msra.mxu0 0
    %2414 = vmatprep.subr.bf16.mxu0 0
    %2415 = vmatpush1.bf16.msra.mxu0 0
    %2416 = vmatprep.subr.bf16.mxu0 0
    %2417 = vmatpush1.bf16.msra.mxu0 0
    %2418 = vmatprep.subr.bf16.mxu0 0
    %2419 = vmatpush1.bf16.msra.mxu0 0
    %2420 = vmatprep.subr.bf16.mxu0 0
    %2421 = vmatpush1.bf16.msra.mxu0 0
    %2422 = vmatprep.subr.bf16.mxu0 0
    %2423 = vmatpush1.bf16.msra.mxu0 0
    %2424 = vmatprep.subr.bf16.mxu0 0
    %2425 = vmatpush1.bf16.msra.mxu0 0
    %2426 = vmatprep.subr.bf16.mxu0 0
    %2427 = vmatpush1.bf16.msra.mxu0 0
    %2428 = vmatprep.subr.bf16.mxu0 0
    %2429 = vmatpush1.bf16.msra.mxu0 0
    %2430 = vmatprep.subr.bf16.mxu0 0
    %2431 = vmatpush1.bf16.msra.mxu0 0
    %2432 = vmatprep.subr.bf16.mxu0 0
    %2433 = vmatpush1.bf16.msra.mxu0 0
    %2434 = vmatprep.mubr.bf16.mxu0 0
    %2435 = vmatmul.mubr.bf16.gmra.mrb[0].mxu0 %v2400
    %v2436 = vpop.f32.mrb[0].mxu0
    %v2437 = vadd.f32 %v2386, %v2436
    %v2438 = vpop.f32.mrb[0].mxu0
    %v2439 = vpop.f32.mrb[0].mxu0
    %v2440 = vadd.f32 %v2386, %v2439
    %v2441 = vpop.f32.mrb[0].mxu0
    %2442 = vdwg.mxu0
    %v2443 = vadd.f32 %v1363, %v2437
    %v2444 = vadd.f32 %v1364, %v2440
    %v2445 = vld [vmem:[%s6 + $0xa] sm:$0x1]
    %v2446 = vld [vmem:[%s6 + $0xb] sm:$0x1]
    %v2447 = vsel %vm60, %v2443, 0.0
    %2448 = vadd.xlane.f32.xlu0 %v2447
    %v2449 = vpop.xlane.xlu0 %2448
    %v2450 = vsel %vm60, %v2444, 0.0
    %2451 = vadd.xlane.f32.xlu0 %v2450
    %v2452 = vpop.xlane.xlu0 %2451
    %v2453 = vmul.f32 %v2449, %v1131
    %v2454 = vmul.f32 %v2452, %v1131
    %v2455 = vmul.f32 %v2443, %v2443
    %v2456 = vmul.f32 %v2444, %v2444
    %v2457 = vsel %vm60, %v2455, 0.0
    %2458 = vadd.xlane.f32.xlu0 %v2457
    %v2459 = vpop.xlane.xlu0 %2458
    %v2460 = vsel %vm60, %v2456, 0.0
    %2461 = vadd.xlane.f32.xlu0 %v2460
    %v2462 = vpop.xlane.xlu0 %2461
    %v2463 = vmul.f32 %v2459, %v1131
    %v2464 = vmul.f32 %v2462, %v1131
    %v2465 = vmul.f32 %v2453, %v2453
    %v2466 = vmul.f32 %v2454, %v2454
    %v2467 = vsub.f32 %v2463, %v2465
    %v2468 = vsub.f32 %v2464, %v2466
    %v2469 = vsub.f32 %v2443, %v2453
    %v2470 = vsub.f32 %v2444, %v2454
    %v2471 = vadd.f32 %v2467, 1e-05
    %v2472 = vadd.f32 %v2468, 1e-05
    %v2473 = vrsqrt.pop %v2471
    %v2474 = vrsqrt.pop %v2472
    %v2475 = vmul.f32 %v2469, %v2473
    %v2476 = vmul.f32 %v2470, %v2474
    %v2477 = vlaneseq
    %v2478 = vshrl.u32 %v2477, 7
    %v2479 = vsub.s32 0, %v2478
    %v2480 = vrot.slane %v2445, %v2479
    %v2481 = vmul.f32 %v2475, %v2480
    %v2482 = vmul.f32 %v2476, %v2480
    %v2483 = vlaneseq
    %v2484 = vshrl.u32 %v2483, 7
    %v2485 = vsub.s32 0, %v2484
    %v2486 = vrot.slane %v2446, %v2485
    %v2487 = vadd.f32 %v2481, %v2486
    %v2488 = vadd.f32 %v2482, %v2486
    %v2489 = vld [vmem:[%s5 + $0x70] sm:$0xf]
    %v2490 = vld [vmem:[%s5 + $0x74] sm:$0xf]
    %v2491 = vld [vmem:[%s5 + $0x78] sm:$0xf]
    %v2492 = vld [vmem:[%s5 + $0x7c] sm:$0xf]
    %v2493 = vpack.c.bf16 %v2488, %v2487
    %v2494 = vld [vmem:[%s6 + $0xc] sm:$0x1]
    %v2495 = vlaneseq
    %v2496 = vshrl.u32 %v2495, 7
    %v2497 = vsub.s32 0, %v2496
    %v2498 = vrot.slane %v2494, %v2497
    %v2503 = vunpack.c.l.b16 %v2489
    %v2504 = vunpack.c.l.b16 %v2490
    %v2505 = vunpack.c.l.b16 %v2491
    %v2506 = vunpack.c.l.b16 %v2492
    %v2507 = vpack.c.b16 %v2504, %v2503
    %v2508 = vpack.c.b16 %v2506, %v2505
    %v2512 = vsel %vm60, %v2493, 0
    %2514 = vmatprep.subr.bf16.mxu0 0
    %2515 = vmatpush1.bf16.msra.mxu0 %v2507
    %2516 = vmatprep.subr.bf16.mxu0 0
    %2517 = vmatpush1.bf16.msra.mxu0 %v2508
    %2518 = vmatprep.subr.bf16.mxu0 0
    %2519 = vmatpush1.bf16.msra.mxu0 0
    %2520 = vmatprep.subr.bf16.mxu0 0
    %2521 = vmatpush1.bf16.msra.mxu0 0
    %2522 = vmatprep.subr.bf16.mxu0 0
    %2523 = vmatpush1.bf16.msra.mxu0 0
    %2524 = vmatprep.subr.bf16.mxu0 0
    %2525 = vmatpush1.bf16.msra.mxu0 0
    %2526 = vmatprep.subr.bf16.mxu0 0
    %2527 = vmatpush1.bf16.msra.mxu0 0
    %2528 = vmatprep.subr.bf16.mxu0 0
    %2529 = vmatpush1.bf16.msra.mxu0 0
    %2530 = vmatprep.subr.bf16.mxu0 0
    %2531 = vmatpush1.bf16.msra.mxu0 0
    %2532 = vmatprep.subr.bf16.mxu0 0
    %2533 = vmatpush1.bf16.msra.mxu0 0
    %2534 = vmatprep.subr.bf16.mxu0 0
    %2535 = vmatpush1.bf16.msra.mxu0 0
    %2536 = vmatprep.subr.bf16.mxu0 0
    %2537 = vmatpush1.bf16.msra.mxu0 0
    %2538 = vmatprep.subr.bf16.mxu0 0
    %2539 = vmatpush1.bf16.msra.mxu0 0
    %2540 = vmatprep.subr.bf16.mxu0 0
    %2541 = vmatpush1.bf16.msra.mxu0 0
    %2542 = vmatprep.subr.bf16.mxu0 0
    %2543 = vmatpush1.bf16.msra.mxu0 0
    %2544 = vmatprep.subr.bf16.mxu0 0
    %2545 = vmatpush1.bf16.msra.mxu0 0
    %2546 = vmatprep.mubr.bf16.mxu0 0
    %2547 = vmatmul.mubr.bf16.gmra.mrb[0].mxu0 %v2512
    %v2548 = vpop.f32.mrb[0].mxu0
    %v2549 = vadd.f32 %v2498, %v2548
    %v2550 = vpop.f32.mrb[0].mxu0
    %v2551 = vpop.f32.mrb[0].mxu0
    %v2552 = vadd.f32 %v2498, %v2551
    %v2553 = vpop.f32.mrb[0].mxu0
    %2554 = vdwg.mxu0
    %v2555 = vmax.f32 %v2549, 0.0
    %v2556 = vmax.f32 %v2552, 0.0
    %v2557 = vld [vmem:[%s5 + $0x80] sm:$0xf]
    %v2558 = vld [vmem:[%s5 + $0x84] sm:$0xf]
    %v2559 = vld [vmem:[%s5 + $0x88] sm:$0xf]
    %v2560 = vld [vmem:[%s5 + $0x8c] sm:$0xf]
    %v2561 = vld [vmem:[%s5 + $0x90] sm:$0xf]
    %v2562 = vld [vmem:[%s5 + $0x94] sm:$0xf]
    %v2563 = vld [vmem:[%s5 + $0x98] sm:$0xf]
    %v2564 = vld [vmem:[%s5 + $0x9c] sm:$0xf]
    %v2565 = vpack.c.bf16 %v2556, %v2555
    %v2566 = vld [vmem:[%s6 + $0xd] sm:$0x1]
    %v2567 = vlaneseq
    %v2568 = vshrl.u32 %v2567, 7
    %v2569 = vsub.s32 0, %v2568
    %v2570 = vrot.slane %v2566, %v2569
    %v2579 = vunpack.c.l.b16 %v2557
    %v2580 = vunpack.c.l.b16 %v2558
    %v2581 = vunpack.c.l.b16 %v2559
    %v2582 = vunpack.c.l.b16 %v2560
    %v2583 = vunpack.c.l.b16 %v2561
    %v2584 = vunpack.c.l.b16 %v2562
    %v2585 = vunpack.c.l.b16 %v2563
    %v2586 = vunpack.c.l.b16 %v2564
    %v2587 = vpack.c.b16 %v2580, %v2579
    %v2588 = vpack.c.b16 %v2582, %v2581
    %v2589 = vpack.c.b16 %v2584, %v2583
    %v2590 = vpack.c.b16 %v2586, %v2585
    %v2596 = vsel %vm1274, %v2565, 0
    %2598 = vmatprep.subr.bf16.mxu0 0
    %2599 = vmatpush1.bf16.msra.mxu0 %v2587
    %2600 = vmatprep.subr.bf16.mxu0 0
    %2601 = vmatpush1.bf16.msra.mxu0 %v2588
    %2602 = vmatprep.subr.bf16.mxu0 0
    %2603 = vmatpush1.bf16.msra.mxu0 %v2589
    %2604 = vmatprep.subr.bf16.mxu0 0
    %2605 = vmatpush1.bf16.msra.mxu0 %v2590
    %2606 = vmatprep.subr.bf16.mxu0 0
    %2607 = vmatpush1.bf16.msra.mxu0 0
    %2608 = vmatprep.subr.bf16.mxu0 0
    %2609 = vmatpush1.bf16.msra.mxu0 0
    %2610 = vmatprep.subr.bf16.mxu0 0
    %2611 = vmatpush1.bf16.msra.mxu0 0
    %2612 = vmatprep.subr.bf16.mxu0 0
    %2613 = vmatpush1.bf16.msra.mxu0 0
    %2614 = vmatprep.subr.bf16.mxu0 0
    %2615 = vmatpush1.bf16.msra.mxu0 0
    %2616 = vmatprep.subr.bf16.mxu0 0
    %2617 = vmatpush1.bf16.msra.mxu0 0
    %2618 = vmatprep.subr.bf16.mxu0 0
    %2619 = vmatpush1.bf16.msra.mxu0 0
    %2620 = vmatprep.subr.bf16.mxu0 0
    %2621 = vmatpush1.bf16.msra.mxu0 0
    %2622 = vmatprep.subr.bf16.mxu0 0
    %2623 = vmatpush1.bf16.msra.mxu0 0
    %2624 = vmatprep.subr.bf16.mxu0 0
    %2625 = vmatpush1.bf16.msra.mxu0 0
    %2626 = vmatprep.subr.bf16.mxu0 0
    %2627 = vmatpush1.bf16.msra.mxu0 0
    %2628 = vmatprep.subr.bf16.mxu0 0
    %2629 = vmatpush1.bf16.msra.mxu0 0
    %2630 = vmatprep.mubr.bf16.mxu0 0
    %2631 = vmatmul.mubr.bf16.gmra.mrb[0].mxu0 %v2596
    %v2632 = vpop.f32.mrb[0].mxu0
    %v2633 = vadd.f32 %v2570, %v2632
    %v2634 = vpop.f32.mrb[0].mxu0
    %v2635 = vpop.f32.mrb[0].mxu0
    %v2636 = vadd.f32 %v2570, %v2635
    %v2637 = vpop.f32.mrb[0].mxu0
    %2638 = vdwg.mxu0
    %v2639 = vadd.f32 %v2487, %v2633
    %v2640 = vadd.f32 %v2488, %v2636
    %v2641 = vld [vmem:[%s6 + $0xe] sm:$0x1]
    %v2642 = vld [vmem:[%s6 + $0xf] sm:$0x1]
    %v2643 = vsel %vm60, %v2639, 0.0
    %2644 = vadd.xlane.f32.xlu0 %v2643
    %v2645 = vpop.xlane.xlu0 %2644
    %v2646 = vsel %vm60, %v2640, 0.0
    %2647 = vadd.xlane.f32.xlu0 %v2646
    %v2648 = vpop.xlane.xlu0 %2647
    %v2649 = vmul.f32 %v2645, %v1131
    %v2650 = vmul.f32 %v2648, %v1131
    %v2651 = vmul.f32 %v2639, %v2639
    %v2652 = vmul.f32 %v2640, %v2640
    %v2653 = vsel %vm60, %v2651, 0.0
    %2654 = vadd.xlane.f32.xlu0 %v2653
    %v2655 = vpop.xlane.xlu0 %2654
    %v2656 = vsel %vm60, %v2652, 0.0
    %2657 = vadd.xlane.f32.xlu0 %v2656
    %v2658 = vpop.xlane.xlu0 %2657
    %v2659 = vmul.f32 %v2655, %v1131
    %v2660 = vmul.f32 %v2658, %v1131
    %v2661 = vmul.f32 %v2649, %v2649
    %v2662 = vmul.f32 %v2650, %v2650
    %v2663 = vsub.f32 %v2659, %v2661
    %v2664 = vsub.f32 %v2660, %v2662
    %v2665 = vsub.f32 %v2639, %v2649
    %v2666 = vsub.f32 %v2640, %v2650
    %v2667 = vadd.f32 %v2663, 1e-05
    %v2668 = vadd.f32 %v2664, 1e-05
    %v2669 = vrsqrt.pop %v2667
    %v2670 = vrsqrt.pop %v2668
    %v2671 = vmul.f32 %v2665, %v2669
    %v2672 = vmul.f32 %v2666, %v2670
    %v2673 = vlaneseq
    %v2674 = vshrl.u32 %v2673, 7
    %v2675 = vsub.s32 0, %v2674
    %v2676 = vrot.slane %v2641, %v2675
    %v2677 = vmul.f32 %v2671, %v2676
    %v2678 = vmul.f32 %v2672, %v2676
    %v2679 = vlaneseq
    %v2680 = vshrl.u32 %v2679, 7
    %v2681 = vsub.s32 0, %v2680
    %v2682 = vrot.slane %v2642, %v2681
    %v2683 = vadd.f32 %v2677, %v2682
    %v2684 = vadd.f32 %v2678, %v2682
    %v2685 = vld [vmem:[%s1] sm:$0xff]
    %v2686 = vld [vmem:[%s1 + $0x8] sm:$0xff]
    %v2687 = vld [vmem:[%s3] sm:$0xff]
    %v2688 = vld [vmem:[%s3 + $0x8] sm:$0xff]
    %v2689 = vld [vmem:[%s3 + $0x10] sm:$0xff]
    %v2690 = vld [vmem:[%s3 + $0x18] sm:$0xff]
    %v2691 = vld [vmem:[%s3 + $0x20] sm:$0xff]
    %v2692 = vld [vmem:[%s3 + $0x28] sm:$0xff]
    %v2693 = vld [vmem:[%s3 + $0x30] sm:$0xff]
    %v2694 = vld [vmem:[%s3 + $0x38] sm:$0xff]
    %v2695 = vld [vmem:[%s4] sm:$0xff]
    %v2696 = vld [vmem:[%s4 + $0x8] sm:$0xff]
    %v2697 = vld [vmem:[%s4 + $0x10] sm:$0xff]
    %v2698 = vld [vmem:[%s4 + $0x18] sm:$0xff]
    %v2699 = vld [vmem:[%s4 + $0x20] sm:$0xff]
    %v2700 = vld [vmem:[%s4 + $0x28] sm:$0xff]
    %v2701 = vld [vmem:[%s4 + $0x30] sm:$0xff]
    %v2702 = vld [vmem:[%s4 + $0x38] sm:$0xff]
    %v2703 = vld [vmem:[%s5 + $0xa0] sm:$0xf]
    %v2704 = vld [vmem:[%s5 + $0xa4] sm:$0xf]
    %v2705 = vld [vmem:[%s5 + $0xa8] sm:$0xf]
    %v2706 = vld [vmem:[%s5 + $0xac] sm:$0xf]
    %v2707 = vpack.c.bf16 %v2686, %v2685
    %v2708 = vld [vmem:[%s6 + $0x10] sm:$0x1]
    %v2709 = vlaneseq
    %v2710 = vshrl.u32 %v2709, 7
    %v2711 = vsub.s32 0, %v2710
    %v2712 = vrot.slane %v2708, %v2711
    %v2717 = vunpack.c.l.b16 %v2703
    %v2718 = vunpack.c.l.b16 %v2704
    %v2719 = vunpack.c.l.b16 %v2705
    %v2720 = vunpack.c.l.b16 %v2706
    %v2721 = vpack.c.b16 %v2718, %v2717
    %v2722 = vpack.c.b16 %v2720, %v2719
    %v2726 = vsel %vm60, %v2707, 0
    %2728 = vmatprep.subr.bf16.mxu0 0
    %2729 = vmatpush1.bf16.msra.mxu0 %v2721
    %2730 = vmatprep.subr.bf16.mxu0 0
    %2731 = vmatpush1.bf16.msra.mxu0 %v2722
    %2732 = vmatprep.subr.bf16.mxu0 0
    %2733 = vmatpush1.bf16.msra.mxu0 0
    %2734 = vmatprep.subr.bf16.mxu0 0
    %2735 = vmatpush1.bf16.msra.mxu0 0
    %2736 = vmatprep.subr.bf16.mxu0 0
    %2737 = vmatpush1.bf16.msra.mxu0 0
    %2738 = vmatprep.subr.bf16.mxu0 0
    %2739 = vmatpush1.bf16.msra.mxu0 0
    %2740 = vmatprep.subr.bf16.mxu0 0
    %2741 = vmatpush1.bf16.msra.mxu0 0
    %2742 = vmatprep.subr.bf16.mxu0 0
    %2743 = vmatpush1.bf16.msra.mxu0 0
    %2744 = vmatprep.subr.bf16.mxu0 0
    %2745 = vmatpush1.bf16.msra.mxu0 0
    %2746 = vmatprep.subr.bf16.mxu0 0
    %2747 = vmatpush1.bf16.msra.mxu0 0
    %2748 = vmatprep.subr.bf16.mxu0 0
    %2749 = vmatpush1.bf16.msra.mxu0 0
    %2750 = vmatprep.subr.bf16.mxu0 0
    %2751 = vmatpush1.bf16.msra.mxu0 0
    %2752 = vmatprep.subr.bf16.mxu0 0
    %2753 = vmatpush1.bf16.msra.mxu0 0
    %2754 = vmatprep.subr.bf16.mxu0 0
    %2755 = vmatpush1.bf16.msra.mxu0 0
    %2756 = vmatprep.subr.bf16.mxu0 0
    %2757 = vmatpush1.bf16.msra.mxu0 0
    %2758 = vmatprep.subr.bf16.mxu0 0
    %2759 = vmatpush1.bf16.msra.mxu0 0
    %2760 = vmatprep.mubr.bf16.mxu0 0
    %2761 = vmatmul.mubr.bf16.gmra.mrb[0].mxu0 %v2726
    %v2762 = vpop.f32.mrb[0].mxu0
    %v2763 = vadd.f32 %v2712, %v2762
    %v2764 = vpop.f32.mrb[0].mxu0
    %v2765 = vpop.f32.mrb[0].mxu0
    %v2766 = vadd.f32 %v2712, %v2765
    %v2767 = vpop.f32.mrb[0].mxu0
    %2768 = vdwg.mxu0
    %2771 = vrot.lane.b32.xlu0 %v2763, 120
    %v2772 = vpop.permute.xlu0 %2771
    %2773 = vrot.lane.b32.xlu0 %v2766, 120
    %v2774 = vpop.permute.xlu0 %2773
    %2777 = vrot.lane.b32.xlu0 %v2763, 112
    %v2778 = vpop.permute.xlu0 %2777
    %2779 = vrot.lane.b32.xlu0 %v2766, 112
    %v2780 = vpop.permute.xlu0 %2779
    %2783 = vrot.lane.b32.xlu0 %v2763, 104
    %v2784 = vpop.permute.xlu0 %2783
    %2785 = vrot.lane.b32.xlu0 %v2766, 104
    %v2786 = vpop.permute.xlu0 %2785
    %v2789 = vpack.c.bf16 %v2763, %v2763
    %v2790 = vpack.c.bf16 %v2766, %v2766
    %v2791 = vpack.c.bf16 %v2772, %v2772
    %v2792 = vpack.c.bf16 %v2774, %v2774
    %v2793 = vpack.c.bf16 %v2778, %v2778
    %v2794 = vpack.c.bf16 %v2780, %v2780
    %v2795 = vpack.c.bf16 %v2784, %v2784
    %v2796 = vpack.c.bf16 %v2786, %v2786
    %2798 = vrot.lane.b32.xlu0 %v2789, 96
    %v2799 = vpop.permute.xlu0 %2798
    %v2801 = vsel %vm136, %v2789, 0
    %v2804 = vsel %vm136, %v2799, 0
    %2806 = vmatprep.subr.bf16.mxu0 0
    %2807 = vmatpush1.bf16.xpose.msra.mxu0 %v2804
    %2808 = vmatprep.subr.bf16.mxu0 0
    %2809 = vmatpush1.bf16.xpose.msra.mxu0 0
    %2810 = vmatprep.subr.bf16.mxu0 0
    %2811 = vmatpush1.bf16.xpose.msra.mxu0 0
    %2812 = vmatprep.subr.bf16.mxu0 0
    %2813 = vmatpush1.bf16.xpose.msra.mxu0 0
    %2814 = vmatprep.subr.bf16.mxu0 0
    %2815 = vmatpush1.bf16.xpose.msra.mxu0 0
    %2816 = vmatprep.subr.bf16.mxu0 0
    %2817 = vmatpush1.bf16.xpose.msra.mxu0 0
    %2818 = vmatprep.subr.bf16.mxu0 0
    %2819 = vmatpush1.bf16.xpose.msra.mxu0 0
    %2820 = vmatprep.subr.bf16.mxu0 0
    %2821 = vmatpush1.bf16.xpose.msra.mxu0 0
    %2822 = vmatprep.subr.bf16.mxu0 0
    %2823 = vmatpush1.bf16.xpose.msra.mxu0 0
    %2824 = vmatprep.subr.bf16.mxu0 0
    %2825 = vmatpush1.bf16.xpose.msra.mxu0 0
    %2826 = vmatprep.subr.bf16.mxu0 0
    %2827 = vmatpush1.bf16.xpose.msra.mxu0 0
    %2828 = vmatprep.subr.bf16.mxu0 0
    %2829 = vmatpush1.bf16.xpose.msra.mxu0 0
    %2830 = vmatprep.subr.bf16.mxu0 0
    %2831 = vmatpush1.bf16.xpose.msra.mxu0 0
    %2832 = vmatprep.subr.bf16.mxu0 0
    %2833 = vmatpush1.bf16.xpose.msra.mxu0 0
    %2834 = vmatprep.subr.bf16.mxu0 0
    %2835 = vmatpush1.bf16.xpose.msra.mxu0 0
    %2836 = vmatprep.subr.bf16.mxu0 0
    %2837 = vmatpush1.bf16.xpose.msra.mxu0 0
    %2838 = vmatprep.mubr.bf16.mxu0 0
    %2839 = vmatmul.mubr.bf16.gmra.mrb[0].mxu0 %v2801
    %v2840 = vpop.f32.mrb[0].mxu0
    %v2841 = vadd.f32 0.0, %v2840
    %v2842 = vpop.f32.mrb[0].mxu0
    %v2843 = vpop.f32.mrb[0].mxu0
    %v2844 = vpop.f32.mrb[0].mxu0
    %2845 = vdwg.mxu0
    %2847 = vrot.lane.b32.xlu0 %v2790, 96
    %v2848 = vpop.permute.xlu0 %2847
    %v2850 = vsel %vm136, %v2790, 0
    %v2853 = vsel %vm136, %v2848, 0
    %2855 = vmatprep.subr.bf16.mxu0 0
    %2856 = vmatpush1.bf16.xpose.msra.mxu0 %v2853
    %2857 = vmatprep.subr.bf16.mxu0 0
    %2858 = vmatpush1.bf16.xpose.msra.mxu0 0
    %2859 = vmatprep.subr.bf16.mxu0 0
    %2860 = vmatpush1.bf16.xpose.msra.mxu0 0
    %2861 = vmatprep.subr.bf16.mxu0 0
    %2862 = vmatpush1.bf16.xpose.msra.mxu0 0
    %2863 = vmatprep.subr.bf16.mxu0 0
    %2864 = vmatpush1.bf16.xpose.msra.mxu0 0
    %2865 = vmatprep.subr.bf16.mxu0 0
    %2866 = vmatpush1.bf16.xpose.msra.mxu0 0
    %2867 = vmatprep.subr.bf16.mxu0 0
    %2868 = vmatpush1.bf16.xpose.msra.mxu0 0
    %2869 = vmatprep.subr.bf16.mxu0 0
    %2870 = vmatpush1.bf16.xpose.msra.mxu0 0
    %2871 = vmatprep.subr.bf16.mxu0 0
    %2872 = vmatpush1.bf16.xpose.msra.mxu0 0
    %2873 = vmatprep.subr.bf16.mxu0 0
    %2874 = vmatpush1.bf16.xpose.msra.mxu0 0
    %2875 = vmatprep.subr.bf16.mxu0 0
    %2876 = vmatpush1.bf16.xpose.msra.mxu0 0
    %2877 = vmatprep.subr.bf16.mxu0 0
    %2878 = vmatpush1.bf16.xpose.msra.mxu0 0
    %2879 = vmatprep.subr.bf16.mxu0 0
    %2880 = vmatpush1.bf16.xpose.msra.mxu0 0
    %2881 = vmatprep.subr.bf16.mxu0 0
    %2882 = vmatpush1.bf16.xpose.msra.mxu0 0
    %2883 = vmatprep.subr.bf16.mxu0 0
    %2884 = vmatpush1.bf16.xpose.msra.mxu0 0
    %2885 = vmatprep.subr.bf16.mxu0 0
    %2886 = vmatpush1.bf16.xpose.msra.mxu0 0
    %2887 = vmatprep.mubr.bf16.mxu0 0
    %2888 = vmatmul.mubr.bf16.gmra.mrb[0].mxu0 %v2850
    %v2889 = vpop.f32.mrb[0].mxu0
    %v2890 = vadd.f32 0.0, %v2889
    %v2891 = vpop.f32.mrb[0].mxu0
    %v2892 = vpop.f32.mrb[0].mxu0
    %v2893 = vpop.f32.mrb[0].mxu0
    %2894 = vdwg.mxu0
    %2896 = vrot.lane.b32.xlu0 %v2791, 96
    %v2897 = vpop.permute.xlu0 %2896
    %v2899 = vsel %vm136, %v2791, 0
    %v2902 = vsel %vm136, %v2897, 0
    %2904 = vmatprep.subr.bf16.mxu0 0
    %2905 = vmatpush1.bf16.xpose.msra.mxu0 %v2902
    %2906 = vmatprep.subr.bf16.mxu0 0
    %2907 = vmatpush1.bf16.xpose.msra.mxu0 0
    %2908 = vmatprep.subr.bf16.mxu0 0
    %2909 = vmatpush1.bf16.xpose.msra.mxu0 0
    %2910 = vmatprep.subr.bf16.mxu0 0
    %2911 = vmatpush1.bf16.xpose.msra.mxu0 0
    %2912 = vmatprep.subr.bf16.mxu0 0
    %2913 = vmatpush1.bf16.xpose.msra.mxu0 0
    %2914 = vmatprep.subr.bf16.mxu0 0
    %2915 = vmatpush1.bf16.xpose.msra.mxu0 0
    %2916 = vmatprep.subr.bf16.mxu0 0
    %2917 = vmatpush1.bf16.xpose.msra.mxu0 0
    %2918 = vmatprep.subr.bf16.mxu0 0
    %2919 = vmatpush1.bf16.xpose.msra.mxu0 0
    %2920 = vmatprep.subr.bf16.mxu0 0
    %2921 = vmatpush1.bf16.xpose.msra.mxu0 0
    %2922 = vmatprep.subr.bf16.mxu0 0
    %2923 = vmatpush1.bf16.xpose.msra.mxu0 0
    %2924 = vmatprep.subr.bf16.mxu0 0
    %2925 = vmatpush1.bf16.xpose.msra.mxu0 0
    %2926 = vmatprep.subr.bf16.mxu0 0
    %2927 = vmatpush1.bf16.xpose.msra.mxu0 0
    %2928 = vmatprep.subr.bf16.mxu0 0
    %2929 = vmatpush1.bf16.xpose.msra.mxu0 0
    %2930 = vmatprep.subr.bf16.mxu0 0
    %2931 = vmatpush1.bf16.xpose.msra.mxu0 0
    %2932 = vmatprep.subr.bf16.mxu0 0
    %2933 = vmatpush1.bf16.xpose.msra.mxu0 0
    %2934 = vmatprep.subr.bf16.mxu0 0
    %2935 = vmatpush1.bf16.xpose.msra.mxu0 0
    %2936 = vmatprep.mubr.bf16.mxu0 0
    %2937 = vmatmul.mubr.bf16.gmra.mrb[0].mxu0 %v2899
    %v2938 = vpop.f32.mrb[0].mxu0
    %v2939 = vadd.f32 0.0, %v2938
    %v2940 = vpop.f32.mrb[0].mxu0
    %v2941 = vpop.f32.mrb[0].mxu0
    %v2942 = vpop.f32.mrb[0].mxu0
    %2943 = vdwg.mxu0
    %2945 = vrot.lane.b32.xlu0 %v2792, 96
    %v2946 = vpop.permute.xlu0 %2945
    %v2948 = vsel %vm136, %v2792, 0
    %v2951 = vsel %vm136, %v2946, 0
    %2953 = vmatprep.subr.bf16.mxu0 0
    %2954 = vmatpush1.bf16.xpose.msra.mxu0 %v2951
    %2955 = vmatprep.subr.bf16.mxu0 0
    %2956 = vmatpush1.bf16.xpose.msra.mxu0 0
    %2957 = vmatprep.subr.bf16.mxu0 0
    %2958 = vmatpush1.bf16.xpose.msra.mxu0 0
    %2959 = vmatprep.subr.bf16.mxu0 0
    %2960 = vmatpush1.bf16.xpose.msra.mxu0 0
    %2961 = vmatprep.subr.bf16.mxu0 0
    %2962 = vmatpush1.bf16.xpose.msra.mxu0 0
    %2963 = vmatprep.subr.bf16.mxu0 0
    %2964 = vmatpush1.bf16.xpose.msra.mxu0 0
    %2965 = vmatprep.subr.bf16.mxu0 0
    %2966 = vmatpush1.bf16.xpose.msra.mxu0 0
    %2967 = vmatprep.subr.bf16.mxu0 0
    %2968 = vmatpush1.bf16.xpose.msra.mxu0 0
    %2969 = vmatprep.subr.bf16.mxu0 0
    %2970 = vmatpush1.bf16.xpose.msra.mxu0 0
    %2971 = vmatprep.subr.bf16.mxu0 0
    %2972 = vmatpush1.bf16.xpose.msra.mxu0 0
    %2973 = vmatprep.subr.bf16.mxu0 0
    %2974 = vmatpush1.bf16.xpose.msra.mxu0 0
    %2975 = vmatprep.subr.bf16.mxu0 0
    %2976 = vmatpush1.bf16.xpose.msra.mxu0 0
    %2977 = vmatprep.subr.bf16.mxu0 0
    %2978 = vmatpush1.bf16.xpose.msra.mxu0 0
    %2979 = vmatprep.subr.bf16.mxu0 0
    %2980 = vmatpush1.bf16.xpose.msra.mxu0 0
    %2981 = vmatprep.subr.bf16.mxu0 0
    %2982 = vmatpush1.bf16.xpose.msra.mxu0 0
    %2983 = vmatprep.subr.bf16.mxu0 0
    %2984 = vmatpush1.bf16.xpose.msra.mxu0 0
    %2985 = vmatprep.mubr.bf16.mxu0 0
    %2986 = vmatmul.mubr.bf16.gmra.mrb[0].mxu0 %v2948
    %v2987 = vpop.f32.mrb[0].mxu0
    %v2988 = vadd.f32 0.0, %v2987
    %v2989 = vpop.f32.mrb[0].mxu0
    %v2990 = vpop.f32.mrb[0].mxu0
    %v2991 = vpop.f32.mrb[0].mxu0
    %2992 = vdwg.mxu0
    %2994 = vrot.lane.b32.xlu0 %v2793, 96
    %v2995 = vpop.permute.xlu0 %2994
    %v2997 = vsel %vm136, %v2793, 0
    %v3000 = vsel %vm136, %v2995, 0
    %3002 = vmatprep.subr.bf16.mxu0 0
    %3003 = vmatpush1.bf16.xpose.msra.mxu0 %v3000
    %3004 = vmatprep.subr.bf16.mxu0 0
    %3005 = vmatpush1.bf16.xpose.msra.mxu0 0
    %3006 = vmatprep.subr.bf16.mxu0 0
    %3007 = vmatpush1.bf16.xpose.msra.mxu0 0
    %3008 = vmatprep.subr.bf16.mxu0 0
    %3009 = vmatpush1.bf16.xpose.msra.mxu0 0
    %3010 = vmatprep.subr.bf16.mxu0 0
    %3011 = vmatpush1.bf16.xpose.msra.mxu0 0
    %3012 = vmatprep.subr.bf16.mxu0 0
    %3013 = vmatpush1.bf16.xpose.msra.mxu0 0
    %3014 = vmatprep.subr.bf16.mxu0 0
    %3015 = vmatpush1.bf16.xpose.msra.mxu0 0
    %3016 = vmatprep.subr.bf16.mxu0 0
    %3017 = vmatpush1.bf16.xpose.msra.mxu0 0
    %3018 = vmatprep.subr.bf16.mxu0 0
    %3019 = vmatpush1.bf16.xpose.msra.mxu0 0
    %3020 = vmatprep.subr.bf16.mxu0 0
    %3021 = vmatpush1.bf16.xpose.msra.mxu0 0
    %3022 = vmatprep.subr.bf16.mxu0 0
    %3023 = vmatpush1.bf16.xpose.msra.mxu0 0
    %3024 = vmatprep.subr.bf16.mxu0 0
    %3025 = vmatpush1.bf16.xpose.msra.mxu0 0
    %3026 = vmatprep.subr.bf16.mxu0 0
    %3027 = vmatpush1.bf16.xpose.msra.mxu0 0
    %3028 = vmatprep.subr.bf16.mxu0 0
    %3029 = vmatpush1.bf16.xpose.msra.mxu0 0
    %3030 = vmatprep.subr.bf16.mxu0 0
    %3031 = vmatpush1.bf16.xpose.msra.mxu0 0
    %3032 = vmatprep.subr.bf16.mxu0 0
    %3033 = vmatpush1.bf16.xpose.msra.mxu0 0
    %3034 = vmatprep.mubr.bf16.mxu0 0
    %3035 = vmatmul.mubr.bf16.gmra.mrb[0].mxu0 %v2997
    %v3036 = vpop.f32.mrb[0].mxu0
    %v3037 = vadd.f32 0.0, %v3036
    %v3038 = vpop.f32.mrb[0].mxu0
    %v3039 = vpop.f32.mrb[0].mxu0
    %v3040 = vpop.f32.mrb[0].mxu0
    %3041 = vdwg.mxu0
    %3043 = vrot.lane.b32.xlu0 %v2794, 96
    %v3044 = vpop.permute.xlu0 %3043
    %v3046 = vsel %vm136, %v2794, 0
    %v3049 = vsel %vm136, %v3044, 0
    %3051 = vmatprep.subr.bf16.mxu0 0
    %3052 = vmatpush1.bf16.xpose.msra.mxu0 %v3049
    %3053 = vmatprep.subr.bf16.mxu0 0
    %3054 = vmatpush1.bf16.xpose.msra.mxu0 0
    %3055 = vmatprep.subr.bf16.mxu0 0
    %3056 = vmatpush1.bf16.xpose.msra.mxu0 0
    %3057 = vmatprep.subr.bf16.mxu0 0
    %3058 = vmatpush1.bf16.xpose.msra.mxu0 0
    %3059 = vmatprep.subr.bf16.mxu0 0
    %3060 = vmatpush1.bf16.xpose.msra.mxu0 0
    %3061 = vmatprep.subr.bf16.mxu0 0
    %3062 = vmatpush1.bf16.xpose.msra.mxu0 0
    %3063 = vmatprep.subr.bf16.mxu0 0
    %3064 = vmatpush1.bf16.xpose.msra.mxu0 0
    %3065 = vmatprep.subr.bf16.mxu0 0
    %3066 = vmatpush1.bf16.xpose.msra.mxu0 0
    %3067 = vmatprep.subr.bf16.mxu0 0
    %3068 = vmatpush1.bf16.xpose.msra.mxu0 0
    %3069 = vmatprep.subr.bf16.mxu0 0
    %3070 = vmatpush1.bf16.xpose.msra.mxu0 0
    %3071 = vmatprep.subr.bf16.mxu0 0
    %3072 = vmatpush1.bf16.xpose.msra.mxu0 0
    %3073 = vmatprep.subr.bf16.mxu0 0
    %3074 = vmatpush1.bf16.xpose.msra.mxu0 0
    %3075 = vmatprep.subr.bf16.mxu0 0
    %3076 = vmatpush1.bf16.xpose.msra.mxu0 0
    %3077 = vmatprep.subr.bf16.mxu0 0
    %3078 = vmatpush1.bf16.xpose.msra.mxu0 0
    %3079 = vmatprep.subr.bf16.mxu0 0
    %3080 = vmatpush1.bf16.xpose.msra.mxu0 0
    %3081 = vmatprep.subr.bf16.mxu0 0
    %3082 = vmatpush1.bf16.xpose.msra.mxu0 0
    %3083 = vmatprep.mubr.bf16.mxu0 0
    %3084 = vmatmul.mubr.bf16.gmra.mrb[0].mxu0 %v3046
    %v3085 = vpop.f32.mrb[0].mxu0
    %v3086 = vadd.f32 0.0, %v3085
    %v3087 = vpop.f32.mrb[0].mxu0
    %v3088 = vpop.f32.mrb[0].mxu0
    %v3089 = vpop.f32.mrb[0].mxu0
    %3090 = vdwg.mxu0
    %3092 = vrot.lane.b32.xlu0 %v2795, 96
    %v3093 = vpop.permute.xlu0 %3092
    %v3095 = vsel %vm136, %v2795, 0
    %v3098 = vsel %vm136, %v3093, 0
    %3100 = vmatprep.subr.bf16.mxu0 0
    %3101 = vmatpush1.bf16.xpose.msra.mxu0 %v3098
    %3102 = vmatprep.subr.bf16.mxu0 0
    %3103 = vmatpush1.bf16.xpose.msra.mxu0 0
    %3104 = vmatprep.subr.bf16.mxu0 0
    %3105 = vmatpush1.bf16.xpose.msra.mxu0 0
    %3106 = vmatprep.subr.bf16.mxu0 0
    %3107 = vmatpush1.bf16.xpose.msra.mxu0 0
    %3108 = vmatprep.subr.bf16.mxu0 0
    %3109 = vmatpush1.bf16.xpose.msra.mxu0 0
    %3110 = vmatprep.subr.bf16.mxu0 0
    %3111 = vmatpush1.bf16.xpose.msra.mxu0 0
    %3112 = vmatprep.subr.bf16.mxu0 0
    %3113 = vmatpush1.bf16.xpose.msra.mxu0 0
    %3114 = vmatprep.subr.bf16.mxu0 0
    %3115 = vmatpush1.bf16.xpose.msra.mxu0 0
    %3116 = vmatprep.subr.bf16.mxu0 0
    %3117 = vmatpush1.bf16.xpose.msra.mxu0 0
    %3118 = vmatprep.subr.bf16.mxu0 0
    %3119 = vmatpush1.bf16.xpose.msra.mxu0 0
    %3120 = vmatprep.subr.bf16.mxu0 0
    %3121 = vmatpush1.bf16.xpose.msra.mxu0 0
    %3122 = vmatprep.subr.bf16.mxu0 0
    %3123 = vmatpush1.bf16.xpose.msra.mxu0 0
    %3124 = vmatprep.subr.bf16.mxu0 0
    %3125 = vmatpush1.bf16.xpose.msra.mxu0 0
    %3126 = vmatprep.subr.bf16.mxu0 0
    %3127 = vmatpush1.bf16.xpose.msra.mxu0 0
    %3128 = vmatprep.subr.bf16.mxu0 0
    %3129 = vmatpush1.bf16.xpose.msra.mxu0 0
    %3130 = vmatprep.subr.bf16.mxu0 0
    %3131 = vmatpush1.bf16.xpose.msra.mxu0 0
    %3132 = vmatprep.mubr.bf16.mxu0 0
    %3133 = vmatmul.mubr.bf16.gmra.mrb[0].mxu0 %v3095
    %v3134 = vpop.f32.mrb[0].mxu0
    %v3135 = vadd.f32 0.0, %v3134
    %v3136 = vpop.f32.mrb[0].mxu0
    %v3137 = vpop.f32.mrb[0].mxu0
    %v3138 = vpop.f32.mrb[0].mxu0
    %3139 = vdwg.mxu0
    %3141 = vrot.lane.b32.xlu0 %v2796, 96
    %v3142 = vpop.permute.xlu0 %3141
    %v3144 = vsel %vm136, %v2796, 0
    %v3147 = vsel %vm136, %v3142, 0
    %3149 = vmatprep.subr.bf16.mxu0 0
    %3150 = vmatpush1.bf16.xpose.msra.mxu0 %v3147
    %3151 = vmatprep.subr.bf16.mxu0 0
    %3152 = vmatpush1.bf16.xpose.msra.mxu0 0
    %3153 = vmatprep.subr.bf16.mxu0 0
    %3154 = vmatpush1.bf16.xpose.msra.mxu0 0
    %3155 = vmatprep.subr.bf16.mxu0 0
    %3156 = vmatpush1.bf16.xpose.msra.mxu0 0
    %3157 = vmatprep.subr.bf16.mxu0 0
    %3158 = vmatpush1.bf16.xpose.msra.mxu0 0
    %3159 = vmatprep.subr.bf16.mxu0 0
    %3160 = vmatpush1.bf16.xpose.msra.mxu0 0
    %3161 = vmatprep.subr.bf16.mxu0 0
    %3162 = vmatpush1.bf16.xpose.msra.mxu0 0
    %3163 = vmatprep.subr.bf16.mxu0 0
    %3164 = vmatpush1.bf16.xpose.msra.mxu0 0
    %3165 = vmatprep.subr.bf16.mxu0 0
    %3166 = vmatpush1.bf16.xpose.msra.mxu0 0
    %3167 = vmatprep.subr.bf16.mxu0 0
    %3168 = vmatpush1.bf16.xpose.msra.mxu0 0
    %3169 = vmatprep.subr.bf16.mxu0 0
    %3170 = vmatpush1.bf16.xpose.msra.mxu0 0
    %3171 = vmatprep.subr.bf16.mxu0 0
    %3172 = vmatpush1.bf16.xpose.msra.mxu0 0
    %3173 = vmatprep.subr.bf16.mxu0 0
    %3174 = vmatpush1.bf16.xpose.msra.mxu0 0
    %3175 = vmatprep.subr.bf16.mxu0 0
    %3176 = vmatpush1.bf16.xpose.msra.mxu0 0
    %3177 = vmatprep.subr.bf16.mxu0 0
    %3178 = vmatpush1.bf16.xpose.msra.mxu0 0
    %3179 = vmatprep.subr.bf16.mxu0 0
    %3180 = vmatpush1.bf16.xpose.msra.mxu0 0
    %3181 = vmatprep.mubr.bf16.mxu0 0
    %3182 = vmatmul.mubr.bf16.gmra.mrb[0].mxu0 %v3144
    %v3183 = vpop.f32.mrb[0].mxu0
    %v3184 = vadd.f32 0.0, %v3183
    %v3185 = vpop.f32.mrb[0].mxu0
    %v3186 = vpop.f32.mrb[0].mxu0
    %v3187 = vpop.f32.mrb[0].mxu0
    %3188 = vdwg.mxu0
    %v3189 = vmul.f32 %v2841, 0.35355338
    %v3190 = vmul.f32 %v2890, 0.35355338
    %v3191 = vmul.f32 %v2939, 0.35355338
    %v3192 = vmul.f32 %v2988, 0.35355338
    %v3193 = vmul.f32 %v3037, 0.35355338
    %v3194 = vmul.f32 %v3086, 0.35355338
    %v3195 = vmul.f32 %v3135, 0.35355338
    %v3196 = vmul.f32 %v3184, 0.35355338
    %v3197 = vadd.f32 %v3189, %v2687
    %v3198 = vadd.f32 %v3190, %v2688
    %v3199 = vadd.f32 %v3191, %v2689
    %v3200 = vadd.f32 %v3192, %v2690
    %v3201 = vadd.f32 %v3193, %v2691
    %v3202 = vadd.f32 %v3194, %v2692
    %v3203 = vadd.f32 %v3195, %v2693
    %v3204 = vadd.f32 %v3196, %v2694
    %v3205 = vsel %vm136, %v3197, -inf
    %3206 = vmax.xlane.f32.xlu0 %v3205
    %v3207 = vpop.xlane.xlu0 %3206
    %v3208 = vsel %vm136, %v3198, -inf
    %3209 = vmax.xlane.f32.xlu0 %v3208
    %v3210 = vpop.xlane.xlu0 %3209
    %v3211 = vsel %vm136, %v3199, -inf
    %3212 = vmax.xlane.f32.xlu0 %v3211
    %v3213 = vpop.xlane.xlu0 %3212
    %v3214 = vsel %vm136, %v3200, -inf
    %3215 = vmax.xlane.f32.xlu0 %v3214
    %v3216 = vpop.xlane.xlu0 %3215
    %v3217 = vsel %vm136, %v3201, -inf
    %3218 = vmax.xlane.f32.xlu0 %v3217
    %v3219 = vpop.xlane.xlu0 %3218
    %v3220 = vsel %vm136, %v3202, -inf
    %3221 = vmax.xlane.f32.xlu0 %v3220
    %v3222 = vpop.xlane.xlu0 %3221
    %v3223 = vsel %vm136, %v3203, -inf
    %3224 = vmax.xlane.f32.xlu0 %v3223
    %v3225 = vpop.xlane.xlu0 %3224
    %v3226 = vsel %vm136, %v3204, -inf
    %3227 = vmax.xlane.f32.xlu0 %v3226
    %v3228 = vpop.xlane.xlu0 %3227
    %v3229 = vsub.f32 %v3197, %v3207
    %v3230 = vsub.f32 %v3198, %v3210
    %v3231 = vsub.f32 %v3199, %v3213
    %v3232 = vsub.f32 %v3200, %v3216
    %v3233 = vsub.f32 %v3201, %v3219
    %v3234 = vsub.f32 %v3202, %v3222
    %v3235 = vsub.f32 %v3203, %v3225
    %v3236 = vsub.f32 %v3204, %v3228
    %v3237 = vmul.f32 %v3229, 1.442695
    %v3238 = vpow.pop %v3237
    %v3239 = vmul.f32 %v3230, 1.442695
    %v3240 = vpow.pop %v3239
    %v3241 = vmul.f32 %v3231, 1.442695
    %v3242 = vpow.pop %v3241
    %v3243 = vmul.f32 %v3232, 1.442695
    %v3244 = vpow.pop %v3243
    %v3245 = vmul.f32 %v3233, 1.442695
    %v3246 = vpow.pop %v3245
    %v3247 = vmul.f32 %v3234, 1.442695
    %v3248 = vpow.pop %v3247
    %v3249 = vmul.f32 %v3235, 1.442695
    %v3250 = vpow.pop %v3249
    %v3251 = vmul.f32 %v3236, 1.442695
    %v3252 = vpow.pop %v3251
    %v3253 = vsel %vm136, %v3238, 0.0
    %3254 = vadd.xlane.f32.xlu0 %v3253
    %v3255 = vpop.xlane.xlu0 %3254
    %v3256 = vsel %vm136, %v3240, 0.0
    %3257 = vadd.xlane.f32.xlu0 %v3256
    %v3258 = vpop.xlane.xlu0 %3257
    %v3259 = vsel %vm136, %v3242, 0.0
    %3260 = vadd.xlane.f32.xlu0 %v3259
    %v3261 = vpop.xlane.xlu0 %3260
    %v3262 = vsel %vm136, %v3244, 0.0
    %3263 = vadd.xlane.f32.xlu0 %v3262
    %v3264 = vpop.xlane.xlu0 %3263
    %v3265 = vsel %vm136, %v3246, 0.0
    %3266 = vadd.xlane.f32.xlu0 %v3265
    %v3267 = vpop.xlane.xlu0 %3266
    %v3268 = vsel %vm136, %v3248, 0.0
    %3269 = vadd.xlane.f32.xlu0 %v3268
    %v3270 = vpop.xlane.xlu0 %3269
    %v3271 = vsel %vm136, %v3250, 0.0
    %3272 = vadd.xlane.f32.xlu0 %v3271
    %v3273 = vpop.xlane.xlu0 %3272
    %v3274 = vsel %vm136, %v3252, 0.0
    %3275 = vadd.xlane.f32.xlu0 %v3274
    %v3276 = vpop.xlane.xlu0 %3275
    %v3277 = vrcp.pop %v3255
    %v3278 = vrcp.pop %v3258
    %v3279 = vrcp.pop %v3261
    %v3280 = vrcp.pop %v3264
    %v3281 = vrcp.pop %v3267
    %v3282 = vrcp.pop %v3270
    %v3283 = vrcp.pop %v3273
    %v3284 = vrcp.pop %v3276
    %v3285 = vmul.f32 %v3238, %v3277
    %v3286 = vmul.f32 %v3240, %v3278
    %v3287 = vmul.f32 %v3242, %v3279
    %v3288 = vmul.f32 %v3244, %v3280
    %v3289 = vmul.f32 %v3246, %v3281
    %v3290 = vmul.f32 %v3248, %v3282
    %v3291 = vmul.f32 %v3250, %v3283
    %v3292 = vmul.f32 %v3252, %v3284
    %v3293 = vpack.c.bf16 %v3285, %v3285
    %v3294 = vpack.c.bf16 %v3286, %v3286
    %v3295 = vpack.c.bf16 %v3287, %v3287
    %v3296 = vpack.c.bf16 %v3288, %v3288
    %v3297 = vpack.c.bf16 %v3289, %v3289
    %v3298 = vpack.c.bf16 %v3290, %v3290
    %v3299 = vpack.c.bf16 %v3291, %v3291
    %v3300 = vpack.c.bf16 %v3292, %v3292
    %3301 = vrot.lane.b32.xlu0 %v2789, 64
    %v3302 = vpop.permute.xlu0 %3301
    %v3304 = vsel %vm136, %v3293, 0
    %v3307 = vsel %vm643, %v3302, 0
    %3309 = vmatprep.subr.bf16.mxu0 0
    %3310 = vmatpush1.bf16.msra.mxu0 %v3307
    %3311 = vmatprep.subr.bf16.mxu0 0
    %3312 = vmatpush1.bf16.msra.mxu0 0
    %3313 = vmatprep.subr.bf16.mxu0 0
    %3314 = vmatpush1.bf16.msra.mxu0 0
    %3315 = vmatprep.subr.bf16.mxu0 0
    %3316 = vmatpush1.bf16.msra.mxu0 0
    %3317 = vmatprep.subr.bf16.mxu0 0
    %3318 = vmatpush1.bf16.msra.mxu0 0
    %3319 = vmatprep.subr.bf16.mxu0 0
    %3320 = vmatpush1.bf16.msra.mxu0 0
    %3321 = vmatprep.subr.bf16.mxu0 0
    %3322 = vmatpush1.bf16.msra.mxu0 0
    %3323 = vmatprep.subr.bf16.mxu0 0
    %3324 = vmatpush1.bf16.msra.mxu0 0
    %3325 = vmatprep.subr.bf16.mxu0 0
    %3326 = vmatpush1.bf16.msra.mxu0 0
    %3327 = vmatprep.subr.bf16.mxu0 0
    %3328 = vmatpush1.bf16.msra.mxu0 0
    %3329 = vmatprep.subr.bf16.mxu0 0
    %3330 = vmatpush1.bf16.msra.mxu0 0
    %3331 = vmatprep.subr.bf16.mxu0 0
    %3332 = vmatpush1.bf16.msra.mxu0 0
    %3333 = vmatprep.subr.bf16.mxu0 0
    %3334 = vmatpush1.bf16.msra.mxu0 0
    %3335 = vmatprep.subr.bf16.mxu0 0
    %3336 = vmatpush1.bf16.msra.mxu0 0
    %3337 = vmatprep.subr.bf16.mxu0 0
    %3338 = vmatpush1.bf16.msra.mxu0 0
    %3339 = vmatprep.subr.bf16.mxu0 0
    %3340 = vmatpush1.bf16.msra.mxu0 0
    %3341 = vmatprep.mubr.bf16.mxu0 0
    %3342 = vmatmul.mubr.bf16.gmra.mrb[0].mxu0 %v3304
    %v3343 = vpop.f32.mrb[0].mxu0
    %v3344 = vadd.f32 0.0, %v3343
    %v3345 = vpop.f32.mrb[0].mxu0
    %v3346 = vpop.f32.mrb[0].mxu0
    %v3347 = vpop.f32.mrb[0].mxu0
    %3348 = vdwg.mxu0
    %3349 = vrot.lane.b32.xlu0 %v2790, 64
    %v3350 = vpop.permute.xlu0 %3349
    %v3352 = vsel %vm136, %v3294, 0
    %v3355 = vsel %vm643, %v3350, 0
    %3357 = vmatprep.subr.bf16.mxu0 0
    %3358 = vmatpush1.bf16.msra.mxu0 %v3355
    %3359 = vmatprep.subr.bf16.mxu0 0
    %3360 = vmatpush1.bf16.msra.mxu0 0
    %3361 = vmatprep.subr.bf16.mxu0 0
    %3362 = vmatpush1.bf16.msra.mxu0 0
    %3363 = vmatprep.subr.bf16.mxu0 0
    %3364 = vmatpush1.bf16.msra.mxu0 0
    %3365 = vmatprep.subr.bf16.mxu0 0
    %3366 = vmatpush1.bf16.msra.mxu0 0
    %3367 = vmatprep.subr.bf16.mxu0 0
    %3368 = vmatpush1.bf16.msra.mxu0 0
    %3369 = vmatprep.subr.bf16.mxu0 0
    %3370 = vmatpush1.bf16.msra.mxu0 0
    %3371 = vmatprep.subr.bf16.mxu0 0
    %3372 = vmatpush1.bf16.msra.mxu0 0
    %3373 = vmatprep.subr.bf16.mxu0 0
    %3374 = vmatpush1.bf16.msra.mxu0 0
    %3375 = vmatprep.subr.bf16.mxu0 0
    %3376 = vmatpush1.bf16.msra.mxu0 0
    %3377 = vmatprep.subr.bf16.mxu0 0
    %3378 = vmatpush1.bf16.msra.mxu0 0
    %3379 = vmatprep.subr.bf16.mxu0 0
    %3380 = vmatpush1.bf16.msra.mxu0 0
    %3381 = vmatprep.subr.bf16.mxu0 0
    %3382 = vmatpush1.bf16.msra.mxu0 0
    %3383 = vmatprep.subr.bf16.mxu0 0
    %3384 = vmatpush1.bf16.msra.mxu0 0
    %3385 = vmatprep.subr.bf16.mxu0 0
    %3386 = vmatpush1.bf16.msra.mxu0 0
    %3387 = vmatprep.subr.bf16.mxu0 0
    %3388 = vmatpush1.bf16.msra.mxu0 0
    %3389 = vmatprep.mubr.bf16.mxu0 0
    %3390 = vmatmul.mubr.bf16.gmra.mrb[0].mxu0 %v3352
    %v3391 = vpop.f32.mrb[0].mxu0
    %v3392 = vadd.f32 0.0, %v3391
    %v3393 = vpop.f32.mrb[0].mxu0
    %v3394 = vpop.f32.mrb[0].mxu0
    %v3395 = vpop.f32.mrb[0].mxu0
    %3396 = vdwg.mxu0
    %3397 = vrot.lane.b32.xlu0 %v2791, 64
    %v3398 = vpop.permute.xlu0 %3397
    %v3400 = vsel %vm136, %v3295, 0
    %v3403 = vsel %vm643, %v3398, 0
    %3405 = vmatprep.subr.bf16.mxu0 0
    %3406 = vmatpush1.bf16.msra.mxu0 %v3403
    %3407 = vmatprep.subr.bf16.mxu0 0
    %3408 = vmatpush1.bf16.msra.mxu0 0
    %3409 = vmatprep.subr.bf16.mxu0 0
    %3410 = vmatpush1.bf16.msra.mxu0 0
    %3411 = vmatprep.subr.bf16.mxu0 0
    %3412 = vmatpush1.bf16.msra.mxu0 0
    %3413 = vmatprep.subr.bf16.mxu0 0
    %3414 = vmatpush1.bf16.msra.mxu0 0
    %3415 = vmatprep.subr.bf16.mxu0 0
    %3416 = vmatpush1.bf16.msra.mxu0 0
    %3417 = vmatprep.subr.bf16.mxu0 0
    %3418 = vmatpush1.bf16.msra.mxu0 0
    %3419 = vmatprep.subr.bf16.mxu0 0
    %3420 = vmatpush1.bf16.msra.mxu0 0
    %3421 = vmatprep.subr.bf16.mxu0 0
    %3422 = vmatpush1.bf16.msra.mxu0 0
    %3423 = vmatprep.subr.bf16.mxu0 0
    %3424 = vmatpush1.bf16.msra.mxu0 0
    %3425 = vmatprep.subr.bf16.mxu0 0
    %3426 = vmatpush1.bf16.msra.mxu0 0
    %3427 = vmatprep.subr.bf16.mxu0 0
    %3428 = vmatpush1.bf16.msra.mxu0 0
    %3429 = vmatprep.subr.bf16.mxu0 0
    %3430 = vmatpush1.bf16.msra.mxu0 0
    %3431 = vmatprep.subr.bf16.mxu0 0
    %3432 = vmatpush1.bf16.msra.mxu0 0
    %3433 = vmatprep.subr.bf16.mxu0 0
    %3434 = vmatpush1.bf16.msra.mxu0 0
    %3435 = vmatprep.subr.bf16.mxu0 0
    %3436 = vmatpush1.bf16.msra.mxu0 0
    %3437 = vmatprep.mubr.bf16.mxu0 0
    %3438 = vmatmul.mubr.bf16.gmra.mrb[0].mxu0 %v3400
    %v3439 = vpop.f32.mrb[0].mxu0
    %v3440 = vadd.f32 0.0, %v3439
    %v3441 = vpop.f32.mrb[0].mxu0
    %v3442 = vpop.f32.mrb[0].mxu0
    %v3443 = vpop.f32.mrb[0].mxu0
    %3444 = vdwg.mxu0
    %3445 = vrot.lane.b32.xlu0 %v2792, 64
    %v3446 = vpop.permute.xlu0 %3445
    %v3448 = vsel %vm136, %v3296, 0
    %v3451 = vsel %vm643, %v3446, 0
    %3453 = vmatprep.subr.bf16.mxu0 0
    %3454 = vmatpush1.bf16.msra.mxu0 %v3451
    %3455 = vmatprep.subr.bf16.mxu0 0
    %3456 = vmatpush1.bf16.msra.mxu0 0
    %3457 = vmatprep.subr.bf16.mxu0 0
    %3458 = vmatpush1.bf16.msra.mxu0 0
    %3459 = vmatprep.subr.bf16.mxu0 0
    %3460 = vmatpush1.bf16.msra.mxu0 0
    %3461 = vmatprep.subr.bf16.mxu0 0
    %3462 = vmatpush1.bf16.msra.mxu0 0
    %3463 = vmatprep.subr.bf16.mxu0 0
    %3464 = vmatpush1.bf16.msra.mxu0 0
    %3465 = vmatprep.subr.bf16.mxu0 0
    %3466 = vmatpush1.bf16.msra.mxu0 0
    %3467 = vmatprep.subr.bf16.mxu0 0
    %3468 = vmatpush1.bf16.msra.mxu0 0
    %3469 = vmatprep.subr.bf16.mxu0 0
    %3470 = vmatpush1.bf16.msra.mxu0 0
    %3471 = vmatprep.subr.bf16.mxu0 0
    %3472 = vmatpush1.bf16.msra.mxu0 0
    %3473 = vmatprep.subr.bf16.mxu0 0
    %3474 = vmatpush1.bf16.msra.mxu0 0
    %3475 = vmatprep.subr.bf16.mxu0 0
    %3476 = vmatpush1.bf16.msra.mxu0 0
    %3477 = vmatprep.subr.bf16.mxu0 0
    %3478 = vmatpush1.bf16.msra.mxu0 0
    %3479 = vmatprep.subr.bf16.mxu0 0
    %3480 = vmatpush1.bf16.msra.mxu0 0
    %3481 = vmatprep.subr.bf16.mxu0 0
    %3482 = vmatpush1.bf16.msra.mxu0 0
    %3483 = vmatprep.subr.bf16.mxu0 0
    %3484 = vmatpush1.bf16.msra.mxu0 0
    %3485 = vmatprep.mubr.bf16.mxu0 0
    %3486 = vmatmul.mubr.bf16.gmra.mrb[0].mxu0 %v3448
    %v3487 = vpop.f32.mrb[0].mxu0
    %v3488 = vadd.f32 0.0, %v3487
    %v3489 = vpop.f32.mrb[0].mxu0
    %v3490 = vpop.f32.mrb[0].mxu0
    %v3491 = vpop.f32.mrb[0].mxu0
    %3492 = vdwg.mxu0
    %3493 = vrot.lane.b32.xlu0 %v2793, 64
    %v3494 = vpop.permute.xlu0 %3493
    %v3496 = vsel %vm136, %v3297, 0
    %v3499 = vsel %vm643, %v3494, 0
    %3501 = vmatprep.subr.bf16.mxu0 0
    %3502 = vmatpush1.bf16.msra.mxu0 %v3499
    %3503 = vmatprep.subr.bf16.mxu0 0
    %3504 = vmatpush1.bf16.msra.mxu0 0
    %3505 = vmatprep.subr.bf16.mxu0 0
    %3506 = vmatpush1.bf16.msra.mxu0 0
    %3507 = vmatprep.subr.bf16.mxu0 0
    %3508 = vmatpush1.bf16.msra.mxu0 0
    %3509 = vmatprep.subr.bf16.mxu0 0
    %3510 = vmatpush1.bf16.msra.mxu0 0
    %3511 = vmatprep.subr.bf16.mxu0 0
    %3512 = vmatpush1.bf16.msra.mxu0 0
    %3513 = vmatprep.subr.bf16.mxu0 0
    %3514 = vmatpush1.bf16.msra.mxu0 0
    %3515 = vmatprep.subr.bf16.mxu0 0
    %3516 = vmatpush1.bf16.msra.mxu0 0
    %3517 = vmatprep.subr.bf16.mxu0 0
    %3518 = vmatpush1.bf16.msra.mxu0 0
    %3519 = vmatprep.subr.bf16.mxu0 0
    %3520 = vmatpush1.bf16.msra.mxu0 0
    %3521 = vmatprep.subr.bf16.mxu0 0
    %3522 = vmatpush1.bf16.msra.mxu0 0
    %3523 = vmatprep.subr.bf16.mxu0 0
    %3524 = vmatpush1.bf16.msra.mxu0 0
    %3525 = vmatprep.subr.bf16.mxu0 0
    %3526 = vmatpush1.bf16.msra.mxu0 0
    %3527 = vmatprep.subr.bf16.mxu0 0
    %3528 = vmatpush1.bf16.msra.mxu0 0
    %3529 = vmatprep.subr.bf16.mxu0 0
    %3530 = vmatpush1.bf16.msra.mxu0 0
    %3531 = vmatprep.subr.bf16.mxu0 0
    %3532 = vmatpush1.bf16.msra.mxu0 0
    %3533 = vmatprep.mubr.bf16.mxu0 0
    %3534 = vmatmul.mubr.bf16.gmra.mrb[0].mxu0 %v3496
    %v3535 = vpop.f32.mrb[0].mxu0
    %v3536 = vadd.f32 0.0, %v3535
    %v3537 = vpop.f32.mrb[0].mxu0
    %v3538 = vpop.f32.mrb[0].mxu0
    %v3539 = vpop.f32.mrb[0].mxu0
    %3540 = vdwg.mxu0
    %3541 = vrot.lane.b32.xlu0 %v2794, 64
    %v3542 = vpop.permute.xlu0 %3541
    %v3544 = vsel %vm136, %v3298, 0
    %v3547 = vsel %vm643, %v3542, 0
    %3549 = vmatprep.subr.bf16.mxu0 0
    %3550 = vmatpush1.bf16.msra.mxu0 %v3547
    %3551 = vmatprep.subr.bf16.mxu0 0
    %3552 = vmatpush1.bf16.msra.mxu0 0
    %3553 = vmatprep.subr.bf16.mxu0 0
    %3554 = vmatpush1.bf16.msra.mxu0 0
    %3555 = vmatprep.subr.bf16.mxu0 0
    %3556 = vmatpush1.bf16.msra.mxu0 0
    %3557 = vmatprep.subr.bf16.mxu0 0
    %3558 = vmatpush1.bf16.msra.mxu0 0
    %3559 = vmatprep.subr.bf16.mxu0 0
    %3560 = vmatpush1.bf16.msra.mxu0 0
    %3561 = vmatprep.subr.bf16.mxu0 0
    %3562 = vmatpush1.bf16.msra.mxu0 0
    %3563 = vmatprep.subr.bf16.mxu0 0
    %3564 = vmatpush1.bf16.msra.mxu0 0
    %3565 = vmatprep.subr.bf16.mxu0 0
    %3566 = vmatpush1.bf16.msra.mxu0 0
    %3567 = vmatprep.subr.bf16.mxu0 0
    %3568 = vmatpush1.bf16.msra.mxu0 0
    %3569 = vmatprep.subr.bf16.mxu0 0
    %3570 = vmatpush1.bf16.msra.mxu0 0
    %3571 = vmatprep.subr.bf16.mxu0 0
    %3572 = vmatpush1.bf16.msra.mxu0 0
    %3573 = vmatprep.subr.bf16.mxu0 0
    %3574 = vmatpush1.bf16.msra.mxu0 0
    %3575 = vmatprep.subr.bf16.mxu0 0
    %3576 = vmatpush1.bf16.msra.mxu0 0
    %3577 = vmatprep.subr.bf16.mxu0 0
    %3578 = vmatpush1.bf16.msra.mxu0 0
    %3579 = vmatprep.subr.bf16.mxu0 0
    %3580 = vmatpush1.bf16.msra.mxu0 0
    %3581 = vmatprep.mubr.bf16.mxu0 0
    %3582 = vmatmul.mubr.bf16.gmra.mrb[0].mxu0 %v3544
    %v3583 = vpop.f32.mrb[0].mxu0
    %v3584 = vadd.f32 0.0, %v3583
    %v3585 = vpop.f32.mrb[0].mxu0
    %v3586 = vpop.f32.mrb[0].mxu0
    %v3587 = vpop.f32.mrb[0].mxu0
    %3588 = vdwg.mxu0
    %3589 = vrot.lane.b32.xlu0 %v2795, 64
    %v3590 = vpop.permute.xlu0 %3589
    %v3592 = vsel %vm136, %v3299, 0
    %v3595 = vsel %vm643, %v3590, 0
    %3597 = vmatprep.subr.bf16.mxu0 0
    %3598 = vmatpush1.bf16.msra.mxu0 %v3595
    %3599 = vmatprep.subr.bf16.mxu0 0
    %3600 = vmatpush1.bf16.msra.mxu0 0
    %3601 = vmatprep.subr.bf16.mxu0 0
    %3602 = vmatpush1.bf16.msra.mxu0 0
    %3603 = vmatprep.subr.bf16.mxu0 0
    %3604 = vmatpush1.bf16.msra.mxu0 0
    %3605 = vmatprep.subr.bf16.mxu0 0
    %3606 = vmatpush1.bf16.msra.mxu0 0
    %3607 = vmatprep.subr.bf16.mxu0 0
    %3608 = vmatpush1.bf16.msra.mxu0 0
    %3609 = vmatprep.subr.bf16.mxu0 0
    %3610 = vmatpush1.bf16.msra.mxu0 0
    %3611 = vmatprep.subr.bf16.mxu0 0
    %3612 = vmatpush1.bf16.msra.mxu0 0
    %3613 = vmatprep.subr.bf16.mxu0 0
    %3614 = vmatpush1.bf16.msra.mxu0 0
    %3615 = vmatprep.subr.bf16.mxu0 0
    %3616 = vmatpush1.bf16.msra.mxu0 0
    %3617 = vmatprep.subr.bf16.mxu0 0
    %3618 = vmatpush1.bf16.msra.mxu0 0
    %3619 = vmatprep.subr.bf16.mxu0 0
    %3620 = vmatpush1.bf16.msra.mxu0 0
    %3621 = vmatprep.subr.bf16.mxu0 0
    %3622 = vmatpush1.bf16.msra.mxu0 0
    %3623 = vmatprep.subr.bf16.mxu0 0
    %3624 = vmatpush1.bf16.msra.mxu0 0
    %3625 = vmatprep.subr.bf16.mxu0 0
    %3626 = vmatpush1.bf16.msra.mxu0 0
    %3627 = vmatprep.subr.bf16.mxu0 0
    %3628 = vmatpush1.bf16.msra.mxu0 0
    %3629 = vmatprep.mubr.bf16.mxu0 0
    %3630 = vmatmul.mubr.bf16.gmra.mrb[0].mxu0 %v3592
    %v3631 = vpop.f32.mrb[0].mxu0
    %v3632 = vadd.f32 0.0, %v3631
    %v3633 = vpop.f32.mrb[0].mxu0
    %v3634 = vpop.f32.mrb[0].mxu0
    %v3635 = vpop.f32.mrb[0].mxu0
    %3636 = vdwg.mxu0
    %3637 = vrot.lane.b32.xlu0 %v2796, 64
    %v3638 = vpop.permute.xlu0 %3637
    %v3640 = vsel %vm136, %v3300, 0
    %v3643 = vsel %vm643, %v3638, 0
    %3645 = vmatprep.subr.bf16.mxu0 0
    %3646 = vmatpush1.bf16.msra.mxu0 %v3643
    %3647 = vmatprep.subr.bf16.mxu0 0
    %3648 = vmatpush1.bf16.msra.mxu0 0
    %3649 = vmatprep.subr.bf16.mxu0 0
    %3650 = vmatpush1.bf16.msra.mxu0 0
    %3651 = vmatprep.subr.bf16.mxu0 0
    %3652 = vmatpush1.bf16.msra.mxu0 0
    %3653 = vmatprep.subr.bf16.mxu0 0
    %3654 = vmatpush1.bf16.msra.mxu0 0
    %3655 = vmatprep.subr.bf16.mxu0 0
    %3656 = vmatpush1.bf16.msra.mxu0 0
    %3657 = vmatprep.subr.bf16.mxu0 0
    %3658 = vmatpush1.bf16.msra.mxu0 0
    %3659 = vmatprep.subr.bf16.mxu0 0
    %3660 = vmatpush1.bf16.msra.mxu0 0
    %3661 = vmatprep.subr.bf16.mxu0 0
    %3662 = vmatpush1.bf16.msra.mxu0 0
    %3663 = vmatprep.subr.bf16.mxu0 0
    %3664 = vmatpush1.bf16.msra.mxu0 0
    %3665 = vmatprep.subr.bf16.mxu0 0
    %3666 = vmatpush1.bf16.msra.mxu0 0
    %3667 = vmatprep.subr.bf16.mxu0 0
    %3668 = vmatpush1.bf16.msra.mxu0 0
    %3669 = vmatprep.subr.bf16.mxu0 0
    %3670 = vmatpush1.bf16.msra.mxu0 0
    %3671 = vmatprep.subr.bf16.mxu0 0
    %3672 = vmatpush1.bf16.msra.mxu0 0
    %3673 = vmatprep.subr.bf16.mxu0 0
    %3674 = vmatpush1.bf16.msra.mxu0 0
    %3675 = vmatprep.subr.bf16.mxu0 0
    %3676 = vmatpush1.bf16.msra.mxu0 0
    %3677 = vmatprep.mubr.bf16.mxu0 0
    %3678 = vmatmul.mubr.bf16.gmra.mrb[0].mxu0 %v3640
    %v3679 = vpop.f32.mrb[0].mxu0
    %v3680 = vadd.f32 0.0, %v3679
    %v3681 = vpop.f32.mrb[0].mxu0
    %v3682 = vpop.f32.mrb[0].mxu0
    %v3683 = vpop.f32.mrb[0].mxu0
    %3684 = vdwg.mxu0
    %3687 = vrot.lane.b32.xlu0 %v3440, 8
    %v3688 = vpop.permute.xlu0 %3687
    %3689 = vrot.lane.b32.xlu0 %v3488, 8
    %v3690 = vpop.permute.xlu0 %3689
    %3695 = vrot.lane.b32.xlu0 %v3536, 16
    %v3696 = vpop.permute.xlu0 %3695
    %3697 = vrot.lane.b32.xlu0 %v3584, 16
    %v3698 = vpop.permute.xlu0 %3697
    %3703 = vrot.lane.b32.xlu0 %v3632, 24
    %v3704 = vpop.permute.xlu0 %3703
    %3705 = vrot.lane.b32.xlu0 %v3680, 24
    %v3706 = vpop.permute.xlu0 %3705
    %v3709 = vsel %vm136, %v3344, %v3688
    %v3710 = vsel %vm136, %v3392, %v3690
    %v3711 = vsel %vm1049, %v3709, %v3696
    %v3712 = vsel %vm1049, %v3710, %v3698
    %v3713 = vsel %vm1052, %v3711, %v3704
    %v3714 = vsel %vm1052, %v3712, %v3706
    %v3715 = vld [vmem:[%s5 + $0xb0] sm:$0xf]
    %v3716 = vld [vmem:[%s5 + $0xb4] sm:$0xf]
    %v3717 = vld [vmem:[%s5 + $0xb8] sm:$0xf]
    %v3718 = vld [vmem:[%s5 + $0xbc] sm:$0xf]
    %v3719 = vpack.c.bf16 %v3714, %v3713
    %v3720 = vld [vmem:[%s6 + $0x11] sm:$0x1]
    %v3721 = vlaneseq
    %v3722 = vshrl.u32 %v3721, 7
    %v3723 = vsub.s32 0, %v3722
    %v3724 = vrot.slane %v3720, %v3723
    %v3729 = vunpack.c.l.b16 %v3715
    %v3730 = vunpack.c.l.b16 %v3716
    %v3731 = vunpack.c.l.b16 %v3717
    %v3732 = vunpack.c.l.b16 %v3718
    %v3733 = vpack.c.b16 %v3730, %v3729
    %v3734 = vpack.c.b16 %v3732, %v3731
    %v3738 = vsel %vm60, %v3719, 0
    %3740 = vmatprep.subr.bf16.mxu0 0
    %3741 = vmatpush1.bf16.msra.mxu0 %v3733
    %3742 = vmatprep.subr.bf16.mxu0 0
    %3743 = vmatpush1.bf16.msra.mxu0 %v3734
    %3744 = vmatprep.subr.bf16.mxu0 0
    %3745 = vmatpush1.bf16.msra.mxu0 0
    %3746 = vmatprep.subr.bf16.mxu0 0
    %3747 = vmatpush1.bf16.msra.mxu0 0
    %3748 = vmatprep.subr.bf16.mxu0 0
    %3749 = vmatpush1.bf16.msra.mxu0 0
    %3750 = vmatprep.subr.bf16.mxu0 0
    %3751 = vmatpush1.bf16.msra.mxu0 0
    %3752 = vmatprep.subr.bf16.mxu0 0
    %3753 = vmatpush1.bf16.msra.mxu0 0
    %3754 = vmatprep.subr.bf16.mxu0 0
    %3755 = vmatpush1.bf16.msra.mxu0 0
    %3756 = vmatprep.subr.bf16.mxu0 0
    %3757 = vmatpush1.bf16.msra.mxu0 0
    %3758 = vmatprep.subr.bf16.mxu0 0
    %3759 = vmatpush1.bf16.msra.mxu0 0
    %3760 = vmatprep.subr.bf16.mxu0 0
    %3761 = vmatpush1.bf16.msra.mxu0 0
    %3762 = vmatprep.subr.bf16.mxu0 0
    %3763 = vmatpush1.bf16.msra.mxu0 0
    %3764 = vmatprep.subr.bf16.mxu0 0
    %3765 = vmatpush1.bf16.msra.mxu0 0
    %3766 = vmatprep.subr.bf16.mxu0 0
    %3767 = vmatpush1.bf16.msra.mxu0 0
    %3768 = vmatprep.subr.bf16.mxu0 0
    %3769 = vmatpush1.bf16.msra.mxu0 0
    %3770 = vmatprep.subr.bf16.mxu0 0
    %3771 = vmatpush1.bf16.msra.mxu0 0
    %3772 = vmatprep.mubr.bf16.mxu0 0
    %3773 = vmatmul.mubr.bf16.gmra.mrb[0].mxu0 %v3738
    %v3774 = vpop.f32.mrb[0].mxu0
    %v3775 = vadd.f32 %v3724, %v3774
    %v3776 = vpop.f32.mrb[0].mxu0
    %v3777 = vpop.f32.mrb[0].mxu0
    %v3778 = vadd.f32 %v3724, %v3777
    %v3779 = vpop.f32.mrb[0].mxu0
    %3780 = vdwg.mxu0
    %v3781 = vadd.f32 %v2685, %v3775
    %v3782 = vadd.f32 %v2686, %v3778
    %v3783 = vld [vmem:[%s6 + $0x12] sm:$0x1]
    %v3784 = vld [vmem:[%s6 + $0x13] sm:$0x1]
    %v3785 = vsel %vm60, %v3781, 0.0
    %3786 = vadd.xlane.f32.xlu0 %v3785
    %v3787 = vpop.xlane.xlu0 %3786
    %v3788 = vsel %vm60, %v3782, 0.0
    %3789 = vadd.xlane.f32.xlu0 %v3788
    %v3790 = vpop.xlane.xlu0 %3789
    %v3791 = vmul.f32 %v3787, %v1131
    %v3792 = vmul.f32 %v3790, %v1131
    %v3793 = vmul.f32 %v3781, %v3781
    %v3794 = vmul.f32 %v3782, %v3782
    %v3795 = vsel %vm60, %v3793, 0.0
    %3796 = vadd.xlane.f32.xlu0 %v3795
    %v3797 = vpop.xlane.xlu0 %3796
    %v3798 = vsel %vm60, %v3794, 0.0
    %3799 = vadd.xlane.f32.xlu0 %v3798
    %v3800 = vpop.xlane.xlu0 %3799
    %v3801 = vmul.f32 %v3797, %v1131
    %v3802 = vmul.f32 %v3800, %v1131
    %v3803 = vmul.f32 %v3791, %v3791
    %v3804 = vmul.f32 %v3792, %v3792
    %v3805 = vsub.f32 %v3801, %v3803
    %v3806 = vsub.f32 %v3802, %v3804
    %v3807 = vsub.f32 %v3781, %v3791
    %v3808 = vsub.f32 %v3782, %v3792
    %v3809 = vadd.f32 %v3805, 1e-05
    %v3810 = vadd.f32 %v3806, 1e-05
    %v3811 = vrsqrt.pop %v3809
    %v3812 = vrsqrt.pop %v3810
    %v3813 = vmul.f32 %v3807, %v3811
    %v3814 = vmul.f32 %v3808, %v3812
    %v3815 = vlaneseq
    %v3816 = vshrl.u32 %v3815, 7
    %v3817 = vsub.s32 0, %v3816
    %v3818 = vrot.slane %v3783, %v3817
    %v3819 = vmul.f32 %v3813, %v3818
    %v3820 = vmul.f32 %v3814, %v3818
    %v3821 = vlaneseq
    %v3822 = vshrl.u32 %v3821, 7
    %v3823 = vsub.s32 0, %v3822
    %v3824 = vrot.slane %v3784, %v3823
    %v3825 = vadd.f32 %v3819, %v3824
    %v3826 = vadd.f32 %v3820, %v3824
    %v3827 = vld [vmem:[%s5 + $0xc0] sm:$0xf]
    %v3828 = vld [vmem:[%s5 + $0xc4] sm:$0xf]
    %v3829 = vld [vmem:[%s5 + $0xc8] sm:$0xf]
    %v3830 = vld [vmem:[%s5 + $0xcc] sm:$0xf]
    %v3831 = vpack.c.bf16 %v3826, %v3825
    %v3832 = vld [vmem:[%s6 + $0x14] sm:$0x1]
    %v3833 = vlaneseq
    %v3834 = vshrl.u32 %v3833, 7
    %v3835 = vsub.s32 0, %v3834
    %v3836 = vrot.slane %v3832, %v3835
    %v3841 = vunpack.c.l.b16 %v3827
    %v3842 = vunpack.c.l.b16 %v3828
    %v3843 = vunpack.c.l.b16 %v3829
    %v3844 = vunpack.c.l.b16 %v3830
    %v3845 = vpack.c.b16 %v3842, %v3841
    %v3846 = vpack.c.b16 %v3844, %v3843
    %v3850 = vsel %vm60, %v3831, 0
    %3852 = vmatprep.subr.bf16.mxu0 0
    %3853 = vmatpush1.bf16.msra.mxu0 %v3845
    %3854 = vmatprep.subr.bf16.mxu0 0
    %3855 = vmatpush1.bf16.msra.mxu0 %v3846
    %3856 = vmatprep.subr.bf16.mxu0 0
    %3857 = vmatpush1.bf16.msra.mxu0 0
    %3858 = vmatprep.subr.bf16.mxu0 0
    %3859 = vmatpush1.bf16.msra.mxu0 0
    %3860 = vmatprep.subr.bf16.mxu0 0
    %3861 = vmatpush1.bf16.msra.mxu0 0
    %3862 = vmatprep.subr.bf16.mxu0 0
    %3863 = vmatpush1.bf16.msra.mxu0 0
    %3864 = vmatprep.subr.bf16.mxu0 0
    %3865 = vmatpush1.bf16.msra.mxu0 0
    %3866 = vmatprep.subr.bf16.mxu0 0
    %3867 = vmatpush1.bf16.msra.mxu0 0
    %3868 = vmatprep.subr.bf16.mxu0 0
    %3869 = vmatpush1.bf16.msra.mxu0 0
    %3870 = vmatprep.subr.bf16.mxu0 0
    %3871 = vmatpush1.bf16.msra.mxu0 0
    %3872 = vmatprep.subr.bf16.mxu0 0
    %3873 = vmatpush1.bf16.msra.mxu0 0
    %3874 = vmatprep.subr.bf16.mxu0 0
    %3875 = vmatpush1.bf16.msra.mxu0 0
    %3876 = vmatprep.subr.bf16.mxu0 0
    %3877 = vmatpush1.bf16.msra.mxu0 0
    %3878 = vmatprep.subr.bf16.mxu0 0
    %3879 = vmatpush1.bf16.msra.mxu0 0
    %3880 = vmatprep.subr.bf16.mxu0 0
    %3881 = vmatpush1.bf16.msra.mxu0 0
    %3882 = vmatprep.subr.bf16.mxu0 0
    %3883 = vmatpush1.bf16.msra.mxu0 0
    %3884 = vmatprep.mubr.bf16.mxu0 0
    %3885 = vmatmul.mubr.bf16.gmra.mrb[0].mxu0 %v3850
    %v3886 = vpop.f32.mrb[0].mxu0
    %v3887 = vadd.f32 %v3836, %v3886
    %v3888 = vpop.f32.mrb[0].mxu0
    %v3889 = vpop.f32.mrb[0].mxu0
    %v3890 = vadd.f32 %v3836, %v3889
    %v3891 = vpop.f32.mrb[0].mxu0
    %3892 = vdwg.mxu0
    %v3893 = vld [vmem:[%s5 + $0xd0] sm:$0xf]
    %v3894 = vld [vmem:[%s5 + $0xd4] sm:$0xf]
    %v3895 = vld [vmem:[%s5 + $0xd8] sm:$0xf]
    %v3896 = vld [vmem:[%s5 + $0xdc] sm:$0xf]
    %v3897 = vpack.c.bf16 %v2684, %v2683
    %v3898 = vld [vmem:[%s6 + $0x15] sm:$0x1]
    %v3899 = vlaneseq
    %v3900 = vshrl.u32 %v3899, 7
    %v3901 = vsub.s32 0, %v3900
    %v3902 = vrot.slane %v3898, %v3901
    %v3907 = vunpack.c.l.b16 %v3893
    %v3908 = vunpack.c.l.b16 %v3894
    %v3909 = vunpack.c.l.b16 %v3895
    %v3910 = vunpack.c.l.b16 %v3896
    %v3911 = vpack.c.b16 %v3908, %v3907
    %v3912 = vpack.c.b16 %v3910, %v3909
    %v3916 = vsel %vm60, %v3897, 0
    %3918 = vmatprep.subr.bf16.mxu0 0
    %3919 = vmatpush1.bf16.msra.mxu0 %v3911
    %3920 = vmatprep.subr.bf16.mxu0 0
    %3921 = vmatpush1.bf16.msra.mxu0 %v3912
    %3922 = vmatprep.subr.bf16.mxu0 0
    %3923 = vmatpush1.bf16.msra.mxu0 0
    %3924 = vmatprep.subr.bf16.mxu0 0
    %3925 = vmatpush1.bf16.msra.mxu0 0
    %3926 = vmatprep.subr.bf16.mxu0 0
    %3927 = vmatpush1.bf16.msra.mxu0 0
    %3928 = vmatprep.subr.bf16.mxu0 0
    %3929 = vmatpush1.bf16.msra.mxu0 0
    %3930 = vmatprep.subr.bf16.mxu0 0
    %3931 = vmatpush1.bf16.msra.mxu0 0
    %3932 = vmatprep.subr.bf16.mxu0 0
    %3933 = vmatpush1.bf16.msra.mxu0 0
    %3934 = vmatprep.subr.bf16.mxu0 0
    %3935 = vmatpush1.bf16.msra.mxu0 0
    %3936 = vmatprep.subr.bf16.mxu0 0
    %3937 = vmatpush1.bf16.msra.mxu0 0
    %3938 = vmatprep.subr.bf16.mxu0 0
    %3939 = vmatpush1.bf16.msra.mxu0 0
    %3940 = vmatprep.subr.bf16.mxu0 0
    %3941 = vmatpush1.bf16.msra.mxu0 0
    %3942 = vmatprep.subr.bf16.mxu0 0
    %3943 = vmatpush1.bf16.msra.mxu0 0
    %3944 = vmatprep.subr.bf16.mxu0 0
    %3945 = vmatpush1.bf16.msra.mxu0 0
    %3946 = vmatprep.subr.bf16.mxu0 0
    %3947 = vmatpush1.bf16.msra.mxu0 0
    %3948 = vmatprep.subr.bf16.mxu0 0
    %3949 = vmatpush1.bf16.msra.mxu0 0
    %3950 = vmatprep.mubr.bf16.mxu0 0
    %3951 = vmatmul.mubr.bf16.gmra.mrb[0].mxu0 %v3916
    %v3952 = vpop.f32.mrb[0].mxu0
    %v3953 = vadd.f32 %v3902, %v3952
    %v3954 = vpop.f32.mrb[0].mxu0
    %v3955 = vpop.f32.mrb[0].mxu0
    %v3956 = vadd.f32 %v3902, %v3955
    %v3957 = vpop.f32.mrb[0].mxu0
    %3958 = vdwg.mxu0
    %3961 = vrot.lane.b32.xlu0 %v3887, 120
    %v3962 = vpop.permute.xlu0 %3961
    %3963 = vrot.lane.b32.xlu0 %v3890, 120
    %v3964 = vpop.permute.xlu0 %3963
    %3967 = vrot.lane.b32.xlu0 %v3887, 112
    %v3968 = vpop.permute.xlu0 %3967
    %3969 = vrot.lane.b32.xlu0 %v3890, 112
    %v3970 = vpop.permute.xlu0 %3969
    %3973 = vrot.lane.b32.xlu0 %v3887, 104
    %v3974 = vpop.permute.xlu0 %3973
    %3975 = vrot.lane.b32.xlu0 %v3890, 104
    %v3976 = vpop.permute.xlu0 %3975
    %v3979 = vpack.c.bf16 %v3887, %v3887
    %v3980 = vpack.c.bf16 %v3890, %v3890
    %v3981 = vpack.c.bf16 %v3962, %v3962
    %v3982 = vpack.c.bf16 %v3964, %v3964
    %v3983 = vpack.c.bf16 %v3968, %v3968
    %v3984 = vpack.c.bf16 %v3970, %v3970
    %v3985 = vpack.c.bf16 %v3974, %v3974
    %v3986 = vpack.c.bf16 %v3976, %v3976
    %3989 = vrot.lane.b32.xlu0 %v3953, 120
    %v3990 = vpop.permute.xlu0 %3989
    %3991 = vrot.lane.b32.xlu0 %v3956, 120
    %v3992 = vpop.permute.xlu0 %3991
    %3995 = vrot.lane.b32.xlu0 %v3953, 112
    %v3996 = vpop.permute.xlu0 %3995
    %3997 = vrot.lane.b32.xlu0 %v3956, 112
    %v3998 = vpop.permute.xlu0 %3997
    %4001 = vrot.lane.b32.xlu0 %v3953, 104
    %v4002 = vpop.permute.xlu0 %4001
    %4003 = vrot.lane.b32.xlu0 %v3956, 104
    %v4004 = vpop.permute.xlu0 %4003
    %v4007 = vpack.c.bf16 %v3953, %v3953
    %v4008 = vpack.c.bf16 %v3956, %v3956
    %v4009 = vpack.c.bf16 %v3990, %v3990
    %v4010 = vpack.c.bf16 %v3992, %v3992
    %v4011 = vpack.c.bf16 %v3996, %v3996
    %v4012 = vpack.c.bf16 %v3998, %v3998
    %v4013 = vpack.c.bf16 %v4002, %v4002
    %v4014 = vpack.c.bf16 %v4004, %v4004
    %v4016 = vsel %vm136, %v3979, 0
    %v4019 = vsel %vm136, %v4007, 0
    %4021 = vmatprep.subr.bf16.mxu0 0
    %4022 = vmatpush1.bf16.xpose.msra.mxu0 %v4019
    %4023 = vmatprep.subr.bf16.mxu0 0
    %4024 = vmatpush1.bf16.xpose.msra.mxu0 0
    %4025 = vmatprep.subr.bf16.mxu0 0
    %4026 = vmatpush1.bf16.xpose.msra.mxu0 0
    %4027 = vmatprep.subr.bf16.mxu0 0
    %4028 = vmatpush1.bf16.xpose.msra.mxu0 0
    %4029 = vmatprep.subr.bf16.mxu0 0
    %4030 = vmatpush1.bf16.xpose.msra.mxu0 0
    %4031 = vmatprep.subr.bf16.mxu0 0
    %4032 = vmatpush1.bf16.xpose.msra.mxu0 0
    %4033 = vmatprep.subr.bf16.mxu0 0
    %4034 = vmatpush1.bf16.xpose.msra.mxu0 0
    %4035 = vmatprep.subr.bf16.mxu0 0
    %4036 = vmatpush1.bf16.xpose.msra.mxu0 0
    %4037 = vmatprep.subr.bf16.mxu0 0
    %4038 = vmatpush1.bf16.xpose.msra.mxu0 0
    %4039 = vmatprep.subr.bf16.mxu0 0
    %4040 = vmatpush1.bf16.xpose.msra.mxu0 0
    %4041 = vmatprep.subr.bf16.mxu0 0
    %4042 = vmatpush1.bf16.xpose.msra.mxu0 0
    %4043 = vmatprep.subr.bf16.mxu0 0
    %4044 = vmatpush1.bf16.xpose.msra.mxu0 0
    %4045 = vmatprep.subr.bf16.mxu0 0
    %4046 = vmatpush1.bf16.xpose.msra.mxu0 0
    %4047 = vmatprep.subr.bf16.mxu0 0
    %4048 = vmatpush1.bf16.xpose.msra.mxu0 0
    %4049 = vmatprep.subr.bf16.mxu0 0
    %4050 = vmatpush1.bf16.xpose.msra.mxu0 0
    %4051 = vmatprep.subr.bf16.mxu0 0
    %4052 = vmatpush1.bf16.xpose.msra.mxu0 0
    %4053 = vmatprep.mubr.bf16.mxu0 0
    %4054 = vmatmul.mubr.bf16.gmra.mrb[0].mxu0 %v4016
    %v4055 = vpop.f32.mrb[0].mxu0
    %v4056 = vadd.f32 0.0, %v4055
    %v4057 = vpop.f32.mrb[0].mxu0
    %v4058 = vpop.f32.mrb[0].mxu0
    %v4059 = vpop.f32.mrb[0].mxu0
    %4060 = vdwg.mxu0
    %v4062 = vsel %vm136, %v3980, 0
    %v4065 = vsel %vm136, %v4008, 0
    %4067 = vmatprep.subr.bf16.mxu0 0
    %4068 = vmatpush1.bf16.xpose.msra.mxu0 %v4065
    %4069 = vmatprep.subr.bf16.mxu0 0
    %4070 = vmatpush1.bf16.xpose.msra.mxu0 0
    %4071 = vmatprep.subr.bf16.mxu0 0
    %4072 = vmatpush1.bf16.xpose.msra.mxu0 0
    %4073 = vmatprep.subr.bf16.mxu0 0
    %4074 = vmatpush1.bf16.xpose.msra.mxu0 0
    %4075 = vmatprep.subr.bf16.mxu0 0
    %4076 = vmatpush1.bf16.xpose.msra.mxu0 0
    %4077 = vmatprep.subr.bf16.mxu0 0
    %4078 = vmatpush1.bf16.xpose.msra.mxu0 0
    %4079 = vmatprep.subr.bf16.mxu0 0
    %4080 = vmatpush1.bf16.xpose.msra.mxu0 0
    %4081 = vmatprep.subr.bf16.mxu0 0
    %4082 = vmatpush1.bf16.xpose.msra.mxu0 0
    %4083 = vmatprep.subr.bf16.mxu0 0
    %4084 = vmatpush1.bf16.xpose.msra.mxu0 0
    %4085 = vmatprep.subr.bf16.mxu0 0
    %4086 = vmatpush1.bf16.xpose.msra.mxu0 0
    %4087 = vmatprep.subr.bf16.mxu0 0
    %4088 = vmatpush1.bf16.xpose.msra.mxu0 0
    %4089 = vmatprep.subr.bf16.mxu0 0
    %4090 = vmatpush1.bf16.xpose.msra.mxu0 0
    %4091 = vmatprep.subr.bf16.mxu0 0
    %4092 = vmatpush1.bf16.xpose.msra.mxu0 0
    %4093 = vmatprep.subr.bf16.mxu0 0
    %4094 = vmatpush1.bf16.xpose.msra.mxu0 0
    %4095 = vmatprep.subr.bf16.mxu0 0
    %4096 = vmatpush1.bf16.xpose.msra.mxu0 0
    %4097 = vmatprep.subr.bf16.mxu0 0
    %4098 = vmatpush1.bf16.xpose.msra.mxu0 0
    %4099 = vmatprep.mubr.bf16.mxu0 0
    %4100 = vmatmul.mubr.bf16.gmra.mrb[0].mxu0 %v4062
    %v4101 = vpop.f32.mrb[0].mxu0
    %v4102 = vadd.f32 0.0, %v4101
    %v4103 = vpop.f32.mrb[0].mxu0
    %v4104 = vpop.f32.mrb[0].mxu0
    %v4105 = vpop.f32.mrb[0].mxu0
    %4106 = vdwg.mxu0
    %v4108 = vsel %vm136, %v3981, 0
    %v4111 = vsel %vm136, %v4009, 0
    %4113 = vmatprep.subr.bf16.mxu0 0
    %4114 = vmatpush1.bf16.xpose.msra.mxu0 %v4111
    %4115 = vmatprep.subr.bf16.mxu0 0
    %4116 = vmatpush1.bf16.xpose.msra.mxu0 0
    %4117 = vmatprep.subr.bf16.mxu0 0
    %4118 = vmatpush1.bf16.xpose.msra.mxu0 0
    %4119 = vmatprep.subr.bf16.mxu0 0
    %4120 = vmatpush1.bf16.xpose.msra.mxu0 0
    %4121 = vmatprep.subr.bf16.mxu0 0
    %4122 = vmatpush1.bf16.xpose.msra.mxu0 0
    %4123 = vmatprep.subr.bf16.mxu0 0
    %4124 = vmatpush1.bf16.xpose.msra.mxu0 0
    %4125 = vmatprep.subr.bf16.mxu0 0
    %4126 = vmatpush1.bf16.xpose.msra.mxu0 0
    %4127 = vmatprep.subr.bf16.mxu0 0
    %4128 = vmatpush1.bf16.xpose.msra.mxu0 0
    %4129 = vmatprep.subr.bf16.mxu0 0
    %4130 = vmatpush1.bf16.xpose.msra.mxu0 0
    %4131 = vmatprep.subr.bf16.mxu0 0
    %4132 = vmatpush1.bf16.xpose.msra.mxu0 0
    %4133 = vmatprep.subr.bf16.mxu0 0
    %4134 = vmatpush1.bf16.xpose.msra.mxu0 0
    %4135 = vmatprep.subr.bf16.mxu0 0
    %4136 = vmatpush1.bf16.xpose.msra.mxu0 0
    %4137 = vmatprep.subr.bf16.mxu0 0
    %4138 = vmatpush1.bf16.xpose.msra.mxu0 0
    %4139 = vmatprep.subr.bf16.mxu0 0
    %4140 = vmatpush1.bf16.xpose.msra.mxu0 0
    %4141 = vmatprep.subr.bf16.mxu0 0
    %4142 = vmatpush1.bf16.xpose.msra.mxu0 0
    %4143 = vmatprep.subr.bf16.mxu0 0
    %4144 = vmatpush1.bf16.xpose.msra.mxu0 0
    %4145 = vmatprep.mubr.bf16.mxu0 0
    %4146 = vmatmul.mubr.bf16.gmra.mrb[0].mxu0 %v4108
    %v4147 = vpop.f32.mrb[0].mxu0
    %v4148 = vadd.f32 0.0, %v4147
    %v4149 = vpop.f32.mrb[0].mxu0
    %v4150 = vpop.f32.mrb[0].mxu0
    %v4151 = vpop.f32.mrb[0].mxu0
    %4152 = vdwg.mxu0
    %v4154 = vsel %vm136, %v3982, 0
    %v4157 = vsel %vm136, %v4010, 0
    %4159 = vmatprep.subr.bf16.mxu0 0
    %4160 = vmatpush1.bf16.xpose.msra.mxu0 %v4157
    %4161 = vmatprep.subr.bf16.mxu0 0
    %4162 = vmatpush1.bf16.xpose.msra.mxu0 0
    %4163 = vmatprep.subr.bf16.mxu0 0
    %4164 = vmatpush1.bf16.xpose.msra.mxu0 0
    %4165 = vmatprep.subr.bf16.mxu0 0
    %4166 = vmatpush1.bf16.xpose.msra.mxu0 0
    %4167 = vmatprep.subr.bf16.mxu0 0
    %4168 = vmatpush1.bf16.xpose.msra.mxu0 0
    %4169 = vmatprep.subr.bf16.mxu0 0
    %4170 = vmatpush1.bf16.xpose.msra.mxu0 0
    %4171 = vmatprep.subr.bf16.mxu0 0
    %4172 = vmatpush1.bf16.xpose.msra.mxu0 0
    %4173 = vmatprep.subr.bf16.mxu0 0
    %4174 = vmatpush1.bf16.xpose.msra.mxu0 0
    %4175 = vmatprep.subr.bf16.mxu0 0
    %4176 = vmatpush1.bf16.xpose.msra.mxu0 0
    %4177 = vmatprep.subr.bf16.mxu0 0
    %4178 = vmatpush1.bf16.xpose.msra.mxu0 0
    %4179 = vmatprep.subr.bf16.mxu0 0
    %4180 = vmatpush1.bf16.xpose.msra.mxu0 0
    %4181 = vmatprep.subr.bf16.mxu0 0
    %4182 = vmatpush1.bf16.xpose.msra.mxu0 0
    %4183 = vmatprep.subr.bf16.mxu0 0
    %4184 = vmatpush1.bf16.xpose.msra.mxu0 0
    %4185 = vmatprep.subr.bf16.mxu0 0
    %4186 = vmatpush1.bf16.xpose.msra.mxu0 0
    %4187 = vmatprep.subr.bf16.mxu0 0
    %4188 = vmatpush1.bf16.xpose.msra.mxu0 0
    %4189 = vmatprep.subr.bf16.mxu0 0
    %4190 = vmatpush1.bf16.xpose.msra.mxu0 0
    %4191 = vmatprep.mubr.bf16.mxu0 0
    %4192 = vmatmul.mubr.bf16.gmra.mrb[0].mxu0 %v4154
    %v4193 = vpop.f32.mrb[0].mxu0
    %v4194 = vadd.f32 0.0, %v4193
    %v4195 = vpop.f32.mrb[0].mxu0
    %v4196 = vpop.f32.mrb[0].mxu0
    %v4197 = vpop.f32.mrb[0].mxu0
    %4198 = vdwg.mxu0
    %v4200 = vsel %vm136, %v3983, 0
    %v4203 = vsel %vm136, %v4011, 0
    %4205 = vmatprep.subr.bf16.mxu0 0
    %4206 = vmatpush1.bf16.xpose.msra.mxu0 %v4203
    %4207 = vmatprep.subr.bf16.mxu0 0
    %4208 = vmatpush1.bf16.xpose.msra.mxu0 0
    %4209 = vmatprep.subr.bf16.mxu0 0
    %4210 = vmatpush1.bf16.xpose.msra.mxu0 0
    %4211 = vmatprep.subr.bf16.mxu0 0
    %4212 = vmatpush1.bf16.xpose.msra.mxu0 0
    %4213 = vmatprep.subr.bf16.mxu0 0
    %4214 = vmatpush1.bf16.xpose.msra.mxu0 0
    %4215 = vmatprep.subr.bf16.mxu0 0
    %4216 = vmatpush1.bf16.xpose.msra.mxu0 0
    %4217 = vmatprep.subr.bf16.mxu0 0
    %4218 = vmatpush1.bf16.xpose.msra.mxu0 0
    %4219 = vmatprep.subr.bf16.mxu0 0
    %4220 = vmatpush1.bf16.xpose.msra.mxu0 0
    %4221 = vmatprep.subr.bf16.mxu0 0
    %4222 = vmatpush1.bf16.xpose.msra.mxu0 0
    %4223 = vmatprep.subr.bf16.mxu0 0
    %4224 = vmatpush1.bf16.xpose.msra.mxu0 0
    %4225 = vmatprep.subr.bf16.mxu0 0
    %4226 = vmatpush1.bf16.xpose.msra.mxu0 0
    %4227 = vmatprep.subr.bf16.mxu0 0
    %4228 = vmatpush1.bf16.xpose.msra.mxu0 0
    %4229 = vmatprep.subr.bf16.mxu0 0
    %4230 = vmatpush1.bf16.xpose.msra.mxu0 0
    %4231 = vmatprep.subr.bf16.mxu0 0
    %4232 = vmatpush1.bf16.xpose.msra.mxu0 0
    %4233 = vmatprep.subr.bf16.mxu0 0
    %4234 = vmatpush1.bf16.xpose.msra.mxu0 0
    %4235 = vmatprep.subr.bf16.mxu0 0
    %4236 = vmatpush1.bf16.xpose.msra.mxu0 0
    %4237 = vmatprep.mubr.bf16.mxu0 0
    %4238 = vmatmul.mubr.bf16.gmra.mrb[0].mxu0 %v4200
    %v4239 = vpop.f32.mrb[0].mxu0
    %v4240 = vadd.f32 0.0, %v4239
    %v4241 = vpop.f32.mrb[0].mxu0
    %v4242 = vpop.f32.mrb[0].mxu0
    %v4243 = vpop.f32.mrb[0].mxu0
    %4244 = vdwg.mxu0
    %v4246 = vsel %vm136, %v3984, 0
    %v4249 = vsel %vm136, %v4012, 0
    %4251 = vmatprep.subr.bf16.mxu0 0
    %4252 = vmatpush1.bf16.xpose.msra.mxu0 %v4249
    %4253 = vmatprep.subr.bf16.mxu0 0
    %4254 = vmatpush1.bf16.xpose.msra.mxu0 0
    %4255 = vmatprep.subr.bf16.mxu0 0
    %4256 = vmatpush1.bf16.xpose.msra.mxu0 0
    %4257 = vmatprep.subr.bf16.mxu0 0
    %4258 = vmatpush1.bf16.xpose.msra.mxu0 0
    %4259 = vmatprep.subr.bf16.mxu0 0
    %4260 = vmatpush1.bf16.xpose.msra.mxu0 0
    %4261 = vmatprep.subr.bf16.mxu0 0
    %4262 = vmatpush1.bf16.xpose.msra.mxu0 0
    %4263 = vmatprep.subr.bf16.mxu0 0
    %4264 = vmatpush1.bf16.xpose.msra.mxu0 0
    %4265 = vmatprep.subr.bf16.mxu0 0
    %4266 = vmatpush1.bf16.xpose.msra.mxu0 0
    %4267 = vmatprep.subr.bf16.mxu0 0
    %4268 = vmatpush1.bf16.xpose.msra.mxu0 0
    %4269 = vmatprep.subr.bf16.mxu0 0
    %4270 = vmatpush1.bf16.xpose.msra.mxu0 0
    %4271 = vmatprep.subr.bf16.mxu0 0
    %4272 = vmatpush1.bf16.xpose.msra.mxu0 0
    %4273 = vmatprep.subr.bf16.mxu0 0
    %4274 = vmatpush1.bf16.xpose.msra.mxu0 0
    %4275 = vmatprep.subr.bf16.mxu0 0
    %4276 = vmatpush1.bf16.xpose.msra.mxu0 0
    %4277 = vmatprep.subr.bf16.mxu0 0
    %4278 = vmatpush1.bf16.xpose.msra.mxu0 0
    %4279 = vmatprep.subr.bf16.mxu0 0
    %4280 = vmatpush1.bf16.xpose.msra.mxu0 0
    %4281 = vmatprep.subr.bf16.mxu0 0
    %4282 = vmatpush1.bf16.xpose.msra.mxu0 0
    %4283 = vmatprep.mubr.bf16.mxu0 0
    %4284 = vmatmul.mubr.bf16.gmra.mrb[0].mxu0 %v4246
    %v4285 = vpop.f32.mrb[0].mxu0
    %v4286 = vadd.f32 0.0, %v4285
    %v4287 = vpop.f32.mrb[0].mxu0
    %v4288 = vpop.f32.mrb[0].mxu0
    %v4289 = vpop.f32.mrb[0].mxu0
    %4290 = vdwg.mxu0
    %v4292 = vsel %vm136, %v3985, 0
    %v4295 = vsel %vm136, %v4013, 0
    %4297 = vmatprep.subr.bf16.mxu0 0
    %4298 = vmatpush1.bf16.xpose.msra.mxu0 %v4295
    %4299 = vmatprep.subr.bf16.mxu0 0
    %4300 = vmatpush1.bf16.xpose.msra.mxu0 0
    %4301 = vmatprep.subr.bf16.mxu0 0
    %4302 = vmatpush1.bf16.xpose.msra.mxu0 0
    %4303 = vmatprep.subr.bf16.mxu0 0
    %4304 = vmatpush1.bf16.xpose.msra.mxu0 0
    %4305 = vmatprep.subr.bf16.mxu0 0
    %4306 = vmatpush1.bf16.xpose.msra.mxu0 0
    %4307 = vmatprep.subr.bf16.mxu0 0
    %4308 = vmatpush1.bf16.xpose.msra.mxu0 0
    %4309 = vmatprep.subr.bf16.mxu0 0
    %4310 = vmatpush1.bf16.xpose.msra.mxu0 0
    %4311 = vmatprep.subr.bf16.mxu0 0
    %4312 = vmatpush1.bf16.xpose.msra.mxu0 0
    %4313 = vmatprep.subr.bf16.mxu0 0
    %4314 = vmatpush1.bf16.xpose.msra.mxu0 0
    %4315 = vmatprep.subr.bf16.mxu0 0
    %4316 = vmatpush1.bf16.xpose.msra.mxu0 0
    %4317 = vmatprep.subr.bf16.mxu0 0
    %4318 = vmatpush1.bf16.xpose.msra.mxu0 0
    %4319 = vmatprep.subr.bf16.mxu0 0
    %4320 = vmatpush1.bf16.xpose.msra.mxu0 0
    %4321 = vmatprep.subr.bf16.mxu0 0
    %4322 = vmatpush1.bf16.xpose.msra.mxu0 0
    %4323 = vmatprep.subr.bf16.mxu0 0
    %4324 = vmatpush1.bf16.xpose.msra.mxu0 0
    %4325 = vmatprep.subr.bf16.mxu0 0
    %4326 = vmatpush1.bf16.xpose.msra.mxu0 0
    %4327 = vmatprep.subr.bf16.mxu0 0
    %4328 = vmatpush1.bf16.xpose.msra.mxu0 0
    %4329 = vmatprep.mubr.bf16.mxu0 0
    %4330 = vmatmul.mubr.bf16.gmra.mrb[0].mxu0 %v4292
    %v4331 = vpop.f32.mrb[0].mxu0
    %v4332 = vadd.f32 0.0, %v4331
    %v4333 = vpop.f32.mrb[0].mxu0
    %v4334 = vpop.f32.mrb[0].mxu0
    %v4335 = vpop.f32.mrb[0].mxu0
    %4336 = vdwg.mxu0
    %v4338 = vsel %vm136, %v3986, 0
    %v4341 = vsel %vm136, %v4014, 0
    %4343 = vmatprep.subr.bf16.mxu0 0
    %4344 = vmatpush1.bf16.xpose.msra.mxu0 %v4341
    %4345 = vmatprep.subr.bf16.mxu0 0
    %4346 = vmatpush1.bf16.xpose.msra.mxu0 0
    %4347 = vmatprep.subr.bf16.mxu0 0
    %4348 = vmatpush1.bf16.xpose.msra.mxu0 0
    %4349 = vmatprep.subr.bf16.mxu0 0
    %4350 = vmatpush1.bf16.xpose.msra.mxu0 0
    %4351 = vmatprep.subr.bf16.mxu0 0
    %4352 = vmatpush1.bf16.xpose.msra.mxu0 0
    %4353 = vmatprep.subr.bf16.mxu0 0
    %4354 = vmatpush1.bf16.xpose.msra.mxu0 0
    %4355 = vmatprep.subr.bf16.mxu0 0
    %4356 = vmatpush1.bf16.xpose.msra.mxu0 0
    %4357 = vmatprep.subr.bf16.mxu0 0
    %4358 = vmatpush1.bf16.xpose.msra.mxu0 0
    %4359 = vmatprep.subr.bf16.mxu0 0
    %4360 = vmatpush1.bf16.xpose.msra.mxu0 0
    %4361 = vmatprep.subr.bf16.mxu0 0
    %4362 = vmatpush1.bf16.xpose.msra.mxu0 0
    %4363 = vmatprep.subr.bf16.mxu0 0
    %4364 = vmatpush1.bf16.xpose.msra.mxu0 0
    %4365 = vmatprep.subr.bf16.mxu0 0
    %4366 = vmatpush1.bf16.xpose.msra.mxu0 0
    %4367 = vmatprep.subr.bf16.mxu0 0
    %4368 = vmatpush1.bf16.xpose.msra.mxu0 0
    %4369 = vmatprep.subr.bf16.mxu0 0
    %4370 = vmatpush1.bf16.xpose.msra.mxu0 0
    %4371 = vmatprep.subr.bf16.mxu0 0
    %4372 = vmatpush1.bf16.xpose.msra.mxu0 0
    %4373 = vmatprep.subr.bf16.mxu0 0
    %4374 = vmatpush1.bf16.xpose.msra.mxu0 0
    %4375 = vmatprep.mubr.bf16.mxu0 0
    %4376 = vmatmul.mubr.bf16.gmra.mrb[0].mxu0 %v4338
    %v4377 = vpop.f32.mrb[0].mxu0
    %v4378 = vadd.f32 0.0, %v4377
    %v4379 = vpop.f32.mrb[0].mxu0
    %v4380 = vpop.f32.mrb[0].mxu0
    %v4381 = vpop.f32.mrb[0].mxu0
    %4382 = vdwg.mxu0
    %v4383 = vmul.f32 %v4056, 0.35355338
    %v4384 = vmul.f32 %v4102, 0.35355338
    %v4385 = vmul.f32 %v4148, 0.35355338
    %v4386 = vmul.f32 %v4194, 0.35355338
    %v4387 = vmul.f32 %v4240, 0.35355338
    %v4388 = vmul.f32 %v4286, 0.35355338
    %v4389 = vmul.f32 %v4332, 0.35355338
    %v4390 = vmul.f32 %v4378, 0.35355338
    %v4391 = vadd.f32 %v4383, %v2695
    %v4392 = vadd.f32 %v4384, %v2696
    %v4393 = vadd.f32 %v4385, %v2697
    %v4394 = vadd.f32 %v4386, %v2698
    %v4395 = vadd.f32 %v4387, %v2699
    %v4396 = vadd.f32 %v4388, %v2700
    %v4397 = vadd.f32 %v4389, %v2701
    %v4398 = vadd.f32 %v4390, %v2702
    %v4399 = vsel %vm136, %v4391, -inf
    %4400 = vmax.xlane.f32.xlu0 %v4399
    %v4401 = vpop.xlane.xlu0 %4400
    %v4402 = vsel %vm136, %v4392, -inf
    %4403 = vmax.xlane.f32.xlu0 %v4402
    %v4404 = vpop.xlane.xlu0 %4403
    %v4405 = vsel %vm136, %v4393, -inf
    %4406 = vmax.xlane.f32.xlu0 %v4405
    %v4407 = vpop.xlane.xlu0 %4406
    %v4408 = vsel %vm136, %v4394, -inf
    %4409 = vmax.xlane.f32.xlu0 %v4408
    %v4410 = vpop.xlane.xlu0 %4409
    %v4411 = vsel %vm136, %v4395, -inf
    %4412 = vmax.xlane.f32.xlu0 %v4411
    %v4413 = vpop.xlane.xlu0 %4412
    %v4414 = vsel %vm136, %v4396, -inf
    %4415 = vmax.xlane.f32.xlu0 %v4414
    %v4416 = vpop.xlane.xlu0 %4415
    %v4417 = vsel %vm136, %v4397, -inf
    %4418 = vmax.xlane.f32.xlu0 %v4417
    %v4419 = vpop.xlane.xlu0 %4418
    %v4420 = vsel %vm136, %v4398, -inf
    %4421 = vmax.xlane.f32.xlu0 %v4420
    %v4422 = vpop.xlane.xlu0 %4421
    %v4423 = vsub.f32 %v4391, %v4401
    %v4424 = vsub.f32 %v4392, %v4404
    %v4425 = vsub.f32 %v4393, %v4407
    %v4426 = vsub.f32 %v4394, %v4410
    %v4427 = vsub.f32 %v4395, %v4413
    %v4428 = vsub.f32 %v4396, %v4416
    %v4429 = vsub.f32 %v4397, %v4419
    %v4430 = vsub.f32 %v4398, %v4422
    %v4431 = vmul.f32 %v4423, 1.442695
    %v4432 = vpow.pop %v4431
    %v4433 = vmul.f32 %v4424, 1.442695
    %v4434 = vpow.pop %v4433
    %v4435 = vmul.f32 %v4425, 1.442695
    %v4436 = vpow.pop %v4435
    %v4437 = vmul.f32 %v4426, 1.442695
    %v4438 = vpow.pop %v4437
    %v4439 = vmul.f32 %v4427, 1.442695
    %v4440 = vpow.pop %v4439
    %v4441 = vmul.f32 %v4428, 1.442695
    %v4442 = vpow.pop %v4441
    %v4443 = vmul.f32 %v4429, 1.442695
    %v4444 = vpow.pop %v4443
    %v4445 = vmul.f32 %v4430, 1.442695
    %v4446 = vpow.pop %v4445
    %v4447 = vsel %vm136, %v4432, 0.0
    %4448 = vadd.xlane.f32.xlu0 %v4447
    %v4449 = vpop.xlane.xlu0 %4448
    %v4450 = vsel %vm136, %v4434, 0.0
    %4451 = vadd.xlane.f32.xlu0 %v4450
    %v4452 = vpop.xlane.xlu0 %4451
    %v4453 = vsel %vm136, %v4436, 0.0
    %4454 = vadd.xlane.f32.xlu0 %v4453
    %v4455 = vpop.xlane.xlu0 %4454
    %v4456 = vsel %vm136, %v4438, 0.0
    %4457 = vadd.xlane.f32.xlu0 %v4456
    %v4458 = vpop.xlane.xlu0 %4457
    %v4459 = vsel %vm136, %v4440, 0.0
    %4460 = vadd.xlane.f32.xlu0 %v4459
    %v4461 = vpop.xlane.xlu0 %4460
    %v4462 = vsel %vm136, %v4442, 0.0
    %4463 = vadd.xlane.f32.xlu0 %v4462
    %v4464 = vpop.xlane.xlu0 %4463
    %v4465 = vsel %vm136, %v4444, 0.0
    %4466 = vadd.xlane.f32.xlu0 %v4465
    %v4467 = vpop.xlane.xlu0 %4466
    %v4468 = vsel %vm136, %v4446, 0.0
    %4469 = vadd.xlane.f32.xlu0 %v4468
    %v4470 = vpop.xlane.xlu0 %4469
    %v4471 = vrcp.pop %v4449
    %v4472 = vrcp.pop %v4452
    %v4473 = vrcp.pop %v4455
    %v4474 = vrcp.pop %v4458
    %v4475 = vrcp.pop %v4461
    %v4476 = vrcp.pop %v4464
    %v4477 = vrcp.pop %v4467
    %v4478 = vrcp.pop %v4470
    %v4479 = vmul.f32 %v4432, %v4471
    %v4480 = vmul.f32 %v4434, %v4472
    %v4481 = vmul.f32 %v4436, %v4473
    %v4482 = vmul.f32 %v4438, %v4474
    %v4483 = vmul.f32 %v4440, %v4475
    %v4484 = vmul.f32 %v4442, %v4476
    %v4485 = vmul.f32 %v4444, %v4477
    %v4486 = vmul.f32 %v4446, %v4478
    %v4487 = vpack.c.bf16 %v4479, %v4479
    %v4488 = vpack.c.bf16 %v4480, %v4480
    %v4489 = vpack.c.bf16 %v4481, %v4481
    %v4490 = vpack.c.bf16 %v4482, %v4482
    %v4491 = vpack.c.bf16 %v4483, %v4483
    %v4492 = vpack.c.bf16 %v4484, %v4484
    %v4493 = vpack.c.bf16 %v4485, %v4485
    %v4494 = vpack.c.bf16 %v4486, %v4486
    %4496 = vrot.lane.b32.xlu0 %v4007, 96
    %v4497 = vpop.permute.xlu0 %4496
    %v4499 = vsel %vm136, %v4487, 0
    %v4502 = vsel %vm643, %v4497, 0
    %4504 = vmatprep.subr.bf16.mxu0 0
    %4505 = vmatpush1.bf16.msra.mxu0 %v4502
    %4506 = vmatprep.subr.bf16.mxu0 0
    %4507 = vmatpush1.bf16.msra.mxu0 0
    %4508 = vmatprep.subr.bf16.mxu0 0
    %4509 = vmatpush1.bf16.msra.mxu0 0
    %4510 = vmatprep.subr.bf16.mxu0 0
    %4511 = vmatpush1.bf16.msra.mxu0 0
    %4512 = vmatprep.subr.bf16.mxu0 0
    %4513 = vmatpush1.bf16.msra.mxu0 0
    %4514 = vmatprep.subr.bf16.mxu0 0
    %4515 = vmatpush1.bf16.msra.mxu0 0
    %4516 = vmatprep.subr.bf16.mxu0 0
    %4517 = vmatpush1.bf16.msra.mxu0 0
    %4518 = vmatprep.subr.bf16.mxu0 0
    %4519 = vmatpush1.bf16.msra.mxu0 0
    %4520 = vmatprep.subr.bf16.mxu0 0
    %4521 = vmatpush1.bf16.msra.mxu0 0
    %4522 = vmatprep.subr.bf16.mxu0 0
    %4523 = vmatpush1.bf16.msra.mxu0 0
    %4524 = vmatprep.subr.bf16.mxu0 0
    %4525 = vmatpush1.bf16.msra.mxu0 0
    %4526 = vmatprep.subr.bf16.mxu0 0
    %4527 = vmatpush1.bf16.msra.mxu0 0
    %4528 = vmatprep.subr.bf16.mxu0 0
    %4529 = vmatpush1.bf16.msra.mxu0 0
    %4530 = vmatprep.subr.bf16.mxu0 0
    %4531 = vmatpush1.bf16.msra.mxu0 0
    %4532 = vmatprep.subr.bf16.mxu0 0
    %4533 = vmatpush1.bf16.msra.mxu0 0
    %4534 = vmatprep.subr.bf16.mxu0 0
    %4535 = vmatpush1.bf16.msra.mxu0 0
    %4536 = vmatprep.mubr.bf16.mxu0 0
    %4537 = vmatmul.mubr.bf16.gmra.mrb[0].mxu0 %v4499
    %v4538 = vpop.f32.mrb[0].mxu0
    %v4539 = vadd.f32 0.0, %v4538
    %v4540 = vpop.f32.mrb[0].mxu0
    %v4541 = vpop.f32.mrb[0].mxu0
    %v4542 = vpop.f32.mrb[0].mxu0
    %4543 = vdwg.mxu0
    %4545 = vrot.lane.b32.xlu0 %v4008, 96
    %v4546 = vpop.permute.xlu0 %4545
    %v4548 = vsel %vm136, %v4488, 0
    %v4551 = vsel %vm643, %v4546, 0
    %4553 = vmatprep.subr.bf16.mxu0 0
    %4554 = vmatpush1.bf16.msra.mxu0 %v4551
    %4555 = vmatprep.subr.bf16.mxu0 0
    %4556 = vmatpush1.bf16.msra.mxu0 0
    %4557 = vmatprep.subr.bf16.mxu0 0
    %4558 = vmatpush1.bf16.msra.mxu0 0
    %4559 = vmatprep.subr.bf16.mxu0 0
    %4560 = vmatpush1.bf16.msra.mxu0 0
    %4561 = vmatprep.subr.bf16.mxu0 0
    %4562 = vmatpush1.bf16.msra.mxu0 0
    %4563 = vmatprep.subr.bf16.mxu0 0
    %4564 = vmatpush1.bf16.msra.mxu0 0
    %4565 = vmatprep.subr.bf16.mxu0 0
    %4566 = vmatpush1.bf16.msra.mxu0 0
    %4567 = vmatprep.subr.bf16.mxu0 0
    %4568 = vmatpush1.bf16.msra.mxu0 0
    %4569 = vmatprep.subr.bf16.mxu0 0
    %4570 = vmatpush1.bf16.msra.mxu0 0
    %4571 = vmatprep.subr.bf16.mxu0 0
    %4572 = vmatpush1.bf16.msra.mxu0 0
    %4573 = vmatprep.subr.bf16.mxu0 0
    %4574 = vmatpush1.bf16.msra.mxu0 0
    %4575 = vmatprep.subr.bf16.mxu0 0
    %4576 = vmatpush1.bf16.msra.mxu0 0
    %4577 = vmatprep.subr.bf16.mxu0 0
    %4578 = vmatpush1.bf16.msra.mxu0 0
    %4579 = vmatprep.subr.bf16.mxu0 0
    %4580 = vmatpush1.bf16.msra.mxu0 0
    %4581 = vmatprep.subr.bf16.mxu0 0
    %4582 = vmatpush1.bf16.msra.mxu0 0
    %4583 = vmatprep.subr.bf16.mxu0 0
    %4584 = vmatpush1.bf16.msra.mxu0 0
    %4585 = vmatprep.mubr.bf16.mxu0 0
    %4586 = vmatmul.mubr.bf16.gmra.mrb[0].mxu0 %v4548
    %v4587 = vpop.f32.mrb[0].mxu0
    %v4588 = vadd.f32 0.0, %v4587
    %v4589 = vpop.f32.mrb[0].mxu0
    %v4590 = vpop.f32.mrb[0].mxu0
    %v4591 = vpop.f32.mrb[0].mxu0
    %4592 = vdwg.mxu0
    %4594 = vrot.lane.b32.xlu0 %v4009, 96
    %v4595 = vpop.permute.xlu0 %4594
    %v4597 = vsel %vm136, %v4489, 0
    %v4600 = vsel %vm643, %v4595, 0
    %4602 = vmatprep.subr.bf16.mxu0 0
    %4603 = vmatpush1.bf16.msra.mxu0 %v4600
    %4604 = vmatprep.subr.bf16.mxu0 0
    %4605 = vmatpush1.bf16.msra.mxu0 0
    %4606 = vmatprep.subr.bf16.mxu0 0
    %4607 = vmatpush1.bf16.msra.mxu0 0
    %4608 = vmatprep.subr.bf16.mxu0 0
    %4609 = vmatpush1.bf16.msra.mxu0 0
    %4610 = vmatprep.subr.bf16.mxu0 0
    %4611 = vmatpush1.bf16.msra.mxu0 0
    %4612 = vmatprep.subr.bf16.mxu0 0
    %4613 = vmatpush1.bf16.msra.mxu0 0
    %4614 = vmatprep.subr.bf16.mxu0 0
    %4615 = vmatpush1.bf16.msra.mxu0 0
    %4616 = vmatprep.subr.bf16.mxu0 0
    %4617 = vmatpush1.bf16.msra.mxu0 0
    %4618 = vmatprep.subr.bf16.mxu0 0
    %4619 = vmatpush1.bf16.msra.mxu0 0
    %4620 = vmatprep.subr.bf16.mxu0 0
    %4621 = vmatpush1.bf16.msra.mxu0 0
    %4622 = vmatprep.subr.bf16.mxu0 0
    %4623 = vmatpush1.bf16.msra.mxu0 0
    %4624 = vmatprep.subr.bf16.mxu0 0
    %4625 = vmatpush1.bf16.msra.mxu0 0
    %4626 = vmatprep.subr.bf16.mxu0 0
    %4627 = vmatpush1.bf16.msra.mxu0 0
    %4628 = vmatprep.subr.bf16.mxu0 0
    %4629 = vmatpush1.bf16.msra.mxu0 0
    %4630 = vmatprep.subr.bf16.mxu0 0
    %4631 = vmatpush1.bf16.msra.mxu0 0
    %4632 = vmatprep.subr.bf16.mxu0 0
    %4633 = vmatpush1.bf16.msra.mxu0 0
    %4634 = vmatprep.mubr.bf16.mxu0 0
    %4635 = vmatmul.mubr.bf16.gmra.mrb[0].mxu0 %v4597
    %v4636 = vpop.f32.mrb[0].mxu0
    %v4637 = vadd.f32 0.0, %v4636
    %v4638 = vpop.f32.mrb[0].mxu0
    %v4639 = vpop.f32.mrb[0].mxu0
    %v4640 = vpop.f32.mrb[0].mxu0
    %4641 = vdwg.mxu0
    %4643 = vrot.lane.b32.xlu0 %v4010, 96
    %v4644 = vpop.permute.xlu0 %4643
    %v4646 = vsel %vm136, %v4490, 0
    %v4649 = vsel %vm643, %v4644, 0
    %4651 = vmatprep.subr.bf16.mxu0 0
    %4652 = vmatpush1.bf16.msra.mxu0 %v4649
    %4653 = vmatprep.subr.bf16.mxu0 0
    %4654 = vmatpush1.bf16.msra.mxu0 0
    %4655 = vmatprep.subr.bf16.mxu0 0
    %4656 = vmatpush1.bf16.msra.mxu0 0
    %4657 = vmatprep.subr.bf16.mxu0 0
    %4658 = vmatpush1.bf16.msra.mxu0 0
    %4659 = vmatprep.subr.bf16.mxu0 0
    %4660 = vmatpush1.bf16.msra.mxu0 0
    %4661 = vmatprep.subr.bf16.mxu0 0
    %4662 = vmatpush1.bf16.msra.mxu0 0
    %4663 = vmatprep.subr.bf16.mxu0 0
    %4664 = vmatpush1.bf16.msra.mxu0 0
    %4665 = vmatprep.subr.bf16.mxu0 0
    %4666 = vmatpush1.bf16.msra.mxu0 0
    %4667 = vmatprep.subr.bf16.mxu0 0
    %4668 = vmatpush1.bf16.msra.mxu0 0
    %4669 = vmatprep.subr.bf16.mxu0 0
    %4670 = vmatpush1.bf16.msra.mxu0 0
    %4671 = vmatprep.subr.bf16.mxu0 0
    %4672 = vmatpush1.bf16.msra.mxu0 0
    %4673 = vmatprep.subr.bf16.mxu0 0
    %4674 = vmatpush1.bf16.msra.mxu0 0
    %4675 = vmatprep.subr.bf16.mxu0 0
    %4676 = vmatpush1.bf16.msra.mxu0 0
    %4677 = vmatprep.subr.bf16.mxu0 0
    %4678 = vmatpush1.bf16.msra.mxu0 0
    %4679 = vmatprep.subr.bf16.mxu0 0
    %4680 = vmatpush1.bf16.msra.mxu0 0
    %4681 = vmatprep.subr.bf16.mxu0 0
    %4682 = vmatpush1.bf16.msra.mxu0 0
    %4683 = vmatprep.mubr.bf16.mxu0 0
    %4684 = vmatmul.mubr.bf16.gmra.mrb[0].mxu0 %v4646
    %v4685 = vpop.f32.mrb[0].mxu0
    %v4686 = vadd.f32 0.0, %v4685
    %v4687 = vpop.f32.mrb[0].mxu0
    %v4688 = vpop.f32.mrb[0].mxu0
    %v4689 = vpop.f32.mrb[0].mxu0
    %4690 = vdwg.mxu0
    %4692 = vrot.lane.b32.xlu0 %v4011, 96
    %v4693 = vpop.permute.xlu0 %4692
    %v4695 = vsel %vm136, %v4491, 0
    %v4698 = vsel %vm643, %v4693, 0
    %4700 = vmatprep.subr.bf16.mxu0 0
    %4701 = vmatpush1.bf16.msra.mxu0 %v4698
    %4702 = vmatprep.subr.bf16.mxu0 0
    %4703 = vmatpush1.bf16.msra.mxu0 0
    %4704 = vmatprep.subr.bf16.mxu0 0
    %4705 = vmatpush1.bf16.msra.mxu0 0
    %4706 = vmatprep.subr.bf16.mxu0 0
    %4707 = vmatpush1.bf16.msra.mxu0 0
    %4708 = vmatprep.subr.bf16.mxu0 0
    %4709 = vmatpush1.bf16.msra.mxu0 0
    %4710 = vmatprep.subr.bf16.mxu0 0
    %4711 = vmatpush1.bf16.msra.mxu0 0
    %4712 = vmatprep.subr.bf16.mxu0 0
    %4713 = vmatpush1.bf16.msra.mxu0 0
    %4714 = vmatprep.subr.bf16.mxu0 0
    %4715 = vmatpush1.bf16.msra.mxu0 0
    %4716 = vmatprep.subr.bf16.mxu0 0
    %4717 = vmatpush1.bf16.msra.mxu0 0
    %4718 = vmatprep.subr.bf16.mxu0 0
    %4719 = vmatpush1.bf16.msra.mxu0 0
    %4720 = vmatprep.subr.bf16.mxu0 0
    %4721 = vmatpush1.bf16.msra.mxu0 0
    %4722 = vmatprep.subr.bf16.mxu0 0
    %4723 = vmatpush1.bf16.msra.mxu0 0
    %4724 = vmatprep.subr.bf16.mxu0 0
    %4725 = vmatpush1.bf16.msra.mxu0 0
    %4726 = vmatprep.subr.bf16.mxu0 0
    %4727 = vmatpush1.bf16.msra.mxu0 0
    %4728 = vmatprep.subr.bf16.mxu0 0
    %4729 = vmatpush1.bf16.msra.mxu0 0
    %4730 = vmatprep.subr.bf16.mxu0 0
    %4731 = vmatpush1.bf16.msra.mxu0 0
    %4732 = vmatprep.mubr.bf16.mxu0 0
    %4733 = vmatmul.mubr.bf16.gmra.mrb[0].mxu0 %v4695
    %v4734 = vpop.f32.mrb[0].mxu0
    %v4735 = vadd.f32 0.0, %v4734
    %v4736 = vpop.f32.mrb[0].mxu0
    %v4737 = vpop.f32.mrb[0].mxu0
    %v4738 = vpop.f32.mrb[0].mxu0
    %4739 = vdwg.mxu0
    %4741 = vrot.lane.b32.xlu0 %v4012, 96
    %v4742 = vpop.permute.xlu0 %4741
    %v4744 = vsel %vm136, %v4492, 0
    %v4747 = vsel %vm643, %v4742, 0
    %4749 = vmatprep.subr.bf16.mxu0 0
    %4750 = vmatpush1.bf16.msra.mxu0 %v4747
    %4751 = vmatprep.subr.bf16.mxu0 0
    %4752 = vmatpush1.bf16.msra.mxu0 0
    %4753 = vmatprep.subr.bf16.mxu0 0
    %4754 = vmatpush1.bf16.msra.mxu0 0
    %4755 = vmatprep.subr.bf16.mxu0 0
    %4756 = vmatpush1.bf16.msra.mxu0 0
    %4757 = vmatprep.subr.bf16.mxu0 0
    %4758 = vmatpush1.bf16.msra.mxu0 0
    %4759 = vmatprep.subr.bf16.mxu0 0
    %4760 = vmatpush1.bf16.msra.mxu0 0
    %4761 = vmatprep.subr.bf16.mxu0 0
    %4762 = vmatpush1.bf16.msra.mxu0 0
    %4763 = vmatprep.subr.bf16.mxu0 0
    %4764 = vmatpush1.bf16.msra.mxu0 0
    %4765 = vmatprep.subr.bf16.mxu0 0
    %4766 = vmatpush1.bf16.msra.mxu0 0
    %4767 = vmatprep.subr.bf16.mxu0 0
    %4768 = vmatpush1.bf16.msra.mxu0 0
    %4769 = vmatprep.subr.bf16.mxu0 0
    %4770 = vmatpush1.bf16.msra.mxu0 0
    %4771 = vmatprep.subr.bf16.mxu0 0
    %4772 = vmatpush1.bf16.msra.mxu0 0
    %4773 = vmatprep.subr.bf16.mxu0 0
    %4774 = vmatpush1.bf16.msra.mxu0 0
    %4775 = vmatprep.subr.bf16.mxu0 0
    %4776 = vmatpush1.bf16.msra.mxu0 0
    %4777 = vmatprep.subr.bf16.mxu0 0
    %4778 = vmatpush1.bf16.msra.mxu0 0
    %4779 = vmatprep.subr.bf16.mxu0 0
    %4780 = vmatpush1.bf16.msra.mxu0 0
    %4781 = vmatprep.mubr.bf16.mxu0 0
    %4782 = vmatmul.mubr.bf16.gmra.mrb[0].mxu0 %v4744
    %v4783 = vpop.f32.mrb[0].mxu0
    %v4784 = vadd.f32 0.0, %v4783
    %v4785 = vpop.f32.mrb[0].mxu0
    %v4786 = vpop.f32.mrb[0].mxu0
    %v4787 = vpop.f32.mrb[0].mxu0
    %4788 = vdwg.mxu0
    %4790 = vrot.lane.b32.xlu0 %v4013, 96
    %v4791 = vpop.permute.xlu0 %4790
    %v4793 = vsel %vm136, %v4493, 0
    %v4796 = vsel %vm643, %v4791, 0
    %4798 = vmatprep.subr.bf16.mxu0 0
    %4799 = vmatpush1.bf16.msra.mxu0 %v4796
    %4800 = vmatprep.subr.bf16.mxu0 0
    %4801 = vmatpush1.bf16.msra.mxu0 0
    %4802 = vmatprep.subr.bf16.mxu0 0
    %4803 = vmatpush1.bf16.msra.mxu0 0
    %4804 = vmatprep.subr.bf16.mxu0 0
    %4805 = vmatpush1.bf16.msra.mxu0 0
    %4806 = vmatprep.subr.bf16.mxu0 0
    %4807 = vmatpush1.bf16.msra.mxu0 0
    %4808 = vmatprep.subr.bf16.mxu0 0
    %4809 = vmatpush1.bf16.msra.mxu0 0
    %4810 = vmatprep.subr.bf16.mxu0 0
    %4811 = vmatpush1.bf16.msra.mxu0 0
    %4812 = vmatprep.subr.bf16.mxu0 0
    %4813 = vmatpush1.bf16.msra.mxu0 0
    %4814 = vmatprep.subr.bf16.mxu0 0
    %4815 = vmatpush1.bf16.msra.mxu0 0
    %4816 = vmatprep.subr.bf16.mxu0 0
    %4817 = vmatpush1.bf16.msra.mxu0 0
    %4818 = vmatprep.subr.bf16.mxu0 0
    %4819 = vmatpush1.bf16.msra.mxu0 0
    %4820 = vmatprep.subr.bf16.mxu0 0
    %4821 = vmatpush1.bf16.msra.mxu0 0
    %4822 = vmatprep.subr.bf16.mxu0 0
    %4823 = vmatpush1.bf16.msra.mxu0 0
    %4824 = vmatprep.subr.bf16.mxu0 0
    %4825 = vmatpush1.bf16.msra.mxu0 0
    %4826 = vmatprep.subr.bf16.mxu0 0
    %4827 = vmatpush1.bf16.msra.mxu0 0
    %4828 = vmatprep.subr.bf16.mxu0 0
    %4829 = vmatpush1.bf16.msra.mxu0 0
    %4830 = vmatprep.mubr.bf16.mxu0 0
    %4831 = vmatmul.mubr.bf16.gmra.mrb[0].mxu0 %v4793
    %v4832 = vpop.f32.mrb[0].mxu0
    %v4833 = vadd.f32 0.0, %v4832
    %v4834 = vpop.f32.mrb[0].mxu0
    %v4835 = vpop.f32.mrb[0].mxu0
    %v4836 = vpop.f32.mrb[0].mxu0
    %4837 = vdwg.mxu0
    %4839 = vrot.lane.b32.xlu0 %v4014, 96
    %v4840 = vpop.permute.xlu0 %4839
    %v4842 = vsel %vm136, %v4494, 0
    %v4845 = vsel %vm643, %v4840, 0
    %4847 = vmatprep.subr.bf16.mxu0 0
    %4848 = vmatpush1.bf16.msra.mxu0 %v4845
    %4849 = vmatprep.subr.bf16.mxu0 0
    %4850 = vmatpush1.bf16.msra.mxu0 0
    %4851 = vmatprep.subr.bf16.mxu0 0
    %4852 = vmatpush1.bf16.msra.mxu0 0
    %4853 = vmatprep.subr.bf16.mxu0 0
    %4854 = vmatpush1.bf16.msra.mxu0 0
    %4855 = vmatprep.subr.bf16.mxu0 0
    %4856 = vmatpush1.bf16.msra.mxu0 0
    %4857 = vmatprep.subr.bf16.mxu0 0
    %4858 = vmatpush1.bf16.msra.mxu0 0
    %4859 = vmatprep.subr.bf16.mxu0 0
    %4860 = vmatpush1.bf16.msra.mxu0 0
    %4861 = vmatprep.subr.bf16.mxu0 0
    %4862 = vmatpush1.bf16.msra.mxu0 0
    %4863 = vmatprep.subr.bf16.mxu0 0
    %4864 = vmatpush1.bf16.msra.mxu0 0
    %4865 = vmatprep.subr.bf16.mxu0 0
    %4866 = vmatpush1.bf16.msra.mxu0 0
    %4867 = vmatprep.subr.bf16.mxu0 0
    %4868 = vmatpush1.bf16.msra.mxu0 0
    %4869 = vmatprep.subr.bf16.mxu0 0
    %4870 = vmatpush1.bf16.msra.mxu0 0
    %4871 = vmatprep.subr.bf16.mxu0 0
    %4872 = vmatpush1.bf16.msra.mxu0 0
    %4873 = vmatprep.subr.bf16.mxu0 0
    %4874 = vmatpush1.bf16.msra.mxu0 0
    %4875 = vmatprep.subr.bf16.mxu0 0
    %4876 = vmatpush1.bf16.msra.mxu0 0
    %4877 = vmatprep.subr.bf16.mxu0 0
    %4878 = vmatpush1.bf16.msra.mxu0 0
    %4879 = vmatprep.mubr.bf16.mxu0 0
    %4880 = vmatmul.mubr.bf16.gmra.mrb[0].mxu0 %v4842
    %v4881 = vpop.f32.mrb[0].mxu0
    %v4882 = vadd.f32 0.0, %v4881
    %v4883 = vpop.f32.mrb[0].mxu0
    %v4884 = vpop.f32.mrb[0].mxu0
    %v4885 = vpop.f32.mrb[0].mxu0
    %4886 = vdwg.mxu0
    %4889 = vrot.lane.b32.xlu0 %v4637, 8
    %v4890 = vpop.permute.xlu0 %4889
    %4891 = vrot.lane.b32.xlu0 %v4686, 8
    %v4892 = vpop.permute.xlu0 %4891
    %4897 = vrot.lane.b32.xlu0 %v4735, 16
    %v4898 = vpop.permute.xlu0 %4897
    %4899 = vrot.lane.b32.xlu0 %v4784, 16
    %v4900 = vpop.permute.xlu0 %4899
    %4905 = vrot.lane.b32.xlu0 %v4833, 24
    %v4906 = vpop.permute.xlu0 %4905
    %4907 = vrot.lane.b32.xlu0 %v4882, 24
    %v4908 = vpop.permute.xlu0 %4907
    %v4911 = vsel %vm136, %v4539, %v4890
    %v4912 = vsel %vm136, %v4588, %v4892
    %v4913 = vsel %vm1049, %v4911, %v4898
    %v4914 = vsel %vm1049, %v4912, %v4900
    %v4915 = vsel %vm1052, %v4913, %v4906
    %v4916 = vsel %vm1052, %v4914, %v4908
    %v4917 = vld [vmem:[%s5 + $0xe0] sm:$0xf]
    %v4918 = vld [vmem:[%s5 + $0xe4] sm:$0xf]
    %v4919 = vld [vmem:[%s5 + $0xe8] sm:$0xf]
    %v4920 = vld [vmem:[%s5 + $0xec] sm:$0xf]
    %v4921 = vpack.c.bf16 %v4916, %v4915
    %v4922 = vld [vmem:[%s6 + $0x16] sm:$0x1]
    %v4923 = vlaneseq
    %v4924 = vshrl.u32 %v4923, 7
    %v4925 = vsub.s32 0, %v4924
    %v4926 = vrot.slane %v4922, %v4925
    %v4931 = vunpack.c.l.b16 %v4917
    %v4932 = vunpack.c.l.b16 %v4918
    %v4933 = vunpack.c.l.b16 %v4919
    %v4934 = vunpack.c.l.b16 %v4920
    %v4935 = vpack.c.b16 %v4932, %v4931
    %v4936 = vpack.c.b16 %v4934, %v4933
    %v4940 = vsel %vm60, %v4921, 0
    %4942 = vmatprep.subr.bf16.mxu0 0
    %4943 = vmatpush1.bf16.msra.mxu0 %v4935
    %4944 = vmatprep.subr.bf16.mxu0 0
    %4945 = vmatpush1.bf16.msra.mxu0 %v4936
    %4946 = vmatprep.subr.bf16.mxu0 0
    %4947 = vmatpush1.bf16.msra.mxu0 0
    %4948 = vmatprep.subr.bf16.mxu0 0
    %4949 = vmatpush1.bf16.msra.mxu0 0
    %4950 = vmatprep.subr.bf16.mxu0 0
    %4951 = vmatpush1.bf16.msra.mxu0 0
    %4952 = vmatprep.subr.bf16.mxu0 0
    %4953 = vmatpush1.bf16.msra.mxu0 0
    %4954 = vmatprep.subr.bf16.mxu0 0
    %4955 = vmatpush1.bf16.msra.mxu0 0
    %4956 = vmatprep.subr.bf16.mxu0 0
    %4957 = vmatpush1.bf16.msra.mxu0 0
    %4958 = vmatprep.subr.bf16.mxu0 0
    %4959 = vmatpush1.bf16.msra.mxu0 0
    %4960 = vmatprep.subr.bf16.mxu0 0
    %4961 = vmatpush1.bf16.msra.mxu0 0
    %4962 = vmatprep.subr.bf16.mxu0 0
    %4963 = vmatpush1.bf16.msra.mxu0 0
    %4964 = vmatprep.subr.bf16.mxu0 0
    %4965 = vmatpush1.bf16.msra.mxu0 0
    %4966 = vmatprep.subr.bf16.mxu0 0
    %4967 = vmatpush1.bf16.msra.mxu0 0
    %4968 = vmatprep.subr.bf16.mxu0 0
    %4969 = vmatpush1.bf16.msra.mxu0 0
    %4970 = vmatprep.subr.bf16.mxu0 0
    %4971 = vmatpush1.bf16.msra.mxu0 0
    %4972 = vmatprep.subr.bf16.mxu0 0
    %4973 = vmatpush1.bf16.msra.mxu0 0
    %4974 = vmatprep.mubr.bf16.mxu0 0
    %4975 = vmatmul.mubr.bf16.gmra.mrb[0].mxu0 %v4940
    %v4976 = vpop.f32.mrb[0].mxu0
    %v4977 = vadd.f32 %v4926, %v4976
    %v4978 = vpop.f32.mrb[0].mxu0
    %v4979 = vpop.f32.mrb[0].mxu0
    %v4980 = vadd.f32 %v4926, %v4979
    %v4981 = vpop.f32.mrb[0].mxu0
    %4982 = vdwg.mxu0
    %v4983 = vadd.f32 %v3825, %v4977
    %v4984 = vadd.f32 %v3826, %v4980
    %v4985 = vld [vmem:[%s6 + $0x17] sm:$0x1]
    %v4986 = vld [vmem:[%s6 + $0x18] sm:$0x1]
    %v4987 = vsel %vm60, %v4983, 0.0
    %4988 = vadd.xlane.f32.xlu0 %v4987
    %v4989 = vpop.xlane.xlu0 %4988
    %v4990 = vsel %vm60, %v4984, 0.0
    %4991 = vadd.xlane.f32.xlu0 %v4990
    %v4992 = vpop.xlane.xlu0 %4991
    %v4993 = vmul.f32 %v4989, %v1131
    %v4994 = vmul.f32 %v4992, %v1131
    %v4995 = vmul.f32 %v4983, %v4983
    %v4996 = vmul.f32 %v4984, %v4984
    %v4997 = vsel %vm60, %v4995, 0.0
    %4998 = vadd.xlane.f32.xlu0 %v4997
    %v4999 = vpop.xlane.xlu0 %4998
    %v5000 = vsel %vm60, %v4996, 0.0
    %5001 = vadd.xlane.f32.xlu0 %v5000
    %v5002 = vpop.xlane.xlu0 %5001
    %v5003 = vmul.f32 %v4999, %v1131
    %v5004 = vmul.f32 %v5002, %v1131
    %v5005 = vmul.f32 %v4993, %v4993
    %v5006 = vmul.f32 %v4994, %v4994
    %v5007 = vsub.f32 %v5003, %v5005
    %v5008 = vsub.f32 %v5004, %v5006
    %v5009 = vsub.f32 %v4983, %v4993
    %v5010 = vsub.f32 %v4984, %v4994
    %v5011 = vadd.f32 %v5007, 1e-05
    %v5012 = vadd.f32 %v5008, 1e-05
    %v5013 = vrsqrt.pop %v5011
    %v5014 = vrsqrt.pop %v5012
    %v5015 = vmul.f32 %v5009, %v5013
    %v5016 = vmul.f32 %v5010, %v5014
    %v5017 = vlaneseq
    %v5018 = vshrl.u32 %v5017, 7
    %v5019 = vsub.s32 0, %v5018
    %v5020 = vrot.slane %v4985, %v5019
    %v5021 = vmul.f32 %v5015, %v5020
    %v5022 = vmul.f32 %v5016, %v5020
    %v5023 = vlaneseq
    %v5024 = vshrl.u32 %v5023, 7
    %v5025 = vsub.s32 0, %v5024
    %v5026 = vrot.slane %v4986, %v5025
    %v5027 = vadd.f32 %v5021, %v5026
    %v5028 = vadd.f32 %v5022, %v5026
    %v5029 = vld [vmem:[%s5 + $0xf0] sm:$0xf]
    %v5030 = vld [vmem:[%s5 + $0xf4] sm:$0xf]
    %v5031 = vld [vmem:[%s5 + $0xf8] sm:$0xf]
    %v5032 = vld [vmem:[%s5 + $0xfc] sm:$0xf]
    %v5033 = vpack.c.bf16 %v5028, %v5027
    %v5034 = vld [vmem:[%s6 + $0x19] sm:$0x1]
    %v5035 = vlaneseq
    %v5036 = vshrl.u32 %v5035, 7
    %v5037 = vsub.s32 0, %v5036
    %v5038 = vrot.slane %v5034, %v5037
    %v5043 = vunpack.c.l.b16 %v5029
    %v5044 = vunpack.c.l.b16 %v5030
    %v5045 = vunpack.c.l.b16 %v5031
    %v5046 = vunpack.c.l.b16 %v5032
    %v5047 = vpack.c.b16 %v5044, %v5043
    %v5048 = vpack.c.b16 %v5046, %v5045
    %v5052 = vsel %vm60, %v5033, 0
    %5054 = vmatprep.subr.bf16.mxu0 0
    %5055 = vmatpush1.bf16.msra.mxu0 %v5047
    %5056 = vmatprep.subr.bf16.mxu0 0
    %5057 = vmatpush1.bf16.msra.mxu0 %v5048
    %5058 = vmatprep.subr.bf16.mxu0 0
    %5059 = vmatpush1.bf16.msra.mxu0 0
    %5060 = vmatprep.subr.bf16.mxu0 0
    %5061 = vmatpush1.bf16.msra.mxu0 0
    %5062 = vmatprep.subr.bf16.mxu0 0
    %5063 = vmatpush1.bf16.msra.mxu0 0
    %5064 = vmatprep.subr.bf16.mxu0 0
    %5065 = vmatpush1.bf16.msra.mxu0 0
    %5066 = vmatprep.subr.bf16.mxu0 0
    %5067 = vmatpush1.bf16.msra.mxu0 0
    %5068 = vmatprep.subr.bf16.mxu0 0
    %5069 = vmatpush1.bf16.msra.mxu0 0
    %5070 = vmatprep.subr.bf16.mxu0 0
    %5071 = vmatpush1.bf16.msra.mxu0 0
    %5072 = vmatprep.subr.bf16.mxu0 0
    %5073 = vmatpush1.bf16.msra.mxu0 0
    %5074 = vmatprep.subr.bf16.mxu0 0
    %5075 = vmatpush1.bf16.msra.mxu0 0
    %5076 = vmatprep.subr.bf16.mxu0 0
    %5077 = vmatpush1.bf16.msra.mxu0 0
    %5078 = vmatprep.subr.bf16.mxu0 0
    %5079 = vmatpush1.bf16.msra.mxu0 0
    %5080 = vmatprep.subr.bf16.mxu0 0
    %5081 = vmatpush1.bf16.msra.mxu0 0
    %5082 = vmatprep.subr.bf16.mxu0 0
    %5083 = vmatpush1.bf16.msra.mxu0 0
    %5084 = vmatprep.subr.bf16.mxu0 0
    %5085 = vmatpush1.bf16.msra.mxu0 0
    %5086 = vmatprep.mubr.bf16.mxu0 0
    %5087 = vmatmul.mubr.bf16.gmra.mrb[0].mxu0 %v5052
    %v5088 = vpop.f32.mrb[0].mxu0
    %v5089 = vadd.f32 %v5038, %v5088
    %v5090 = vpop.f32.mrb[0].mxu0
    %v5091 = vpop.f32.mrb[0].mxu0
    %v5092 = vadd.f32 %v5038, %v5091
    %v5093 = vpop.f32.mrb[0].mxu0
    %5094 = vdwg.mxu0
    %v5095 = vmax.f32 %v5089, 0.0
    %v5096 = vmax.f32 %v5092, 0.0
    %v5097 = vld [vmem:[%s5 + $0x100] sm:$0xf]
    %v5098 = vld [vmem:[%s5 + $0x104] sm:$0xf]
    %v5099 = vld [vmem:[%s5 + $0x108] sm:$0xf]
    %v5100 = vld [vmem:[%s5 + $0x10c] sm:$0xf]
    %v5101 = vld [vmem:[%s5 + $0x110] sm:$0xf]
    %v5102 = vld [vmem:[%s5 + $0x114] sm:$0xf]
    %v5103 = vld [vmem:[%s5 + $0x118] sm:$0xf]
    %v5104 = vld [vmem:[%s5 + $0x11c] sm:$0xf]
    %v5105 = vpack.c.bf16 %v5096, %v5095
    %v5106 = vld [vmem:[%s6 + $0x1a] sm:$0x1]
    %v5107 = vlaneseq
    %v5108 = vshrl.u32 %v5107, 7
    %v5109 = vsub.s32 0, %v5108
    %v5110 = vrot.slane %v5106, %v5109
    %v5119 = vunpack.c.l.b16 %v5097
    %v5120 = vunpack.c.l.b16 %v5098
    %v5121 = vunpack.c.l.b16 %v5099
    %v5122 = vunpack.c.l.b16 %v5100
    %v5123 = vunpack.c.l.b16 %v5101
    %v5124 = vunpack.c.l.b16 %v5102
    %v5125 = vunpack.c.l.b16 %v5103
    %v5126 = vunpack.c.l.b16 %v5104
    %v5127 = vpack.c.b16 %v5120, %v5119
    %v5128 = vpack.c.b16 %v5122, %v5121
    %v5129 = vpack.c.b16 %v5124, %v5123
    %v5130 = vpack.c.b16 %v5126, %v5125
    %v5136 = vsel %vm1274, %v5105, 0
    %5138 = vmatprep.subr.bf16.mxu0 0
    %5139 = vmatpush1.bf16.msra.mxu0 %v5127
    %5140 = vmatprep.subr.bf16.mxu0 0
    %5141 = vmatpush1.bf16.msra.mxu0 %v5128
    %5142 = vmatprep.subr.bf16.mxu0 0
    %5143 = vmatpush1.bf16.msra.mxu0 %v5129
    %5144 = vmatprep.subr.bf16.mxu0 0
    %5145 = vmatpush1.bf16.msra.mxu0 %v5130
    %5146 = vmatprep.subr.bf16.mxu0 0
    %5147 = vmatpush1.bf16.msra.mxu0 0
    %5148 = vmatprep.subr.bf16.mxu0 0
    %5149 = vmatpush1.bf16.msra.mxu0 0
    %5150 = vmatprep.subr.bf16.mxu0 0
    %5151 = vmatpush1.bf16.msra.mxu0 0
    %5152 = vmatprep.subr.bf16.mxu0 0
    %5153 = vmatpush1.bf16.msra.mxu0 0
    %5154 = vmatprep.subr.bf16.mxu0 0
    %5155 = vmatpush1.bf16.msra.mxu0 0
    %5156 = vmatprep.subr.bf16.mxu0 0
    %5157 = vmatpush1.bf16.msra.mxu0 0
    %5158 = vmatprep.subr.bf16.mxu0 0
    %5159 = vmatpush1.bf16.msra.mxu0 0
    %5160 = vmatprep.subr.bf16.mxu0 0
    %5161 = vmatpush1.bf16.msra.mxu0 0
    %5162 = vmatprep.subr.bf16.mxu0 0
    %5163 = vmatpush1.bf16.msra.mxu0 0
    %5164 = vmatprep.subr.bf16.mxu0 0
    %5165 = vmatpush1.bf16.msra.mxu0 0
    %5166 = vmatprep.subr.bf16.mxu0 0
    %5167 = vmatpush1.bf16.msra.mxu0 0
    %5168 = vmatprep.subr.bf16.mxu0 0
    %5169 = vmatpush1.bf16.msra.mxu0 0
    %5170 = vmatprep.mubr.bf16.mxu0 0
    %5171 = vmatmul.mubr.bf16.gmra.mrb[0].mxu0 %v5136
    %v5172 = vpop.f32.mrb[0].mxu0
    %v5173 = vadd.f32 %v5110, %v5172
    %v5174 = vpop.f32.mrb[0].mxu0
    %v5175 = vpop.f32.mrb[0].mxu0
    %v5176 = vadd.f32 %v5110, %v5175
    %v5177 = vpop.f32.mrb[0].mxu0
    %5178 = vdwg.mxu0
    %v5179 = vadd.f32 %v5027, %v5173
    %v5180 = vadd.f32 %v5028, %v5176
    %v5181 = vld [vmem:[%s6 + $0x1b] sm:$0x1]
    %v5182 = vld [vmem:[%s6 + $0x1c] sm:$0x1]
    %v5183 = vsel %vm60, %v5179, 0.0
    %5184 = vadd.xlane.f32.xlu0 %v5183
    %v5185 = vpop.xlane.xlu0 %5184
    %v5186 = vsel %vm60, %v5180, 0.0
    %5187 = vadd.xlane.f32.xlu0 %v5186
    %v5188 = vpop.xlane.xlu0 %5187
    %v5189 = vmul.f32 %v5185, %v1131
    %v5190 = vmul.f32 %v5188, %v1131
    %v5191 = vmul.f32 %v5179, %v5179
    %v5192 = vmul.f32 %v5180, %v5180
    %v5193 = vsel %vm60, %v5191, 0.0
    %5194 = vadd.xlane.f32.xlu0 %v5193
    %v5195 = vpop.xlane.xlu0 %5194
    %v5196 = vsel %vm60, %v5192, 0.0
    %5197 = vadd.xlane.f32.xlu0 %v5196
    %v5198 = vpop.xlane.xlu0 %5197
    %v5199 = vmul.f32 %v5195, %v1131
    %v5200 = vmul.f32 %v5198, %v1131
    %v5201 = vmul.f32 %v5189, %v5189
    %v5202 = vmul.f32 %v5190, %v5190
    %v5203 = vsub.f32 %v5199, %v5201
    %v5204 = vsub.f32 %v5200, %v5202
    %v5205 = vsub.f32 %v5179, %v5189
    %v5206 = vsub.f32 %v5180, %v5190
    %v5207 = vadd.f32 %v5203, 1e-05
    %v5208 = vadd.f32 %v5204, 1e-05
    %v5209 = vrsqrt.pop %v5207
    %v5210 = vrsqrt.pop %v5208
    %v5211 = vmul.f32 %v5205, %v5209
    %v5212 = vmul.f32 %v5206, %v5210
    %v5213 = vlaneseq
    %v5214 = vshrl.u32 %v5213, 7
    %v5215 = vsub.s32 0, %v5214
    %v5216 = vrot.slane %v5181, %v5215
    %v5217 = vmul.f32 %v5211, %v5216
    %v5218 = vmul.f32 %v5212, %v5216
    %v5219 = vlaneseq
    %v5220 = vshrl.u32 %v5219, 7
    %v5221 = vsub.s32 0, %v5220
    %v5222 = vrot.slane %v5182, %v5221
    %v5223 = vadd.f32 %v5217, %v5222
    %v5224 = vadd.f32 %v5218, %v5222
    %v5225 = vld [vmem:[%s5 + $0x120] sm:$0xf]
    %v5226 = vld [vmem:[%s5 + $0x124] sm:$0xf]
    %v5227 = vld [vmem:[%s5 + $0x128] sm:$0xf]
    %v5228 = vld [vmem:[%s5 + $0x12c] sm:$0xf]
    %v5229 = vpack.c.bf16 %v5224, %v5223
    %v5230 = vld [vmem:[%s6 + $0x1d] sm:$0x1]
    %v5231 = vlaneseq
    %v5232 = vshrl.u32 %v5231, 7
    %v5233 = vsub.s32 0, %v5232
    %v5234 = vrot.slane %v5230, %v5233
    %v5239 = vunpack.c.l.b16 %v5225
    %v5240 = vunpack.c.l.b16 %v5226
    %v5241 = vunpack.c.l.b16 %v5227
    %v5242 = vunpack.c.l.b16 %v5228
    %v5243 = vpack.c.b16 %v5240, %v5239
    %v5244 = vpack.c.b16 %v5242, %v5241
    %v5248 = vsel %vm60, %v5229, 0
    %5250 = vmatprep.subr.bf16.mxu0 0
    %5251 = vmatpush1.bf16.msra.mxu0 %v5243
    %5252 = vmatprep.subr.bf16.mxu0 0
    %5253 = vmatpush1.bf16.msra.mxu0 %v5244
    %5254 = vmatprep.subr.bf16.mxu0 0
    %5255 = vmatpush1.bf16.msra.mxu0 0
    %5256 = vmatprep.subr.bf16.mxu0 0
    %5257 = vmatpush1.bf16.msra.mxu0 0
    %5258 = vmatprep.subr.bf16.mxu0 0
    %5259 = vmatpush1.bf16.msra.mxu0 0
    %5260 = vmatprep.subr.bf16.mxu0 0
    %5261 = vmatpush1.bf16.msra.mxu0 0
    %5262 = vmatprep.subr.bf16.mxu0 0
    %5263 = vmatpush1.bf16.msra.mxu0 0
    %5264 = vmatprep.subr.bf16.mxu0 0
    %5265 = vmatpush1.bf16.msra.mxu0 0
    %5266 = vmatprep.subr.bf16.mxu0 0
    %5267 = vmatpush1.bf16.msra.mxu0 0
    %5268 = vmatprep.subr.bf16.mxu0 0
    %5269 = vmatpush1.bf16.msra.mxu0 0
    %5270 = vmatprep.subr.bf16.mxu0 0
    %5271 = vmatpush1.bf16.msra.mxu0 0
    %5272 = vmatprep.subr.bf16.mxu0 0
    %5273 = vmatpush1.bf16.msra.mxu0 0
    %5274 = vmatprep.subr.bf16.mxu0 0
    %5275 = vmatpush1.bf16.msra.mxu0 0
    %5276 = vmatprep.subr.bf16.mxu0 0
    %5277 = vmatpush1.bf16.msra.mxu0 0
    %5278 = vmatprep.subr.bf16.mxu0 0
    %5279 = vmatpush1.bf16.msra.mxu0 0
    %5280 = vmatprep.subr.bf16.mxu0 0
    %5281 = vmatpush1.bf16.msra.mxu0 0
    %5282 = vmatprep.mubr.bf16.mxu0 0
    %5283 = vmatmul.mubr.bf16.gmra.mrb[0].mxu0 %v5248
    %v5284 = vpop.f32.mrb[0].mxu0
    %v5285 = vadd.f32 %v5234, %v5284
    %v5286 = vpop.f32.mrb[0].mxu0
    %v5287 = vpop.f32.mrb[0].mxu0
    %v5288 = vadd.f32 %v5234, %v5287
    %v5289 = vpop.f32.mrb[0].mxu0
    %5290 = vdwg.mxu0
    %5293 = vrot.lane.b32.xlu0 %v5285, 120
    %v5294 = vpop.permute.xlu0 %5293
    %5295 = vrot.lane.b32.xlu0 %v5288, 120
    %v5296 = vpop.permute.xlu0 %5295
    %5299 = vrot.lane.b32.xlu0 %v5285, 112
    %v5300 = vpop.permute.xlu0 %5299
    %5301 = vrot.lane.b32.xlu0 %v5288, 112
    %v5302 = vpop.permute.xlu0 %5301
    %5305 = vrot.lane.b32.xlu0 %v5285, 104
    %v5306 = vpop.permute.xlu0 %5305
    %5307 = vrot.lane.b32.xlu0 %v5288, 104
    %v5308 = vpop.permute.xlu0 %5307
    %v5311 = vpack.c.bf16 %v5285, %v5285
    %v5312 = vpack.c.bf16 %v5288, %v5288
    %v5313 = vpack.c.bf16 %v5294, %v5294
    %v5314 = vpack.c.bf16 %v5296, %v5296
    %v5315 = vpack.c.bf16 %v5300, %v5300
    %v5316 = vpack.c.bf16 %v5302, %v5302
    %v5317 = vpack.c.bf16 %v5306, %v5306
    %v5318 = vpack.c.bf16 %v5308, %v5308
    %5320 = vrot.lane.b32.xlu0 %v5311, 96
    %v5321 = vpop.permute.xlu0 %5320
    %v5323 = vsel %vm136, %v5311, 0
    %v5326 = vsel %vm136, %v5321, 0
    %5328 = vmatprep.subr.bf16.mxu0 0
    %5329 = vmatpush1.bf16.xpose.msra.mxu0 %v5326
    %5330 = vmatprep.subr.bf16.mxu0 0
    %5331 = vmatpush1.bf16.xpose.msra.mxu0 0
    %5332 = vmatprep.subr.bf16.mxu0 0
    %5333 = vmatpush1.bf16.xpose.msra.mxu0 0
    %5334 = vmatprep.subr.bf16.mxu0 0
    %5335 = vmatpush1.bf16.xpose.msra.mxu0 0
    %5336 = vmatprep.subr.bf16.mxu0 0
    %5337 = vmatpush1.bf16.xpose.msra.mxu0 0
    %5338 = vmatprep.subr.bf16.mxu0 0
    %5339 = vmatpush1.bf16.xpose.msra.mxu0 0
    %5340 = vmatprep.subr.bf16.mxu0 0
    %5341 = vmatpush1.bf16.xpose.msra.mxu0 0
    %5342 = vmatprep.subr.bf16.mxu0 0
    %5343 = vmatpush1.bf16.xpose.msra.mxu0 0
    %5344 = vmatprep.subr.bf16.mxu0 0
    %5345 = vmatpush1.bf16.xpose.msra.mxu0 0
    %5346 = vmatprep.subr.bf16.mxu0 0
    %5347 = vmatpush1.bf16.xpose.msra.mxu0 0
    %5348 = vmatprep.subr.bf16.mxu0 0
    %5349 = vmatpush1.bf16.xpose.msra.mxu0 0
    %5350 = vmatprep.subr.bf16.mxu0 0
    %5351 = vmatpush1.bf16.xpose.msra.mxu0 0
    %5352 = vmatprep.subr.bf16.mxu0 0
    %5353 = vmatpush1.bf16.xpose.msra.mxu0 0
    %5354 = vmatprep.subr.bf16.mxu0 0
    %5355 = vmatpush1.bf16.xpose.msra.mxu0 0
    %5356 = vmatprep.subr.bf16.mxu0 0
    %5357 = vmatpush1.bf16.xpose.msra.mxu0 0
    %5358 = vmatprep.subr.bf16.mxu0 0
    %5359 = vmatpush1.bf16.xpose.msra.mxu0 0
    %5360 = vmatprep.mubr.bf16.mxu0 0
    %5361 = vmatmul.mubr.bf16.gmra.mrb[0].mxu0 %v5323
    %v5362 = vpop.f32.mrb[0].mxu0
    %v5363 = vadd.f32 0.0, %v5362
    %v5364 = vpop.f32.mrb[0].mxu0
    %v5365 = vpop.f32.mrb[0].mxu0
    %v5366 = vpop.f32.mrb[0].mxu0
    %5367 = vdwg.mxu0
    %5369 = vrot.lane.b32.xlu0 %v5312, 96
    %v5370 = vpop.permute.xlu0 %5369
    %v5372 = vsel %vm136, %v5312, 0
    %v5375 = vsel %vm136, %v5370, 0
    %5377 = vmatprep.subr.bf16.mxu0 0
    %5378 = vmatpush1.bf16.xpose.msra.mxu0 %v5375
    %5379 = vmatprep.subr.bf16.mxu0 0
    %5380 = vmatpush1.bf16.xpose.msra.mxu0 0
    %5381 = vmatprep.subr.bf16.mxu0 0
    %5382 = vmatpush1.bf16.xpose.msra.mxu0 0
    %5383 = vmatprep.subr.bf16.mxu0 0
    %5384 = vmatpush1.bf16.xpose.msra.mxu0 0
    %5385 = vmatprep.subr.bf16.mxu0 0
    %5386 = vmatpush1.bf16.xpose.msra.mxu0 0
    %5387 = vmatprep.subr.bf16.mxu0 0
    %5388 = vmatpush1.bf16.xpose.msra.mxu0 0
    %5389 = vmatprep.subr.bf16.mxu0 0
    %5390 = vmatpush1.bf16.xpose.msra.mxu0 0
    %5391 = vmatprep.subr.bf16.mxu0 0
    %5392 = vmatpush1.bf16.xpose.msra.mxu0 0
    %5393 = vmatprep.subr.bf16.mxu0 0
    %5394 = vmatpush1.bf16.xpose.msra.mxu0 0
    %5395 = vmatprep.subr.bf16.mxu0 0
    %5396 = vmatpush1.bf16.xpose.msra.mxu0 0
    %5397 = vmatprep.subr.bf16.mxu0 0
    %5398 = vmatpush1.bf16.xpose.msra.mxu0 0
    %5399 = vmatprep.subr.bf16.mxu0 0
    %5400 = vmatpush1.bf16.xpose.msra.mxu0 0
    %5401 = vmatprep.subr.bf16.mxu0 0
    %5402 = vmatpush1.bf16.xpose.msra.mxu0 0
    %5403 = vmatprep.subr.bf16.mxu0 0
    %5404 = vmatpush1.bf16.xpose.msra.mxu0 0
    %5405 = vmatprep.subr.bf16.mxu0 0
    %5406 = vmatpush1.bf16.xpose.msra.mxu0 0
    %5407 = vmatprep.subr.bf16.mxu0 0
    %5408 = vmatpush1.bf16.xpose.msra.mxu0 0
    %5409 = vmatprep.mubr.bf16.mxu0 0
    %5410 = vmatmul.mubr.bf16.gmra.mrb[0].mxu0 %v5372
    %v5411 = vpop.f32.mrb[0].mxu0
    %v5412 = vadd.f32 0.0, %v5411
    %v5413 = vpop.f32.mrb[0].mxu0
    %v5414 = vpop.f32.mrb[0].mxu0
    %v5415 = vpop.f32.mrb[0].mxu0
    %5416 = vdwg.mxu0
    %5418 = vrot.lane.b32.xlu0 %v5313, 96
    %v5419 = vpop.permute.xlu0 %5418
    %v5421 = vsel %vm136, %v5313, 0
    %v5424 = vsel %vm136, %v5419, 0
    %5426 = vmatprep.subr.bf16.mxu0 0
    %5427 = vmatpush1.bf16.xpose.msra.mxu0 %v5424
    %5428 = vmatprep.subr.bf16.mxu0 0
    %5429 = vmatpush1.bf16.xpose.msra.mxu0 0
    %5430 = vmatprep.subr.bf16.mxu0 0
    %5431 = vmatpush1.bf16.xpose.msra.mxu0 0
    %5432 = vmatprep.subr.bf16.mxu0 0
    %5433 = vmatpush1.bf16.xpose.msra.mxu0 0
    %5434 = vmatprep.subr.bf16.mxu0 0
    %5435 = vmatpush1.bf16.xpose.msra.mxu0 0
    %5436 = vmatprep.subr.bf16.mxu0 0
    %5437 = vmatpush1.bf16.xpose.msra.mxu0 0
    %5438 = vmatprep.subr.bf16.mxu0 0
    %5439 = vmatpush1.bf16.xpose.msra.mxu0 0
    %5440 = vmatprep.subr.bf16.mxu0 0
    %5441 = vmatpush1.bf16.xpose.msra.mxu0 0
    %5442 = vmatprep.subr.bf16.mxu0 0
    %5443 = vmatpush1.bf16.xpose.msra.mxu0 0
    %5444 = vmatprep.subr.bf16.mxu0 0
    %5445 = vmatpush1.bf16.xpose.msra.mxu0 0
    %5446 = vmatprep.subr.bf16.mxu0 0
    %5447 = vmatpush1.bf16.xpose.msra.mxu0 0
    %5448 = vmatprep.subr.bf16.mxu0 0
    %5449 = vmatpush1.bf16.xpose.msra.mxu0 0
    %5450 = vmatprep.subr.bf16.mxu0 0
    %5451 = vmatpush1.bf16.xpose.msra.mxu0 0
    %5452 = vmatprep.subr.bf16.mxu0 0
    %5453 = vmatpush1.bf16.xpose.msra.mxu0 0
    %5454 = vmatprep.subr.bf16.mxu0 0
    %5455 = vmatpush1.bf16.xpose.msra.mxu0 0
    %5456 = vmatprep.subr.bf16.mxu0 0
    %5457 = vmatpush1.bf16.xpose.msra.mxu0 0
    %5458 = vmatprep.mubr.bf16.mxu0 0
    %5459 = vmatmul.mubr.bf16.gmra.mrb[0].mxu0 %v5421
    %v5460 = vpop.f32.mrb[0].mxu0
    %v5461 = vadd.f32 0.0, %v5460
    %v5462 = vpop.f32.mrb[0].mxu0
    %v5463 = vpop.f32.mrb[0].mxu0
    %v5464 = vpop.f32.mrb[0].mxu0
    %5465 = vdwg.mxu0
    %5467 = vrot.lane.b32.xlu0 %v5314, 96
    %v5468 = vpop.permute.xlu0 %5467
    %v5470 = vsel %vm136, %v5314, 0
    %v5473 = vsel %vm136, %v5468, 0
    %5475 = vmatprep.subr.bf16.mxu0 0
    %5476 = vmatpush1.bf16.xpose.msra.mxu0 %v5473
    %5477 = vmatprep.subr.bf16.mxu0 0
    %5478 = vmatpush1.bf16.xpose.msra.mxu0 0
    %5479 = vmatprep.subr.bf16.mxu0 0
    %5480 = vmatpush1.bf16.xpose.msra.mxu0 0
    %5481 = vmatprep.subr.bf16.mxu0 0
    %5482 = vmatpush1.bf16.xpose.msra.mxu0 0
    %5483 = vmatprep.subr.bf16.mxu0 0
    %5484 = vmatpush1.bf16.xpose.msra.mxu0 0
    %5485 = vmatprep.subr.bf16.mxu0 0
    %5486 = vmatpush1.bf16.xpose.msra.mxu0 0
    %5487 = vmatprep.subr.bf16.mxu0 0
    %5488 = vmatpush1.bf16.xpose.msra.mxu0 0
    %5489 = vmatprep.subr.bf16.mxu0 0
    %5490 = vmatpush1.bf16.xpose.msra.mxu0 0
    %5491 = vmatprep.subr.bf16.mxu0 0
    %5492 = vmatpush1.bf16.xpose.msra.mxu0 0
    %5493 = vmatprep.subr.bf16.mxu0 0
    %5494 = vmatpush1.bf16.xpose.msra.mxu0 0
    %5495 = vmatprep.subr.bf16.mxu0 0
    %5496 = vmatpush1.bf16.xpose.msra.mxu0 0
    %5497 = vmatprep.subr.bf16.mxu0 0
    %5498 = vmatpush1.bf16.xpose.msra.mxu0 0
    %5499 = vmatprep.subr.bf16.mxu0 0
    %5500 = vmatpush1.bf16.xpose.msra.mxu0 0
    %5501 = vmatprep.subr.bf16.mxu0 0
    %5502 = vmatpush1.bf16.xpose.msra.mxu0 0
    %5503 = vmatprep.subr.bf16.mxu0 0
    %5504 = vmatpush1.bf16.xpose.msra.mxu0 0
    %5505 = vmatprep.subr.bf16.mxu0 0
    %5506 = vmatpush1.bf16.xpose.msra.mxu0 0
    %5507 = vmatprep.mubr.bf16.mxu0 0
    %5508 = vmatmul.mubr.bf16.gmra.mrb[0].mxu0 %v5470
    %v5509 = vpop.f32.mrb[0].mxu0
    %v5510 = vadd.f32 0.0, %v5509
    %v5511 = vpop.f32.mrb[0].mxu0
    %v5512 = vpop.f32.mrb[0].mxu0
    %v5513 = vpop.f32.mrb[0].mxu0
    %5514 = vdwg.mxu0
    %5516 = vrot.lane.b32.xlu0 %v5315, 96
    %v5517 = vpop.permute.xlu0 %5516
    %v5519 = vsel %vm136, %v5315, 0
    %v5522 = vsel %vm136, %v5517, 0
    %5524 = vmatprep.subr.bf16.mxu0 0
    %5525 = vmatpush1.bf16.xpose.msra.mxu0 %v5522
    %5526 = vmatprep.subr.bf16.mxu0 0
    %5527 = vmatpush1.bf16.xpose.msra.mxu0 0
    %5528 = vmatprep.subr.bf16.mxu0 0
    %5529 = vmatpush1.bf16.xpose.msra.mxu0 0
    %5530 = vmatprep.subr.bf16.mxu0 0
    %5531 = vmatpush1.bf16.xpose.msra.mxu0 0
    %5532 = vmatprep.subr.bf16.mxu0 0
    %5533 = vmatpush1.bf16.xpose.msra.mxu0 0
    %5534 = vmatprep.subr.bf16.mxu0 0
    %5535 = vmatpush1.bf16.xpose.msra.mxu0 0
    %5536 = vmatprep.subr.bf16.mxu0 0
    %5537 = vmatpush1.bf16.xpose.msra.mxu0 0
    %5538 = vmatprep.subr.bf16.mxu0 0
    %5539 = vmatpush1.bf16.xpose.msra.mxu0 0
    %5540 = vmatprep.subr.bf16.mxu0 0
    %5541 = vmatpush1.bf16.xpose.msra.mxu0 0
    %5542 = vmatprep.subr.bf16.mxu0 0
    %5543 = vmatpush1.bf16.xpose.msra.mxu0 0
    %5544 = vmatprep.subr.bf16.mxu0 0
    %5545 = vmatpush1.bf16.xpose.msra.mxu0 0
    %5546 = vmatprep.subr.bf16.mxu0 0
    %5547 = vmatpush1.bf16.xpose.msra.mxu0 0
    %5548 = vmatprep.subr.bf16.mxu0 0
    %5549 = vmatpush1.bf16.xpose.msra.mxu0 0
    %5550 = vmatprep.subr.bf16.mxu0 0
    %5551 = vmatpush1.bf16.xpose.msra.mxu0 0
    %5552 = vmatprep.subr.bf16.mxu0 0
    %5553 = vmatpush1.bf16.xpose.msra.mxu0 0
    %5554 = vmatprep.subr.bf16.mxu0 0
    %5555 = vmatpush1.bf16.xpose.msra.mxu0 0
    %5556 = vmatprep.mubr.bf16.mxu0 0
    %5557 = vmatmul.mubr.bf16.gmra.mrb[0].mxu0 %v5519
    %v5558 = vpop.f32.mrb[0].mxu0
    %v5559 = vadd.f32 0.0, %v5558
    %v5560 = vpop.f32.mrb[0].mxu0
    %v5561 = vpop.f32.mrb[0].mxu0
    %v5562 = vpop.f32.mrb[0].mxu0
    %5563 = vdwg.mxu0
    %5565 = vrot.lane.b32.xlu0 %v5316, 96
    %v5566 = vpop.permute.xlu0 %5565
    %v5568 = vsel %vm136, %v5316, 0
    %v5571 = vsel %vm136, %v5566, 0
    %5573 = vmatprep.subr.bf16.mxu0 0
    %5574 = vmatpush1.bf16.xpose.msra.mxu0 %v5571
    %5575 = vmatprep.subr.bf16.mxu0 0
    %5576 = vmatpush1.bf16.xpose.msra.mxu0 0
    %5577 = vmatprep.subr.bf16.mxu0 0
    %5578 = vmatpush1.bf16.xpose.msra.mxu0 0
    %5579 = vmatprep.subr.bf16.mxu0 0
    %5580 = vmatpush1.bf16.xpose.msra.mxu0 0
    %5581 = vmatprep.subr.bf16.mxu0 0
    %5582 = vmatpush1.bf16.xpose.msra.mxu0 0
    %5583 = vmatprep.subr.bf16.mxu0 0
    %5584 = vmatpush1.bf16.xpose.msra.mxu0 0
    %5585 = vmatprep.subr.bf16.mxu0 0
    %5586 = vmatpush1.bf16.xpose.msra.mxu0 0
    %5587 = vmatprep.subr.bf16.mxu0 0
    %5588 = vmatpush1.bf16.xpose.msra.mxu0 0
    %5589 = vmatprep.subr.bf16.mxu0 0
    %5590 = vmatpush1.bf16.xpose.msra.mxu0 0
    %5591 = vmatprep.subr.bf16.mxu0 0
    %5592 = vmatpush1.bf16.xpose.msra.mxu0 0
    %5593 = vmatprep.subr.bf16.mxu0 0
    %5594 = vmatpush1.bf16.xpose.msra.mxu0 0
    %5595 = vmatprep.subr.bf16.mxu0 0
    %5596 = vmatpush1.bf16.xpose.msra.mxu0 0
    %5597 = vmatprep.subr.bf16.mxu0 0
    %5598 = vmatpush1.bf16.xpose.msra.mxu0 0
    %5599 = vmatprep.subr.bf16.mxu0 0
    %5600 = vmatpush1.bf16.xpose.msra.mxu0 0
    %5601 = vmatprep.subr.bf16.mxu0 0
    %5602 = vmatpush1.bf16.xpose.msra.mxu0 0
    %5603 = vmatprep.subr.bf16.mxu0 0
    %5604 = vmatpush1.bf16.xpose.msra.mxu0 0
    %5605 = vmatprep.mubr.bf16.mxu0 0
    %5606 = vmatmul.mubr.bf16.gmra.mrb[0].mxu0 %v5568
    %v5607 = vpop.f32.mrb[0].mxu0
    %v5608 = vadd.f32 0.0, %v5607
    %v5609 = vpop.f32.mrb[0].mxu0
    %v5610 = vpop.f32.mrb[0].mxu0
    %v5611 = vpop.f32.mrb[0].mxu0
    %5612 = vdwg.mxu0
    %5614 = vrot.lane.b32.xlu0 %v5317, 96
    %v5615 = vpop.permute.xlu0 %5614
    %v5617 = vsel %vm136, %v5317, 0
    %v5620 = vsel %vm136, %v5615, 0
    %5622 = vmatprep.subr.bf16.mxu0 0
    %5623 = vmatpush1.bf16.xpose.msra.mxu0 %v5620
    %5624 = vmatprep.subr.bf16.mxu0 0
    %5625 = vmatpush1.bf16.xpose.msra.mxu0 0
    %5626 = vmatprep.subr.bf16.mxu0 0
    %5627 = vmatpush1.bf16.xpose.msra.mxu0 0
    %5628 = vmatprep.subr.bf16.mxu0 0
    %5629 = vmatpush1.bf16.xpose.msra.mxu0 0
    %5630 = vmatprep.subr.bf16.mxu0 0
    %5631 = vmatpush1.bf16.xpose.msra.mxu0 0
    %5632 = vmatprep.subr.bf16.mxu0 0
    %5633 = vmatpush1.bf16.xpose.msra.mxu0 0
    %5634 = vmatprep.subr.bf16.mxu0 0
    %5635 = vmatpush1.bf16.xpose.msra.mxu0 0
    %5636 = vmatprep.subr.bf16.mxu0 0
    %5637 = vmatpush1.bf16.xpose.msra.mxu0 0
    %5638 = vmatprep.subr.bf16.mxu0 0
    %5639 = vmatpush1.bf16.xpose.msra.mxu0 0
    %5640 = vmatprep.subr.bf16.mxu0 0
    %5641 = vmatpush1.bf16.xpose.msra.mxu0 0
    %5642 = vmatprep.subr.bf16.mxu0 0
    %5643 = vmatpush1.bf16.xpose.msra.mxu0 0
    %5644 = vmatprep.subr.bf16.mxu0 0
    %5645 = vmatpush1.bf16.xpose.msra.mxu0 0
    %5646 = vmatprep.subr.bf16.mxu0 0
    %5647 = vmatpush1.bf16.xpose.msra.mxu0 0
    %5648 = vmatprep.subr.bf16.mxu0 0
    %5649 = vmatpush1.bf16.xpose.msra.mxu0 0
    %5650 = vmatprep.subr.bf16.mxu0 0
    %5651 = vmatpush1.bf16.xpose.msra.mxu0 0
    %5652 = vmatprep.subr.bf16.mxu0 0
    %5653 = vmatpush1.bf16.xpose.msra.mxu0 0
    %5654 = vmatprep.mubr.bf16.mxu0 0
    %5655 = vmatmul.mubr.bf16.gmra.mrb[0].mxu0 %v5617
    %v5656 = vpop.f32.mrb[0].mxu0
    %v5657 = vadd.f32 0.0, %v5656
    %v5658 = vpop.f32.mrb[0].mxu0
    %v5659 = vpop.f32.mrb[0].mxu0
    %v5660 = vpop.f32.mrb[0].mxu0
    %5661 = vdwg.mxu0
    %5663 = vrot.lane.b32.xlu0 %v5318, 96
    %v5664 = vpop.permute.xlu0 %5663
    %v5666 = vsel %vm136, %v5318, 0
    %v5669 = vsel %vm136, %v5664, 0
    %5671 = vmatprep.subr.bf16.mxu0 0
    %5672 = vmatpush1.bf16.xpose.msra.mxu0 %v5669
    %5673 = vmatprep.subr.bf16.mxu0 0
    %5674 = vmatpush1.bf16.xpose.msra.mxu0 0
    %5675 = vmatprep.subr.bf16.mxu0 0
    %5676 = vmatpush1.bf16.xpose.msra.mxu0 0
    %5677 = vmatprep.subr.bf16.mxu0 0
    %5678 = vmatpush1.bf16.xpose.msra.mxu0 0
    %5679 = vmatprep.subr.bf16.mxu0 0
    %5680 = vmatpush1.bf16.xpose.msra.mxu0 0
    %5681 = vmatprep.subr.bf16.mxu0 0
    %5682 = vmatpush1.bf16.xpose.msra.mxu0 0
    %5683 = vmatprep.subr.bf16.mxu0 0
    %5684 = vmatpush1.bf16.xpose.msra.mxu0 0
    %5685 = vmatprep.subr.bf16.mxu0 0
    %5686 = vmatpush1.bf16.xpose.msra.mxu0 0
    %5687 = vmatprep.subr.bf16.mxu0 0
    %5688 = vmatpush1.bf16.xpose.msra.mxu0 0
    %5689 = vmatprep.subr.bf16.mxu0 0
    %5690 = vmatpush1.bf16.xpose.msra.mxu0 0
    %5691 = vmatprep.subr.bf16.mxu0 0
    %5692 = vmatpush1.bf16.xpose.msra.mxu0 0
    %5693 = vmatprep.subr.bf16.mxu0 0
    %5694 = vmatpush1.bf16.xpose.msra.mxu0 0
    %5695 = vmatprep.subr.bf16.mxu0 0
    %5696 = vmatpush1.bf16.xpose.msra.mxu0 0
    %5697 = vmatprep.subr.bf16.mxu0 0
    %5698 = vmatpush1.bf16.xpose.msra.mxu0 0
    %5699 = vmatprep.subr.bf16.mxu0 0
    %5700 = vmatpush1.bf16.xpose.msra.mxu0 0
    %5701 = vmatprep.subr.bf16.mxu0 0
    %5702 = vmatpush1.bf16.xpose.msra.mxu0 0
    %5703 = vmatprep.mubr.bf16.mxu0 0
    %5704 = vmatmul.mubr.bf16.gmra.mrb[0].mxu0 %v5666
    %v5705 = vpop.f32.mrb[0].mxu0
    %v5706 = vadd.f32 0.0, %v5705
    %v5707 = vpop.f32.mrb[0].mxu0
    %v5708 = vpop.f32.mrb[0].mxu0
    %v5709 = vpop.f32.mrb[0].mxu0
    %5710 = vdwg.mxu0
    %v5711 = vmul.f32 %v5363, 0.35355338
    %v5712 = vmul.f32 %v5412, 0.35355338
    %v5713 = vmul.f32 %v5461, 0.35355338
    %v5714 = vmul.f32 %v5510, 0.35355338
    %v5715 = vmul.f32 %v5559, 0.35355338
    %v5716 = vmul.f32 %v5608, 0.35355338
    %v5717 = vmul.f32 %v5657, 0.35355338
    %v5718 = vmul.f32 %v5706, 0.35355338
    %v5719 = vadd.f32 %v5711, %v2687
    %v5720 = vadd.f32 %v5712, %v2688
    %v5721 = vadd.f32 %v5713, %v2689
    %v5722 = vadd.f32 %v5714, %v2690
    %v5723 = vadd.f32 %v5715, %v2691
    %v5724 = vadd.f32 %v5716, %v2692
    %v5725 = vadd.f32 %v5717, %v2693
    %v5726 = vadd.f32 %v5718, %v2694
    %v5727 = vsel %vm136, %v5719, -inf
    %5728 = vmax.xlane.f32.xlu0 %v5727
    %v5729 = vpop.xlane.xlu0 %5728
    %v5730 = vsel %vm136, %v5720, -inf
    %5731 = vmax.xlane.f32.xlu0 %v5730
    %v5732 = vpop.xlane.xlu0 %5731
    %v5733 = vsel %vm136, %v5721, -inf
    %5734 = vmax.xlane.f32.xlu0 %v5733
    %v5735 = vpop.xlane.xlu0 %5734
    %v5736 = vsel %vm136, %v5722, -inf
    %5737 = vmax.xlane.f32.xlu0 %v5736
    %v5738 = vpop.xlane.xlu0 %5737
    %v5739 = vsel %vm136, %v5723, -inf
    %5740 = vmax.xlane.f32.xlu0 %v5739
    %v5741 = vpop.xlane.xlu0 %5740
    %v5742 = vsel %vm136, %v5724, -inf
    %5743 = vmax.xlane.f32.xlu0 %v5742
    %v5744 = vpop.xlane.xlu0 %5743
    %v5745 = vsel %vm136, %v5725, -inf
    %5746 = vmax.xlane.f32.xlu0 %v5745
    %v5747 = vpop.xlane.xlu0 %5746
    %v5748 = vsel %vm136, %v5726, -inf
    %5749 = vmax.xlane.f32.xlu0 %v5748
    %v5750 = vpop.xlane.xlu0 %5749
    %v5751 = vsub.f32 %v5719, %v5729
    %v5752 = vsub.f32 %v5720, %v5732
    %v5753 = vsub.f32 %v5721, %v5735
    %v5754 = vsub.f32 %v5722, %v5738
    %v5755 = vsub.f32 %v5723, %v5741
    %v5756 = vsub.f32 %v5724, %v5744
    %v5757 = vsub.f32 %v5725, %v5747
    %v5758 = vsub.f32 %v5726, %v5750
    %v5759 = vmul.f32 %v5751, 1.442695
    %v5760 = vpow.pop %v5759
    %v5761 = vmul.f32 %v5752, 1.442695
    %v5762 = vpow.pop %v5761
    %v5763 = vmul.f32 %v5753, 1.442695
    %v5764 = vpow.pop %v5763
    %v5765 = vmul.f32 %v5754, 1.442695
    %v5766 = vpow.pop %v5765
    %v5767 = vmul.f32 %v5755, 1.442695
    %v5768 = vpow.pop %v5767
    %v5769 = vmul.f32 %v5756, 1.442695
    %v5770 = vpow.pop %v5769
    %v5771 = vmul.f32 %v5757, 1.442695
    %v5772 = vpow.pop %v5771
    %v5773 = vmul.f32 %v5758, 1.442695
    %v5774 = vpow.pop %v5773
    %v5775 = vsel %vm136, %v5760, 0.0
    %5776 = vadd.xlane.f32.xlu0 %v5775
    %v5777 = vpop.xlane.xlu0 %5776
    %v5778 = vsel %vm136, %v5762, 0.0
    %5779 = vadd.xlane.f32.xlu0 %v5778
    %v5780 = vpop.xlane.xlu0 %5779
    %v5781 = vsel %vm136, %v5764, 0.0
    %5782 = vadd.xlane.f32.xlu0 %v5781
    %v5783 = vpop.xlane.xlu0 %5782
    %v5784 = vsel %vm136, %v5766, 0.0
    %5785 = vadd.xlane.f32.xlu0 %v5784
    %v5786 = vpop.xlane.xlu0 %5785
    %v5787 = vsel %vm136, %v5768, 0.0
    %5788 = vadd.xlane.f32.xlu0 %v5787
    %v5789 = vpop.xlane.xlu0 %5788
    %v5790 = vsel %vm136, %v5770, 0.0
    %5791 = vadd.xlane.f32.xlu0 %v5790
    %v5792 = vpop.xlane.xlu0 %5791
    %v5793 = vsel %vm136, %v5772, 0.0
    %5794 = vadd.xlane.f32.xlu0 %v5793
    %v5795 = vpop.xlane.xlu0 %5794
    %v5796 = vsel %vm136, %v5774, 0.0
    %5797 = vadd.xlane.f32.xlu0 %v5796
    %v5798 = vpop.xlane.xlu0 %5797
    %v5799 = vrcp.pop %v5777
    %v5800 = vrcp.pop %v5780
    %v5801 = vrcp.pop %v5783
    %v5802 = vrcp.pop %v5786
    %v5803 = vrcp.pop %v5789
    %v5804 = vrcp.pop %v5792
    %v5805 = vrcp.pop %v5795
    %v5806 = vrcp.pop %v5798
    %v5807 = vmul.f32 %v5760, %v5799
    %v5808 = vmul.f32 %v5762, %v5800
    %v5809 = vmul.f32 %v5764, %v5801
    %v5810 = vmul.f32 %v5766, %v5802
    %v5811 = vmul.f32 %v5768, %v5803
    %v5812 = vmul.f32 %v5770, %v5804
    %v5813 = vmul.f32 %v5772, %v5805
    %v5814 = vmul.f32 %v5774, %v5806
    %v5815 = vpack.c.bf16 %v5807, %v5807
    %v5816 = vpack.c.bf16 %v5808, %v5808
    %v5817 = vpack.c.bf16 %v5809, %v5809
    %v5818 = vpack.c.bf16 %v5810, %v5810
    %v5819 = vpack.c.bf16 %v5811, %v5811
    %v5820 = vpack.c.bf16 %v5812, %v5812
    %v5821 = vpack.c.bf16 %v5813, %v5813
    %v5822 = vpack.c.bf16 %v5814, %v5814
    %5823 = vrot.lane.b32.xlu0 %v5311, 64
    %v5824 = vpop.permute.xlu0 %5823
    %v5826 = vsel %vm136, %v5815, 0
    %v5829 = vsel %vm643, %v5824, 0
    %5831 = vmatprep.subr.bf16.mxu0 0
    %5832 = vmatpush1.bf16.msra.mxu0 %v5829
    %5833 = vmatprep.subr.bf16.mxu0 0
    %5834 = vmatpush1.bf16.msra.mxu0 0
    %5835 = vmatprep.subr.bf16.mxu0 0
    %5836 = vmatpush1.bf16.msra.mxu0 0
    %5837 = vmatprep.subr.bf16.mxu0 0
    %5838 = vmatpush1.bf16.msra.mxu0 0
    %5839 = vmatprep.subr.bf16.mxu0 0
    %5840 = vmatpush1.bf16.msra.mxu0 0
    %5841 = vmatprep.subr.bf16.mxu0 0
    %5842 = vmatpush1.bf16.msra.mxu0 0
    %5843 = vmatprep.subr.bf16.mxu0 0
    %5844 = vmatpush1.bf16.msra.mxu0 0
    %5845 = vmatprep.subr.bf16.mxu0 0
    %5846 = vmatpush1.bf16.msra.mxu0 0
    %5847 = vmatprep.subr.bf16.mxu0 0
    %5848 = vmatpush1.bf16.msra.mxu0 0
    %5849 = vmatprep.subr.bf16.mxu0 0
    %5850 = vmatpush1.bf16.msra.mxu0 0
    %5851 = vmatprep.subr.bf16.mxu0 0
    %5852 = vmatpush1.bf16.msra.mxu0 0
    %5853 = vmatprep.subr.bf16.mxu0 0
    %5854 = vmatpush1.bf16.msra.mxu0 0
    %5855 = vmatprep.subr.bf16.mxu0 0
    %5856 = vmatpush1.bf16.msra.mxu0 0
    %5857 = vmatprep.subr.bf16.mxu0 0
    %5858 = vmatpush1.bf16.msra.mxu0 0
    %5859 = vmatprep.subr.bf16.mxu0 0
    %5860 = vmatpush1.bf16.msra.mxu0 0
    %5861 = vmatprep.subr.bf16.mxu0 0
    %5862 = vmatpush1.bf16.msra.mxu0 0
    %5863 = vmatprep.mubr.bf16.mxu0 0
    %5864 = vmatmul.mubr.bf16.gmra.mrb[0].mxu0 %v5826
    %v5865 = vpop.f32.mrb[0].mxu0
    %v5866 = vadd.f32 0.0, %v5865
    %v5867 = vpop.f32.mrb[0].mxu0
    %v5868 = vpop.f32.mrb[0].mxu0
    %v5869 = vpop.f32.mrb[0].mxu0
    %5870 = vdwg.mxu0
    %5871 = vrot.lane.b32.xlu0 %v5312, 64
    %v5872 = vpop.permute.xlu0 %5871
    %v5874 = vsel %vm136, %v5816, 0
    %v5877 = vsel %vm643, %v5872, 0
    %5879 = vmatprep.subr.bf16.mxu0 0
    %5880 = vmatpush1.bf16.msra.mxu0 %v5877
    %5881 = vmatprep.subr.bf16.mxu0 0
    %5882 = vmatpush1.bf16.msra.mxu0 0
    %5883 = vmatprep.subr.bf16.mxu0 0
    %5884 = vmatpush1.bf16.msra.mxu0 0
    %5885 = vmatprep.subr.bf16.mxu0 0
    %5886 = vmatpush1.bf16.msra.mxu0 0
    %5887 = vmatprep.subr.bf16.mxu0 0
    %5888 = vmatpush1.bf16.msra.mxu0 0
    %5889 = vmatprep.subr.bf16.mxu0 0
    %5890 = vmatpush1.bf16.msra.mxu0 0
    %5891 = vmatprep.subr.bf16.mxu0 0
    %5892 = vmatpush1.bf16.msra.mxu0 0
    %5893 = vmatprep.subr.bf16.mxu0 0
    %5894 = vmatpush1.bf16.msra.mxu0 0
    %5895 = vmatprep.subr.bf16.mxu0 0
    %5896 = vmatpush1.bf16.msra.mxu0 0
    %5897 = vmatprep.subr.bf16.mxu0 0
    %5898 = vmatpush1.bf16.msra.mxu0 0
    %5899 = vmatprep.subr.bf16.mxu0 0
    %5900 = vmatpush1.bf16.msra.mxu0 0
    %5901 = vmatprep.subr.bf16.mxu0 0
    %5902 = vmatpush1.bf16.msra.mxu0 0
    %5903 = vmatprep.subr.bf16.mxu0 0
    %5904 = vmatpush1.bf16.msra.mxu0 0
    %5905 = vmatprep.subr.bf16.mxu0 0
    %5906 = vmatpush1.bf16.msra.mxu0 0
    %5907 = vmatprep.subr.bf16.mxu0 0
    %5908 = vmatpush1.bf16.msra.mxu0 0
    %5909 = vmatprep.subr.bf16.mxu0 0
    %5910 = vmatpush1.bf16.msra.mxu0 0
    %5911 = vmatprep.mubr.bf16.mxu0 0
    %5912 = vmatmul.mubr.bf16.gmra.mrb[0].mxu0 %v5874
    %v5913 = vpop.f32.mrb[0].mxu0
    %v5914 = vadd.f32 0.0, %v5913
    %v5915 = vpop.f32.mrb[0].mxu0
    %v5916 = vpop.f32.mrb[0].mxu0
    %v5917 = vpop.f32.mrb[0].mxu0
    %5918 = vdwg.mxu0
    %5919 = vrot.lane.b32.xlu0 %v5313, 64
    %v5920 = vpop.permute.xlu0 %5919
    %v5922 = vsel %vm136, %v5817, 0
    %v5925 = vsel %vm643, %v5920, 0
    %5927 = vmatprep.subr.bf16.mxu0 0
    %5928 = vmatpush1.bf16.msra.mxu0 %v5925
    %5929 = vmatprep.subr.bf16.mxu0 0
    %5930 = vmatpush1.bf16.msra.mxu0 0
    %5931 = vmatprep.subr.bf16.mxu0 0
    %5932 = vmatpush1.bf16.msra.mxu0 0
    %5933 = vmatprep.subr.bf16.mxu0 0
    %5934 = vmatpush1.bf16.msra.mxu0 0
    %5935 = vmatprep.subr.bf16.mxu0 0
    %5936 = vmatpush1.bf16.msra.mxu0 0
    %5937 = vmatprep.subr.bf16.mxu0 0
    %5938 = vmatpush1.bf16.msra.mxu0 0
    %5939 = vmatprep.subr.bf16.mxu0 0
    %5940 = vmatpush1.bf16.msra.mxu0 0
    %5941 = vmatprep.subr.bf16.mxu0 0
    %5942 = vmatpush1.bf16.msra.mxu0 0
    %5943 = vmatprep.subr.bf16.mxu0 0
    %5944 = vmatpush1.bf16.msra.mxu0 0
    %5945 = vmatprep.subr.bf16.mxu0 0
    %5946 = vmatpush1.bf16.msra.mxu0 0
    %5947 = vmatprep.subr.bf16.mxu0 0
    %5948 = vmatpush1.bf16.msra.mxu0 0
    %5949 = vmatprep.subr.bf16.mxu0 0
    %5950 = vmatpush1.bf16.msra.mxu0 0
    %5951 = vmatprep.subr.bf16.mxu0 0
    %5952 = vmatpush1.bf16.msra.mxu0 0
    %5953 = vmatprep.subr.bf16.mxu0 0
    %5954 = vmatpush1.bf16.msra.mxu0 0
    %5955 = vmatprep.subr.bf16.mxu0 0
    %5956 = vmatpush1.bf16.msra.mxu0 0
    %5957 = vmatprep.subr.bf16.mxu0 0
    %5958 = vmatpush1.bf16.msra.mxu0 0
    %5959 = vmatprep.mubr.bf16.mxu0 0
    %5960 = vmatmul.mubr.bf16.gmra.mrb[0].mxu0 %v5922
    %v5961 = vpop.f32.mrb[0].mxu0
    %v5962 = vadd.f32 0.0, %v5961
    %v5963 = vpop.f32.mrb[0].mxu0
    %v5964 = vpop.f32.mrb[0].mxu0
    %v5965 = vpop.f32.mrb[0].mxu0
    %5966 = vdwg.mxu0
    %5967 = vrot.lane.b32.xlu0 %v5314, 64
    %v5968 = vpop.permute.xlu0 %5967
    %v5970 = vsel %vm136, %v5818, 0
    %v5973 = vsel %vm643, %v5968, 0
    %5975 = vmatprep.subr.bf16.mxu0 0
    %5976 = vmatpush1.bf16.msra.mxu0 %v5973
    %5977 = vmatprep.subr.bf16.mxu0 0
    %5978 = vmatpush1.bf16.msra.mxu0 0
    %5979 = vmatprep.subr.bf16.mxu0 0
    %5980 = vmatpush1.bf16.msra.mxu0 0
    %5981 = vmatprep.subr.bf16.mxu0 0
    %5982 = vmatpush1.bf16.msra.mxu0 0
    %5983 = vmatprep.subr.bf16.mxu0 0
    %5984 = vmatpush1.bf16.msra.mxu0 0
    %5985 = vmatprep.subr.bf16.mxu0 0
    %5986 = vmatpush1.bf16.msra.mxu0 0
    %5987 = vmatprep.subr.bf16.mxu0 0
    %5988 = vmatpush1.bf16.msra.mxu0 0
    %5989 = vmatprep.subr.bf16.mxu0 0
    %5990 = vmatpush1.bf16.msra.mxu0 0
    %5991 = vmatprep.subr.bf16.mxu0 0
    %5992 = vmatpush1.bf16.msra.mxu0 0
    %5993 = vmatprep.subr.bf16.mxu0 0
    %5994 = vmatpush1.bf16.msra.mxu0 0
    %5995 = vmatprep.subr.bf16.mxu0 0
    %5996 = vmatpush1.bf16.msra.mxu0 0
    %5997 = vmatprep.subr.bf16.mxu0 0
    %5998 = vmatpush1.bf16.msra.mxu0 0
    %5999 = vmatprep.subr.bf16.mxu0 0
    %6000 = vmatpush1.bf16.msra.mxu0 0
    %6001 = vmatprep.subr.bf16.mxu0 0
    %6002 = vmatpush1.bf16.msra.mxu0 0
    %6003 = vmatprep.subr.bf16.mxu0 0
    %6004 = vmatpush1.bf16.msra.mxu0 0
    %6005 = vmatprep.subr.bf16.mxu0 0
    %6006 = vmatpush1.bf16.msra.mxu0 0
    %6007 = vmatprep.mubr.bf16.mxu0 0
    %6008 = vmatmul.mubr.bf16.gmra.mrb[0].mxu0 %v5970
    %v6009 = vpop.f32.mrb[0].mxu0
    %v6010 = vadd.f32 0.0, %v6009
    %v6011 = vpop.f32.mrb[0].mxu0
    %v6012 = vpop.f32.mrb[0].mxu0
    %v6013 = vpop.f32.mrb[0].mxu0
    %6014 = vdwg.mxu0
    %6015 = vrot.lane.b32.xlu0 %v5315, 64
    %v6016 = vpop.permute.xlu0 %6015
    %v6018 = vsel %vm136, %v5819, 0
    %v6021 = vsel %vm643, %v6016, 0
    %6023 = vmatprep.subr.bf16.mxu0 0
    %6024 = vmatpush1.bf16.msra.mxu0 %v6021
    %6025 = vmatprep.subr.bf16.mxu0 0
    %6026 = vmatpush1.bf16.msra.mxu0 0
    %6027 = vmatprep.subr.bf16.mxu0 0
    %6028 = vmatpush1.bf16.msra.mxu0 0
    %6029 = vmatprep.subr.bf16.mxu0 0
    %6030 = vmatpush1.bf16.msra.mxu0 0
    %6031 = vmatprep.subr.bf16.mxu0 0
    %6032 = vmatpush1.bf16.msra.mxu0 0
    %6033 = vmatprep.subr.bf16.mxu0 0
    %6034 = vmatpush1.bf16.msra.mxu0 0
    %6035 = vmatprep.subr.bf16.mxu0 0
    %6036 = vmatpush1.bf16.msra.mxu0 0
    %6037 = vmatprep.subr.bf16.mxu0 0
    %6038 = vmatpush1.bf16.msra.mxu0 0
    %6039 = vmatprep.subr.bf16.mxu0 0
    %6040 = vmatpush1.bf16.msra.mxu0 0
    %6041 = vmatprep.subr.bf16.mxu0 0
    %6042 = vmatpush1.bf16.msra.mxu0 0
    %6043 = vmatprep.subr.bf16.mxu0 0
    %6044 = vmatpush1.bf16.msra.mxu0 0
    %6045 = vmatprep.subr.bf16.mxu0 0
    %6046 = vmatpush1.bf16.msra.mxu0 0
    %6047 = vmatprep.subr.bf16.mxu0 0
    %6048 = vmatpush1.bf16.msra.mxu0 0
    %6049 = vmatprep.subr.bf16.mxu0 0
    %6050 = vmatpush1.bf16.msra.mxu0 0
    %6051 = vmatprep.subr.bf16.mxu0 0
    %6052 = vmatpush1.bf16.msra.mxu0 0
    %6053 = vmatprep.subr.bf16.mxu0 0
    %6054 = vmatpush1.bf16.msra.mxu0 0
    %6055 = vmatprep.mubr.bf16.mxu0 0
    %6056 = vmatmul.mubr.bf16.gmra.mrb[0].mxu0 %v6018
    %v6057 = vpop.f32.mrb[0].mxu0
    %v6058 = vadd.f32 0.0, %v6057
    %v6059 = vpop.f32.mrb[0].mxu0
    %v6060 = vpop.f32.mrb[0].mxu0
    %v6061 = vpop.f32.mrb[0].mxu0
    %6062 = vdwg.mxu0
    %6063 = vrot.lane.b32.xlu0 %v5316, 64
    %v6064 = vpop.permute.xlu0 %6063
    %v6066 = vsel %vm136, %v5820, 0
    %v6069 = vsel %vm643, %v6064, 0
    %6071 = vmatprep.subr.bf16.mxu0 0
    %6072 = vmatpush1.bf16.msra.mxu0 %v6069
    %6073 = vmatprep.subr.bf16.mxu0 0
    %6074 = vmatpush1.bf16.msra.mxu0 0
    %6075 = vmatprep.subr.bf16.mxu0 0
    %6076 = vmatpush1.bf16.msra.mxu0 0
    %6077 = vmatprep.subr.bf16.mxu0 0
    %6078 = vmatpush1.bf16.msra.mxu0 0
    %6079 = vmatprep.subr.bf16.mxu0 0
    %6080 = vmatpush1.bf16.msra.mxu0 0
    %6081 = vmatprep.subr.bf16.mxu0 0
    %6082 = vmatpush1.bf16.msra.mxu0 0
    %6083 = vmatprep.subr.bf16.mxu0 0
    %6084 = vmatpush1.bf16.msra.mxu0 0
    %6085 = vmatprep.subr.bf16.mxu0 0
    %6086 = vmatpush1.bf16.msra.mxu0 0
    %6087 = vmatprep.subr.bf16.mxu0 0
    %6088 = vmatpush1.bf16.msra.mxu0 0
    %6089 = vmatprep.subr.bf16.mxu0 0
    %6090 = vmatpush1.bf16.msra.mxu0 0
    %6091 = vmatprep.subr.bf16.mxu0 0
    %6092 = vmatpush1.bf16.msra.mxu0 0
    %6093 = vmatprep.subr.bf16.mxu0 0
    %6094 = vmatpush1.bf16.msra.mxu0 0
    %6095 = vmatprep.subr.bf16.mxu0 0
    %6096 = vmatpush1.bf16.msra.mxu0 0
    %6097 = vmatprep.subr.bf16.mxu0 0
    %6098 = vmatpush1.bf16.msra.mxu0 0
    %6099 = vmatprep.subr.bf16.mxu0 0
    %6100 = vmatpush1.bf16.msra.mxu0 0
    %6101 = vmatprep.subr.bf16.mxu0 0
    %6102 = vmatpush1.bf16.msra.mxu0 0
    %6103 = vmatprep.mubr.bf16.mxu0 0
    %6104 = vmatmul.mubr.bf16.gmra.mrb[0].mxu0 %v6066
    %v6105 = vpop.f32.mrb[0].mxu0
    %v6106 = vadd.f32 0.0, %v6105
    %v6107 = vpop.f32.mrb[0].mxu0
    %v6108 = vpop.f32.mrb[0].mxu0
    %v6109 = vpop.f32.mrb[0].mxu0
    %6110 = vdwg.mxu0
    %6111 = vrot.lane.b32.xlu0 %v5317, 64
    %v6112 = vpop.permute.xlu0 %6111
    %v6114 = vsel %vm136, %v5821, 0
    %v6117 = vsel %vm643, %v6112, 0
    %6119 = vmatprep.subr.bf16.mxu0 0
    %6120 = vmatpush1.bf16.msra.mxu0 %v6117
    %6121 = vmatprep.subr.bf16.mxu0 0
    %6122 = vmatpush1.bf16.msra.mxu0 0
    %6123 = vmatprep.subr.bf16.mxu0 0
    %6124 = vmatpush1.bf16.msra.mxu0 0
    %6125 = vmatprep.subr.bf16.mxu0 0
    %6126 = vmatpush1.bf16.msra.mxu0 0
    %6127 = vmatprep.subr.bf16.mxu0 0
    %6128 = vmatpush1.bf16.msra.mxu0 0
    %6129 = vmatprep.subr.bf16.mxu0 0
    %6130 = vmatpush1.bf16.msra.mxu0 0
    %6131 = vmatprep.subr.bf16.mxu0 0
    %6132 = vmatpush1.bf16.msra.mxu0 0
    %6133 = vmatprep.subr.bf16.mxu0 0
    %6134 = vmatpush1.bf16.msra.mxu0 0
    %6135 = vmatprep.subr.bf16.mxu0 0
    %6136 = vmatpush1.bf16.msra.mxu0 0
    %6137 = vmatprep.subr.bf16.mxu0 0
    %6138 = vmatpush1.bf16.msra.mxu0 0
    %6139 = vmatprep.subr.bf16.mxu0 0
    %6140 = vmatpush1.bf16.msra.mxu0 0
    %6141 = vmatprep.subr.bf16.mxu0 0
    %6142 = vmatpush1.bf16.msra.mxu0 0
    %6143 = vmatprep.subr.bf16.mxu0 0
    %6144 = vmatpush1.bf16.msra.mxu0 0
    %6145 = vmatprep.subr.bf16.mxu0 0
    %6146 = vmatpush1.bf16.msra.mxu0 0
    %6147 = vmatprep.subr.bf16.mxu0 0
    %6148 = vmatpush1.bf16.msra.mxu0 0
    %6149 = vmatprep.subr.bf16.mxu0 0
    %6150 = vmatpush1.bf16.msra.mxu0 0
    %6151 = vmatprep.mubr.bf16.mxu0 0
    %6152 = vmatmul.mubr.bf16.gmra.mrb[0].mxu0 %v6114
    %v6153 = vpop.f32.mrb[0].mxu0
    %v6154 = vadd.f32 0.0, %v6153
    %v6155 = vpop.f32.mrb[0].mxu0
    %v6156 = vpop.f32.mrb[0].mxu0
    %v6157 = vpop.f32.mrb[0].mxu0
    %6158 = vdwg.mxu0
    %6159 = vrot.lane.b32.xlu0 %v5318, 64
    %v6160 = vpop.permute.xlu0 %6159
    %v6162 = vsel %vm136, %v5822, 0
    %v6165 = vsel %vm643, %v6160, 0
    %6167 = vmatprep.subr.bf16.mxu0 0
    %6168 = vmatpush1.bf16.msra.mxu0 %v6165
    %6169 = vmatprep.subr.bf16.mxu0 0
    %6170 = vmatpush1.bf16.msra.mxu0 0
    %6171 = vmatprep.subr.bf16.mxu0 0
    %6172 = vmatpush1.bf16.msra.mxu0 0
    %6173 = vmatprep.subr.bf16.mxu0 0
    %6174 = vmatpush1.bf16.msra.mxu0 0
    %6175 = vmatprep.subr.bf16.mxu0 0
    %6176 = vmatpush1.bf16.msra.mxu0 0
    %6177 = vmatprep.subr.bf16.mxu0 0
    %6178 = vmatpush1.bf16.msra.mxu0 0
    %6179 = vmatprep.subr.bf16.mxu0 0
    %6180 = vmatpush1.bf16.msra.mxu0 0
    %6181 = vmatprep.subr.bf16.mxu0 0
    %6182 = vmatpush1.bf16.msra.mxu0 0
    %6183 = vmatprep.subr.bf16.mxu0 0
    %6184 = vmatpush1.bf16.msra.mxu0 0
    %6185 = vmatprep.subr.bf16.mxu0 0
    %6186 = vmatpush1.bf16.msra.mxu0 0
    %6187 = vmatprep.subr.bf16.mxu0 0
    %6188 = vmatpush1.bf16.msra.mxu0 0
    %6189 = vmatprep.subr.bf16.mxu0 0
    %6190 = vmatpush1.bf16.msra.mxu0 0
    %6191 = vmatprep.subr.bf16.mxu0 0
    %6192 = vmatpush1.bf16.msra.mxu0 0
    %6193 = vmatprep.subr.bf16.mxu0 0
    %6194 = vmatpush1.bf16.msra.mxu0 0
    %6195 = vmatprep.subr.bf16.mxu0 0
    %6196 = vmatpush1.bf16.msra.mxu0 0
    %6197 = vmatprep.subr.bf16.mxu0 0
    %6198 = vmatpush1.bf16.msra.mxu0 0
    %6199 = vmatprep.mubr.bf16.mxu0 0
    %6200 = vmatmul.mubr.bf16.gmra.mrb[0].mxu0 %v6162
    %v6201 = vpop.f32.mrb[0].mxu0
    %v6202 = vadd.f32 0.0, %v6201
    %v6203 = vpop.f32.mrb[0].mxu0
    %v6204 = vpop.f32.mrb[0].mxu0
    %v6205 = vpop.f32.mrb[0].mxu0
    %6206 = vdwg.mxu0
    %6209 = vrot.lane.b32.xlu0 %v5962, 8
    %v6210 = vpop.permute.xlu0 %6209
    %6211 = vrot.lane.b32.xlu0 %v6010, 8
    %v6212 = vpop.permute.xlu0 %6211
    %6217 = vrot.lane.b32.xlu0 %v6058, 16
    %v6218 = vpop.permute.xlu0 %6217
    %6219 = vrot.lane.b32.xlu0 %v6106, 16
    %v6220 = vpop.permute.xlu0 %6219
    %6225 = vrot.lane.b32.xlu0 %v6154, 24
    %v6226 = vpop.permute.xlu0 %6225
    %6227 = vrot.lane.b32.xlu0 %v6202, 24
    %v6228 = vpop.permute.xlu0 %6227
    %v6231 = vsel %vm136, %v5866, %v6210
    %v6232 = vsel %vm136, %v5914, %v6212
    %v6233 = vsel %vm1049, %v6231, %v6218
    %v6234 = vsel %vm1049, %v6232, %v6220
    %v6235 = vsel %vm1052, %v6233, %v6226
    %v6236 = vsel %vm1052, %v6234, %v6228
    %v6237 = vld [vmem:[%s5 + $0x130] sm:$0xf]
    %v6238 = vld [vmem:[%s5 + $0x134] sm:$0xf]
    %v6239 = vld [vmem:[%s5 + $0x138] sm:$0xf]
    %v6240 = vld [vmem:[%s5 + $0x13c] sm:$0xf]
    %v6241 = vpack.c.bf16 %v6236, %v6235
    %v6242 = vld [vmem:[%s6 + $0x1e] sm:$0x1]
    %v6243 = vlaneseq
    %v6244 = vshrl.u32 %v6243, 7
    %v6245 = vsub.s32 0, %v6244
    %v6246 = vrot.slane %v6242, %v6245
    %v6251 = vunpack.c.l.b16 %v6237
    %v6252 = vunpack.c.l.b16 %v6238
    %v6253 = vunpack.c.l.b16 %v6239
    %v6254 = vunpack.c.l.b16 %v6240
    %v6255 = vpack.c.b16 %v6252, %v6251
    %v6256 = vpack.c.b16 %v6254, %v6253
    %v6260 = vsel %vm60, %v6241, 0
    %6262 = vmatprep.subr.bf16.mxu0 0
    %6263 = vmatpush1.bf16.msra.mxu0 %v6255
    %6264 = vmatprep.subr.bf16.mxu0 0
    %6265 = vmatpush1.bf16.msra.mxu0 %v6256
    %6266 = vmatprep.subr.bf16.mxu0 0
    %6267 = vmatpush1.bf16.msra.mxu0 0
    %6268 = vmatprep.subr.bf16.mxu0 0
    %6269 = vmatpush1.bf16.msra.mxu0 0
    %6270 = vmatprep.subr.bf16.mxu0 0
    %6271 = vmatpush1.bf16.msra.mxu0 0
    %6272 = vmatprep.subr.bf16.mxu0 0
    %6273 = vmatpush1.bf16.msra.mxu0 0
    %6274 = vmatprep.subr.bf16.mxu0 0
    %6275 = vmatpush1.bf16.msra.mxu0 0
    %6276 = vmatprep.subr.bf16.mxu0 0
    %6277 = vmatpush1.bf16.msra.mxu0 0
    %6278 = vmatprep.subr.bf16.mxu0 0
    %6279 = vmatpush1.bf16.msra.mxu0 0
    %6280 = vmatprep.subr.bf16.mxu0 0
    %6281 = vmatpush1.bf16.msra.mxu0 0
    %6282 = vmatprep.subr.bf16.mxu0 0
    %6283 = vmatpush1.bf16.msra.mxu0 0
    %6284 = vmatprep.subr.bf16.mxu0 0
    %6285 = vmatpush1.bf16.msra.mxu0 0
    %6286 = vmatprep.subr.bf16.mxu0 0
    %6287 = vmatpush1.bf16.msra.mxu0 0
    %6288 = vmatprep.subr.bf16.mxu0 0
    %6289 = vmatpush1.bf16.msra.mxu0 0
    %6290 = vmatprep.subr.bf16.mxu0 0
    %6291 = vmatpush1.bf16.msra.mxu0 0
    %6292 = vmatprep.subr.bf16.mxu0 0
    %6293 = vmatpush1.bf16.msra.mxu0 0
    %6294 = vmatprep.mubr.bf16.mxu0 0
    %6295 = vmatmul.mubr.bf16.gmra.mrb[0].mxu0 %v6260
    %v6296 = vpop.f32.mrb[0].mxu0
    %v6297 = vadd.f32 %v6246, %v6296
    %v6298 = vpop.f32.mrb[0].mxu0
    %v6299 = vpop.f32.mrb[0].mxu0
    %v6300 = vadd.f32 %v6246, %v6299
    %v6301 = vpop.f32.mrb[0].mxu0
    %6302 = vdwg.mxu0
    %v6303 = vadd.f32 %v5223, %v6297
    %v6304 = vadd.f32 %v5224, %v6300
    %v6305 = vld [vmem:[%s6 + $0x1f] sm:$0x1]
    %v6306 = vld [vmem:[%s6 + $0x20] sm:$0x1]
    %v6307 = vsel %vm60, %v6303, 0.0
    %6308 = vadd.xlane.f32.xlu0 %v6307
    %v6309 = vpop.xlane.xlu0 %6308
    %v6310 = vsel %vm60, %v6304, 0.0
    %6311 = vadd.xlane.f32.xlu0 %v6310
    %v6312 = vpop.xlane.xlu0 %6311
    %v6313 = vmul.f32 %v6309, %v1131
    %v6314 = vmul.f32 %v6312, %v1131
    %v6315 = vmul.f32 %v6303, %v6303
    %v6316 = vmul.f32 %v6304, %v6304
    %v6317 = vsel %vm60, %v6315, 0.0
    %6318 = vadd.xlane.f32.xlu0 %v6317
    %v6319 = vpop.xlane.xlu0 %6318
    %v6320 = vsel %vm60, %v6316, 0.0
    %6321 = vadd.xlane.f32.xlu0 %v6320
    %v6322 = vpop.xlane.xlu0 %6321
    %v6323 = vmul.f32 %v6319, %v1131
    %v6324 = vmul.f32 %v6322, %v1131
    %v6325 = vmul.f32 %v6313, %v6313
    %v6326 = vmul.f32 %v6314, %v6314
    %v6327 = vsub.f32 %v6323, %v6325
    %v6328 = vsub.f32 %v6324, %v6326
    %v6329 = vsub.f32 %v6303, %v6313
    %v6330 = vsub.f32 %v6304, %v6314
    %v6331 = vadd.f32 %v6327, 1e-05
    %v6332 = vadd.f32 %v6328, 1e-05
    %v6333 = vrsqrt.pop %v6331
    %v6334 = vrsqrt.pop %v6332
    %v6335 = vmul.f32 %v6329, %v6333
    %v6336 = vmul.f32 %v6330, %v6334
    %v6337 = vlaneseq
    %v6338 = vshrl.u32 %v6337, 7
    %v6339 = vsub.s32 0, %v6338
    %v6340 = vrot.slane %v6305, %v6339
    %v6341 = vmul.f32 %v6335, %v6340
    %v6342 = vmul.f32 %v6336, %v6340
    %v6343 = vlaneseq
    %v6344 = vshrl.u32 %v6343, 7
    %v6345 = vsub.s32 0, %v6344
    %v6346 = vrot.slane %v6306, %v6345
    %v6347 = vadd.f32 %v6341, %v6346
    %v6348 = vadd.f32 %v6342, %v6346
    %v6349 = vld [vmem:[%s5 + $0x140] sm:$0xf]
    %v6350 = vld [vmem:[%s5 + $0x144] sm:$0xf]
    %v6351 = vld [vmem:[%s5 + $0x148] sm:$0xf]
    %v6352 = vld [vmem:[%s5 + $0x14c] sm:$0xf]
    %v6353 = vpack.c.bf16 %v6348, %v6347
    %v6354 = vld [vmem:[%s6 + $0x21] sm:$0x1]
    %v6355 = vlaneseq
    %v6356 = vshrl.u32 %v6355, 7
    %v6357 = vsub.s32 0, %v6356
    %v6358 = vrot.slane %v6354, %v6357
    %v6363 = vunpack.c.l.b16 %v6349
    %v6364 = vunpack.c.l.b16 %v6350
    %v6365 = vunpack.c.l.b16 %v6351
    %v6366 = vunpack.c.l.b16 %v6352
    %v6367 = vpack.c.b16 %v6364, %v6363
    %v6368 = vpack.c.b16 %v6366, %v6365
    %v6372 = vsel %vm60, %v6353, 0
    %6374 = vmatprep.subr.bf16.mxu0 0
    %6375 = vmatpush1.bf16.msra.mxu0 %v6367
    %6376 = vmatprep.subr.bf16.mxu0 0
    %6377 = vmatpush1.bf16.msra.mxu0 %v6368
    %6378 = vmatprep.subr.bf16.mxu0 0
    %6379 = vmatpush1.bf16.msra.mxu0 0
    %6380 = vmatprep.subr.bf16.mxu0 0
    %6381 = vmatpush1.bf16.msra.mxu0 0
    %6382 = vmatprep.subr.bf16.mxu0 0
    %6383 = vmatpush1.bf16.msra.mxu0 0
    %6384 = vmatprep.subr.bf16.mxu0 0
    %6385 = vmatpush1.bf16.msra.mxu0 0
    %6386 = vmatprep.subr.bf16.mxu0 0
    %6387 = vmatpush1.bf16.msra.mxu0 0
    %6388 = vmatprep.subr.bf16.mxu0 0
    %6389 = vmatpush1.bf16.msra.mxu0 0
    %6390 = vmatprep.subr.bf16.mxu0 0
    %6391 = vmatpush1.bf16.msra.mxu0 0
    %6392 = vmatprep.subr.bf16.mxu0 0
    %6393 = vmatpush1.bf16.msra.mxu0 0
    %6394 = vmatprep.subr.bf16.mxu0 0
    %6395 = vmatpush1.bf16.msra.mxu0 0
    %6396 = vmatprep.subr.bf16.mxu0 0
    %6397 = vmatpush1.bf16.msra.mxu0 0
    %6398 = vmatprep.subr.bf16.mxu0 0
    %6399 = vmatpush1.bf16.msra.mxu0 0
    %6400 = vmatprep.subr.bf16.mxu0 0
    %6401 = vmatpush1.bf16.msra.mxu0 0
    %6402 = vmatprep.subr.bf16.mxu0 0
    %6403 = vmatpush1.bf16.msra.mxu0 0
    %6404 = vmatprep.subr.bf16.mxu0 0
    %6405 = vmatpush1.bf16.msra.mxu0 0
    %6406 = vmatprep.mubr.bf16.mxu0 0
    %6407 = vmatmul.mubr.bf16.gmra.mrb[0].mxu0 %v6372
    %v6408 = vpop.f32.mrb[0].mxu0
    %v6409 = vadd.f32 %v6358, %v6408
    %v6410 = vpop.f32.mrb[0].mxu0
    %v6411 = vpop.f32.mrb[0].mxu0
    %v6412 = vadd.f32 %v6358, %v6411
    %v6413 = vpop.f32.mrb[0].mxu0
    %6414 = vdwg.mxu0
    %v6415 = vld [vmem:[%s5 + $0x150] sm:$0xf]
    %v6416 = vld [vmem:[%s5 + $0x154] sm:$0xf]
    %v6417 = vld [vmem:[%s5 + $0x158] sm:$0xf]
    %v6418 = vld [vmem:[%s5 + $0x15c] sm:$0xf]
    %v6419 = vld [vmem:[%s6 + $0x22] sm:$0x1]
    %v6420 = vlaneseq
    %v6421 = vshrl.u32 %v6420, 7
    %v6422 = vsub.s32 0, %v6421
    %v6423 = vrot.slane %v6419, %v6422
    %v6428 = vunpack.c.l.b16 %v6415
    %v6429 = vunpack.c.l.b16 %v6416
    %v6430 = vunpack.c.l.b16 %v6417
    %v6431 = vunpack.c.l.b16 %v6418
    %v6432 = vpack.c.b16 %v6429, %v6428
    %v6433 = vpack.c.b16 %v6431, %v6430
    %6436 = vmatprep.subr.bf16.mxu0 0
    %6437 = vmatpush1.bf16.msra.mxu0 %v6432
    %6438 = vmatprep.subr.bf16.mxu0 0
    %6439 = vmatpush1.bf16.msra.mxu0 %v6433
    %6440 = vmatprep.subr.bf16.mxu0 0
    %6441 = vmatpush1.bf16.msra.mxu0 0
    %6442 = vmatprep.subr.bf16.mxu0 0
    %6443 = vmatpush1.bf16.msra.mxu0 0
    %6444 = vmatprep.subr.bf16.mxu0 0
    %6445 = vmatpush1.bf16.msra.mxu0 0
    %6446 = vmatprep.subr.bf16.mxu0 0
    %6447 = vmatpush1.bf16.msra.mxu0 0
    %6448 = vmatprep.subr.bf16.mxu0 0
    %6449 = vmatpush1.bf16.msra.mxu0 0
    %6450 = vmatprep.subr.bf16.mxu0 0
    %6451 = vmatpush1.bf16.msra.mxu0 0
    %6452 = vmatprep.subr.bf16.mxu0 0
    %6453 = vmatpush1.bf16.msra.mxu0 0
    %6454 = vmatprep.subr.bf16.mxu0 0
    %6455 = vmatpush1.bf16.msra.mxu0 0
    %6456 = vmatprep.subr.bf16.mxu0 0
    %6457 = vmatpush1.bf16.msra.mxu0 0
    %6458 = vmatprep.subr.bf16.mxu0 0
    %6459 = vmatpush1.bf16.msra.mxu0 0
    %6460 = vmatprep.subr.bf16.mxu0 0
    %6461 = vmatpush1.bf16.msra.mxu0 0
    %6462 = vmatprep.subr.bf16.mxu0 0
    %6463 = vmatpush1.bf16.msra.mxu0 0
    %6464 = vmatprep.subr.bf16.mxu0 0
    %6465 = vmatpush1.bf16.msra.mxu0 0
    %6466 = vmatprep.subr.bf16.mxu0 0
    %6467 = vmatpush1.bf16.msra.mxu0 0
    %6468 = vmatprep.mubr.bf16.mxu0 0
    %6469 = vmatmul.mubr.bf16.gmra.mrb[0].mxu0 %v3916
    %v6470 = vpop.f32.mrb[0].mxu0
    %v6471 = vadd.f32 %v6423, %v6470
    %v6472 = vpop.f32.mrb[0].mxu0
    %v6473 = vpop.f32.mrb[0].mxu0
    %v6474 = vadd.f32 %v6423, %v6473
    %v6475 = vpop.f32.mrb[0].mxu0
    %6476 = vdwg.mxu0
    %6479 = vrot.lane.b32.xlu0 %v6409, 120
    %v6480 = vpop.permute.xlu0 %6479
    %6481 = vrot.lane.b32.xlu0 %v6412, 120
    %v6482 = vpop.permute.xlu0 %6481
    %6485 = vrot.lane.b32.xlu0 %v6409, 112
    %v6486 = vpop.permute.xlu0 %6485
    %6487 = vrot.lane.b32.xlu0 %v6412, 112
    %v6488 = vpop.permute.xlu0 %6487
    %6491 = vrot.lane.b32.xlu0 %v6409, 104
    %v6492 = vpop.permute.xlu0 %6491
    %6493 = vrot.lane.b32.xlu0 %v6412, 104
    %v6494 = vpop.permute.xlu0 %6493
    %v6497 = vpack.c.bf16 %v6409, %v6409
    %v6498 = vpack.c.bf16 %v6412, %v6412
    %v6499 = vpack.c.bf16 %v6480, %v6480
    %v6500 = vpack.c.bf16 %v6482, %v6482
    %v6501 = vpack.c.bf16 %v6486, %v6486
    %v6502 = vpack.c.bf16 %v6488, %v6488
    %v6503 = vpack.c.bf16 %v6492, %v6492
    %v6504 = vpack.c.bf16 %v6494, %v6494
    %6507 = vrot.lane.b32.xlu0 %v6471, 120
    %v6508 = vpop.permute.xlu0 %6507
    %6509 = vrot.lane.b32.xlu0 %v6474, 120
    %v6510 = vpop.permute.xlu0 %6509
    %6513 = vrot.lane.b32.xlu0 %v6471, 112
    %v6514 = vpop.permute.xlu0 %6513
    %6515 = vrot.lane.b32.xlu0 %v6474, 112
    %v6516 = vpop.permute.xlu0 %6515
    %6519 = vrot.lane.b32.xlu0 %v6471, 104
    %v6520 = vpop.permute.xlu0 %6519
    %6521 = vrot.lane.b32.xlu0 %v6474, 104
    %v6522 = vpop.permute.xlu0 %6521
    %v6525 = vpack.c.bf16 %v6471, %v6471
    %v6526 = vpack.c.bf16 %v6474, %v6474
    %v6527 = vpack.c.bf16 %v6508, %v6508
    %v6528 = vpack.c.bf16 %v6510, %v6510
    %v6529 = vpack.c.bf16 %v6514, %v6514
    %v6530 = vpack.c.bf16 %v6516, %v6516
    %v6531 = vpack.c.bf16 %v6520, %v6520
    %v6532 = vpack.c.bf16 %v6522, %v6522
    %v6534 = vsel %vm136, %v6497, 0
    %v6537 = vsel %vm136, %v6525, 0
    %6539 = vmatprep.subr.bf16.mxu0 0
    %6540 = vmatpush1.bf16.xpose.msra.mxu0 %v6537
    %6541 = vmatprep.subr.bf16.mxu0 0
    %6542 = vmatpush1.bf16.xpose.msra.mxu0 0
    %6543 = vmatprep.subr.bf16.mxu0 0
    %6544 = vmatpush1.bf16.xpose.msra.mxu0 0
    %6545 = vmatprep.subr.bf16.mxu0 0
    %6546 = vmatpush1.bf16.xpose.msra.mxu0 0
    %6547 = vmatprep.subr.bf16.mxu0 0
    %6548 = vmatpush1.bf16.xpose.msra.mxu0 0
    %6549 = vmatprep.subr.bf16.mxu0 0
    %6550 = vmatpush1.bf16.xpose.msra.mxu0 0
    %6551 = vmatprep.subr.bf16.mxu0 0
    %6552 = vmatpush1.bf16.xpose.msra.mxu0 0
    %6553 = vmatprep.subr.bf16.mxu0 0
    %6554 = vmatpush1.bf16.xpose.msra.mxu0 0
    %6555 = vmatprep.subr.bf16.mxu0 0
    %6556 = vmatpush1.bf16.xpose.msra.mxu0 0
    %6557 = vmatprep.subr.bf16.mxu0 0
    %6558 = vmatpush1.bf16.xpose.msra.mxu0 0
    %6559 = vmatprep.subr.bf16.mxu0 0
    %6560 = vmatpush1.bf16.xpose.msra.mxu0 0
    %6561 = vmatprep.subr.bf16.mxu0 0
    %6562 = vmatpush1.bf16.xpose.msra.mxu0 0
    %6563 = vmatprep.subr.bf16.mxu0 0
    %6564 = vmatpush1.bf16.xpose.msra.mxu0 0
    %6565 = vmatprep.subr.bf16.mxu0 0
    %6566 = vmatpush1.bf16.xpose.msra.mxu0 0
    %6567 = vmatprep.subr.bf16.mxu0 0
    %6568 = vmatpush1.bf16.xpose.msra.mxu0 0
    %6569 = vmatprep.subr.bf16.mxu0 0
    %6570 = vmatpush1.bf16.xpose.msra.mxu0 0
    %6571 = vmatprep.mubr.bf16.mxu0 0
    %6572 = vmatmul.mubr.bf16.gmra.mrb[0].mxu0 %v6534
    %v6573 = vpop.f32.mrb[0].mxu0
    %v6574 = vadd.f32 0.0, %v6573
    %v6575 = vpop.f32.mrb[0].mxu0
    %v6576 = vpop.f32.mrb[0].mxu0
    %v6577 = vpop.f32.mrb[0].mxu0
    %6578 = vdwg.mxu0
    %v6580 = vsel %vm136, %v6498, 0
    %v6583 = vsel %vm136, %v6526, 0
    %6585 = vmatprep.subr.bf16.mxu0 0
    %6586 = vmatpush1.bf16.xpose.msra.mxu0 %v6583
    %6587 = vmatprep.subr.bf16.mxu0 0
    %6588 = vmatpush1.bf16.xpose.msra.mxu0 0
    %6589 = vmatprep.subr.bf16.mxu0 0
    %6590 = vmatpush1.bf16.xpose.msra.mxu0 0
    %6591 = vmatprep.subr.bf16.mxu0 0
    %6592 = vmatpush1.bf16.xpose.msra.mxu0 0
    %6593 = vmatprep.subr.bf16.mxu0 0
    %6594 = vmatpush1.bf16.xpose.msra.mxu0 0
    %6595 = vmatprep.subr.bf16.mxu0 0
    %6596 = vmatpush1.bf16.xpose.msra.mxu0 0
    %6597 = vmatprep.subr.bf16.mxu0 0
    %6598 = vmatpush1.bf16.xpose.msra.mxu0 0
    %6599 = vmatprep.subr.bf16.mxu0 0
    %6600 = vmatpush1.bf16.xpose.msra.mxu0 0
    %6601 = vmatprep.subr.bf16.mxu0 0
    %6602 = vmatpush1.bf16.xpose.msra.mxu0 0
    %6603 = vmatprep.subr.bf16.mxu0 0
    %6604 = vmatpush1.bf16.xpose.msra.mxu0 0
    %6605 = vmatprep.subr.bf16.mxu0 0
    %6606 = vmatpush1.bf16.xpose.msra.mxu0 0
    %6607 = vmatprep.subr.bf16.mxu0 0
    %6608 = vmatpush1.bf16.xpose.msra.mxu0 0
    %6609 = vmatprep.subr.bf16.mxu0 0
    %6610 = vmatpush1.bf16.xpose.msra.mxu0 0
    %6611 = vmatprep.subr.bf16.mxu0 0
    %6612 = vmatpush1.bf16.xpose.msra.mxu0 0
    %6613 = vmatprep.subr.bf16.mxu0 0
    %6614 = vmatpush1.bf16.xpose.msra.mxu0 0
    %6615 = vmatprep.subr.bf16.mxu0 0
    %6616 = vmatpush1.bf16.xpose.msra.mxu0 0
    %6617 = vmatprep.mubr.bf16.mxu0 0
    %6618 = vmatmul.mubr.bf16.gmra.mrb[0].mxu0 %v6580
    %v6619 = vpop.f32.mrb[0].mxu0
    %v6620 = vadd.f32 0.0, %v6619
    %v6621 = vpop.f32.mrb[0].mxu0
    %v6622 = vpop.f32.mrb[0].mxu0
    %v6623 = vpop.f32.mrb[0].mxu0
    %6624 = vdwg.mxu0
    %v6626 = vsel %vm136, %v6499, 0
    %v6629 = vsel %vm136, %v6527, 0
    %6631 = vmatprep.subr.bf16.mxu0 0
    %6632 = vmatpush1.bf16.xpose.msra.mxu0 %v6629
    %6633 = vmatprep.subr.bf16.mxu0 0
    %6634 = vmatpush1.bf16.xpose.msra.mxu0 0
    %6635 = vmatprep.subr.bf16.mxu0 0
    %6636 = vmatpush1.bf16.xpose.msra.mxu0 0
    %6637 = vmatprep.subr.bf16.mxu0 0
    %6638 = vmatpush1.bf16.xpose.msra.mxu0 0
    %6639 = vmatprep.subr.bf16.mxu0 0
    %6640 = vmatpush1.bf16.xpose.msra.mxu0 0
    %6641 = vmatprep.subr.bf16.mxu0 0
    %6642 = vmatpush1.bf16.xpose.msra.mxu0 0
    %6643 = vmatprep.subr.bf16.mxu0 0
    %6644 = vmatpush1.bf16.xpose.msra.mxu0 0
    %6645 = vmatprep.subr.bf16.mxu0 0
    %6646 = vmatpush1.bf16.xpose.msra.mxu0 0
    %6647 = vmatprep.subr.bf16.mxu0 0
    %6648 = vmatpush1.bf16.xpose.msra.mxu0 0
    %6649 = vmatprep.subr.bf16.mxu0 0
    %6650 = vmatpush1.bf16.xpose.msra.mxu0 0
    %6651 = vmatprep.subr.bf16.mxu0 0
    %6652 = vmatpush1.bf16.xpose.msra.mxu0 0
    %6653 = vmatprep.subr.bf16.mxu0 0
    %6654 = vmatpush1.bf16.xpose.msra.mxu0 0
    %6655 = vmatprep.subr.bf16.mxu0 0
    %6656 = vmatpush1.bf16.xpose.msra.mxu0 0
    %6657 = vmatprep.subr.bf16.mxu0 0
    %6658 = vmatpush1.bf16.xpose.msra.mxu0 0
    %6659 = vmatprep.subr.bf16.mxu0 0
    %6660 = vmatpush1.bf16.xpose.msra.mxu0 0
    %6661 = vmatprep.subr.bf16.mxu0 0
    %6662 = vmatpush1.bf16.xpose.msra.mxu0 0
    %6663 = vmatprep.mubr.bf16.mxu0 0
    %6664 = vmatmul.mubr.bf16.gmra.mrb[0].mxu0 %v6626
    %v6665 = vpop.f32.mrb[0].mxu0
    %v6666 = vadd.f32 0.0, %v6665
    %v6667 = vpop.f32.mrb[0].mxu0
    %v6668 = vpop.f32.mrb[0].mxu0
    %v6669 = vpop.f32.mrb[0].mxu0
    %6670 = vdwg.mxu0
    %v6672 = vsel %vm136, %v6500, 0
    %v6675 = vsel %vm136, %v6528, 0
    %6677 = vmatprep.subr.bf16.mxu0 0
    %6678 = vmatpush1.bf16.xpose.msra.mxu0 %v6675
    %6679 = vmatprep.subr.bf16.mxu0 0
    %6680 = vmatpush1.bf16.xpose.msra.mxu0 0
    %6681 = vmatprep.subr.bf16.mxu0 0
    %6682 = vmatpush1.bf16.xpose.msra.mxu0 0
    %6683 = vmatprep.subr.bf16.mxu0 0
    %6684 = vmatpush1.bf16.xpose.msra.mxu0 0
    %6685 = vmatprep.subr.bf16.mxu0 0
    %6686 = vmatpush1.bf16.xpose.msra.mxu0 0
    %6687 = vmatprep.subr.bf16.mxu0 0
    %6688 = vmatpush1.bf16.xpose.msra.mxu0 0
    %6689 = vmatprep.subr.bf16.mxu0 0
    %6690 = vmatpush1.bf16.xpose.msra.mxu0 0
    %6691 = vmatprep.subr.bf16.mxu0 0
    %6692 = vmatpush1.bf16.xpose.msra.mxu0 0
    %6693 = vmatprep.subr.bf16.mxu0 0
    %6694 = vmatpush1.bf16.xpose.msra.mxu0 0
    %6695 = vmatprep.subr.bf16.mxu0 0
    %6696 = vmatpush1.bf16.xpose.msra.mxu0 0
    %6697 = vmatprep.subr.bf16.mxu0 0
    %6698 = vmatpush1.bf16.xpose.msra.mxu0 0
    %6699 = vmatprep.subr.bf16.mxu0 0
    %6700 = vmatpush1.bf16.xpose.msra.mxu0 0
    %6701 = vmatprep.subr.bf16.mxu0 0
    %6702 = vmatpush1.bf16.xpose.msra.mxu0 0
    %6703 = vmatprep.subr.bf16.mxu0 0
    %6704 = vmatpush1.bf16.xpose.msra.mxu0 0
    %6705 = vmatprep.subr.bf16.mxu0 0
    %6706 = vmatpush1.bf16.xpose.msra.mxu0 0
    %6707 = vmatprep.subr.bf16.mxu0 0
    %6708 = vmatpush1.bf16.xpose.msra.mxu0 0
    %6709 = vmatprep.mubr.bf16.mxu0 0
    %6710 = vmatmul.mubr.bf16.gmra.mrb[0].mxu0 %v6672
    %v6711 = vpop.f32.mrb[0].mxu0
    %v6712 = vadd.f32 0.0, %v6711
    %v6713 = vpop.f32.mrb[0].mxu0
    %v6714 = vpop.f32.mrb[0].mxu0
    %v6715 = vpop.f32.mrb[0].mxu0
    %6716 = vdwg.mxu0
    %v6718 = vsel %vm136, %v6501, 0
    %v6721 = vsel %vm136, %v6529, 0
    %6723 = vmatprep.subr.bf16.mxu0 0
    %6724 = vmatpush1.bf16.xpose.msra.mxu0 %v6721
    %6725 = vmatprep.subr.bf16.mxu0 0
    %6726 = vmatpush1.bf16.xpose.msra.mxu0 0
    %6727 = vmatprep.subr.bf16.mxu0 0
    %6728 = vmatpush1.bf16.xpose.msra.mxu0 0
    %6729 = vmatprep.subr.bf16.mxu0 0
    %6730 = vmatpush1.bf16.xpose.msra.mxu0 0
    %6731 = vmatprep.subr.bf16.mxu0 0
    %6732 = vmatpush1.bf16.xpose.msra.mxu0 0
    %6733 = vmatprep.subr.bf16.mxu0 0
    %6734 = vmatpush1.bf16.xpose.msra.mxu0 0
    %6735 = vmatprep.subr.bf16.mxu0 0
    %6736 = vmatpush1.bf16.xpose.msra.mxu0 0
    %6737 = vmatprep.subr.bf16.mxu0 0
    %6738 = vmatpush1.bf16.xpose.msra.mxu0 0
    %6739 = vmatprep.subr.bf16.mxu0 0
    %6740 = vmatpush1.bf16.xpose.msra.mxu0 0
    %6741 = vmatprep.subr.bf16.mxu0 0
    %6742 = vmatpush1.bf16.xpose.msra.mxu0 0
    %6743 = vmatprep.subr.bf16.mxu0 0
    %6744 = vmatpush1.bf16.xpose.msra.mxu0 0
    %6745 = vmatprep.subr.bf16.mxu0 0
    %6746 = vmatpush1.bf16.xpose.msra.mxu0 0
    %6747 = vmatprep.subr.bf16.mxu0 0
    %6748 = vmatpush1.bf16.xpose.msra.mxu0 0
    %6749 = vmatprep.subr.bf16.mxu0 0
    %6750 = vmatpush1.bf16.xpose.msra.mxu0 0
    %6751 = vmatprep.subr.bf16.mxu0 0
    %6752 = vmatpush1.bf16.xpose.msra.mxu0 0
    %6753 = vmatprep.subr.bf16.mxu0 0
    %6754 = vmatpush1.bf16.xpose.msra.mxu0 0
    %6755 = vmatprep.mubr.bf16.mxu0 0
    %6756 = vmatmul.mubr.bf16.gmra.mrb[0].mxu0 %v6718
    %v6757 = vpop.f32.mrb[0].mxu0
    %v6758 = vadd.f32 0.0, %v6757
    %v6759 = vpop.f32.mrb[0].mxu0
    %v6760 = vpop.f32.mrb[0].mxu0
    %v6761 = vpop.f32.mrb[0].mxu0
    %6762 = vdwg.mxu0
    %v6764 = vsel %vm136, %v6502, 0
    %v6767 = vsel %vm136, %v6530, 0
    %6769 = vmatprep.subr.bf16.mxu0 0
    %6770 = vmatpush1.bf16.xpose.msra.mxu0 %v6767
    %6771 = vmatprep.subr.bf16.mxu0 0
    %6772 = vmatpush1.bf16.xpose.msra.mxu0 0
    %6773 = vmatprep.subr.bf16.mxu0 0
    %6774 = vmatpush1.bf16.xpose.msra.mxu0 0
    %6775 = vmatprep.subr.bf16.mxu0 0
    %6776 = vmatpush1.bf16.xpose.msra.mxu0 0
    %6777 = vmatprep.subr.bf16.mxu0 0
    %6778 = vmatpush1.bf16.xpose.msra.mxu0 0
    %6779 = vmatprep.subr.bf16.mxu0 0
    %6780 = vmatpush1.bf16.xpose.msra.mxu0 0
    %6781 = vmatprep.subr.bf16.mxu0 0
    %6782 = vmatpush1.bf16.xpose.msra.mxu0 0
    %6783 = vmatprep.subr.bf16.mxu0 0
    %6784 = vmatpush1.bf16.xpose.msra.mxu0 0
    %6785 = vmatprep.subr.bf16.mxu0 0
    %6786 = vmatpush1.bf16.xpose.msra.mxu0 0
    %6787 = vmatprep.subr.bf16.mxu0 0
    %6788 = vmatpush1.bf16.xpose.msra.mxu0 0
    %6789 = vmatprep.subr.bf16.mxu0 0
    %6790 = vmatpush1.bf16.xpose.msra.mxu0 0
    %6791 = vmatprep.subr.bf16.mxu0 0
    %6792 = vmatpush1.bf16.xpose.msra.mxu0 0
    %6793 = vmatprep.subr.bf16.mxu0 0
    %6794 = vmatpush1.bf16.xpose.msra.mxu0 0
    %6795 = vmatprep.subr.bf16.mxu0 0
    %6796 = vmatpush1.bf16.xpose.msra.mxu0 0
    %6797 = vmatprep.subr.bf16.mxu0 0
    %6798 = vmatpush1.bf16.xpose.msra.mxu0 0
    %6799 = vmatprep.subr.bf16.mxu0 0
    %6800 = vmatpush1.bf16.xpose.msra.mxu0 0
    %6801 = vmatprep.mubr.bf16.mxu0 0
    %6802 = vmatmul.mubr.bf16.gmra.mrb[0].mxu0 %v6764
    %v6803 = vpop.f32.mrb[0].mxu0
    %v6804 = vadd.f32 0.0, %v6803
    %v6805 = vpop.f32.mrb[0].mxu0
    %v6806 = vpop.f32.mrb[0].mxu0
    %v6807 = vpop.f32.mrb[0].mxu0
    %6808 = vdwg.mxu0
    %v6810 = vsel %vm136, %v6503, 0
    %v6813 = vsel %vm136, %v6531, 0
    %6815 = vmatprep.subr.bf16.mxu0 0
    %6816 = vmatpush1.bf16.xpose.msra.mxu0 %v6813
    %6817 = vmatprep.subr.bf16.mxu0 0
    %6818 = vmatpush1.bf16.xpose.msra.mxu0 0
    %6819 = vmatprep.subr.bf16.mxu0 0
    %6820 = vmatpush1.bf16.xpose.msra.mxu0 0
    %6821 = vmatprep.subr.bf16.mxu0 0
    %6822 = vmatpush1.bf16.xpose.msra.mxu0 0
    %6823 = vmatprep.subr.bf16.mxu0 0
    %6824 = vmatpush1.bf16.xpose.msra.mxu0 0
    %6825 = vmatprep.subr.bf16.mxu0 0
    %6826 = vmatpush1.bf16.xpose.msra.mxu0 0
    %6827 = vmatprep.subr.bf16.mxu0 0
    %6828 = vmatpush1.bf16.xpose.msra.mxu0 0
    %6829 = vmatprep.subr.bf16.mxu0 0
    %6830 = vmatpush1.bf16.xpose.msra.mxu0 0
    %6831 = vmatprep.subr.bf16.mxu0 0
    %6832 = vmatpush1.bf16.xpose.msra.mxu0 0
    %6833 = vmatprep.subr.bf16.mxu0 0
    %6834 = vmatpush1.bf16.xpose.msra.mxu0 0
    %6835 = vmatprep.subr.bf16.mxu0 0
    %6836 = vmatpush1.bf16.xpose.msra.mxu0 0
    %6837 = vmatprep.subr.bf16.mxu0 0
    %6838 = vmatpush1.bf16.xpose.msra.mxu0 0
    %6839 = vmatprep.subr.bf16.mxu0 0
    %6840 = vmatpush1.bf16.xpose.msra.mxu0 0
    %6841 = vmatprep.subr.bf16.mxu0 0
    %6842 = vmatpush1.bf16.xpose.msra.mxu0 0
    %6843 = vmatprep.subr.bf16.mxu0 0
    %6844 = vmatpush1.bf16.xpose.msra.mxu0 0
    %6845 = vmatprep.subr.bf16.mxu0 0
    %6846 = vmatpush1.bf16.xpose.msra.mxu0 0
    %6847 = vmatprep.mubr.bf16.mxu0 0
    %6848 = vmatmul.mubr.bf16.gmra.mrb[0].mxu0 %v6810
    %v6849 = vpop.f32.mrb[0].mxu0
    %v6850 = vadd.f32 0.0, %v6849
    %v6851 = vpop.f32.mrb[0].mxu0
    %v6852 = vpop.f32.mrb[0].mxu0
    %v6853 = vpop.f32.mrb[0].mxu0
    %6854 = vdwg.mxu0
    %v6856 = vsel %vm136, %v6504, 0
    %v6859 = vsel %vm136, %v6532, 0
    %6861 = vmatprep.subr.bf16.mxu0 0
    %6862 = vmatpush1.bf16.xpose.msra.mxu0 %v6859
    %6863 = vmatprep.subr.bf16.mxu0 0
    %6864 = vmatpush1.bf16.xpose.msra.mxu0 0
    %6865 = vmatprep.subr.bf16.mxu0 0
    %6866 = vmatpush1.bf16.xpose.msra.mxu0 0
    %6867 = vmatprep.subr.bf16.mxu0 0
    %6868 = vmatpush1.bf16.xpose.msra.mxu0 0
    %6869 = vmatprep.subr.bf16.mxu0 0
    %6870 = vmatpush1.bf16.xpose.msra.mxu0 0
    %6871 = vmatprep.subr.bf16.mxu0 0
    %6872 = vmatpush1.bf16.xpose.msra.mxu0 0
    %6873 = vmatprep.subr.bf16.mxu0 0
    %6874 = vmatpush1.bf16.xpose.msra.mxu0 0
    %6875 = vmatprep.subr.bf16.mxu0 0
    %6876 = vmatpush1.bf16.xpose.msra.mxu0 0
    %6877 = vmatprep.subr.bf16.mxu0 0
    %6878 = vmatpush1.bf16.xpose.msra.mxu0 0
    %6879 = vmatprep.subr.bf16.mxu0 0
    %6880 = vmatpush1.bf16.xpose.msra.mxu0 0
    %6881 = vmatprep.subr.bf16.mxu0 0
    %6882 = vmatpush1.bf16.xpose.msra.mxu0 0
    %6883 = vmatprep.subr.bf16.mxu0 0
    %6884 = vmatpush1.bf16.xpose.msra.mxu0 0
    %6885 = vmatprep.subr.bf16.mxu0 0
    %6886 = vmatpush1.bf16.xpose.msra.mxu0 0
    %6887 = vmatprep.subr.bf16.mxu0 0
    %6888 = vmatpush1.bf16.xpose.msra.mxu0 0
    %6889 = vmatprep.subr.bf16.mxu0 0
    %6890 = vmatpush1.bf16.xpose.msra.mxu0 0
    %6891 = vmatprep.subr.bf16.mxu0 0
    %6892 = vmatpush1.bf16.xpose.msra.mxu0 0
    %6893 = vmatprep.mubr.bf16.mxu0 0
    %6894 = vmatmul.mubr.bf16.gmra.mrb[0].mxu0 %v6856
    %v6895 = vpop.f32.mrb[0].mxu0
    %v6896 = vadd.f32 0.0, %v6895
    %v6897 = vpop.f32.mrb[0].mxu0
    %v6898 = vpop.f32.mrb[0].mxu0
    %v6899 = vpop.f32.mrb[0].mxu0
    %6900 = vdwg.mxu0
    %v6901 = vmul.f32 %v6574, 0.35355338
    %v6902 = vmul.f32 %v6620, 0.35355338
    %v6903 = vmul.f32 %v6666, 0.35355338
    %v6904 = vmul.f32 %v6712, 0.35355338
    %v6905 = vmul.f32 %v6758, 0.35355338
    %v6906 = vmul.f32 %v6804, 0.35355338
    %v6907 = vmul.f32 %v6850, 0.35355338
    %v6908 = vmul.f32 %v6896, 0.35355338
    %v6909 = vadd.f32 %v6901, %v2695
    %v6910 = vadd.f32 %v6902, %v2696
    %v6911 = vadd.f32 %v6903, %v2697
    %v6912 = vadd.f32 %v6904, %v2698
    %v6913 = vadd.f32 %v6905, %v2699
    %v6914 = vadd.f32 %v6906, %v2700
    %v6915 = vadd.f32 %v6907, %v2701
    %v6916 = vadd.f32 %v6908, %v2702
    %v6917 = vsel %vm136, %v6909, -inf
    %6918 = vmax.xlane.f32.xlu0 %v6917
    %v6919 = vpop.xlane.xlu0 %6918
    %v6920 = vsel %vm136, %v6910, -inf
    %6921 = vmax.xlane.f32.xlu0 %v6920
    %v6922 = vpop.xlane.xlu0 %6921
    %v6923 = vsel %vm136, %v6911, -inf
    %6924 = vmax.xlane.f32.xlu0 %v6923
    %v6925 = vpop.xlane.xlu0 %6924
    %v6926 = vsel %vm136, %v6912, -inf
    %6927 = vmax.xlane.f32.xlu0 %v6926
    %v6928 = vpop.xlane.xlu0 %6927
    %v6929 = vsel %vm136, %v6913, -inf
    %6930 = vmax.xlane.f32.xlu0 %v6929
    %v6931 = vpop.xlane.xlu0 %6930
    %v6932 = vsel %vm136, %v6914, -inf
    %6933 = vmax.xlane.f32.xlu0 %v6932
    %v6934 = vpop.xlane.xlu0 %6933
    %v6935 = vsel %vm136, %v6915, -inf
    %6936 = vmax.xlane.f32.xlu0 %v6935
    %v6937 = vpop.xlane.xlu0 %6936
    %v6938 = vsel %vm136, %v6916, -inf
    %6939 = vmax.xlane.f32.xlu0 %v6938
    %v6940 = vpop.xlane.xlu0 %6939
    %v6941 = vsub.f32 %v6909, %v6919
    %v6942 = vsub.f32 %v6910, %v6922
    %v6943 = vsub.f32 %v6911, %v6925
    %v6944 = vsub.f32 %v6912, %v6928
    %v6945 = vsub.f32 %v6913, %v6931
    %v6946 = vsub.f32 %v6914, %v6934
    %v6947 = vsub.f32 %v6915, %v6937
    %v6948 = vsub.f32 %v6916, %v6940
    %v6949 = vmul.f32 %v6941, 1.442695
    %v6950 = vpow.pop %v6949
    %v6951 = vmul.f32 %v6942, 1.442695
    %v6952 = vpow.pop %v6951
    %v6953 = vmul.f32 %v6943, 1.442695
    %v6954 = vpow.pop %v6953
    %v6955 = vmul.f32 %v6944, 1.442695
    %v6956 = vpow.pop %v6955
    %v6957 = vmul.f32 %v6945, 1.442695
    %v6958 = vpow.pop %v6957
    %v6959 = vmul.f32 %v6946, 1.442695
    %v6960 = vpow.pop %v6959
    %v6961 = vmul.f32 %v6947, 1.442695
    %v6962 = vpow.pop %v6961
    %v6963 = vmul.f32 %v6948, 1.442695
    %v6964 = vpow.pop %v6963
    %v6965 = vsel %vm136, %v6950, 0.0
    %6966 = vadd.xlane.f32.xlu0 %v6965
    %v6967 = vpop.xlane.xlu0 %6966
    %v6968 = vsel %vm136, %v6952, 0.0
    %6969 = vadd.xlane.f32.xlu0 %v6968
    %v6970 = vpop.xlane.xlu0 %6969
    %v6971 = vsel %vm136, %v6954, 0.0
    %6972 = vadd.xlane.f32.xlu0 %v6971
    %v6973 = vpop.xlane.xlu0 %6972
    %v6974 = vsel %vm136, %v6956, 0.0
    %6975 = vadd.xlane.f32.xlu0 %v6974
    %v6976 = vpop.xlane.xlu0 %6975
    %v6977 = vsel %vm136, %v6958, 0.0
    %6978 = vadd.xlane.f32.xlu0 %v6977
    %v6979 = vpop.xlane.xlu0 %6978
    %v6980 = vsel %vm136, %v6960, 0.0
    %6981 = vadd.xlane.f32.xlu0 %v6980
    %v6982 = vpop.xlane.xlu0 %6981
    %v6983 = vsel %vm136, %v6962, 0.0
    %6984 = vadd.xlane.f32.xlu0 %v6983
    %v6985 = vpop.xlane.xlu0 %6984
    %v6986 = vsel %vm136, %v6964, 0.0
    %6987 = vadd.xlane.f32.xlu0 %v6986
    %v6988 = vpop.xlane.xlu0 %6987
    %v6989 = vrcp.pop %v6967
    %v6990 = vrcp.pop %v6970
    %v6991 = vrcp.pop %v6973
    %v6992 = vrcp.pop %v6976
    %v6993 = vrcp.pop %v6979
    %v6994 = vrcp.pop %v6982
    %v6995 = vrcp.pop %v6985
    %v6996 = vrcp.pop %v6988
    %v6997 = vmul.f32 %v6950, %v6989
    %v6998 = vmul.f32 %v6952, %v6990
    %v6999 = vmul.f32 %v6954, %v6991
    %v7000 = vmul.f32 %v6956, %v6992
    %v7001 = vmul.f32 %v6958, %v6993
    %v7002 = vmul.f32 %v6960, %v6994
    %v7003 = vmul.f32 %v6962, %v6995
    %v7004 = vmul.f32 %v6964, %v6996
    %v7005 = vpack.c.bf16 %v6997, %v6997
    %v7006 = vpack.c.bf16 %v6998, %v6998
    %v7007 = vpack.c.bf16 %v6999, %v6999
    %v7008 = vpack.c.bf16 %v7000, %v7000
    %v7009 = vpack.c.bf16 %v7001, %v7001
    %v7010 = vpack.c.bf16 %v7002, %v7002
    %v7011 = vpack.c.bf16 %v7003, %v7003
    %v7012 = vpack.c.bf16 %v7004, %v7004
    %7014 = vrot.lane.b32.xlu0 %v6525, 96
    %v7015 = vpop.permute.xlu0 %7014
    %v7017 = vsel %vm136, %v7005, 0
    %v7020 = vsel %vm643, %v7015, 0
    %7022 = vmatprep.subr.bf16.mxu0 0
    %7023 = vmatpush1.bf16.msra.mxu0 %v7020
    %7024 = vmatprep.subr.bf16.mxu0 0
    %7025 = vmatpush1.bf16.msra.mxu0 0
    %7026 = vmatprep.subr.bf16.mxu0 0
    %7027 = vmatpush1.bf16.msra.mxu0 0
    %7028 = vmatprep.subr.bf16.mxu0 0
    %7029 = vmatpush1.bf16.msra.mxu0 0
    %7030 = vmatprep.subr.bf16.mxu0 0
    %7031 = vmatpush1.bf16.msra.mxu0 0
    %7032 = vmatprep.subr.bf16.mxu0 0
    %7033 = vmatpush1.bf16.msra.mxu0 0
    %7034 = vmatprep.subr.bf16.mxu0 0
    %7035 = vmatpush1.bf16.msra.mxu0 0
    %7036 = vmatprep.subr.bf16.mxu0 0
    %7037 = vmatpush1.bf16.msra.mxu0 0
    %7038 = vmatprep.subr.bf16.mxu0 0
    %7039 = vmatpush1.bf16.msra.mxu0 0
    %7040 = vmatprep.subr.bf16.mxu0 0
    %7041 = vmatpush1.bf16.msra.mxu0 0
    %7042 = vmatprep.subr.bf16.mxu0 0
    %7043 = vmatpush1.bf16.msra.mxu0 0
    %7044 = vmatprep.subr.bf16.mxu0 0
    %7045 = vmatpush1.bf16.msra.mxu0 0
    %7046 = vmatprep.subr.bf16.mxu0 0
    %7047 = vmatpush1.bf16.msra.mxu0 0
    %7048 = vmatprep.subr.bf16.mxu0 0
    %7049 = vmatpush1.bf16.msra.mxu0 0
    %7050 = vmatprep.subr.bf16.mxu0 0
    %7051 = vmatpush1.bf16.msra.mxu0 0
    %7052 = vmatprep.subr.bf16.mxu0 0
    %7053 = vmatpush1.bf16.msra.mxu0 0
    %7054 = vmatprep.mubr.bf16.mxu0 0
    %7055 = vmatmul.mubr.bf16.gmra.mrb[0].mxu0 %v7017
    %v7056 = vpop.f32.mrb[0].mxu0
    %v7057 = vadd.f32 0.0, %v7056
    %v7058 = vpop.f32.mrb[0].mxu0
    %v7059 = vpop.f32.mrb[0].mxu0
    %v7060 = vpop.f32.mrb[0].mxu0
    %7061 = vdwg.mxu0
    %7063 = vrot.lane.b32.xlu0 %v6526, 96
    %v7064 = vpop.permute.xlu0 %7063
    %v7066 = vsel %vm136, %v7006, 0
    %v7069 = vsel %vm643, %v7064, 0
    %7071 = vmatprep.subr.bf16.mxu0 0
    %7072 = vmatpush1.bf16.msra.mxu0 %v7069
    %7073 = vmatprep.subr.bf16.mxu0 0
    %7074 = vmatpush1.bf16.msra.mxu0 0
    %7075 = vmatprep.subr.bf16.mxu0 0
    %7076 = vmatpush1.bf16.msra.mxu0 0
    %7077 = vmatprep.subr.bf16.mxu0 0
    %7078 = vmatpush1.bf16.msra.mxu0 0
    %7079 = vmatprep.subr.bf16.mxu0 0
    %7080 = vmatpush1.bf16.msra.mxu0 0
    %7081 = vmatprep.subr.bf16.mxu0 0
    %7082 = vmatpush1.bf16.msra.mxu0 0
    %7083 = vmatprep.subr.bf16.mxu0 0
    %7084 = vmatpush1.bf16.msra.mxu0 0
    %7085 = vmatprep.subr.bf16.mxu0 0
    %7086 = vmatpush1.bf16.msra.mxu0 0
    %7087 = vmatprep.subr.bf16.mxu0 0
    %7088 = vmatpush1.bf16.msra.mxu0 0
    %7089 = vmatprep.subr.bf16.mxu0 0
    %7090 = vmatpush1.bf16.msra.mxu0 0
    %7091 = vmatprep.subr.bf16.mxu0 0
    %7092 = vmatpush1.bf16.msra.mxu0 0
    %7093 = vmatprep.subr.bf16.mxu0 0
    %7094 = vmatpush1.bf16.msra.mxu0 0
    %7095 = vmatprep.subr.bf16.mxu0 0
    %7096 = vmatpush1.bf16.msra.mxu0 0
    %7097 = vmatprep.subr.bf16.mxu0 0
    %7098 = vmatpush1.bf16.msra.mxu0 0
    %7099 = vmatprep.subr.bf16.mxu0 0
    %7100 = vmatpush1.bf16.msra.mxu0 0
    %7101 = vmatprep.subr.bf16.mxu0 0
    %7102 = vmatpush1.bf16.msra.mxu0 0
    %7103 = vmatprep.mubr.bf16.mxu0 0
    %7104 = vmatmul.mubr.bf16.gmra.mrb[0].mxu0 %v7066
    %v7105 = vpop.f32.mrb[0].mxu0
    %v7106 = vadd.f32 0.0, %v7105
    %v7107 = vpop.f32.mrb[0].mxu0
    %v7108 = vpop.f32.mrb[0].mxu0
    %v7109 = vpop.f32.mrb[0].mxu0
    %7110 = vdwg.mxu0
    %7112 = vrot.lane.b32.xlu0 %v6527, 96
    %v7113 = vpop.permute.xlu0 %7112
    %v7115 = vsel %vm136, %v7007, 0
    %v7118 = vsel %vm643, %v7113, 0
    %7120 = vmatprep.subr.bf16.mxu0 0
    %7121 = vmatpush1.bf16.msra.mxu0 %v7118
    %7122 = vmatprep.subr.bf16.mxu0 0
    %7123 = vmatpush1.bf16.msra.mxu0 0
    %7124 = vmatprep.subr.bf16.mxu0 0
    %7125 = vmatpush1.bf16.msra.mxu0 0
    %7126 = vmatprep.subr.bf16.mxu0 0
    %7127 = vmatpush1.bf16.msra.mxu0 0
    %7128 = vmatprep.subr.bf16.mxu0 0
    %7129 = vmatpush1.bf16.msra.mxu0 0
    %7130 = vmatprep.subr.bf16.mxu0 0
    %7131 = vmatpush1.bf16.msra.mxu0 0
    %7132 = vmatprep.subr.bf16.mxu0 0
    %7133 = vmatpush1.bf16.msra.mxu0 0
    %7134 = vmatprep.subr.bf16.mxu0 0
    %7135 = vmatpush1.bf16.msra.mxu0 0
    %7136 = vmatprep.subr.bf16.mxu0 0
    %7137 = vmatpush1.bf16.msra.mxu0 0
    %7138 = vmatprep.subr.bf16.mxu0 0
    %7139 = vmatpush1.bf16.msra.mxu0 0
    %7140 = vmatprep.subr.bf16.mxu0 0
    %7141 = vmatpush1.bf16.msra.mxu0 0
    %7142 = vmatprep.subr.bf16.mxu0 0
    %7143 = vmatpush1.bf16.msra.mxu0 0
    %7144 = vmatprep.subr.bf16.mxu0 0
    %7145 = vmatpush1.bf16.msra.mxu0 0
    %7146 = vmatprep.subr.bf16.mxu0 0
    %7147 = vmatpush1.bf16.msra.mxu0 0
    %7148 = vmatprep.subr.bf16.mxu0 0
    %7149 = vmatpush1.bf16.msra.mxu0 0
    %7150 = vmatprep.subr.bf16.mxu0 0
    %7151 = vmatpush1.bf16.msra.mxu0 0
    %7152 = vmatprep.mubr.bf16.mxu0 0
    %7153 = vmatmul.mubr.bf16.gmra.mrb[0].mxu0 %v7115
    %v7154 = vpop.f32.mrb[0].mxu0
    %v7155 = vadd.f32 0.0, %v7154
    %v7156 = vpop.f32.mrb[0].mxu0
    %v7157 = vpop.f32.mrb[0].mxu0
    %v7158 = vpop.f32.mrb[0].mxu0
    %7159 = vdwg.mxu0
    %7161 = vrot.lane.b32.xlu0 %v6528, 96
    %v7162 = vpop.permute.xlu0 %7161
    %v7164 = vsel %vm136, %v7008, 0
    %v7167 = vsel %vm643, %v7162, 0
    %7169 = vmatprep.subr.bf16.mxu0 0
    %7170 = vmatpush1.bf16.msra.mxu0 %v7167
    %7171 = vmatprep.subr.bf16.mxu0 0
    %7172 = vmatpush1.bf16.msra.mxu0 0
    %7173 = vmatprep.subr.bf16.mxu0 0
    %7174 = vmatpush1.bf16.msra.mxu0 0
    %7175 = vmatprep.subr.bf16.mxu0 0
    %7176 = vmatpush1.bf16.msra.mxu0 0
    %7177 = vmatprep.subr.bf16.mxu0 0
    %7178 = vmatpush1.bf16.msra.mxu0 0
    %7179 = vmatprep.subr.bf16.mxu0 0
    %7180 = vmatpush1.bf16.msra.mxu0 0
    %7181 = vmatprep.subr.bf16.mxu0 0
    %7182 = vmatpush1.bf16.msra.mxu0 0
    %7183 = vmatprep.subr.bf16.mxu0 0
    %7184 = vmatpush1.bf16.msra.mxu0 0
    %7185 = vmatprep.subr.bf16.mxu0 0
    %7186 = vmatpush1.bf16.msra.mxu0 0
    %7187 = vmatprep.subr.bf16.mxu0 0
    %7188 = vmatpush1.bf16.msra.mxu0 0
    %7189 = vmatprep.subr.bf16.mxu0 0
    %7190 = vmatpush1.bf16.msra.mxu0 0
    %7191 = vmatprep.subr.bf16.mxu0 0
    %7192 = vmatpush1.bf16.msra.mxu0 0
    %7193 = vmatprep.subr.bf16.mxu0 0
    %7194 = vmatpush1.bf16.msra.mxu0 0
    %7195 = vmatprep.subr.bf16.mxu0 0
    %7196 = vmatpush1.bf16.msra.mxu0 0
    %7197 = vmatprep.subr.bf16.mxu0 0
    %7198 = vmatpush1.bf16.msra.mxu0 0
    %7199 = vmatprep.subr.bf16.mxu0 0
    %7200 = vmatpush1.bf16.msra.mxu0 0
    %7201 = vmatprep.mubr.bf16.mxu0 0
    %7202 = vmatmul.mubr.bf16.gmra.mrb[0].mxu0 %v7164
    %v7203 = vpop.f32.mrb[0].mxu0
    %v7204 = vadd.f32 0.0, %v7203
    %v7205 = vpop.f32.mrb[0].mxu0
    %v7206 = vpop.f32.mrb[0].mxu0
    %v7207 = vpop.f32.mrb[0].mxu0
    %7208 = vdwg.mxu0
    %7210 = vrot.lane.b32.xlu0 %v6529, 96
    %v7211 = vpop.permute.xlu0 %7210
    %v7213 = vsel %vm136, %v7009, 0
    %v7216 = vsel %vm643, %v7211, 0
    %7218 = vmatprep.subr.bf16.mxu0 0
    %7219 = vmatpush1.bf16.msra.mxu0 %v7216
    %7220 = vmatprep.subr.bf16.mxu0 0
    %7221 = vmatpush1.bf16.msra.mxu0 0
    %7222 = vmatprep.subr.bf16.mxu0 0
    %7223 = vmatpush1.bf16.msra.mxu0 0
    %7224 = vmatprep.subr.bf16.mxu0 0
    %7225 = vmatpush1.bf16.msra.mxu0 0
    %7226 = vmatprep.subr.bf16.mxu0 0
    %7227 = vmatpush1.bf16.msra.mxu0 0
    %7228 = vmatprep.subr.bf16.mxu0 0
    %7229 = vmatpush1.bf16.msra.mxu0 0
    %7230 = vmatprep.subr.bf16.mxu0 0
    %7231 = vmatpush1.bf16.msra.mxu0 0
    %7232 = vmatprep.subr.bf16.mxu0 0
    %7233 = vmatpush1.bf16.msra.mxu0 0
    %7234 = vmatprep.subr.bf16.mxu0 0
    %7235 = vmatpush1.bf16.msra.mxu0 0
    %7236 = vmatprep.subr.bf16.mxu0 0
    %7237 = vmatpush1.bf16.msra.mxu0 0
    %7238 = vmatprep.subr.bf16.mxu0 0
    %7239 = vmatpush1.bf16.msra.mxu0 0
    %7240 = vmatprep.subr.bf16.mxu0 0
    %7241 = vmatpush1.bf16.msra.mxu0 0
    %7242 = vmatprep.subr.bf16.mxu0 0
    %7243 = vmatpush1.bf16.msra.mxu0 0
    %7244 = vmatprep.subr.bf16.mxu0 0
    %7245 = vmatpush1.bf16.msra.mxu0 0
    %7246 = vmatprep.subr.bf16.mxu0 0
    %7247 = vmatpush1.bf16.msra.mxu0 0
    %7248 = vmatprep.subr.bf16.mxu0 0
    %7249 = vmatpush1.bf16.msra.mxu0 0
    %7250 = vmatprep.mubr.bf16.mxu0 0
    %7251 = vmatmul.mubr.bf16.gmra.mrb[0].mxu0 %v7213
    %v7252 = vpop.f32.mrb[0].mxu0
    %v7253 = vadd.f32 0.0, %v7252
    %v7254 = vpop.f32.mrb[0].mxu0
    %v7255 = vpop.f32.mrb[0].mxu0
    %v7256 = vpop.f32.mrb[0].mxu0
    %7257 = vdwg.mxu0
    %7259 = vrot.lane.b32.xlu0 %v6530, 96
    %v7260 = vpop.permute.xlu0 %7259
    %v7262 = vsel %vm136, %v7010, 0
    %v7265 = vsel %vm643, %v7260, 0
    %7267 = vmatprep.subr.bf16.mxu0 0
    %7268 = vmatpush1.bf16.msra.mxu0 %v7265
    %7269 = vmatprep.subr.bf16.mxu0 0
    %7270 = vmatpush1.bf16.msra.mxu0 0
    %7271 = vmatprep.subr.bf16.mxu0 0
    %7272 = vmatpush1.bf16.msra.mxu0 0
    %7273 = vmatprep.subr.bf16.mxu0 0
    %7274 = vmatpush1.bf16.msra.mxu0 0
    %7275 = vmatprep.subr.bf16.mxu0 0
    %7276 = vmatpush1.bf16.msra.mxu0 0
    %7277 = vmatprep.subr.bf16.mxu0 0
    %7278 = vmatpush1.bf16.msra.mxu0 0
    %7279 = vmatprep.subr.bf16.mxu0 0
    %7280 = vmatpush1.bf16.msra.mxu0 0
    %7281 = vmatprep.subr.bf16.mxu0 0
    %7282 = vmatpush1.bf16.msra.mxu0 0
    %7283 = vmatprep.subr.bf16.mxu0 0
    %7284 = vmatpush1.bf16.msra.mxu0 0
    %7285 = vmatprep.subr.bf16.mxu0 0
    %7286 = vmatpush1.bf16.msra.mxu0 0
    %7287 = vmatprep.subr.bf16.mxu0 0
    %7288 = vmatpush1.bf16.msra.mxu0 0
    %7289 = vmatprep.subr.bf16.mxu0 0
    %7290 = vmatpush1.bf16.msra.mxu0 0
    %7291 = vmatprep.subr.bf16.mxu0 0
    %7292 = vmatpush1.bf16.msra.mxu0 0
    %7293 = vmatprep.subr.bf16.mxu0 0
    %7294 = vmatpush1.bf16.msra.mxu0 0
    %7295 = vmatprep.subr.bf16.mxu0 0
    %7296 = vmatpush1.bf16.msra.mxu0 0
    %7297 = vmatprep.subr.bf16.mxu0 0
    %7298 = vmatpush1.bf16.msra.mxu0 0
    %7299 = vmatprep.mubr.bf16.mxu0 0
    %7300 = vmatmul.mubr.bf16.gmra.mrb[0].mxu0 %v7262
    %v7301 = vpop.f32.mrb[0].mxu0
    %v7302 = vadd.f32 0.0, %v7301
    %v7303 = vpop.f32.mrb[0].mxu0
    %v7304 = vpop.f32.mrb[0].mxu0
    %v7305 = vpop.f32.mrb[0].mxu0
    %7306 = vdwg.mxu0
    %7308 = vrot.lane.b32.xlu0 %v6531, 96
    %v7309 = vpop.permute.xlu0 %7308
    %v7311 = vsel %vm136, %v7011, 0
    %v7314 = vsel %vm643, %v7309, 0
    %7316 = vmatprep.subr.bf16.mxu0 0
    %7317 = vmatpush1.bf16.msra.mxu0 %v7314
    %7318 = vmatprep.subr.bf16.mxu0 0
    %7319 = vmatpush1.bf16.msra.mxu0 0
    %7320 = vmatprep.subr.bf16.mxu0 0
    %7321 = vmatpush1.bf16.msra.mxu0 0
    %7322 = vmatprep.subr.bf16.mxu0 0
    %7323 = vmatpush1.bf16.msra.mxu0 0
    %7324 = vmatprep.subr.bf16.mxu0 0
    %7325 = vmatpush1.bf16.msra.mxu0 0
    %7326 = vmatprep.subr.bf16.mxu0 0
    %7327 = vmatpush1.bf16.msra.mxu0 0
    %7328 = vmatprep.subr.bf16.mxu0 0
    %7329 = vmatpush1.bf16.msra.mxu0 0
    %7330 = vmatprep.subr.bf16.mxu0 0
    %7331 = vmatpush1.bf16.msra.mxu0 0
    %7332 = vmatprep.subr.bf16.mxu0 0
    %7333 = vmatpush1.bf16.msra.mxu0 0
    %7334 = vmatprep.subr.bf16.mxu0 0
    %7335 = vmatpush1.bf16.msra.mxu0 0
    %7336 = vmatprep.subr.bf16.mxu0 0
    %7337 = vmatpush1.bf16.msra.mxu0 0
    %7338 = vmatprep.subr.bf16.mxu0 0
    %7339 = vmatpush1.bf16.msra.mxu0 0
    %7340 = vmatprep.subr.bf16.mxu0 0
    %7341 = vmatpush1.bf16.msra.mxu0 0
    %7342 = vmatprep.subr.bf16.mxu0 0
    %7343 = vmatpush1.bf16.msra.mxu0 0
    %7344 = vmatprep.subr.bf16.mxu0 0
    %7345 = vmatpush1.bf16.msra.mxu0 0
    %7346 = vmatprep.subr.bf16.mxu0 0
    %7347 = vmatpush1.bf16.msra.mxu0 0
    %7348 = vmatprep.mubr.bf16.mxu0 0
    %7349 = vmatmul.mubr.bf16.gmra.mrb[0].mxu0 %v7311
    %v7350 = vpop.f32.mrb[0].mxu0
    %v7351 = vadd.f32 0.0, %v7350
    %v7352 = vpop.f32.mrb[0].mxu0
    %v7353 = vpop.f32.mrb[0].mxu0
    %v7354 = vpop.f32.mrb[0].mxu0
    %7355 = vdwg.mxu0
    %7357 = vrot.lane.b32.xlu0 %v6532, 96
    %v7358 = vpop.permute.xlu0 %7357
    %v7360 = vsel %vm136, %v7012, 0
    %v7363 = vsel %vm643, %v7358, 0
    %7365 = vmatprep.subr.bf16.mxu0 0
    %7366 = vmatpush1.bf16.msra.mxu0 %v7363
    %7367 = vmatprep.subr.bf16.mxu0 0
    %7368 = vmatpush1.bf16.msra.mxu0 0
    %7369 = vmatprep.subr.bf16.mxu0 0
    %7370 = vmatpush1.bf16.msra.mxu0 0
    %7371 = vmatprep.subr.bf16.mxu0 0
    %7372 = vmatpush1.bf16.msra.mxu0 0
    %7373 = vmatprep.subr.bf16.mxu0 0
    %7374 = vmatpush1.bf16.msra.mxu0 0
    %7375 = vmatprep.subr.bf16.mxu0 0
    %7376 = vmatpush1.bf16.msra.mxu0 0
    %7377 = vmatprep.subr.bf16.mxu0 0
    %7378 = vmatpush1.bf16.msra.mxu0 0
    %7379 = vmatprep.subr.bf16.mxu0 0
    %7380 = vmatpush1.bf16.msra.mxu0 0
    %7381 = vmatprep.subr.bf16.mxu0 0
    %7382 = vmatpush1.bf16.msra.mxu0 0
    %7383 = vmatprep.subr.bf16.mxu0 0
    %7384 = vmatpush1.bf16.msra.mxu0 0
    %7385 = vmatprep.subr.bf16.mxu0 0
    %7386 = vmatpush1.bf16.msra.mxu0 0
    %7387 = vmatprep.subr.bf16.mxu0 0
    %7388 = vmatpush1.bf16.msra.mxu0 0
    %7389 = vmatprep.subr.bf16.mxu0 0
    %7390 = vmatpush1.bf16.msra.mxu0 0
    %7391 = vmatprep.subr.bf16.mxu0 0
    %7392 = vmatpush1.bf16.msra.mxu0 0
    %7393 = vmatprep.subr.bf16.mxu0 0
    %7394 = vmatpush1.bf16.msra.mxu0 0
    %7395 = vmatprep.subr.bf16.mxu0 0
    %7396 = vmatpush1.bf16.msra.mxu0 0
    %7397 = vmatprep.mubr.bf16.mxu0 0
    %7398 = vmatmul.mubr.bf16.gmra.mrb[0].mxu0 %v7360
    %v7399 = vpop.f32.mrb[0].mxu0
    %v7400 = vadd.f32 0.0, %v7399
    %v7401 = vpop.f32.mrb[0].mxu0
    %v7402 = vpop.f32.mrb[0].mxu0
    %v7403 = vpop.f32.mrb[0].mxu0
    %7404 = vdwg.mxu0
    %7407 = vrot.lane.b32.xlu0 %v7155, 8
    %v7408 = vpop.permute.xlu0 %7407
    %7409 = vrot.lane.b32.xlu0 %v7204, 8
    %v7410 = vpop.permute.xlu0 %7409
    %7415 = vrot.lane.b32.xlu0 %v7253, 16
    %v7416 = vpop.permute.xlu0 %7415
    %7417 = vrot.lane.b32.xlu0 %v7302, 16
    %v7418 = vpop.permute.xlu0 %7417
    %7423 = vrot.lane.b32.xlu0 %v7351, 24
    %v7424 = vpop.permute.xlu0 %7423
    %7425 = vrot.lane.b32.xlu0 %v7400, 24
    %v7426 = vpop.permute.xlu0 %7425
    %v7429 = vsel %vm136, %v7057, %v7408
    %v7430 = vsel %vm136, %v7106, %v7410
    %v7431 = vsel %vm1049, %v7429, %v7416
    %v7432 = vsel %vm1049, %v7430, %v7418
    %v7433 = vsel %vm1052, %v7431, %v7424
    %v7434 = vsel %vm1052, %v7432, %v7426
    %v7435 = vld [vmem:[%s5 + $0x160] sm:$0xf]
    %v7436 = vld [vmem:[%s5 + $0x164] sm:$0xf]
    %v7437 = vld [vmem:[%s5 + $0x168] sm:$0xf]
    %v7438 = vld [vmem:[%s5 + $0x16c] sm:$0xf]
    %v7439 = vpack.c.bf16 %v7434, %v7433
    %v7440 = vld [vmem:[%s6 + $0x23] sm:$0x1]
    %v7441 = vlaneseq
    %v7442 = vshrl.u32 %v7441, 7
    %v7443 = vsub.s32 0, %v7442
    %v7444 = vrot.slane %v7440, %v7443
    %v7449 = vunpack.c.l.b16 %v7435
    %v7450 = vunpack.c.l.b16 %v7436
    %v7451 = vunpack.c.l.b16 %v7437
    %v7452 = vunpack.c.l.b16 %v7438
    %v7453 = vpack.c.b16 %v7450, %v7449
    %v7454 = vpack.c.b16 %v7452, %v7451
    %v7458 = vsel %vm60, %v7439, 0
    %7460 = vmatprep.subr.bf16.mxu0 0
    %7461 = vmatpush1.bf16.msra.mxu0 %v7453
    %7462 = vmatprep.subr.bf16.mxu0 0
    %7463 = vmatpush1.bf16.msra.mxu0 %v7454
    %7464 = vmatprep.subr.bf16.mxu0 0
    %7465 = vmatpush1.bf16.msra.mxu0 0
    %7466 = vmatprep.subr.bf16.mxu0 0
    %7467 = vmatpush1.bf16.msra.mxu0 0
    %7468 = vmatprep.subr.bf16.mxu0 0
    %7469 = vmatpush1.bf16.msra.mxu0 0
    %7470 = vmatprep.subr.bf16.mxu0 0
    %7471 = vmatpush1.bf16.msra.mxu0 0
    %7472 = vmatprep.subr.bf16.mxu0 0
    %7473 = vmatpush1.bf16.msra.mxu0 0
    %7474 = vmatprep.subr.bf16.mxu0 0
    %7475 = vmatpush1.bf16.msra.mxu0 0
    %7476 = vmatprep.subr.bf16.mxu0 0
    %7477 = vmatpush1.bf16.msra.mxu0 0
    %7478 = vmatprep.subr.bf16.mxu0 0
    %7479 = vmatpush1.bf16.msra.mxu0 0
    %7480 = vmatprep.subr.bf16.mxu0 0
    %7481 = vmatpush1.bf16.msra.mxu0 0
    %7482 = vmatprep.subr.bf16.mxu0 0
    %7483 = vmatpush1.bf16.msra.mxu0 0
    %7484 = vmatprep.subr.bf16.mxu0 0
    %7485 = vmatpush1.bf16.msra.mxu0 0
    %7486 = vmatprep.subr.bf16.mxu0 0
    %7487 = vmatpush1.bf16.msra.mxu0 0
    %7488 = vmatprep.subr.bf16.mxu0 0
    %7489 = vmatpush1.bf16.msra.mxu0 0
    %7490 = vmatprep.subr.bf16.mxu0 0
    %7491 = vmatpush1.bf16.msra.mxu0 0
    %7492 = vmatprep.mubr.bf16.mxu0 0
    %7493 = vmatmul.mubr.bf16.gmra.mrb[0].mxu0 %v7458
    %v7494 = vpop.f32.mrb[0].mxu0
    %v7495 = vadd.f32 %v7444, %v7494
    %v7496 = vpop.f32.mrb[0].mxu0
    %v7497 = vpop.f32.mrb[0].mxu0
    %v7498 = vadd.f32 %v7444, %v7497
    %v7499 = vpop.f32.mrb[0].mxu0
    %7500 = vdwg.mxu0
    %v7501 = vadd.f32 %v6347, %v7495
    %v7502 = vadd.f32 %v6348, %v7498
    %v7503 = vld [vmem:[%s6 + $0x24] sm:$0x1]
    %v7504 = vld [vmem:[%s6 + $0x25] sm:$0x1]
    %v7505 = vsel %vm60, %v7501, 0.0
    %7506 = vadd.xlane.f32.xlu0 %v7505
    %v7507 = vpop.xlane.xlu0 %7506
    %v7508 = vsel %vm60, %v7502, 0.0
    %7509 = vadd.xlane.f32.xlu0 %v7508
    %v7510 = vpop.xlane.xlu0 %7509
    %v7511 = vmul.f32 %v7507, %v1131
    %v7512 = vmul.f32 %v7510, %v1131
    %v7513 = vmul.f32 %v7501, %v7501
    %v7514 = vmul.f32 %v7502, %v7502
    %v7515 = vsel %vm60, %v7513, 0.0
    %7516 = vadd.xlane.f32.xlu0 %v7515
    %v7517 = vpop.xlane.xlu0 %7516
    %v7518 = vsel %vm60, %v7514, 0.0
    %7519 = vadd.xlane.f32.xlu0 %v7518
    %v7520 = vpop.xlane.xlu0 %7519
    %v7521 = vmul.f32 %v7517, %v1131
    %v7522 = vmul.f32 %v7520, %v1131
    %v7523 = vmul.f32 %v7511, %v7511
    %v7524 = vmul.f32 %v7512, %v7512
    %v7525 = vsub.f32 %v7521, %v7523
    %v7526 = vsub.f32 %v7522, %v7524
    %v7527 = vsub.f32 %v7501, %v7511
    %v7528 = vsub.f32 %v7502, %v7512
    %v7529 = vadd.f32 %v7525, 1e-05
    %v7530 = vadd.f32 %v7526, 1e-05
    %v7531 = vrsqrt.pop %v7529
    %v7532 = vrsqrt.pop %v7530
    %v7533 = vmul.f32 %v7527, %v7531
    %v7534 = vmul.f32 %v7528, %v7532
    %v7535 = vlaneseq
    %v7536 = vshrl.u32 %v7535, 7
    %v7537 = vsub.s32 0, %v7536
    %v7538 = vrot.slane %v7503, %v7537
    %v7539 = vmul.f32 %v7533, %v7538
    %v7540 = vmul.f32 %v7534, %v7538
    %v7541 = vlaneseq
    %v7542 = vshrl.u32 %v7541, 7
    %v7543 = vsub.s32 0, %v7542
    %v7544 = vrot.slane %v7504, %v7543
    %v7545 = vadd.f32 %v7539, %v7544
    %v7546 = vadd.f32 %v7540, %v7544
    %v7547 = vld [vmem:[%s5 + $0x170] sm:$0xf]
    %v7548 = vld [vmem:[%s5 + $0x174] sm:$0xf]
    %v7549 = vld [vmem:[%s5 + $0x178] sm:$0xf]
    %v7550 = vld [vmem:[%s5 + $0x17c] sm:$0xf]
    %v7551 = vpack.c.bf16 %v7546, %v7545
    %v7552 = vld [vmem:[%s6 + $0x26] sm:$0x1]
    %v7553 = vlaneseq
    %v7554 = vshrl.u32 %v7553, 7
    %v7555 = vsub.s32 0, %v7554
    %v7556 = vrot.slane %v7552, %v7555
    %v7561 = vunpack.c.l.b16 %v7547
    %v7562 = vunpack.c.l.b16 %v7548
    %v7563 = vunpack.c.l.b16 %v7549
    %v7564 = vunpack.c.l.b16 %v7550
    %v7565 = vpack.c.b16 %v7562, %v7561
    %v7566 = vpack.c.b16 %v7564, %v7563
    %v7570 = vsel %vm60, %v7551, 0
    %7572 = vmatprep.subr.bf16.mxu0 0
    %7573 = vmatpush1.bf16.msra.mxu0 %v7565
    %7574 = vmatprep.subr.bf16.mxu0 0
    %7575 = vmatpush1.bf16.msra.mxu0 %v7566
    %7576 = vmatprep.subr.bf16.mxu0 0
    %7577 = vmatpush1.bf16.msra.mxu0 0
    %7578 = vmatprep.subr.bf16.mxu0 0
    %7579 = vmatpush1.bf16.msra.mxu0 0
    %7580 = vmatprep.subr.bf16.mxu0 0
    %7581 = vmatpush1.bf16.msra.mxu0 0
    %7582 = vmatprep.subr.bf16.mxu0 0
    %7583 = vmatpush1.bf16.msra.mxu0 0
    %7584 = vmatprep.subr.bf16.mxu0 0
    %7585 = vmatpush1.bf16.msra.mxu0 0
    %7586 = vmatprep.subr.bf16.mxu0 0
    %7587 = vmatpush1.bf16.msra.mxu0 0
    %7588 = vmatprep.subr.bf16.mxu0 0
    %7589 = vmatpush1.bf16.msra.mxu0 0
    %7590 = vmatprep.subr.bf16.mxu0 0
    %7591 = vmatpush1.bf16.msra.mxu0 0
    %7592 = vmatprep.subr.bf16.mxu0 0
    %7593 = vmatpush1.bf16.msra.mxu0 0
    %7594 = vmatprep.subr.bf16.mxu0 0
    %7595 = vmatpush1.bf16.msra.mxu0 0
    %7596 = vmatprep.subr.bf16.mxu0 0
    %7597 = vmatpush1.bf16.msra.mxu0 0
    %7598 = vmatprep.subr.bf16.mxu0 0
    %7599 = vmatpush1.bf16.msra.mxu0 0
    %7600 = vmatprep.subr.bf16.mxu0 0
    %7601 = vmatpush1.bf16.msra.mxu0 0
    %7602 = vmatprep.subr.bf16.mxu0 0
    %7603 = vmatpush1.bf16.msra.mxu0 0
    %7604 = vmatprep.mubr.bf16.mxu0 0
    %7605 = vmatmul.mubr.bf16.gmra.mrb[0].mxu0 %v7570
    %v7606 = vpop.f32.mrb[0].mxu0
    %v7607 = vadd.f32 %v7556, %v7606
    %v7608 = vpop.f32.mrb[0].mxu0
    %v7609 = vpop.f32.mrb[0].mxu0
    %v7610 = vadd.f32 %v7556, %v7609
    %v7611 = vpop.f32.mrb[0].mxu0
    %7612 = vdwg.mxu0
    %v7613 = vmax.f32 %v7607, 0.0
    %v7614 = vmax.f32 %v7610, 0.0
    %v7615 = vld [vmem:[%s5 + $0x180] sm:$0xf]
    %v7616 = vld [vmem:[%s5 + $0x184] sm:$0xf]
    %v7617 = vld [vmem:[%s5 + $0x188] sm:$0xf]
    %v7618 = vld [vmem:[%s5 + $0x18c] sm:$0xf]
    %v7619 = vld [vmem:[%s5 + $0x190] sm:$0xf]
    %v7620 = vld [vmem:[%s5 + $0x194] sm:$0xf]
    %v7621 = vld [vmem:[%s5 + $0x198] sm:$0xf]
    %v7622 = vld [vmem:[%s5 + $0x19c] sm:$0xf]
    %v7623 = vpack.c.bf16 %v7614, %v7613
    %v7624 = vld [vmem:[%s6 + $0x27] sm:$0x1]
    %v7625 = vlaneseq
    %v7626 = vshrl.u32 %v7625, 7
    %v7627 = vsub.s32 0, %v7626
    %v7628 = vrot.slane %v7624, %v7627
    %v7637 = vunpack.c.l.b16 %v7615
    %v7638 = vunpack.c.l.b16 %v7616
    %v7639 = vunpack.c.l.b16 %v7617
    %v7640 = vunpack.c.l.b16 %v7618
    %v7641 = vunpack.c.l.b16 %v7619
    %v7642 = vunpack.c.l.b16 %v7620
    %v7643 = vunpack.c.l.b16 %v7621
    %v7644 = vunpack.c.l.b16 %v7622
    %v7645 = vpack.c.b16 %v7638, %v7637
    %v7646 = vpack.c.b16 %v7640, %v7639
    %v7647 = vpack.c.b16 %v7642, %v7641
    %v7648 = vpack.c.b16 %v7644, %v7643
    %v7654 = vsel %vm1274, %v7623, 0
    %7656 = vmatprep.subr.bf16.mxu0 0
    %7657 = vmatpush1.bf16.msra.mxu0 %v7645
    %7658 = vmatprep.subr.bf16.mxu0 0
    %7659 = vmatpush1.bf16.msra.mxu0 %v7646
    %7660 = vmatprep.subr.bf16.mxu0 0
    %7661 = vmatpush1.bf16.msra.mxu0 %v7647
    %7662 = vmatprep.subr.bf16.mxu0 0
    %7663 = vmatpush1.bf16.msra.mxu0 %v7648
    %7664 = vmatprep.subr.bf16.mxu0 0
    %7665 = vmatpush1.bf16.msra.mxu0 0
    %7666 = vmatprep.subr.bf16.mxu0 0
    %7667 = vmatpush1.bf16.msra.mxu0 0
    %7668 = vmatprep.subr.bf16.mxu0 0
    %7669 = vmatpush1.bf16.msra.mxu0 0
    %7670 = vmatprep.subr.bf16.mxu0 0
    %7671 = vmatpush1.bf16.msra.mxu0 0
    %7672 = vmatprep.subr.bf16.mxu0 0
    %7673 = vmatpush1.bf16.msra.mxu0 0
    %7674 = vmatprep.subr.bf16.mxu0 0
    %7675 = vmatpush1.bf16.msra.mxu0 0
    %7676 = vmatprep.subr.bf16.mxu0 0
    %7677 = vmatpush1.bf16.msra.mxu0 0
    %7678 = vmatprep.subr.bf16.mxu0 0
    %7679 = vmatpush1.bf16.msra.mxu0 0
    %7680 = vmatprep.subr.bf16.mxu0 0
    %7681 = vmatpush1.bf16.msra.mxu0 0
    %7682 = vmatprep.subr.bf16.mxu0 0
    %7683 = vmatpush1.bf16.msra.mxu0 0
    %7684 = vmatprep.subr.bf16.mxu0 0
    %7685 = vmatpush1.bf16.msra.mxu0 0
    %7686 = vmatprep.subr.bf16.mxu0 0
    %7687 = vmatpush1.bf16.msra.mxu0 0
    %7688 = vmatprep.mubr.bf16.mxu0 0
    %7689 = vmatmul.mubr.bf16.gmra.mrb[0].mxu0 %v7654
    %v7690 = vpop.f32.mrb[0].mxu0
    %v7691 = vadd.f32 %v7628, %v7690
    %v7692 = vpop.f32.mrb[0].mxu0
    %v7693 = vpop.f32.mrb[0].mxu0
    %v7694 = vadd.f32 %v7628, %v7693
    %v7695 = vpop.f32.mrb[0].mxu0
    %7696 = vdwg.mxu0
    %v7697 = vadd.f32 %v7545, %v7691
    %v7698 = vadd.f32 %v7546, %v7694
    %v7699 = vld [vmem:[%s6 + $0x28] sm:$0x1]
    %v7700 = vld [vmem:[%s6 + $0x29] sm:$0x1]
    %v7701 = vsel %vm60, %v7697, 0.0
    %7702 = vadd.xlane.f32.xlu0 %v7701
    %v7703 = vpop.xlane.xlu0 %7702
    %v7704 = vsel %vm60, %v7698, 0.0
    %7705 = vadd.xlane.f32.xlu0 %v7704
    %v7706 = vpop.xlane.xlu0 %7705
    %v7707 = vmul.f32 %v7703, %v1131
    %v7708 = vmul.f32 %v7706, %v1131
    %v7709 = vmul.f32 %v7697, %v7697
    %v7710 = vmul.f32 %v7698, %v7698
    %v7711 = vsel %vm60, %v7709, 0.0
    %7712 = vadd.xlane.f32.xlu0 %v7711
    %v7713 = vpop.xlane.xlu0 %7712
    %v7714 = vsel %vm60, %v7710, 0.0
    %7715 = vadd.xlane.f32.xlu0 %v7714
    %v7716 = vpop.xlane.xlu0 %7715
    %v7717 = vmul.f32 %v7713, %v1131
    %v7718 = vmul.f32 %v7716, %v1131
    %v7719 = vmul.f32 %v7707, %v7707
    %v7720 = vmul.f32 %v7708, %v7708
    %v7721 = vsub.f32 %v7717, %v7719
    %v7722 = vsub.f32 %v7718, %v7720
    %v7723 = vsub.f32 %v7697, %v7707
    %v7724 = vsub.f32 %v7698, %v7708
    %v7725 = vadd.f32 %v7721, 1e-05
    %v7726 = vadd.f32 %v7722, 1e-05
    %v7727 = vrsqrt.pop %v7725
    %v7728 = vrsqrt.pop %v7726
    %v7729 = vmul.f32 %v7723, %v7727
    %v7730 = vmul.f32 %v7724, %v7728
    %v7731 = vlaneseq
    %v7732 = vshrl.u32 %v7731, 7
    %v7733 = vsub.s32 0, %v7732
    %v7734 = vrot.slane %v7699, %v7733
    %v7735 = vmul.f32 %v7729, %v7734
    %v7736 = vmul.f32 %v7730, %v7734
    %v7737 = vlaneseq
    %v7738 = vshrl.u32 %v7737, 7
    %v7739 = vsub.s32 0, %v7738
    %v7740 = vrot.slane %v7700, %v7739
    %v7741 = vadd.f32 %v7735, %v7740
    %v7742 = vadd.f32 %v7736, %v7740
    %v7743 = vld [vmem:[%s5 + $0x1a0] sm:$0xf]
    %v7744 = vld [vmem:[%s5 + $0x1a4] sm:$0xf]
    %v7745 = vld [vmem:[%s5 + $0x1a8] sm:$0xf]
    %v7746 = vld [vmem:[%s5 + $0x1ac] sm:$0xf]
    %v7747 = vpack.c.bf16 %v7742, %v7741
    %v7748 = vld [vmem:[%s6 + $0x2a] sm:$0x1]
    %v7749 = vlaneseq
    %v7750 = vshrl.u32 %v7749, 7
    %v7751 = vsub.s32 0, %v7750
    %v7752 = vrot.slane %v7748, %v7751
    %v7757 = vunpack.c.l.b16 %v7743
    %v7758 = vunpack.c.l.b16 %v7744
    %v7759 = vunpack.c.l.b16 %v7745
    %v7760 = vunpack.c.l.b16 %v7746
    %v7761 = vpack.c.b16 %v7758, %v7757
    %v7762 = vpack.c.b16 %v7760, %v7759
    %v7766 = vsel %vm60, %v7747, 0
    %7768 = vmatprep.subr.bf16.mxu0 0
    %7769 = vmatpush1.bf16.msra.mxu0 %v7761
    %7770 = vmatprep.subr.bf16.mxu0 0
    %7771 = vmatpush1.bf16.msra.mxu0 %v7762
    %7772 = vmatprep.subr.bf16.mxu0 0
    %7773 = vmatpush1.bf16.msra.mxu0 0
    %7774 = vmatprep.subr.bf16.mxu0 0
    %7775 = vmatpush1.bf16.msra.mxu0 0
    %7776 = vmatprep.subr.bf16.mxu0 0
    %7777 = vmatpush1.bf16.msra.mxu0 0
    %7778 = vmatprep.subr.bf16.mxu0 0
    %7779 = vmatpush1.bf16.msra.mxu0 0
    %7780 = vmatprep.subr.bf16.mxu0 0
    %7781 = vmatpush1.bf16.msra.mxu0 0
    %7782 = vmatprep.subr.bf16.mxu0 0
    %7783 = vmatpush1.bf16.msra.mxu0 0
    %7784 = vmatprep.subr.bf16.mxu0 0
    %7785 = vmatpush1.bf16.msra.mxu0 0
    %7786 = vmatprep.subr.bf16.mxu0 0
    %7787 = vmatpush1.bf16.msra.mxu0 0
    %7788 = vmatprep.subr.bf16.mxu0 0
    %7789 = vmatpush1.bf16.msra.mxu0 0
    %7790 = vmatprep.subr.bf16.mxu0 0
    %7791 = vmatpush1.bf16.msra.mxu0 0
    %7792 = vmatprep.subr.bf16.mxu0 0
    %7793 = vmatpush1.bf16.msra.mxu0 0
    %7794 = vmatprep.subr.bf16.mxu0 0
    %7795 = vmatpush1.bf16.msra.mxu0 0
    %7796 = vmatprep.subr.bf16.mxu0 0
    %7797 = vmatpush1.bf16.msra.mxu0 0
    %7798 = vmatprep.subr.bf16.mxu0 0
    %7799 = vmatpush1.bf16.msra.mxu0 0
    %7800 = vmatprep.mubr.bf16.mxu0 0
    %7801 = vmatmul.mubr.bf16.gmra.mrb[0].mxu0 %v7766
    %v7802 = vpop.f32.mrb[0].mxu0
    %v7803 = vadd.f32 %v7752, %v7802
    %v7804 = vpop.f32.mrb[0].mxu0
    %v7805 = vpop.f32.mrb[0].mxu0
    %v7806 = vadd.f32 %v7752, %v7805
    %v7807 = vpop.f32.mrb[0].mxu0
    %7808 = vdwg.mxu0
    %7809 = vst [vmem:[#allocation2] sm:$0xff] %v7803
    %7810 = vst [vmem:[#allocation2 + $0x8] sm:$0xff] %v7806
    // Predicated region
    $region30: #{transformer_forward.1} parent=1 // pred_check
      _
    $region31: #{transformer_forward.1} parent=1 // pred_check_branch
      %7812 = sbr.rel (0) target = $region33
    $region32: #{transformer_forward.1} parent=1 // pred_region
      %s7814 = ssub.s32 256, 256
      %7815 = vsyncadd [#allocation3], %s7814
      %s7816 = sshll.u32 [#allocation2], 4
      %s7817 = int_to_ptr.vmem [resolvable:$true] %s7816
      %7822 = dma.vmem_to_hbm [thread:$0]  %s7817, 256, %s7, [#allocation3], 128, 128, 8
    $region33: #{transformer_forward.1} parent=1 // pred_fallthru
      _
    // Predicated region
    $region34: #{transformer_forward.1} parent=1 // pred_check
      _
    $region35: #{transformer_forward.1} parent=1 // pred_check_branch
      %7824 = sbr.rel (0) target = $region37
    $region36: #{transformer_forward.1} parent=1 // pred_region
      %7825 = dma.done [#allocation3], 256
    $region37: #{transformer_forward.1} parent=1 // pred_fallthru
      _
    %7826 = vsyncpa [#allocation3], 1

</llo_original>
